<compile_context>
chip_gen: v5e
topology: v5e:2x2
jax: 0.10.0
libtpu: 0.0.40
codegen_flags: <defaults>
</compile_context>

<pallas_src>
import functools

import jax
import jax.numpy as jnp
from jax.experimental import pallas as pl
from jax.experimental.pallas import tpu as pltpu

LANE = 128


def rup(n, m=LANE):
    return ((n + m - 1) // m) * m


# (c_in, c_out, stride, expansion, has_downsample) for the 5 inverted-residual
# blocks: layer1, layer2, layer3, layer4[0], layer4[1].
BLOCK_CFG = (
    (32, 16, 1, 1, True),
    (16, 32, 2, 6, True),
    (32, 64, 2, 6, True),
    (64, 96, 2, 6, True),
    (96, 96, 1, 6, False),
)


# -----------------------------------------------------------------------------
# Pallas kernels
# -----------------------------------------------------------------------------
def _vspec():
    return pl.BlockSpec(memory_space=pltpu.MemorySpace.VMEM)


def _vspecs(n):
    return [pl.BlockSpec(memory_space=pltpu.MemorySpace.VMEM) for _ in range(n)]


def _mm_bias_act_kernel(x_ref, w_ref, b_ref, o_ref, *, relu):
    """(M, K) @ (K, C) + bias(1, C), optional ReLU.  BN folded into w/b."""
    y = jnp.dot(x_ref[...].astype(jnp.bfloat16),
                w_ref[...].astype(jnp.bfloat16),
                preferred_element_type=jnp.float32)
    y = y + b_ref[...]
    if relu:
        y = jnp.maximum(y, 0.0)
    o_ref[...] = y


def _dw3x3_bn_relu_kernel(x_ref, w_ref, b_ref, o_ref):
    """Depthwise 3x3 (stride 1) + folded BN + ReLU.

    x_ref: (N, H+2, W+2, C) spatially pre-padded; w_ref: (9, C); b_ref: (1, C)
    o_ref: (N, H, W, C).  Channels live on lanes; the 9 taps are shifted
    elementwise multiply-accumulates entirely in VMEM (no im2col expansion).
    """
    _, ho, wo, _ = o_ref.shape
    x = x_ref[...]
    w = w_ref[...]
    acc = x[:, 0:ho, 0:wo, :] * w[0]
    for k in range(1, 9):
        kh, kw = k // 3, k % 3
        acc = acc + x[:, kh:kh + ho, kw:kw + wo, :] * w[k]
    o_ref[...] = jnp.maximum(acc + b_ref[...], 0.0)


def _block_tail_ds_kernel(h_ref, x_ref, wp_ref, bp_ref, wd_ref, bd_ref, o_ref):
    """1x1 project conv+BN, 1x1 downsample conv+BN, residual add — one kernel."""
    y = jnp.dot(h_ref[...].astype(jnp.bfloat16), wp_ref[...].astype(jnp.bfloat16),
                preferred_element_type=jnp.float32) + bp_ref[...]
    r = jnp.dot(x_ref[...].astype(jnp.bfloat16), wd_ref[...].astype(jnp.bfloat16),
                preferred_element_type=jnp.float32) + bd_ref[...]
    o_ref[...] = y + r


def _block_tail_id_kernel(h_ref, x_ref, wp_ref, bp_ref, o_ref):
    """1x1 project conv+BN plus identity residual add."""
    y = jnp.dot(h_ref[...].astype(jnp.bfloat16), wp_ref[...].astype(jnp.bfloat16),
                preferred_element_type=jnp.float32) + bp_ref[...]
    o_ref[...] = y + x_ref[...]


def _log_softmax(z):
    m = jnp.max(z, axis=-1, keepdims=True)
    z = z - m
    return z - jnp.log(jnp.sum(jnp.exp(z), axis=-1, keepdims=True))


def _head_kernel(x_ref, wc_ref, w1_ref, b1_ref, w2_ref, b2_ref, w3_ref, b3_ref,
                 cls_ref, dom_ref):
    """Fused head: global avgpool + conv7 + log_softmax and the domain MLP.

    x_ref: (N, H*W, 128) conv5 output.  ReverseLayerF is identity in forward.
    """
    feat = jnp.mean(x_ref[...], axis=1)                                # (N, 128)
    logits = jnp.dot(feat, wc_ref[...], preferred_element_type=jnp.float32)
    cls_ref[...] = _log_softmax(logits)
    h = jnp.dot(feat, w1_ref[...], preferred_element_type=jnp.float32) + b1_ref[...]
    h = jnp.where(h > 0, h, 0.01 * h)                                  # LeakyReLU
    h = jnp.dot(h, w2_ref[...], preferred_element_type=jnp.float32) + b2_ref[...]
    h = jnp.where(h > 0, h, 0.01 * h)
    d = jnp.dot(h, w3_ref[...], preferred_element_type=jnp.float32) + b3_ref[...]
    dom_ref[...] = _log_softmax(d)


# -----------------------------------------------------------------------------
# pallas_call wrappers (grid-free: whole operands are VMEM-resident)
# -----------------------------------------------------------------------------
def matmul_bias_act(x, w, b, relu):
    m, c_out = x.shape[0], w.shape[1]
    kernel = functools.partial(_mm_bias_act_kernel, relu=relu)
    return pl.pallas_call(
        kernel,
        out_shape=jax.ShapeDtypeStruct((m, c_out), jnp.float32),
        in_specs=_vspecs(3),
        out_specs=_vspec(),
    )(x, w, b)


def depthwise_bn_relu(x, w, b):
    n, h, wdt, c = x.shape
    xp = jnp.pad(x, ((0, 0), (1, 1), (1, 1), (0, 0)))   # static pad widths
    return pl.pallas_call(
        _dw3x3_bn_relu_kernel,
        out_shape=jax.ShapeDtypeStruct((n, h, wdt, c), jnp.float32),
        in_specs=_vspecs(3),
        out_specs=_vspec(),
    )(xp, w, b)


def block_tail(h, x, wp, bp, wd=None, bd=None):
    m, c_out = h.shape[0], wp.shape[1]
    if wd is not None:
        return pl.pallas_call(
            _block_tail_ds_kernel,
            out_shape=jax.ShapeDtypeStruct((m, c_out), jnp.float32),
            in_specs=_vspecs(6),
            out_specs=_vspec(),
        )(h, x, wp, bp, wd, bd)
    return pl.pallas_call(
        _block_tail_id_kernel,
        out_shape=jax.ShapeDtypeStruct((m, c_out), jnp.float32),
        in_specs=_vspecs(4),
        out_specs=_vspec(),
    )(h, x, wp, bp)


def head(x7, p):
    n = x7.shape[0]
    class_num = p["conv7_w"].shape[1]
    return pl.pallas_call(
        _head_kernel,
        out_shape=(jax.ShapeDtypeStruct((n, class_num), jnp.float32),
                   jax.ShapeDtypeStruct((n, 2), jnp.float32)),
        in_specs=_vspecs(8),
        out_specs=(_vspec(), _vspec()),
    )(x7, p["conv7_w"], p["dom_w1"], p["dom_b1"], p["dom_w2"], p["dom_b2"],
      p["dom_w3"], p["dom_b3"])


# -----------------------------------------------------------------------------
# Plain-JAX layout glue (static shapes only)
# -----------------------------------------------------------------------------
def im2col_3x3_s2(x):
    """(N, H, W, C) -> (N, H//2, W//2, 9*C) patches in (kh, kw, c) order for the
    3x3 / stride-2 / pad-1 conv1.  Only used once, for the 1-channel input."""
    n, h, w, c = x.shape
    xp = jnp.pad(x, ((0, 0), (1, 1), (1, 1), (0, 0)))
    ho, wo = h // 2, w // 2
    taps = []
    for kh in range(3):
        for kw in range(3):
            taps.append(xp[:, kh:kh + 2 * ho:2, kw:kw + 2 * wo:2, :])
    return jnp.concatenate(taps, axis=-1)


def inverted_residual(x, blk, stride, has_ds):
    n, h, w, c_in = x.shape
    # 1x1 expand conv + BN + ReLU (batch & spatial folded into matmul M dim).
    hdn = matmul_bias_act(x.reshape(n * h * w, c_in),
                          blk["exp_w"], blk["exp_b"], relu=True)
    c_h = hdn.shape[1]
    # 3x3 depthwise conv + BN + ReLU, computed at stride 1 fully in VMEM;
    # stride-2 blocks simply keep every other output position (cheap XLA slice,
    # identical to a stride-2 depthwise conv with pad=1).
    hdn = depthwise_bn_relu(hdn.reshape(n, h, w, c_h), blk["dw_w"], blk["dw_b"])
    if stride == 2:
        hdn = hdn[:, ::2, ::2, :]
        xr = x[:, ::2, ::2, :]        # 1x1 stride-2 downsample input positions
    else:
        xr = x
    ho, wo = hdn.shape[1], hdn.shape[2]
    hm = hdn.reshape(n * ho * wo, c_h)
    xm = xr.reshape(n * ho * wo, c_in)
    if has_ds:
        y = block_tail(hm, xm, blk["prj_w"], blk["prj_b"], blk["ds_w"], blk["ds_b"])
    else:
        y = block_tail(hm, xm, blk["prj_w"], blk["prj_b"])
    return y.reshape(n, ho, wo, y.shape[1])


@jax.jit
def mobilenet_forward(x_nchw, alpha, params):
    del alpha  # ReverseLayerF is identity in the forward pass.
    n = x_nchw.shape[0]
    x = jnp.transpose(x_nchw, (0, 2, 3, 1)).astype(jnp.float32)    # NHWC
    # conv1 3x3 s2 p1 + BN + ReLU  (im2col + fused matmul kernel).
    patches = im2col_3x3_s2(x)
    _, ho, wo, pk = patches.shape
    y = matmul_bias_act(patches.reshape(n * ho * wo, pk),
                        params["conv1_w"], params["conv1_b"], relu=True)
    x = y.reshape(n, ho, wo, y.shape[1])
    # Inverted-residual trunk (layer1..layer4).
    for (_, _, stride, _, has_ds), blk in zip(BLOCK_CFG, params["blocks"]):
        x = inverted_residual(x, blk, stride, has_ds)
    # conv5 1x1 (no BN / activation).
    _, h, w, c = x.shape
    x = matmul_bias_act(x.reshape(n * h * w, c),
                        params["conv5_w"], params["conv5_b"], relu=False)
    x7 = x.reshape(n, h * w, x.shape[1])
    # Fused head: avgpool + conv7 + log_softmax, and the domain classifier.
    return head(x7, params)


# -----------------------------------------------------------------------------
# Parameter construction: deterministic synthetic weights, BN folded, padded
# to lane-dense (multiple-of-128) channel counts with exact zeros in padding.
# -----------------------------------------------------------------------------
def _rand_bn(key, c, eps=1e-5):
    kg, kb, km, kv = jax.random.split(key, 4)
    gamma = jax.random.uniform(kg, (c,), jnp.float32, 0.5, 1.5)
    beta = 0.1 * jax.random.normal(kb, (c,), jnp.float32)
    mean = 0.1 * jax.random.normal(km, (c,), jnp.float32)
    var = jax.random.uniform(kv, (c,), jnp.float32, 0.5, 1.5)
    scale = gamma / jnp.sqrt(var + eps)
    return scale, beta - mean * scale


def make_pw(key, c_in, c_out, with_bn=True):
    k1, k2 = jax.random.split(key)
    w = 0.05 * jax.random.normal(k1, (c_out, c_in), jnp.float32)  # (C_out, C_in, 1, 1)
    if with_bn:
        scale, shift = _rand_bn(k2, c_out)
    else:
        scale = jnp.ones((c_out,), jnp.float32)
        shift = jnp.zeros((c_out,), jnp.float32)
    wm = w.T * scale[None, :]
    wp = jnp.zeros((rup(c_in), rup(c_out)), jnp.float32).at[:c_in, :c_out].set(wm)
    bp = jnp.zeros((1, rup(c_out)), jnp.float32).at[0, :c_out].set(shift)
    return wp, bp


def make_dw(key, c):
    k1, k2 = jax.random.split(key)
    w = 0.05 * jax.random.normal(k1, (c, 3, 3), jnp.float32)      # (C, 1, 3, 3)
    scale, shift = _rand_bn(k2, c)
    wf = jnp.transpose(w * scale[:, None, None], (1, 2, 0)).reshape(9, c)
    wp = jnp.zeros((9, rup(c)), jnp.float32).at[:, :c].set(wf)
    bp = jnp.zeros((1, rup(c)), jnp.float32).at[0, :c].set(shift)
    return wp, bp


def make_conv1(key, c_in, c_out):
    k1, k2 = jax.random.split(key)
    w = 0.2 * jax.random.normal(k1, (c_out, c_in, 3, 3), jnp.float32)
    scale, shift = _rand_bn(k2, c_out)
    wf = jnp.transpose(w, (2, 3, 1, 0)).reshape(9 * c_in, c_out) * scale[None, :]
    wp = jnp.zeros((9 * c_in, rup(c_out)), jnp.float32).at[:, :c_out].set(wf)
    bp = jnp.zeros((1, rup(c_out)), jnp.float32).at[0, :c_out].set(shift)
    return wp, bp


def make_linear(key, d_in, d_out, d_in_pad, d_out_pad, with_bias=True):
    k1, k2 = jax.random.split(key)
    w = 0.05 * jax.random.normal(k1, (d_out, d_in), jnp.float32)  # PyTorch (out, in)
    wp = jnp.zeros((d_in_pad, d_out_pad), jnp.float32).at[:d_in, :d_out].set(w.T)
    if with_bias:
        b = 0.05 * jax.random.normal(k2, (d_out,), jnp.float32)
    else:
        b = jnp.zeros((d_out,), jnp.float32)
    bp = jnp.zeros((1, d_out_pad), jnp.float32).at[0, :d_out].set(b)
    return wp, bp


def make_block(key, c_in, c_out, expansion, has_ds):
    hidden = c_in * expansion
    ks = jax.random.split(key, 4)
    blk = {}
    blk["exp_w"], blk["exp_b"] = make_pw(ks[0], c_in, hidden)
    blk["dw_w"], blk["dw_b"] = make_dw(ks[1], hidden)
    blk["prj_w"], blk["prj_b"] = make_pw(ks[2], hidden, c_out)
    if has_ds:
        blk["ds_w"], blk["ds_b"] = make_pw(ks[3], c_in, c_out)
    return blk


def build_params(key, class_num):
    keys = jax.random.split(key, 12)
    p = {}
    p["conv1_w"], p["conv1_b"] = make_conv1(keys[0], 1, 32)
    p["blocks"] = [make_block(keys[1 + i], c_in, c_out, expansion, has_ds)
                   for i, (c_in, c_out, _, expansion, has_ds) in enumerate(BLOCK_CFG)]
    p["conv5_w"], p["conv5_b"] = make_pw(keys[6], 96, 128, with_bn=False)
    p["conv7_w"], _ = make_linear(keys[7], 128, class_num, 128, class_num, with_bias=False)
    p["dom_w1"], p["dom_b1"] = make_linear(keys[8], 128, 500, 128, 512)
    p["dom_w2"], p["dom_b2"] = make_linear(keys[9], 500, 500, 512, 512)
    p["dom_w3"], p["dom_b3"] = make_linear(keys[10], 500, 2, 512, 2)
    return p


# -----------------------------------------------------------------------------
if __name__ == "__main__":
    N, H, W, class_num = 2, 1, 32, 10
    key = jax.random.PRNGKey(0)
    kx, kp = jax.random.split(key)
    x = jax.random.normal(kx, (N, H, 32, 32), jnp.float32)   # (N, C=1, 32, 32)
    alpha = 0.5                                              # unused in forward
    params = build_params(kp, class_num)

    cls_out, dom_out = mobilenet_forward(x, alpha, params)
    cls_out, dom_out = jax.block_until_ready((cls_out, dom_out))

    assert cls_out.shape == (N, class_num), cls_out.shape
    assert dom_out.shape == (N, 2), dom_out.shape
    # log-softmax rows should exponentiate-and-sum to ~1
    assert jnp.allclose(jnp.exp(cls_out).sum(axis=1), 1.0, atol=1e-3)
    assert jnp.allclose(jnp.exp(dom_out).sum(axis=1), 1.0, atol=1e-3)
    print("KERNEL_OK")
</pallas_src>

<mosaic_0001>
module attributes {stable_mosaic.version = 11 : i64} {
  func.func @_mm_bias_act_kernel(%arg0: memref<512x128xf32, #tpu.memory_space<vmem>>, %arg1: memref<128x128xf32, #tpu.memory_space<vmem>>, %arg2: memref<1x128xf32, #tpu.memory_space<vmem>>, %arg3: memref<512x128xf32, #tpu.memory_space<vmem>>) attributes {dimension_semantics = [], scalar_prefetch = 0 : i64, scratch_operands = 0 : i64, tpu.core_type = #tpu.core_type<tc>} {
    %c0 = arith.constant 0 : index
    %c0_0 = arith.constant 0 : index
    %0 = vector.load %arg0[%c0, %c0_0] : memref<512x128xf32, #tpu.memory_space<vmem>>, vector<512x128xf32>
    %1 = arith.truncf %0 : vector<512x128xf32> to vector<512x128xbf16>
    %c0_1 = arith.constant 0 : index
    %c0_2 = arith.constant 0 : index
    %2 = vector.load %arg1[%c0_1, %c0_2] : memref<128x128xf32, #tpu.memory_space<vmem>>, vector<128x128xf32>
    %3 = arith.truncf %2 : vector<128x128xf32> to vector<128x128xbf16>
    %cst = arith.constant dense<0.000000e+00> : vector<512x128xf32>
    %4 = tpu.matmul %1, %3, %cst {dimension_numbers = #tpu.dot_dimension_numbers<[1], [0], [0], [1], [0, 0, 1, 1], [], []>} : vector<512x128xbf16>, vector<128x128xbf16>, vector<512x128xf32> -> vector<512x128xf32>
    %c0_3 = arith.constant 0 : index
    %c0_4 = arith.constant 0 : index
    %5 = vector.load %arg2[%c0_3, %c0_4] : memref<1x128xf32, #tpu.memory_space<vmem>>, vector<1x128xf32>
    %6 = vector.broadcast %5 : vector<1x128xf32> to vector<512x128xf32>
    %7 = arith.addf %4, %6 : vector<512x128xf32>
    %cst_5 = arith.constant 0.000000e+00 : f32
    %8 = vector.broadcast %cst_5 : f32 to vector<512x128xf32>
    %9 = arith.maximumf %7, %8 : vector<512x128xf32>
    %c0_6 = arith.constant 0 : index
    %c0_7 = arith.constant 0 : index
    %10 = vector.load %arg3[%c0_6, %c0_7] : memref<512x128xf32, #tpu.memory_space<vmem>>, vector<512x128xf32>
    tpu.vector_store %arg3[%c0_6, %c0_7], %9 {strides = array<i32>} : memref<512x128xf32, #tpu.memory_space<vmem>>, vector<512x128xf32>,
    return
  }
}

module attributes {stable_mosaic.version = 11 : i64} {
  func.func @_mm_bias_act_kernel(%arg0: memref<512x9xf32, #tpu.memory_space<vmem>>, %arg1: memref<9x128xf32, #tpu.memory_space<vmem>>, %arg2: memref<1x128xf32, #tpu.memory_space<vmem>>, %arg3: memref<512x128xf32, #tpu.memory_space<vmem>>) attributes {dimension_semantics = [], scalar_prefetch = 0 : i64, scratch_operands = 0 : i64, tpu.core_type = #tpu.core_type<tc>} {
    %c0 = arith.constant 0 : index
    %c0_0 = arith.constant 0 : index
    %0 = vector.load %arg0[%c0, %c0_0] : memref<512x9xf32, #tpu.memory_space<vmem>>, vector<512x9xf32>
    %1 = arith.truncf %0 : vector<512x9xf32> to vector<512x9xbf16>
    %c0_1 = arith.constant 0 : index
    %c0_2 = arith.constant 0 : index
    %2 = vector.load %arg1[%c0_1, %c0_2] : memref<9x128xf32, #tpu.memory_space<vmem>>, vector<9x128xf32>
    %3 = arith.truncf %2 : vector<9x128xf32> to vector<9x128xbf16>
    %cst = arith.constant dense<0.000000e+00> : vector<512x128xf32>
    %4 = tpu.matmul %1, %3, %cst {dimension_numbers = #tpu.dot_dimension_numbers<[1], [0], [0], [1], [0, 0, 1, 1], [], []>} : vector<512x9xbf16>, vector<9x128xbf16>, vector<512x128xf32> -> vector<512x128xf32>
    %c0_3 = arith.constant 0 : index
    %c0_4 = arith.constant 0 : index
    %5 = vector.load %arg2[%c0_3, %c0_4] : memref<1x128xf32, #tpu.memory_space<vmem>>, vector<1x128xf32>
    %6 = vector.broadcast %5 : vector<1x128xf32> to vector<512x128xf32>
    %7 = arith.addf %4, %6 : vector<512x128xf32>
    %cst_5 = arith.constant 0.000000e+00 : f32
    %8 = vector.broadcast %cst_5 : f32 to vector<512x128xf32>
    %9 = arith.maximumf %7, %8 : vector<512x128xf32>
    %c0_6 = arith.constant 0 : index
    %c0_7 = arith.constant 0 : index
    %10 = vector.load %arg3[%c0_6, %c0_7] : memref<512x128xf32, #tpu.memory_space<vmem>>, vector<512x128xf32>
    tpu.vector_store %arg3[%c0_6, %c0_7], %9 {strides = array<i32>} : memref<512x128xf32, #tpu.memory_space<vmem>>, vector<512x128xf32>,
    return
  }
}

module attributes {stable_mosaic.version = 11 : i64} {
  func.func @_dw3x3_bn_relu_kernel(%arg0: memref<2x18x18x128xf32, #tpu.memory_space<vmem>>, %arg1: memref<9x128xf32, #tpu.memory_space<vmem>>, %arg2: memref<1x128xf32, #tpu.memory_space<vmem>>, %arg3: memref<2x16x16x128xf32, #tpu.memory_space<vmem>>) attributes {dimension_semantics = [], scalar_prefetch = 0 : i64, scratch_operands = 0 : i64, tpu.core_type = #tpu.core_type<tc>} {
    %c0 = arith.constant 0 : index
    %c0_0 = arith.constant 0 : index
    %c0_1 = arith.constant 0 : index
    %c0_2 = arith.constant 0 : index
    %0 = vector.load %arg0[%c0, %c0_0, %c0_1, %c0_2] : memref<2x18x18x128xf32, #tpu.memory_space<vmem>>, vector<2x18x18x128xf32>
    %c0_3 = arith.constant 0 : index
    %c0_4 = arith.constant 0 : index
    %1 = vector.load %arg1[%c0_3, %c0_4] : memref<9x128xf32, #tpu.memory_space<vmem>>, vector<9x128xf32>
    %2 = vector.extract_strided_slice %0 {offsets = [0, 0, 0, 0], sizes = [2, 16, 16, 128], strides = [1, 1, 1, 1]} : vector<2x18x18x128xf32> to vector<2x16x16x128xf32>
    %3 = vector.extract_strided_slice %1 {offsets = [0, 0], sizes = [1, 128], strides = [1, 1]} : vector<9x128xf32> to vector<1x128xf32>
    %4 = vector.shape_cast %3 : vector<1x128xf32> to vector<128xf32>
    %5 = vector.shape_cast %4 : vector<128xf32> to vector<1x1x1x128xf32>
    %6 = vector.broadcast %5 : vector<1x1x1x128xf32> to vector<2x16x16x128xf32>
    %7 = arith.mulf %2, %6 : vector<2x16x16x128xf32>
    %8 = vector.extract_strided_slice %0 {offsets = [0, 0, 1, 0], sizes = [2, 16, 16, 128], strides = [1, 1, 1, 1]} : vector<2x18x18x128xf32> to vector<2x16x16x128xf32>
    %9 = vector.extract_strided_slice %1 {offsets = [1, 0], sizes = [1, 128], strides = [1, 1]} : vector<9x128xf32> to vector<1x128xf32>
    %10 = vector.shape_cast %9 : vector<1x128xf32> to vector<128xf32>
    %11 = vector.shape_cast %10 : vector<128xf32> to vector<1x1x1x128xf32>
    %12 = vector.broadcast %11 : vector<1x1x1x128xf32> to vector<2x16x16x128xf32>
    %13 = arith.mulf %8, %12 : vector<2x16x16x128xf32>
    %14 = arith.addf %7, %13 : vector<2x16x16x128xf32>
    %15 = vector.extract_strided_slice %0 {offsets = [0, 0, 2, 0], sizes = [2, 16, 16, 128], strides = [1, 1, 1, 1]} : vector<2x18x18x128xf32> to vector<2x16x16x128xf32>
    %16 = vector.extract_strided_slice %1 {offsets = [2, 0], sizes = [1, 128], strides = [1, 1]} : vector<9x128xf32> to vector<1x128xf32>
    %17 = vector.shape_cast %16 : vector<1x128xf32> to vector<128xf32>
    %18 = vector.shape_cast %17 : vector<128xf32> to vector<1x1x1x128xf32>
    %19 = vector.broadcast %18 : vector<1x1x1x128xf32> to vector<2x16x16x128xf32>
    %20 = arith.mulf %15, %19 : vector<2x16x16x128xf32>
    %21 = arith.addf %14, %20 : vector<2x16x16x128xf32>
    %22 = vector.extract_strided_slice %0 {offsets = [0, 1, 0, 0], sizes = [2, 16, 16, 128], strides = [1, 1, 1, 1]} : vector<2x18x18x128xf32> to vector<2x16x16x128xf32>
    %23 = vector.extract_strided_slice %1 {offsets = [3, 0], sizes = [1, 128], strides = [1, 1]} : vector<9x128xf32> to vector<1x128xf32>
    %24 = vector.shape_cast %23 : vector<1x128xf32> to vector<128xf32>
    %25 = vector.shape_cast %24 : vector<128xf32> to vector<1x1x1x128xf32>
    %26 = vector.broadcast %25 : vector<1x1x1x128xf32> to vector<2x16x16x128xf32>
    %27 = arith.mulf %22, %26 : vector<2x16x16x128xf32>
    %28 = arith.addf %21, %27 : vector<2x16x16x128xf32>
    %29 = vector.extract_strided_slice %0 {offsets = [0, 1, 1, 0], sizes = [2, 16, 16, 128], strides = [1, 1, 1, 1]} : vector<2x18x18x128xf32> to vector<2x16x16x128xf32>
    %30 = vector.extract_strided_slice %1 {offsets = [4, 0], sizes = [1, 128], strides = [1, 1]} : vector<9x128xf32> to vector<1x128xf32>
    %31 = vector.shape_cast %30 : vector<1x128xf32> to vector<128xf32>
    %32 = vector.shape_cast %31 : vector<128xf32> to vector<1x1x1x128xf32>
    %33 = vector.broadcast %32 : vector<1x1x1x128xf32> to vector<2x16x16x128xf32>
    %34 = arith.mulf %29, %33 : vector<2x16x16x128xf32>
    %35 = arith.addf %28, %34 : vector<2x16x16x128xf32>
    %36 = vector.extract_strided_slice %0 {offsets = [0, 1, 2, 0], sizes = [2, 16, 16, 128], strides = [1, 1, 1, 1]} : vector<2x18x18x128xf32> to vector<2x16x16x128xf32>
    %37 = vector.extract_strided_slice %1 {offsets = [5, 0], sizes = [1, 128], strides = [1, 1]} : vector<9x128xf32> to vector<1x128xf32>
    %38 = vector.shape_cast %37 : vector<1x128xf32> to vector<128xf32>
    %39 = vector.shape_cast %38 : vector<128xf32> to vector<1x1x1x128xf32>
    %40 = vector.broadcast %39 : vector<1x1x1x128xf32> to vector<2x16x16x128xf32>
    %41 = arith.mulf %36, %40 : vector<2x16x16x128xf32>
    %42 = arith.addf %35, %41 : vector<2x16x16x128xf32>
    %43 = vector.extract_strided_slice %0 {offsets = [0, 2, 0, 0], sizes = [2, 16, 16, 128], strides = [1, 1, 1, 1]} : vector<2x18x18x128xf32> to vector<2x16x16x128xf32>
    %44 = vector.extract_strided_slice %1 {offsets = [6, 0], sizes = [1, 128], strides = [1, 1]} : vector<9x128xf32> to vector<1x128xf32>
    %45 = vector.shape_cast %44 : vector<1x128xf32> to vector<128xf32>
    %46 = vector.shape_cast %45 : vector<128xf32> to vector<1x1x1x128xf32>
    %47 = vector.broadcast %46 : vector<1x1x1x128xf32> to vector<2x16x16x128xf32>
    %48 = arith.mulf %43, %47 : vector<2x16x16x128xf32>
    %49 = arith.addf %42, %48 : vector<2x16x16x128xf32>
    %50 = vector.extract_strided_slice %0 {offsets = [0, 2, 1, 0], sizes = [2, 16, 16, 128], strides = [1, 1, 1, 1]} : vector<2x18x18x128xf32> to vector<2x16x16x128xf32>
    %51 = vector.extract_strided_slice %1 {offsets = [7, 0], sizes = [1, 128], strides = [1, 1]} : vector<9x128xf32> to vector<1x128xf32>
    %52 = vector.shape_cast %51 : vector<1x128xf32> to vector<128xf32>
    %53 = vector.shape_cast %52 : vector<128xf32> to vector<1x1x1x128xf32>
    %54 = vector.broadcast %53 : vector<1x1x1x128xf32> to vector<2x16x16x128xf32>
    %55 = arith.mulf %50, %54 : vector<2x16x16x128xf32>
    %56 = arith.addf %49, %55 : vector<2x16x16x128xf32>
    %57 = vector.extract_strided_slice %0 {offsets = [0, 2, 2, 0], sizes = [2, 16, 16, 128], strides = [1, 1, 1, 1]} : vector<2x18x18x128xf32> to vector<2x16x16x128xf32>
    %58 = vector.extract_strided_slice %1 {offsets = [8, 0], sizes = [1, 128], strides = [1, 1]} : vector<9x128xf32> to vector<1x128xf32>
    %59 = vector.shape_cast %58 : vector<1x128xf32> to vector<128xf32>
    %60 = vector.shape_cast %59 : vector<128xf32> to vector<1x1x1x128xf32>
    %61 = vector.broadcast %60 : vector<1x1x1x128xf32> to vector<2x16x16x128xf32>
    %62 = arith.mulf %57, %61 : vector<2x16x16x128xf32>
    %63 = arith.addf %56, %62 : vector<2x16x16x128xf32>
    %c0_5 = arith.constant 0 : index
    %c0_6 = arith.constant 0 : index
    %64 = vector.load %arg2[%c0_5, %c0_6] : memref<1x128xf32, #tpu.memory_space<vmem>>, vector<1x128xf32>
    %65 = vector.shape_cast %64 : vector<1x128xf32> to vector<1x1x1x128xf32>
    %66 = vector.broadcast %65 : vector<1x1x1x128xf32> to vector<2x16x16x128xf32>
    %67 = arith.addf %63, %66 : vector<2x16x16x128xf32>
    %cst = arith.constant 0.000000e+00 : f32
    %68 = vector.broadcast %cst : f32 to vector<2x16x16x128xf32>
    %69 = arith.maximumf %67, %68 : vector<2x16x16x128xf32>
    %c0_7 = arith.constant 0 : index
    %c0_8 = arith.constant 0 : index
    %c0_9 = arith.constant 0 : index
    %c0_10 = arith.constant 0 : index
    %70 = vector.load %arg3[%c0_7, %c0_8, %c0_9, %c0_10] : memref<2x16x16x128xf32, #tpu.memory_space<vmem>>, vector<2x16x16x128xf32>
    tpu.vector_store %arg3[%c0_7, %c0_8, %c0_9, %c0_10], %69 {strides = array<i32>} : memref<2x16x16x128xf32, #tpu.memory_space<vmem>>, vector<2x16x16x128xf32>,
    return
  }
}

module attributes {stable_mosaic.version = 11 : i64} {
  func.func @_block_tail_ds_kernel(%arg0: memref<512x128xf32, #tpu.memory_space<vmem>>, %arg1: memref<512x128xf32, #tpu.memory_space<vmem>>, %arg2: memref<128x128xf32, #tpu.memory_space<vmem>>, %arg3: memref<1x128xf32, #tpu.memory_space<vmem>>, %arg4: memref<128x128xf32, #tpu.memory_space<vmem>>, %arg5: memref<1x128xf32, #tpu.memory_space<vmem>>, %arg6: memref<512x128xf32, #tpu.memory_space<vmem>>) attributes {dimension_semantics = [], scalar_prefetch = 0 : i64, scratch_operands = 0 : i64, tpu.core_type = #tpu.core_type<tc>} {
    %c0 = arith.constant 0 : index
    %c0_0 = arith.constant 0 : index
    %0 = vector.load %arg0[%c0, %c0_0] : memref<512x128xf32, #tpu.memory_space<vmem>>, vector<512x128xf32>
    %1 = arith.truncf %0 : vector<512x128xf32> to vector<512x128xbf16>
    %c0_1 = arith.constant 0 : index
    %c0_2 = arith.constant 0 : index
    %2 = vector.load %arg2[%c0_1, %c0_2] : memref<128x128xf32, #tpu.memory_space<vmem>>, vector<128x128xf32>
    %3 = arith.truncf %2 : vector<128x128xf32> to vector<128x128xbf16>
    %cst = arith.constant dense<0.000000e+00> : vector<512x128xf32>
    %4 = tpu.matmul %1, %3, %cst {dimension_numbers = #tpu.dot_dimension_numbers<[1], [0], [0], [1], [0, 0, 1, 1], [], []>} : vector<512x128xbf16>, vector<128x128xbf16>, vector<512x128xf32> -> vector<512x128xf32>
    %c0_3 = arith.constant 0 : index
    %c0_4 = arith.constant 0 : index
    %5 = vector.load %arg3[%c0_3, %c0_4] : memref<1x128xf32, #tpu.memory_space<vmem>>, vector<1x128xf32>
    %6 = vector.broadcast %5 : vector<1x128xf32> to vector<512x128xf32>
    %7 = arith.addf %4, %6 : vector<512x128xf32>
    %c0_5 = arith.constant 0 : index
    %c0_6 = arith.constant 0 : index
    %8 = vector.load %arg1[%c0_5, %c0_6] : memref<512x128xf32, #tpu.memory_space<vmem>>, vector<512x128xf32>
    %9 = arith.truncf %8 : vector<512x128xf32> to vector<512x128xbf16>
    %c0_7 = arith.constant 0 : index
    %c0_8 = arith.constant 0 : index
    %10 = vector.load %arg4[%c0_7, %c0_8] : memref<128x128xf32, #tpu.memory_space<vmem>>, vector<128x128xf32>
    %11 = arith.truncf %10 : vector<128x128xf32> to vector<128x128xbf16>
    %cst_9 = arith.constant dense<0.000000e+00> : vector<512x128xf32>
    %12 = tpu.matmul %9, %11, %cst_9 {dimension_numbers = #tpu.dot_dimension_numbers<[1], [0], [0], [1], [0, 0, 1, 1], [], []>} : vector<512x128xbf16>, vector<128x128xbf16>, vector<512x128xf32> -> vector<512x128xf32>
    %c0_10 = arith.constant 0 : index
    %c0_11 = arith.constant 0 : index
    %13 = vector.load %arg5[%c0_10, %c0_11] : memref<1x128xf32, #tpu.memory_space<vmem>>, vector<1x128xf32>
    %14 = vector.broadcast %13 : vector<1x128xf32> to vector<512x128xf32>
    %15 = arith.addf %12, %14 : vector<512x128xf32>
    %16 = arith.addf %7, %15 : vector<512x128xf32>
    %c0_12 = arith.constant 0 : index
    %c0_13 = arith.constant 0 : index
    %17 = vector.load %arg6[%c0_12, %c0_13] : memref<512x128xf32, #tpu.memory_space<vmem>>, vector<512x128xf32>
    tpu.vector_store %arg6[%c0_12, %c0_13], %16 {strides = array<i32>} : memref<512x128xf32, #tpu.memory_space<vmem>>, vector<512x128xf32>,
    return
  }
}

module attributes {stable_mosaic.version = 11 : i64} {
  func.func @_mm_bias_act_kernel(%arg0: memref<128x128xf32, #tpu.memory_space<vmem>>, %arg1: memref<128x256xf32, #tpu.memory_space<vmem>>, %arg2: memref<1x256xf32, #tpu.memory_space<vmem>>, %arg3: memref<128x256xf32, #tpu.memory_space<vmem>>) attributes {dimension_semantics = [], scalar_prefetch = 0 : i64, scratch_operands = 0 : i64, tpu.core_type = #tpu.core_type<tc>} {
    %c0 = arith.constant 0 : index
    %c0_0 = arith.constant 0 : index
    %0 = vector.load %arg0[%c0, %c0_0] : memref<128x128xf32, #tpu.memory_space<vmem>>, vector<128x128xf32>
    %1 = arith.truncf %0 : vector<128x128xf32> to vector<128x128xbf16>
    %c0_1 = arith.constant 0 : index
    %c0_2 = arith.constant 0 : index
    %2 = vector.load %arg1[%c0_1, %c0_2] : memref<128x256xf32, #tpu.memory_space<vmem>>, vector<128x256xf32>
    %3 = arith.truncf %2 : vector<128x256xf32> to vector<128x256xbf16>
    %cst = arith.constant dense<0.000000e+00> : vector<128x256xf32>
    %4 = tpu.matmul %1, %3, %cst {dimension_numbers = #tpu.dot_dimension_numbers<[1], [0], [0], [1], [0, 0, 1, 1], [], []>} : vector<128x128xbf16>, vector<128x256xbf16>, vector<128x256xf32> -> vector<128x256xf32>
    %c0_3 = arith.constant 0 : index
    %c0_4 = arith.constant 0 : index
    %5 = vector.load %arg2[%c0_3, %c0_4] : memref<1x256xf32, #tpu.memory_space<vmem>>, vector<1x256xf32>
    %6 = vector.broadcast %5 : vector<1x256xf32> to vector<128x256xf32>
    %7 = arith.addf %4, %6 : vector<128x256xf32>
    %cst_5 = arith.constant 0.000000e+00 : f32
    %8 = vector.broadcast %cst_5 : f32 to vector<128x256xf32>
    %9 = arith.maximumf %7, %8 : vector<128x256xf32>
    %c0_6 = arith.constant 0 : index
    %c0_7 = arith.constant 0 : index
    %10 = vector.load %arg3[%c0_6, %c0_7] : memref<128x256xf32, #tpu.memory_space<vmem>>, vector<128x256xf32>
    tpu.vector_store %arg3[%c0_6, %c0_7], %9 {strides = array<i32>} : memref<128x256xf32, #tpu.memory_space<vmem>>, vector<128x256xf32>,
    return
  }
}

module attributes {stable_mosaic.version = 11 : i64} {
  func.func @_block_tail_ds_kernel(%arg0: memref<128x128xf32, #tpu.memory_space<vmem>>, %arg1: memref<128x128xf32, #tpu.memory_space<vmem>>, %arg2: memref<128x128xf32, #tpu.memory_space<vmem>>, %arg3: memref<1x128xf32, #tpu.memory_space<vmem>>, %arg4: memref<128x128xf32, #tpu.memory_space<vmem>>, %arg5: memref<1x128xf32, #tpu.memory_space<vmem>>, %arg6: memref<128x128xf32, #tpu.memory_space<vmem>>) attributes {dimension_semantics = [], scalar_prefetch = 0 : i64, scratch_operands = 0 : i64, tpu.core_type = #tpu.core_type<tc>} {
    %c0 = arith.constant 0 : index
    %c0_0 = arith.constant 0 : index
    %0 = vector.load %arg0[%c0, %c0_0] : memref<128x128xf32, #tpu.memory_space<vmem>>, vector<128x128xf32>
    %1 = arith.truncf %0 : vector<128x128xf32> to vector<128x128xbf16>
    %c0_1 = arith.constant 0 : index
    %c0_2 = arith.constant 0 : index
    %2 = vector.load %arg2[%c0_1, %c0_2] : memref<128x128xf32, #tpu.memory_space<vmem>>, vector<128x128xf32>
    %3 = arith.truncf %2 : vector<128x128xf32> to vector<128x128xbf16>
    %cst = arith.constant dense<0.000000e+00> : vector<128x128xf32>
    %4 = tpu.matmul %1, %3, %cst {dimension_numbers = #tpu.dot_dimension_numbers<[1], [0], [0], [1], [0, 0, 1, 1], [], []>} : vector<128x128xbf16>, vector<128x128xbf16>, vector<128x128xf32> -> vector<128x128xf32>
    %c0_3 = arith.constant 0 : index
    %c0_4 = arith.constant 0 : index
    %5 = vector.load %arg3[%c0_3, %c0_4] : memref<1x128xf32, #tpu.memory_space<vmem>>, vector<1x128xf32>
    %6 = vector.broadcast %5 : vector<1x128xf32> to vector<128x128xf32>
    %7 = arith.addf %4, %6 : vector<128x128xf32>
    %c0_5 = arith.constant 0 : index
    %c0_6 = arith.constant 0 : index
    %8 = vector.load %arg1[%c0_5, %c0_6] : memref<128x128xf32, #tpu.memory_space<vmem>>, vector<128x128xf32>
    %9 = arith.truncf %8 : vector<128x128xf32> to vector<128x128xbf16>
    %c0_7 = arith.constant 0 : index
    %c0_8 = arith.constant 0 : index
    %10 = vector.load %arg4[%c0_7, %c0_8] : memref<128x128xf32, #tpu.memory_space<vmem>>, vector<128x128xf32>
    %11 = arith.truncf %10 : vector<128x128xf32> to vector<128x128xbf16>
    %cst_9 = arith.constant dense<0.000000e+00> : vector<128x128xf32>
    %12 = tpu.matmul %9, %11, %cst_9 {dimension_numbers = #tpu.dot_dimension_numbers<[1], [0], [0], [1], [0, 0, 1, 1], [], []>} : vector<128x128xbf16>, vector<128x128xbf16>, vector<128x128xf32> -> vector<128x128xf32>
    %c0_10 = arith.constant 0 : index
    %c0_11 = arith.constant 0 : index
    %13 = vector.load %arg5[%c0_10, %c0_11] : memref<1x128xf32, #tpu.memory_space<vmem>>, vector<1x128xf32>
    %14 = vector.broadcast %13 : vector<1x128xf32> to vector<128x128xf32>
    %15 = arith.addf %12, %14 : vector<128x128xf32>
    %16 = arith.addf %7, %15 : vector<128x128xf32>
    %c0_12 = arith.constant 0 : index
    %c0_13 = arith.constant 0 : index
    %17 = vector.load %arg6[%c0_12, %c0_13] : memref<128x128xf32, #tpu.memory_space<vmem>>, vector<128x128xf32>
    tpu.vector_store %arg6[%c0_12, %c0_13], %16 {strides = array<i32>} : memref<128x128xf32, #tpu.memory_space<vmem>>, vector<128x128xf32>,
    return
  }
}

module attributes {stable_mosaic.version = 11 : i64} {
  func.func @_dw3x3_bn_relu_kernel(%arg0: memref<2x10x10x256xf32, #tpu.memory_space<vmem>>, %arg1: memref<9x256xf32, #tpu.memory_space<vmem>>, %arg2: memref<1x256xf32, #tpu.memory_space<vmem>>, %arg3: memref<2x8x8x256xf32, #tpu.memory_space<vmem>>) attributes {dimension_semantics = [], scalar_prefetch = 0 : i64, scratch_operands = 0 : i64, tpu.core_type = #tpu.core_type<tc>} {
    %c0 = arith.constant 0 : index
    %c0_0 = arith.constant 0 : index
    %c0_1 = arith.constant 0 : index
    %c0_2 = arith.constant 0 : index
    %0 = vector.load %arg0[%c0, %c0_0, %c0_1, %c0_2] : memref<2x10x10x256xf32, #tpu.memory_space<vmem>>, vector<2x10x10x256xf32>
    %c0_3 = arith.constant 0 : index
    %c0_4 = arith.constant 0 : index
    %1 = vector.load %arg1[%c0_3, %c0_4] : memref<9x256xf32, #tpu.memory_space<vmem>>, vector<9x256xf32>
    %2 = vector.extract_strided_slice %0 {offsets = [0, 0, 0, 0], sizes = [2, 8, 8, 256], strides = [1, 1, 1, 1]} : vector<2x10x10x256xf32> to vector<2x8x8x256xf32>
    %3 = vector.extract_strided_slice %1 {offsets = [0, 0], sizes = [1, 256], strides = [1, 1]} : vector<9x256xf32> to vector<1x256xf32>
    %4 = vector.shape_cast %3 : vector<1x256xf32> to vector<256xf32>
    %5 = vector.shape_cast %4 : vector<256xf32> to vector<1x1x1x256xf32>
    %6 = vector.broadcast %5 : vector<1x1x1x256xf32> to vector<2x8x8x256xf32>
    %7 = arith.mulf %2, %6 : vector<2x8x8x256xf32>
    %8 = vector.extract_strided_slice %0 {offsets = [0, 0, 1, 0], sizes = [2, 8, 8, 256], strides = [1, 1, 1, 1]} : vector<2x10x10x256xf32> to vector<2x8x8x256xf32>
    %9 = vector.extract_strided_slice %1 {offsets = [1, 0], sizes = [1, 256], strides = [1, 1]} : vector<9x256xf32> to vector<1x256xf32>
    %10 = vector.shape_cast %9 : vector<1x256xf32> to vector<256xf32>
    %11 = vector.shape_cast %10 : vector<256xf32> to vector<1x1x1x256xf32>
    %12 = vector.broadcast %11 : vector<1x1x1x256xf32> to vector<2x8x8x256xf32>
    %13 = arith.mulf %8, %12 : vector<2x8x8x256xf32>
    %14 = arith.addf %7, %13 : vector<2x8x8x256xf32>
    %15 = vector.extract_strided_slice %0 {offsets = [0, 0, 2, 0], sizes = [2, 8, 8, 256], strides = [1, 1, 1, 1]} : vector<2x10x10x256xf32> to vector<2x8x8x256xf32>
    %16 = vector.extract_strided_slice %1 {offsets = [2, 0], sizes = [1, 256], strides = [1, 1]} : vector<9x256xf32> to vector<1x256xf32>
    %17 = vector.shape_cast %16 : vector<1x256xf32> to vector<256xf32>
    %18 = vector.shape_cast %17 : vector<256xf32> to vector<1x1x1x256xf32>
    %19 = vector.broadcast %18 : vector<1x1x1x256xf32> to vector<2x8x8x256xf32>
    %20 = arith.mulf %15, %19 : vector<2x8x8x256xf32>
    %21 = arith.addf %14, %20 : vector<2x8x8x256xf32>
    %22 = vector.extract_strided_slice %0 {offsets = [0, 1, 0, 0], sizes = [2, 8, 8, 256], strides = [1, 1, 1, 1]} : vector<2x10x10x256xf32> to vector<2x8x8x256xf32>
    %23 = vector.extract_strided_slice %1 {offsets = [3, 0], sizes = [1, 256], strides = [1, 1]} : vector<9x256xf32> to vector<1x256xf32>
    %24 = vector.shape_cast %23 : vector<1x256xf32> to vector<256xf32>
    %25 = vector.shape_cast %24 : vector<256xf32> to vector<1x1x1x256xf32>
    %26 = vector.broadcast %25 : vector<1x1x1x256xf32> to vector<2x8x8x256xf32>
    %27 = arith.mulf %22, %26 : vector<2x8x8x256xf32>
    %28 = arith.addf %21, %27 : vector<2x8x8x256xf32>
    %29 = vector.extract_strided_slice %0 {offsets = [0, 1, 1, 0], sizes = [2, 8, 8, 256], strides = [1, 1, 1, 1]} : vector<2x10x10x256xf32> to vector<2x8x8x256xf32>
    %30 = vector.extract_strided_slice %1 {offsets = [4, 0], sizes = [1, 256], strides = [1, 1]} : vector<9x256xf32> to vector<1x256xf32>
    %31 = vector.shape_cast %30 : vector<1x256xf32> to vector<256xf32>
    %32 = vector.shape_cast %31 : vector<256xf32> to vector<1x1x1x256xf32>
    %33 = vector.broadcast %32 : vector<1x1x1x256xf32> to vector<2x8x8x256xf32>
    %34 = arith.mulf %29, %33 : vector<2x8x8x256xf32>
    %35 = arith.addf %28, %34 : vector<2x8x8x256xf32>
    %36 = vector.extract_strided_slice %0 {offsets = [0, 1, 2, 0], sizes = [2, 8, 8, 256], strides = [1, 1, 1, 1]} : vector<2x10x10x256xf32> to vector<2x8x8x256xf32>
    %37 = vector.extract_strided_slice %1 {offsets = [5, 0], sizes = [1, 256], strides = [1, 1]} : vector<9x256xf32> to vector<1x256xf32>
    %38 = vector.shape_cast %37 : vector<1x256xf32> to vector<256xf32>
    %39 = vector.shape_cast %38 : vector<256xf32> to vector<1x1x1x256xf32>
    %40 = vector.broadcast %39 : vector<1x1x1x256xf32> to vector<2x8x8x256xf32>
    %41 = arith.mulf %36, %40 : vector<2x8x8x256xf32>
    %42 = arith.addf %35, %41 : vector<2x8x8x256xf32>
    %43 = vector.extract_strided_slice %0 {offsets = [0, 2, 0, 0], sizes = [2, 8, 8, 256], strides = [1, 1, 1, 1]} : vector<2x10x10x256xf32> to vector<2x8x8x256xf32>
    %44 = vector.extract_strided_slice %1 {offsets = [6, 0], sizes = [1, 256], strides = [1, 1]} : vector<9x256xf32> to vector<1x256xf32>
    %45 = vector.shape_cast %44 : vector<1x256xf32> to vector<256xf32>
    %46 = vector.shape_cast %45 : vector<256xf32> to vector<1x1x1x256xf32>
    %47 = vector.broadcast %46 : vector<1x1x1x256xf32> to vector<2x8x8x256xf32>
    %48 = arith.mulf %43, %47 : vector<2x8x8x256xf32>
    %49 = arith.addf %42, %48 : vector<2x8x8x256xf32>
    %50 = vector.extract_strided_slice %0 {offsets = [0, 2, 1, 0], sizes = [2, 8, 8, 256], strides = [1, 1, 1, 1]} : vector<2x10x10x256xf32> to vector<2x8x8x256xf32>
    %51 = vector.extract_strided_slice %1 {offsets = [7, 0], sizes = [1, 256], strides = [1, 1]} : vector<9x256xf32> to vector<1x256xf32>
    %52 = vector.shape_cast %51 : vector<1x256xf32> to vector<256xf32>
    %53 = vector.shape_cast %52 : vector<256xf32> to vector<1x1x1x256xf32>
    %54 = vector.broadcast %53 : vector<1x1x1x256xf32> to vector<2x8x8x256xf32>
    %55 = arith.mulf %50, %54 : vector<2x8x8x256xf32>
    %56 = arith.addf %49, %55 : vector<2x8x8x256xf32>
    %57 = vector.extract_strided_slice %0 {offsets = [0, 2, 2, 0], sizes = [2, 8, 8, 256], strides = [1, 1, 1, 1]} : vector<2x10x10x256xf32> to vector<2x8x8x256xf32>
    %58 = vector.extract_strided_slice %1 {offsets = [8, 0], sizes = [1, 256], strides = [1, 1]} : vector<9x256xf32> to vector<1x256xf32>
    %59 = vector.shape_cast %58 : vector<1x256xf32> to vector<256xf32>
    %60 = vector.shape_cast %59 : vector<256xf32> to vector<1x1x1x256xf32>
    %61 = vector.broadcast %60 : vector<1x1x1x256xf32> to vector<2x8x8x256xf32>
    %62 = arith.mulf %57, %61 : vector<2x8x8x256xf32>
    %63 = arith.addf %56, %62 : vector<2x8x8x256xf32>
    %c0_5 = arith.constant 0 : index
    %c0_6 = arith.constant 0 : index
    %64 = vector.load %arg2[%c0_5, %c0_6] : memref<1x256xf32, #tpu.memory_space<vmem>>, vector<1x256xf32>
    %65 = vector.shape_cast %64 : vector<1x256xf32> to vector<1x1x1x256xf32>
    %66 = vector.broadcast %65 : vector<1x1x1x256xf32> to vector<2x8x8x256xf32>
    %67 = arith.addf %63, %66 : vector<2x8x8x256xf32>
    %cst = arith.constant 0.000000e+00 : f32
    %68 = vector.broadcast %cst : f32 to vector<2x8x8x256xf32>
    %69 = arith.maximumf %67, %68 : vector<2x8x8x256xf32>
    %c0_7 = arith.constant 0 : index
    %c0_8 = arith.constant 0 : index
    %c0_9 = arith.constant 0 : index
    %c0_10 = arith.constant 0 : index
    %70 = vector.load %arg3[%c0_7, %c0_8, %c0_9, %c0_10] : memref<2x8x8x256xf32, #tpu.memory_space<vmem>>, vector<2x8x8x256xf32>
    tpu.vector_store %arg3[%c0_7, %c0_8, %c0_9, %c0_10], %69 {strides = array<i32>} : memref<2x8x8x256xf32, #tpu.memory_space<vmem>>, vector<2x8x8x256xf32>,
    return
  }
}

module attributes {stable_mosaic.version = 11 : i64} {
  func.func @_mm_bias_act_kernel(%arg0: memref<32x128xf32, #tpu.memory_space<vmem>>, %arg1: memref<128x384xf32, #tpu.memory_space<vmem>>, %arg2: memref<1x384xf32, #tpu.memory_space<vmem>>, %arg3: memref<32x384xf32, #tpu.memory_space<vmem>>) attributes {dimension_semantics = [], scalar_prefetch = 0 : i64, scratch_operands = 0 : i64, tpu.core_type = #tpu.core_type<tc>} {
    %c0 = arith.constant 0 : index
    %c0_0 = arith.constant 0 : index
    %0 = vector.load %arg0[%c0, %c0_0] : memref<32x128xf32, #tpu.memory_space<vmem>>, vector<32x128xf32>
    %1 = arith.truncf %0 : vector<32x128xf32> to vector<32x128xbf16>
    %c0_1 = arith.constant 0 : index
    %c0_2 = arith.constant 0 : index
    %2 = vector.load %arg1[%c0_1, %c0_2] : memref<128x384xf32, #tpu.memory_space<vmem>>, vector<128x384xf32>
    %3 = arith.truncf %2 : vector<128x384xf32> to vector<128x384xbf16>
    %cst = arith.constant dense<0.000000e+00> : vector<32x384xf32>
    %4 = tpu.matmul %1, %3, %cst {dimension_numbers = #tpu.dot_dimension_numbers<[1], [0], [0], [1], [0, 0, 1, 1], [], []>} : vector<32x128xbf16>, vector<128x384xbf16>, vector<32x384xf32> -> vector<32x384xf32>
    %c0_3 = arith.constant 0 : index
    %c0_4 = arith.constant 0 : index
    %5 = vector.load %arg2[%c0_3, %c0_4] : memref<1x384xf32, #tpu.memory_space<vmem>>, vector<1x384xf32>
    %6 = vector.broadcast %5 : vector<1x384xf32> to vector<32x384xf32>
    %7 = arith.addf %4, %6 : vector<32x384xf32>
    %cst_5 = arith.constant 0.000000e+00 : f32
    %8 = vector.broadcast %cst_5 : f32 to vector<32x384xf32>
    %9 = arith.maximumf %7, %8 : vector<32x384xf32>
    %c0_6 = arith.constant 0 : index
    %c0_7 = arith.constant 0 : index
    %10 = vector.load %arg3[%c0_6, %c0_7] : memref<32x384xf32, #tpu.memory_space<vmem>>, vector<32x384xf32>
    tpu.vector_store %arg3[%c0_6, %c0_7], %9 {strides = array<i32>} : memref<32x384xf32, #tpu.memory_space<vmem>>, vector<32x384xf32>,
    return
  }
}

module attributes {stable_mosaic.version = 11 : i64} {
  func.func @_block_tail_ds_kernel(%arg0: memref<32x256xf32, #tpu.memory_space<vmem>>, %arg1: memref<32x128xf32, #tpu.memory_space<vmem>>, %arg2: memref<256x128xf32, #tpu.memory_space<vmem>>, %arg3: memref<1x128xf32, #tpu.memory_space<vmem>>, %arg4: memref<128x128xf32, #tpu.memory_space<vmem>>, %arg5: memref<1x128xf32, #tpu.memory_space<vmem>>, %arg6: memref<32x128xf32, #tpu.memory_space<vmem>>) attributes {dimension_semantics = [], scalar_prefetch = 0 : i64, scratch_operands = 0 : i64, tpu.core_type = #tpu.core_type<tc>} {
    %c0 = arith.constant 0 : index
    %c0_0 = arith.constant 0 : index
    %0 = vector.load %arg0[%c0, %c0_0] : memref<32x256xf32, #tpu.memory_space<vmem>>, vector<32x256xf32>
    %1 = arith.truncf %0 : vector<32x256xf32> to vector<32x256xbf16>
    %c0_1 = arith.constant 0 : index
    %c0_2 = arith.constant 0 : index
    %2 = vector.load %arg2[%c0_1, %c0_2] : memref<256x128xf32, #tpu.memory_space<vmem>>, vector<256x128xf32>
    %3 = arith.truncf %2 : vector<256x128xf32> to vector<256x128xbf16>
    %cst = arith.constant dense<0.000000e+00> : vector<32x128xf32>
    %4 = tpu.matmul %1, %3, %cst {dimension_numbers = #tpu.dot_dimension_numbers<[1], [0], [0], [1], [0, 0, 1, 1], [], []>} : vector<32x256xbf16>, vector<256x128xbf16>, vector<32x128xf32> -> vector<32x128xf32>
    %c0_3 = arith.constant 0 : index
    %c0_4 = arith.constant 0 : index
    %5 = vector.load %arg3[%c0_3, %c0_4] : memref<1x128xf32, #tpu.memory_space<vmem>>, vector<1x128xf32>
    %6 = vector.broadcast %5 : vector<1x128xf32> to vector<32x128xf32>
    %7 = arith.addf %4, %6 : vector<32x128xf32>
    %c0_5 = arith.constant 0 : index
    %c0_6 = arith.constant 0 : index
    %8 = vector.load %arg1[%c0_5, %c0_6] : memref<32x128xf32, #tpu.memory_space<vmem>>, vector<32x128xf32>
    %9 = arith.truncf %8 : vector<32x128xf32> to vector<32x128xbf16>
    %c0_7 = arith.constant 0 : index
    %c0_8 = arith.constant 0 : index
    %10 = vector.load %arg4[%c0_7, %c0_8] : memref<128x128xf32, #tpu.memory_space<vmem>>, vector<128x128xf32>
    %11 = arith.truncf %10 : vector<128x128xf32> to vector<128x128xbf16>
    %cst_9 = arith.constant dense<0.000000e+00> : vector<32x128xf32>
    %12 = tpu.matmul %9, %11, %cst_9 {dimension_numbers = #tpu.dot_dimension_numbers<[1], [0], [0], [1], [0, 0, 1, 1], [], []>} : vector<32x128xbf16>, vector<128x128xbf16>, vector<32x128xf32> -> vector<32x128xf32>
    %c0_10 = arith.constant 0 : index
    %c0_11 = arith.constant 0 : index
    %13 = vector.load %arg5[%c0_10, %c0_11] : memref<1x128xf32, #tpu.memory_space<vmem>>, vector<1x128xf32>
    %14 = vector.broadcast %13 : vector<1x128xf32> to vector<32x128xf32>
    %15 = arith.addf %12, %14 : vector<32x128xf32>
    %16 = arith.addf %7, %15 : vector<32x128xf32>
    %c0_12 = arith.constant 0 : index
    %c0_13 = arith.constant 0 : index
    %17 = vector.load %arg6[%c0_12, %c0_13] : memref<32x128xf32, #tpu.memory_space<vmem>>, vector<32x128xf32>
    tpu.vector_store %arg6[%c0_12, %c0_13], %16 {strides = array<i32>} : memref<32x128xf32, #tpu.memory_space<vmem>>, vector<32x128xf32>,
    return
  }
}

module attributes {stable_mosaic.version = 11 : i64} {
  func.func @_dw3x3_bn_relu_kernel(%arg0: memref<2x6x6x384xf32, #tpu.memory_space<vmem>>, %arg1: memref<9x384xf32, #tpu.memory_space<vmem>>, %arg2: memref<1x384xf32, #tpu.memory_space<vmem>>, %arg3: memref<2x4x4x384xf32, #tpu.memory_space<vmem>>) attributes {dimension_semantics = [], scalar_prefetch = 0 : i64, scratch_operands = 0 : i64, tpu.core_type = #tpu.core_type<tc>} {
    %c0 = arith.constant 0 : index
    %c0_0 = arith.constant 0 : index
    %c0_1 = arith.constant 0 : index
    %c0_2 = arith.constant 0 : index
    %0 = vector.load %arg0[%c0, %c0_0, %c0_1, %c0_2] : memref<2x6x6x384xf32, #tpu.memory_space<vmem>>, vector<2x6x6x384xf32>
    %c0_3 = arith.constant 0 : index
    %c0_4 = arith.constant 0 : index
    %1 = vector.load %arg1[%c0_3, %c0_4] : memref<9x384xf32, #tpu.memory_space<vmem>>, vector<9x384xf32>
    %2 = vector.extract_strided_slice %0 {offsets = [0, 0, 0, 0], sizes = [2, 4, 4, 384], strides = [1, 1, 1, 1]} : vector<2x6x6x384xf32> to vector<2x4x4x384xf32>
    %3 = vector.extract_strided_slice %1 {offsets = [0, 0], sizes = [1, 384], strides = [1, 1]} : vector<9x384xf32> to vector<1x384xf32>
    %4 = vector.shape_cast %3 : vector<1x384xf32> to vector<384xf32>
    %5 = vector.shape_cast %4 : vector<384xf32> to vector<1x1x1x384xf32>
    %6 = vector.broadcast %5 : vector<1x1x1x384xf32> to vector<2x4x4x384xf32>
    %7 = arith.mulf %2, %6 : vector<2x4x4x384xf32>
    %8 = vector.extract_strided_slice %0 {offsets = [0, 0, 1, 0], sizes = [2, 4, 4, 384], strides = [1, 1, 1, 1]} : vector<2x6x6x384xf32> to vector<2x4x4x384xf32>
    %9 = vector.extract_strided_slice %1 {offsets = [1, 0], sizes = [1, 384], strides = [1, 1]} : vector<9x384xf32> to vector<1x384xf32>
    %10 = vector.shape_cast %9 : vector<1x384xf32> to vector<384xf32>
    %11 = vector.shape_cast %10 : vector<384xf32> to vector<1x1x1x384xf32>
    %12 = vector.broadcast %11 : vector<1x1x1x384xf32> to vector<2x4x4x384xf32>
    %13 = arith.mulf %8, %12 : vector<2x4x4x384xf32>
    %14 = arith.addf %7, %13 : vector<2x4x4x384xf32>
    %15 = vector.extract_strided_slice %0 {offsets = [0, 0, 2, 0], sizes = [2, 4, 4, 384], strides = [1, 1, 1, 1]} : vector<2x6x6x384xf32> to vector<2x4x4x384xf32>
    %16 = vector.extract_strided_slice %1 {offsets = [2, 0], sizes = [1, 384], strides = [1, 1]} : vector<9x384xf32> to vector<1x384xf32>
    %17 = vector.shape_cast %16 : vector<1x384xf32> to vector<384xf32>
    %18 = vector.shape_cast %17 : vector<384xf32> to vector<1x1x1x384xf32>
    %19 = vector.broadcast %18 : vector<1x1x1x384xf32> to vector<2x4x4x384xf32>
    %20 = arith.mulf %15, %19 : vector<2x4x4x384xf32>
    %21 = arith.addf %14, %20 : vector<2x4x4x384xf32>
    %22 = vector.extract_strided_slice %0 {offsets = [0, 1, 0, 0], sizes = [2, 4, 4, 384], strides = [1, 1, 1, 1]} : vector<2x6x6x384xf32> to vector<2x4x4x384xf32>
    %23 = vector.extract_strided_slice %1 {offsets = [3, 0], sizes = [1, 384], strides = [1, 1]} : vector<9x384xf32> to vector<1x384xf32>
    %24 = vector.shape_cast %23 : vector<1x384xf32> to vector<384xf32>
    %25 = vector.shape_cast %24 : vector<384xf32> to vector<1x1x1x384xf32>
    %26 = vector.broadcast %25 : vector<1x1x1x384xf32> to vector<2x4x4x384xf32>
    %27 = arith.mulf %22, %26 : vector<2x4x4x384xf32>
    %28 = arith.addf %21, %27 : vector<2x4x4x384xf32>
    %29 = vector.extract_strided_slice %0 {offsets = [0, 1, 1, 0], sizes = [2, 4, 4, 384], strides = [1, 1, 1, 1]} : vector<2x6x6x384xf32> to vector<2x4x4x384xf32>
    %30 = vector.extract_strided_slice %1 {offsets = [4, 0], sizes = [1, 384], strides = [1, 1]} : vector<9x384xf32> to vector<1x384xf32>
    %31 = vector.shape_cast %30 : vector<1x384xf32> to vector<384xf32>
    %32 = vector.shape_cast %31 : vector<384xf32> to vector<1x1x1x384xf32>
    %33 = vector.broadcast %32 : vector<1x1x1x384xf32> to vector<2x4x4x384xf32>
    %34 = arith.mulf %29, %33 : vector<2x4x4x384xf32>
    %35 = arith.addf %28, %34 : vector<2x4x4x384xf32>
    %36 = vector.extract_strided_slice %0 {offsets = [0, 1, 2, 0], sizes = [2, 4, 4, 384], strides = [1, 1, 1, 1]} : vector<2x6x6x384xf32> to vector<2x4x4x384xf32>
    %37 = vector.extract_strided_slice %1 {offsets = [5, 0], sizes = [1, 384], strides = [1, 1]} : vector<9x384xf32> to vector<1x384xf32>
    %38 = vector.shape_cast %37 : vector<1x384xf32> to vector<384xf32>
    %39 = vector.shape_cast %38 : vector<384xf32> to vector<1x1x1x384xf32>
    %40 = vector.broadcast %39 : vector<1x1x1x384xf32> to vector<2x4x4x384xf32>
    %41 = arith.mulf %36, %40 : vector<2x4x4x384xf32>
    %42 = arith.addf %35, %41 : vector<2x4x4x384xf32>
    %43 = vector.extract_strided_slice %0 {offsets = [0, 2, 0, 0], sizes = [2, 4, 4, 384], strides = [1, 1, 1, 1]} : vector<2x6x6x384xf32> to vector<2x4x4x384xf32>
    %44 = vector.extract_strided_slice %1 {offsets = [6, 0], sizes = [1, 384], strides = [1, 1]} : vector<9x384xf32> to vector<1x384xf32>
    %45 = vector.shape_cast %44 : vector<1x384xf32> to vector<384xf32>
    %46 = vector.shape_cast %45 : vector<384xf32> to vector<1x1x1x384xf32>
    %47 = vector.broadcast %46 : vector<1x1x1x384xf32> to vector<2x4x4x384xf32>
    %48 = arith.mulf %43, %47 : vector<2x4x4x384xf32>
    %49 = arith.addf %42, %48 : vector<2x4x4x384xf32>
    %50 = vector.extract_strided_slice %0 {offsets = [0, 2, 1, 0], sizes = [2, 4, 4, 384], strides = [1, 1, 1, 1]} : vector<2x6x6x384xf32> to vector<2x4x4x384xf32>
    %51 = vector.extract_strided_slice %1 {offsets = [7, 0], sizes = [1, 384], strides = [1, 1]} : vector<9x384xf32> to vector<1x384xf32>
    %52 = vector.shape_cast %51 : vector<1x384xf32> to vector<384xf32>
    %53 = vector.shape_cast %52 : vector<384xf32> to vector<1x1x1x384xf32>
    %54 = vector.broadcast %53 : vector<1x1x1x384xf32> to vector<2x4x4x384xf32>
    %55 = arith.mulf %50, %54 : vector<2x4x4x384xf32>
    %56 = arith.addf %49, %55 : vector<2x4x4x384xf32>
    %57 = vector.extract_strided_slice %0 {offsets = [0, 2, 2, 0], sizes = [2, 4, 4, 384], strides = [1, 1, 1, 1]} : vector<2x6x6x384xf32> to vector<2x4x4x384xf32>
    %58 = vector.extract_strided_slice %1 {offsets = [8, 0], sizes = [1, 384], strides = [1, 1]} : vector<9x384xf32> to vector<1x384xf32>
    %59 = vector.shape_cast %58 : vector<1x384xf32> to vector<384xf32>
    %60 = vector.shape_cast %59 : vector<384xf32> to vector<1x1x1x384xf32>
    %61 = vector.broadcast %60 : vector<1x1x1x384xf32> to vector<2x4x4x384xf32>
    %62 = arith.mulf %57, %61 : vector<2x4x4x384xf32>
    %63 = arith.addf %56, %62 : vector<2x4x4x384xf32>
    %c0_5 = arith.constant 0 : index
    %c0_6 = arith.constant 0 : index
    %64 = vector.load %arg2[%c0_5, %c0_6] : memref<1x384xf32, #tpu.memory_space<vmem>>, vector<1x384xf32>
    %65 = vector.shape_cast %64 : vector<1x384xf32> to vector<1x1x1x384xf32>
    %66 = vector.broadcast %65 : vector<1x1x1x384xf32> to vector<2x4x4x384xf32>
    %67 = arith.addf %63, %66 : vector<2x4x4x384xf32>
    %cst = arith.constant 0.000000e+00 : f32
    %68 = vector.broadcast %cst : f32 to vector<2x4x4x384xf32>
    %69 = arith.maximumf %67, %68 : vector<2x4x4x384xf32>
    %c0_7 = arith.constant 0 : index
    %c0_8 = arith.constant 0 : index
    %c0_9 = arith.constant 0 : index
    %c0_10 = arith.constant 0 : index
    %70 = vector.load %arg3[%c0_7, %c0_8, %c0_9, %c0_10] : memref<2x4x4x384xf32, #tpu.memory_space<vmem>>, vector<2x4x4x384xf32>
    tpu.vector_store %arg3[%c0_7, %c0_8, %c0_9, %c0_10], %69 {strides = array<i32>} : memref<2x4x4x384xf32, #tpu.memory_space<vmem>>, vector<2x4x4x384xf32>,
    return
  }
}

module attributes {stable_mosaic.version = 11 : i64} {
  func.func @_mm_bias_act_kernel(%arg0: memref<8x128xf32, #tpu.memory_space<vmem>>, %arg1: memref<128x640xf32, #tpu.memory_space<vmem>>, %arg2: memref<1x640xf32, #tpu.memory_space<vmem>>, %arg3: memref<8x640xf32, #tpu.memory_space<vmem>>) attributes {dimension_semantics = [], scalar_prefetch = 0 : i64, scratch_operands = 0 : i64, tpu.core_type = #tpu.core_type<tc>} {
    %c0 = arith.constant 0 : index
    %c0_0 = arith.constant 0 : index
    %0 = vector.load %arg0[%c0, %c0_0] : memref<8x128xf32, #tpu.memory_space<vmem>>, vector<8x128xf32>
    %1 = arith.truncf %0 : vector<8x128xf32> to vector<8x128xbf16>
    %c0_1 = arith.constant 0 : index
    %c0_2 = arith.constant 0 : index
    %2 = vector.load %arg1[%c0_1, %c0_2] : memref<128x640xf32, #tpu.memory_space<vmem>>, vector<128x640xf32>
    %3 = arith.truncf %2 : vector<128x640xf32> to vector<128x640xbf16>
    %cst = arith.constant dense<0.000000e+00> : vector<8x640xf32>
    %4 = tpu.matmul %1, %3, %cst {dimension_numbers = #tpu.dot_dimension_numbers<[1], [0], [0], [1], [0, 0, 1, 1], [], []>} : vector<8x128xbf16>, vector<128x640xbf16>, vector<8x640xf32> -> vector<8x640xf32>
    %c0_3 = arith.constant 0 : index
    %c0_4 = arith.constant 0 : index
    %5 = vector.load %arg2[%c0_3, %c0_4] : memref<1x640xf32, #tpu.memory_space<vmem>>, vector<1x640xf32>
    %6 = vector.broadcast %5 : vector<1x640xf32> to vector<8x640xf32>
    %7 = arith.addf %4, %6 : vector<8x640xf32>
    %cst_5 = arith.constant 0.000000e+00 : f32
    %8 = vector.broadcast %cst_5 : f32 to vector<8x640xf32>
    %9 = arith.maximumf %7, %8 : vector<8x640xf32>
    %c0_6 = arith.constant 0 : index
    %c0_7 = arith.constant 0 : index
    %10 = vector.load %arg3[%c0_6, %c0_7] : memref<8x640xf32, #tpu.memory_space<vmem>>, vector<8x640xf32>
    tpu.vector_store %arg3[%c0_6, %c0_7], %9 {strides = array<i32>} : memref<8x640xf32, #tpu.memory_space<vmem>>, vector<8x640xf32>,
    return
  }
}

module attributes {stable_mosaic.version = 11 : i64} {
  func.func @_block_tail_ds_kernel(%arg0: memref<8x384xf32, #tpu.memory_space<vmem>>, %arg1: memref<8x128xf32, #tpu.memory_space<vmem>>, %arg2: memref<384x128xf32, #tpu.memory_space<vmem>>, %arg3: memref<1x128xf32, #tpu.memory_space<vmem>>, %arg4: memref<128x128xf32, #tpu.memory_space<vmem>>, %arg5: memref<1x128xf32, #tpu.memory_space<vmem>>, %arg6: memref<8x128xf32, #tpu.memory_space<vmem>>) attributes {dimension_semantics = [], scalar_prefetch = 0 : i64, scratch_operands = 0 : i64, tpu.core_type = #tpu.core_type<tc>} {
    %c0 = arith.constant 0 : index
    %c0_0 = arith.constant 0 : index
    %0 = vector.load %arg0[%c0, %c0_0] : memref<8x384xf32, #tpu.memory_space<vmem>>, vector<8x384xf32>
    %1 = arith.truncf %0 : vector<8x384xf32> to vector<8x384xbf16>
    %c0_1 = arith.constant 0 : index
    %c0_2 = arith.constant 0 : index
    %2 = vector.load %arg2[%c0_1, %c0_2] : memref<384x128xf32, #tpu.memory_space<vmem>>, vector<384x128xf32>
    %3 = arith.truncf %2 : vector<384x128xf32> to vector<384x128xbf16>
    %cst = arith.constant dense<0.000000e+00> : vector<8x128xf32>
    %4 = tpu.matmul %1, %3, %cst {dimension_numbers = #tpu.dot_dimension_numbers<[1], [0], [0], [1], [0, 0, 1, 1], [], []>} : vector<8x384xbf16>, vector<384x128xbf16>, vector<8x128xf32> -> vector<8x128xf32>
    %c0_3 = arith.constant 0 : index
    %c0_4 = arith.constant 0 : index
    %5 = vector.load %arg3[%c0_3, %c0_4] : memref<1x128xf32, #tpu.memory_space<vmem>>, vector<1x128xf32>
    %6 = vector.broadcast %5 : vector<1x128xf32> to vector<8x128xf32>
    %7 = arith.addf %4, %6 : vector<8x128xf32>
    %c0_5 = arith.constant 0 : index
    %c0_6 = arith.constant 0 : index
    %8 = vector.load %arg1[%c0_5, %c0_6] : memref<8x128xf32, #tpu.memory_space<vmem>>, vector<8x128xf32>
    %9 = arith.truncf %8 : vector<8x128xf32> to vector<8x128xbf16>
    %c0_7 = arith.constant 0 : index
    %c0_8 = arith.constant 0 : index
    %10 = vector.load %arg4[%c0_7, %c0_8] : memref<128x128xf32, #tpu.memory_space<vmem>>, vector<128x128xf32>
    %11 = arith.truncf %10 : vector<128x128xf32> to vector<128x128xbf16>
    %cst_9 = arith.constant dense<0.000000e+00> : vector<8x128xf32>
    %12 = tpu.matmul %9, %11, %cst_9 {dimension_numbers = #tpu.dot_dimension_numbers<[1], [0], [0], [1], [0, 0, 1, 1], [], []>} : vector<8x128xbf16>, vector<128x128xbf16>, vector<8x128xf32> -> vector<8x128xf32>
    %c0_10 = arith.constant 0 : index
    %c0_11 = arith.constant 0 : index
    %13 = vector.load %arg5[%c0_10, %c0_11] : memref<1x128xf32, #tpu.memory_space<vmem>>, vector<1x128xf32>
    %14 = vector.broadcast %13 : vector<1x128xf32> to vector<8x128xf32>
    %15 = arith.addf %12, %14 : vector<8x128xf32>
    %16 = arith.addf %7, %15 : vector<8x128xf32>
    %c0_12 = arith.constant 0 : index
    %c0_13 = arith.constant 0 : index
    %17 = vector.load %arg6[%c0_12, %c0_13] : memref<8x128xf32, #tpu.memory_space<vmem>>, vector<8x128xf32>
    tpu.vector_store %arg6[%c0_12, %c0_13], %16 {strides = array<i32>} : memref<8x128xf32, #tpu.memory_space<vmem>>, vector<8x128xf32>,
    return
  }
}

module attributes {stable_mosaic.version = 11 : i64} {
  func.func @_dw3x3_bn_relu_kernel(%arg0: memref<2x4x4x640xf32, #tpu.memory_space<vmem>>, %arg1: memref<9x640xf32, #tpu.memory_space<vmem>>, %arg2: memref<1x640xf32, #tpu.memory_space<vmem>>, %arg3: memref<2x2x2x640xf32, #tpu.memory_space<vmem>>) attributes {dimension_semantics = [], scalar_prefetch = 0 : i64, scratch_operands = 0 : i64, tpu.core_type = #tpu.core_type<tc>} {
    %c0 = arith.constant 0 : index
    %c0_0 = arith.constant 0 : index
    %c0_1 = arith.constant 0 : index
    %c0_2 = arith.constant 0 : index
    %0 = vector.load %arg0[%c0, %c0_0, %c0_1, %c0_2] : memref<2x4x4x640xf32, #tpu.memory_space<vmem>>, vector<2x4x4x640xf32>
    %c0_3 = arith.constant 0 : index
    %c0_4 = arith.constant 0 : index
    %1 = vector.load %arg1[%c0_3, %c0_4] : memref<9x640xf32, #tpu.memory_space<vmem>>, vector<9x640xf32>
    %2 = vector.extract_strided_slice %0 {offsets = [0, 0, 0, 0], sizes = [2, 2, 2, 640], strides = [1, 1, 1, 1]} : vector<2x4x4x640xf32> to vector<2x2x2x640xf32>
    %3 = vector.extract_strided_slice %1 {offsets = [0, 0], sizes = [1, 640], strides = [1, 1]} : vector<9x640xf32> to vector<1x640xf32>
    %4 = vector.shape_cast %3 : vector<1x640xf32> to vector<640xf32>
    %5 = vector.shape_cast %4 : vector<640xf32> to vector<1x1x1x640xf32>
    %6 = vector.broadcast %5 : vector<1x1x1x640xf32> to vector<2x2x2x640xf32>
    %7 = arith.mulf %2, %6 : vector<2x2x2x640xf32>
    %8 = vector.extract_strided_slice %0 {offsets = [0, 0, 1, 0], sizes = [2, 2, 2, 640], strides = [1, 1, 1, 1]} : vector<2x4x4x640xf32> to vector<2x2x2x640xf32>
    %9 = vector.extract_strided_slice %1 {offsets = [1, 0], sizes = [1, 640], strides = [1, 1]} : vector<9x640xf32> to vector<1x640xf32>
    %10 = vector.shape_cast %9 : vector<1x640xf32> to vector<640xf32>
    %11 = vector.shape_cast %10 : vector<640xf32> to vector<1x1x1x640xf32>
    %12 = vector.broadcast %11 : vector<1x1x1x640xf32> to vector<2x2x2x640xf32>
    %13 = arith.mulf %8, %12 : vector<2x2x2x640xf32>
    %14 = arith.addf %7, %13 : vector<2x2x2x640xf32>
    %15 = vector.extract_strided_slice %0 {offsets = [0, 0, 2, 0], sizes = [2, 2, 2, 640], strides = [1, 1, 1, 1]} : vector<2x4x4x640xf32> to vector<2x2x2x640xf32>
    %16 = vector.extract_strided_slice %1 {offsets = [2, 0], sizes = [1, 640], strides = [1, 1]} : vector<9x640xf32> to vector<1x640xf32>
    %17 = vector.shape_cast %16 : vector<1x640xf32> to vector<640xf32>
    %18 = vector.shape_cast %17 : vector<640xf32> to vector<1x1x1x640xf32>
    %19 = vector.broadcast %18 : vector<1x1x1x640xf32> to vector<2x2x2x640xf32>
    %20 = arith.mulf %15, %19 : vector<2x2x2x640xf32>
    %21 = arith.addf %14, %20 : vector<2x2x2x640xf32>
    %22 = vector.extract_strided_slice %0 {offsets = [0, 1, 0, 0], sizes = [2, 2, 2, 640], strides = [1, 1, 1, 1]} : vector<2x4x4x640xf32> to vector<2x2x2x640xf32>
    %23 = vector.extract_strided_slice %1 {offsets = [3, 0], sizes = [1, 640], strides = [1, 1]} : vector<9x640xf32> to vector<1x640xf32>
    %24 = vector.shape_cast %23 : vector<1x640xf32> to vector<640xf32>
    %25 = vector.shape_cast %24 : vector<640xf32> to vector<1x1x1x640xf32>
    %26 = vector.broadcast %25 : vector<1x1x1x640xf32> to vector<2x2x2x640xf32>
    %27 = arith.mulf %22, %26 : vector<2x2x2x640xf32>
    %28 = arith.addf %21, %27 : vector<2x2x2x640xf32>
    %29 = vector.extract_strided_slice %0 {offsets = [0, 1, 1, 0], sizes = [2, 2, 2, 640], strides = [1, 1, 1, 1]} : vector<2x4x4x640xf32> to vector<2x2x2x640xf32>
    %30 = vector.extract_strided_slice %1 {offsets = [4, 0], sizes = [1, 640], strides = [1, 1]} : vector<9x640xf32> to vector<1x640xf32>
    %31 = vector.shape_cast %30 : vector<1x640xf32> to vector<640xf32>
    %32 = vector.shape_cast %31 : vector<640xf32> to vector<1x1x1x640xf32>
    %33 = vector.broadcast %32 : vector<1x1x1x640xf32> to vector<2x2x2x640xf32>
    %34 = arith.mulf %29, %33 : vector<2x2x2x640xf32>
    %35 = arith.addf %28, %34 : vector<2x2x2x640xf32>
    %36 = vector.extract_strided_slice %0 {offsets = [0, 1, 2, 0], sizes = [2, 2, 2, 640], strides = [1, 1, 1, 1]} : vector<2x4x4x640xf32> to vector<2x2x2x640xf32>
    %37 = vector.extract_strided_slice %1 {offsets = [5, 0], sizes = [1, 640], strides = [1, 1]} : vector<9x640xf32> to vector<1x640xf32>
    %38 = vector.shape_cast %37 : vector<1x640xf32> to vector<640xf32>
    %39 = vector.shape_cast %38 : vector<640xf32> to vector<1x1x1x640xf32>
    %40 = vector.broadcast %39 : vector<1x1x1x640xf32> to vector<2x2x2x640xf32>
    %41 = arith.mulf %36, %40 : vector<2x2x2x640xf32>
    %42 = arith.addf %35, %41 : vector<2x2x2x640xf32>
    %43 = vector.extract_strided_slice %0 {offsets = [0, 2, 0, 0], sizes = [2, 2, 2, 640], strides = [1, 1, 1, 1]} : vector<2x4x4x640xf32> to vector<2x2x2x640xf32>
    %44 = vector.extract_strided_slice %1 {offsets = [6, 0], sizes = [1, 640], strides = [1, 1]} : vector<9x640xf32> to vector<1x640xf32>
    %45 = vector.shape_cast %44 : vector<1x640xf32> to vector<640xf32>
    %46 = vector.shape_cast %45 : vector<640xf32> to vector<1x1x1x640xf32>
    %47 = vector.broadcast %46 : vector<1x1x1x640xf32> to vector<2x2x2x640xf32>
    %48 = arith.mulf %43, %47 : vector<2x2x2x640xf32>
    %49 = arith.addf %42, %48 : vector<2x2x2x640xf32>
    %50 = vector.extract_strided_slice %0 {offsets = [0, 2, 1, 0], sizes = [2, 2, 2, 640], strides = [1, 1, 1, 1]} : vector<2x4x4x640xf32> to vector<2x2x2x640xf32>
    %51 = vector.extract_strided_slice %1 {offsets = [7, 0], sizes = [1, 640], strides = [1, 1]} : vector<9x640xf32> to vector<1x640xf32>
    %52 = vector.shape_cast %51 : vector<1x640xf32> to vector<640xf32>
    %53 = vector.shape_cast %52 : vector<640xf32> to vector<1x1x1x640xf32>
    %54 = vector.broadcast %53 : vector<1x1x1x640xf32> to vector<2x2x2x640xf32>
    %55 = arith.mulf %50, %54 : vector<2x2x2x640xf32>
    %56 = arith.addf %49, %55 : vector<2x2x2x640xf32>
    %57 = vector.extract_strided_slice %0 {offsets = [0, 2, 2, 0], sizes = [2, 2, 2, 640], strides = [1, 1, 1, 1]} : vector<2x4x4x640xf32> to vector<2x2x2x640xf32>
    %58 = vector.extract_strided_slice %1 {offsets = [8, 0], sizes = [1, 640], strides = [1, 1]} : vector<9x640xf32> to vector<1x640xf32>
    %59 = vector.shape_cast %58 : vector<1x640xf32> to vector<640xf32>
    %60 = vector.shape_cast %59 : vector<640xf32> to vector<1x1x1x640xf32>
    %61 = vector.broadcast %60 : vector<1x1x1x640xf32> to vector<2x2x2x640xf32>
    %62 = arith.mulf %57, %61 : vector<2x2x2x640xf32>
    %63 = arith.addf %56, %62 : vector<2x2x2x640xf32>
    %c0_5 = arith.constant 0 : index
    %c0_6 = arith.constant 0 : index
    %64 = vector.load %arg2[%c0_5, %c0_6] : memref<1x640xf32, #tpu.memory_space<vmem>>, vector<1x640xf32>
    %65 = vector.shape_cast %64 : vector<1x640xf32> to vector<1x1x1x640xf32>
    %66 = vector.broadcast %65 : vector<1x1x1x640xf32> to vector<2x2x2x640xf32>
    %67 = arith.addf %63, %66 : vector<2x2x2x640xf32>
    %cst = arith.constant 0.000000e+00 : f32
    %68 = vector.broadcast %cst : f32 to vector<2x2x2x640xf32>
    %69 = arith.maximumf %67, %68 : vector<2x2x2x640xf32>
    %c0_7 = arith.constant 0 : index
    %c0_8 = arith.constant 0 : index
    %c0_9 = arith.constant 0 : index
    %c0_10 = arith.constant 0 : index
    %70 = vector.load %arg3[%c0_7, %c0_8, %c0_9, %c0_10] : memref<2x2x2x640xf32, #tpu.memory_space<vmem>>, vector<2x2x2x640xf32>
    tpu.vector_store %arg3[%c0_7, %c0_8, %c0_9, %c0_10], %69 {strides = array<i32>} : memref<2x2x2x640xf32, #tpu.memory_space<vmem>>, vector<2x2x2x640xf32>,
    return
  }
}

module attributes {stable_mosaic.version = 11 : i64} {
  func.func @_block_tail_id_kernel(%arg0: memref<8x640xf32, #tpu.memory_space<vmem>>, %arg1: memref<8x128xf32, #tpu.memory_space<vmem>>, %arg2: memref<640x128xf32, #tpu.memory_space<vmem>>, %arg3: memref<1x128xf32, #tpu.memory_space<vmem>>, %arg4: memref<8x128xf32, #tpu.memory_space<vmem>>) attributes {dimension_semantics = [], scalar_prefetch = 0 : i64, scratch_operands = 0 : i64, tpu.core_type = #tpu.core_type<tc>} {
    %c0 = arith.constant 0 : index
    %c0_0 = arith.constant 0 : index
    %0 = vector.load %arg0[%c0, %c0_0] : memref<8x640xf32, #tpu.memory_space<vmem>>, vector<8x640xf32>
    %1 = arith.truncf %0 : vector<8x640xf32> to vector<8x640xbf16>
    %c0_1 = arith.constant 0 : index
    %c0_2 = arith.constant 0 : index
    %2 = vector.load %arg2[%c0_1, %c0_2] : memref<640x128xf32, #tpu.memory_space<vmem>>, vector<640x128xf32>
    %3 = arith.truncf %2 : vector<640x128xf32> to vector<640x128xbf16>
    %cst = arith.constant dense<0.000000e+00> : vector<8x128xf32>
    %4 = tpu.matmul %1, %3, %cst {dimension_numbers = #tpu.dot_dimension_numbers<[1], [0], [0], [1], [0, 0, 1, 1], [], []>} : vector<8x640xbf16>, vector<640x128xbf16>, vector<8x128xf32> -> vector<8x128xf32>
    %c0_3 = arith.constant 0 : index
    %c0_4 = arith.constant 0 : index
    %5 = vector.load %arg3[%c0_3, %c0_4] : memref<1x128xf32, #tpu.memory_space<vmem>>, vector<1x128xf32>
    %6 = vector.broadcast %5 : vector<1x128xf32> to vector<8x128xf32>
    %7 = arith.addf %4, %6 : vector<8x128xf32>
    %c0_5 = arith.constant 0 : index
    %c0_6 = arith.constant 0 : index
    %8 = vector.load %arg1[%c0_5, %c0_6] : memref<8x128xf32, #tpu.memory_space<vmem>>, vector<8x128xf32>
    %9 = arith.addf %7, %8 : vector<8x128xf32>
    %c0_7 = arith.constant 0 : index
    %c0_8 = arith.constant 0 : index
    %10 = vector.load %arg4[%c0_7, %c0_8] : memref<8x128xf32, #tpu.memory_space<vmem>>, vector<8x128xf32>
    tpu.vector_store %arg4[%c0_7, %c0_8], %9 {strides = array<i32>} : memref<8x128xf32, #tpu.memory_space<vmem>>, vector<8x128xf32>,
    return
  }
}

module attributes {stable_mosaic.version = 11 : i64} {
  func.func @_mm_bias_act_kernel(%arg0: memref<8x128xf32, #tpu.memory_space<vmem>>, %arg1: memref<128x128xf32, #tpu.memory_space<vmem>>, %arg2: memref<1x128xf32, #tpu.memory_space<vmem>>, %arg3: memref<8x128xf32, #tpu.memory_space<vmem>>) attributes {dimension_semantics = [], scalar_prefetch = 0 : i64, scratch_operands = 0 : i64, tpu.core_type = #tpu.core_type<tc>} {
    %c0 = arith.constant 0 : index
    %c0_0 = arith.constant 0 : index
    %0 = vector.load %arg0[%c0, %c0_0] : memref<8x128xf32, #tpu.memory_space<vmem>>, vector<8x128xf32>
    %1 = arith.truncf %0 : vector<8x128xf32> to vector<8x128xbf16>
    %c0_1 = arith.constant 0 : index
    %c0_2 = arith.constant 0 : index
    %2 = vector.load %arg1[%c0_1, %c0_2] : memref<128x128xf32, #tpu.memory_space<vmem>>, vector<128x128xf32>
    %3 = arith.truncf %2 : vector<128x128xf32> to vector<128x128xbf16>
    %cst = arith.constant dense<0.000000e+00> : vector<8x128xf32>
    %4 = tpu.matmul %1, %3, %cst {dimension_numbers = #tpu.dot_dimension_numbers<[1], [0], [0], [1], [0, 0, 1, 1], [], []>} : vector<8x128xbf16>, vector<128x128xbf16>, vector<8x128xf32> -> vector<8x128xf32>
    %c0_3 = arith.constant 0 : index
    %c0_4 = arith.constant 0 : index
    %5 = vector.load %arg2[%c0_3, %c0_4] : memref<1x128xf32, #tpu.memory_space<vmem>>, vector<1x128xf32>
    %6 = vector.broadcast %5 : vector<1x128xf32> to vector<8x128xf32>
    %7 = arith.addf %4, %6 : vector<8x128xf32>
    %c0_5 = arith.constant 0 : index
    %c0_6 = arith.constant 0 : index
    %8 = vector.load %arg3[%c0_5, %c0_6] : memref<8x128xf32, #tpu.memory_space<vmem>>, vector<8x128xf32>
    tpu.vector_store %arg3[%c0_5, %c0_6], %7 {strides = array<i32>} : memref<8x128xf32, #tpu.memory_space<vmem>>, vector<8x128xf32>,
    return
  }
}

module attributes {stable_mosaic.version = 11 : i64} {
  func.func @_head_kernel(%arg0: memref<2x4x128xf32, #tpu.memory_space<vmem>>, %arg1: memref<128x10xf32, #tpu.memory_space<vmem>>, %arg2: memref<128x512xf32, #tpu.memory_space<vmem>>, %arg3: memref<1x512xf32, #tpu.memory_space<vmem>>, %arg4: memref<512x512xf32, #tpu.memory_space<vmem>>, %arg5: memref<1x512xf32, #tpu.memory_space<vmem>>, %arg6: memref<512x2xf32, #tpu.memory_space<vmem>>, %arg7: memref<1x2xf32, #tpu.memory_space<vmem>>, %arg8: memref<2x10xf32, #tpu.memory_space<vmem>>, %arg9: memref<2x2xf32, #tpu.memory_space<vmem>>) attributes {dimension_semantics = [], scalar_prefetch = 0 : i64, scratch_operands = 0 : i64, tpu.core_type = #tpu.core_type<tc>} {
    %c0 = arith.constant 0 : index
    %c0_0 = arith.constant 0 : index
    %c0_1 = arith.constant 0 : index
    %0 = vector.load %arg0[%c0, %c0_0, %c0_1] : memref<2x4x128xf32, #tpu.memory_space<vmem>>, vector<2x4x128xf32>
    %cst = arith.constant dense<0.000000e+00> : vector<2x128xf32>
    %1 = vector.multi_reduction <add>, %0, %cst [1] : vector<2x4x128xf32> to vector<2x128xf32>
    %cst_2 = arith.constant 4.000000e+00 : f32
    %2 = vector.broadcast %cst_2 : f32 to vector<2x128xf32>
    %3 = arith.divf %1, %2 : vector<2x128xf32>
    %c0_3 = arith.constant 0 : index
    %c0_4 = arith.constant 0 : index
    %4 = vector.load %arg1[%c0_3, %c0_4] : memref<128x10xf32, #tpu.memory_space<vmem>>, vector<128x10xf32>
    %cst_5 = arith.constant dense<0.000000e+00> : vector<2x10xf32>
    %5 = tpu.matmul %3, %4, %cst_5 {dimension_numbers = #tpu.dot_dimension_numbers<[1], [0], [0], [1], [0, 0, 1, 1], [], []>} : vector<2x128xf32>, vector<128x10xf32>, vector<2x10xf32> -> vector<2x10xf32>
    %cst_6 = arith.constant dense<0xFF800000> : vector<2xf32>
    %6 = vector.multi_reduction <maximumf>, %5, %cst_6 [1] : vector<2x10xf32> to vector<2xf32>
    %7 = vector.shape_cast %6 : vector<2xf32> to vector<2x1xf32>
    %8 = vector.broadcast %7 : vector<2x1xf32> to vector<2x10xf32>
    %9 = arith.subf %5, %8 : vector<2x10xf32>
    %10 = math.exp %9 : vector<2x10xf32>
    %cst_7 = arith.constant dense<0.000000e+00> : vector<2xf32>
    %11 = vector.multi_reduction <add>, %10, %cst_7 [1] : vector<2x10xf32> to vector<2xf32>
    %12 = vector.shape_cast %11 : vector<2xf32> to vector<2x1xf32>
    %13 = math.log %12 : vector<2x1xf32>
    %14 = vector.broadcast %13 : vector<2x1xf32> to vector<2x10xf32>
    %15 = arith.subf %9, %14 : vector<2x10xf32>
    %c0_8 = arith.constant 0 : index
    %c0_9 = arith.constant 0 : index
    %16 = vector.load %arg8[%c0_8, %c0_9] : memref<2x10xf32, #tpu.memory_space<vmem>>, vector<2x10xf32>
    tpu.vector_store %arg8[%c0_8, %c0_9], %15 {strides = array<i32>} : memref<2x10xf32, #tpu.memory_space<vmem>>, vector<2x10xf32>,
    %c0_10 = arith.constant 0 : index
    %c0_11 = arith.constant 0 : index
    %17 = vector.load %arg2[%c0_10, %c0_11] : memref<128x512xf32, #tpu.memory_space<vmem>>, vector<128x512xf32>
    %cst_12 = arith.constant dense<0.000000e+00> : vector<2x512xf32>
    %18 = tpu.matmul %3, %17, %cst_12 {dimension_numbers = #tpu.dot_dimension_numbers<[1], [0], [0], [1], [0, 0, 1, 1], [], []>} : vector<2x128xf32>, vector<128x512xf32>, vector<2x512xf32> -> vector<2x512xf32>
    %c0_13 = arith.constant 0 : index
    %c0_14 = arith.constant 0 : index
    %19 = vector.load %arg3[%c0_13, %c0_14] : memref<1x512xf32, #tpu.memory_space<vmem>>, vector<1x512xf32>
    %20 = vector.broadcast %19 : vector<1x512xf32> to vector<2x512xf32>
    %21 = arith.addf %18, %20 : vector<2x512xf32>
    %cst_15 = arith.constant 0.000000e+00 : f32
    %22 = vector.broadcast %cst_15 : f32 to vector<2x512xf32>
    %23 = arith.cmpf ogt, %21, %22 : vector<2x512xf32>
    %cst_16 = arith.constant 0.00999999977 : f32
    %24 = vector.broadcast %cst_16 : f32 to vector<2x512xf32>
    %25 = arith.mulf %24, %21 : vector<2x512xf32>
    %26 = arith.select %23, %21, %25 : vector<2x512xi1>, vector<2x512xf32>
    %c0_17 = arith.constant 0 : index
    %c0_18 = arith.constant 0 : index
    %27 = vector.load %arg4[%c0_17, %c0_18] : memref<512x512xf32, #tpu.memory_space<vmem>>, vector<512x512xf32>
    %cst_19 = arith.constant dense<0.000000e+00> : vector<2x512xf32>
    %28 = tpu.matmul %26, %27, %cst_19 {dimension_numbers = #tpu.dot_dimension_numbers<[1], [0], [0], [1], [0, 0, 1, 1], [], []>} : vector<2x512xf32>, vector<512x512xf32>, vector<2x512xf32> -> vector<2x512xf32>
    %c0_20 = arith.constant 0 : index
    %c0_21 = arith.constant 0 : index
    %29 = vector.load %arg5[%c0_20, %c0_21] : memref<1x512xf32, #tpu.memory_space<vmem>>, vector<1x512xf32>
    %30 = vector.broadcast %29 : vector<1x512xf32> to vector<2x512xf32>
    %31 = arith.addf %28, %30 : vector<2x512xf32>
    %cst_22 = arith.constant 0.000000e+00 : f32
    %32 = vector.broadcast %cst_22 : f32 to vector<2x512xf32>
    %33 = arith.cmpf ogt, %31, %32 : vector<2x512xf32>
    %cst_23 = arith.constant 0.00999999977 : f32
    %34 = vector.broadcast %cst_23 : f32 to vector<2x512xf32>
    %35 = arith.mulf %34, %31 : vector<2x512xf32>
    %36 = arith.select %33, %31, %35 : vector<2x512xi1>, vector<2x512xf32>
    %c0_24 = arith.constant 0 : index
    %c0_25 = arith.constant 0 : index
    %37 = vector.load %arg6[%c0_24, %c0_25] : memref<512x2xf32, #tpu.memory_space<vmem>>, vector<512x2xf32>
    %cst_26 = arith.constant dense<0.000000e+00> : vector<2x2xf32>
    %38 = tpu.matmul %36, %37, %cst_26 {dimension_numbers = #tpu.dot_dimension_numbers<[1], [0], [0], [1], [0, 0, 1, 1], [], []>} : vector<2x512xf32>, vector<512x2xf32>, vector<2x2xf32> -> vector<2x2xf32>
    %c0_27 = arith.constant 0 : index
    %c0_28 = arith.constant 0 : index
    %39 = vector.load %arg7[%c0_27, %c0_28] : memref<1x2xf32, #tpu.memory_space<vmem>>, vector<1x2xf32>
    %40 = vector.broadcast %39 : vector<1x2xf32> to vector<2x2xf32>
    %41 = arith.addf %38, %40 : vector<2x2xf32>
    %cst_29 = arith.constant dense<0xFF800000> : vector<2xf32>
    %42 = vector.multi_reduction <maximumf>, %41, %cst_29 [1] : vector<2x2xf32> to vector<2xf32>
    %43 = vector.shape_cast %42 : vector<2xf32> to vector<2x1xf32>
    %44 = vector.broadcast %43 : vector<2x1xf32> to vector<2x2xf32>
    %45 = arith.subf %41, %44 : vector<2x2xf32>
    %46 = math.exp %45 : vector<2x2xf32>
    %cst_30 = arith.constant dense<0.000000e+00> : vector<2xf32>
    %47 = vector.multi_reduction <add>, %46, %cst_30 [1] : vector<2x2xf32> to vector<2xf32>
    %48 = vector.shape_cast %47 : vector<2xf32> to vector<2x1xf32>
    %49 = math.log %48 : vector<2x1xf32>
    %50 = vector.broadcast %49 : vector<2x1xf32> to vector<2x2xf32>
    %51 = arith.subf %45, %50 : vector<2x2xf32>
    %c0_31 = arith.constant 0 : index
    %c0_32 = arith.constant 0 : index
    %52 = vector.load %arg9[%c0_31, %c0_32] : memref<2x2xf32, #tpu.memory_space<vmem>>, vector<2x2xf32>
    tpu.vector_store %arg9[%c0_31, %c0_32], %51 {strides = array<i32>} : memref<2x2xf32, #tpu.memory_space<vmem>>, vector<2x2xf32>,
    return
  }
}

</mosaic_0001>

<llo_original>
// kernel: mobilenet_forward.19
$region0: #{mobilenet_forward.19}
  #allocation0 [shape = 'u32[]', space=smem, size = 0x4, offset = 0x4, fixed_abs, tag = 'smem constant byte address 0x4 - core index']
  #allocation1 [shape = 'u32[72,128]{1,0:T(1,128)}', space=vmem, size = 0x9000, scoped, tag = 'internal scratch']
  %s0 = inlined_call_operand.vmem [shape: f32[512,128], index: 0, kind: input, shape index: {}]
  %s1 = inlined_call_operand.vmem [shape: f32[128,128], index: 1, kind: input, shape index: {}]
  %s2 = inlined_call_operand.vmem [shape: f32[1,128], index: 2, kind: input, shape index: {}]
  %s3 = inlined_call_operand.vmem [shape: f32[512,128], index: 3, kind: output, shape index: {}]
  %s4 = sld [smem:[#allocation0]]
  $region22: #{mobilenet_forward.19} parent=0
    _
  %s6 = ssub.s32 1, %s4
  %s7 = scalar_select 0, %s6, %s4
  // Predicated region
  $region2: #{mobilenet_forward.19} parent=0 // pred_check
    _
  $region3: #{mobilenet_forward.19} parent=0 // pred_check_branch
    %9 = sbr.rel (0) target = $region5
  $region4: #{mobilenet_forward.19} parent=0 // pred_region
    _
  $region5: #{mobilenet_forward.19} parent=0 // pred_fallthru
    _
  // Predicated region
  $region6: #{mobilenet_forward.19} parent=0 // pred_check
    _
  $region7: #{mobilenet_forward.19} parent=0 // pred_check_branch
    %11 = sbr.rel (0) target = $region9
  $region8: #{mobilenet_forward.19} parent=0 // pred_region
    _
  $region9: #{mobilenet_forward.19} parent=0 // pred_fallthru
    _
  // Predicated region
  $region10: #{mobilenet_forward.19} parent=0 // pred_check
    _
  $region11: #{mobilenet_forward.19} parent=0 // pred_check_branch
    %13 = sbr.rel (0) target = $region13
  $region12: #{mobilenet_forward.19} parent=0 // pred_region
    _
  $region13: #{mobilenet_forward.19} parent=0 // pred_fallthru
    _
  %v14 = vld [vmem:[%s0] sm:$0xff]
  %v15 = vld [vmem:[%s0 + $0x8] sm:$0xff]
  %v16 = vld [vmem:[%s0 + $0x10] sm:$0xff]
  %v17 = vld [vmem:[%s0 + $0x18] sm:$0xff]
  %v18 = vld [vmem:[%s0 + $0x20] sm:$0xff]
  %v19 = vld [vmem:[%s0 + $0x28] sm:$0xff]
  %v20 = vld [vmem:[%s0 + $0x30] sm:$0xff]
  %v21 = vld [vmem:[%s0 + $0x38] sm:$0xff]
  %v22 = vld [vmem:[%s0 + $0x40] sm:$0xff]
  %v23 = vld [vmem:[%s0 + $0x48] sm:$0xff]
  %v24 = vld [vmem:[%s0 + $0x50] sm:$0xff]
  %v25 = vld [vmem:[%s0 + $0x58] sm:$0xff]
  %v26 = vld [vmem:[%s0 + $0x60] sm:$0xff]
  %v27 = vld [vmem:[%s0 + $0x68] sm:$0xff]
  %v28 = vld [vmem:[%s0 + $0x70] sm:$0xff]
  %v29 = vld [vmem:[%s0 + $0x78] sm:$0xff]
  %v30 = vld [vmem:[%s0 + $0x80] sm:$0xff]
  %v31 = vld [vmem:[%s0 + $0x88] sm:$0xff]
  %v32 = vld [vmem:[%s0 + $0x90] sm:$0xff]
  %v33 = vld [vmem:[%s0 + $0x98] sm:$0xff]
  %v34 = vld [vmem:[%s0 + $0xa0] sm:$0xff]
  %v35 = vld [vmem:[%s0 + $0xa8] sm:$0xff]
  %v36 = vld [vmem:[%s0 + $0xb0] sm:$0xff]
  %v37 = vld [vmem:[%s0 + $0xb8] sm:$0xff]
  %v38 = vld [vmem:[%s0 + $0xc0] sm:$0xff]
  %v39 = vld [vmem:[%s0 + $0xc8] sm:$0xff]
  %v40 = vld [vmem:[%s0 + $0xd0] sm:$0xff]
  %v41 = vld [vmem:[%s0 + $0xd8] sm:$0xff]
  %v42 = vld [vmem:[%s0 + $0xe0] sm:$0xff]
  %v43 = vld [vmem:[%s0 + $0xe8] sm:$0xff]
  %v44 = vld [vmem:[%s0 + $0xf0] sm:$0xff]
  %v45 = vld [vmem:[%s0 + $0xf8] sm:$0xff]
  %v46 = vld [vmem:[%s0 + $0x100] sm:$0xff]
  %v47 = vld [vmem:[%s0 + $0x108] sm:$0xff]
  %v48 = vld [vmem:[%s0 + $0x110] sm:$0xff]
  %v49 = vld [vmem:[%s0 + $0x118] sm:$0xff]
  %v50 = vld [vmem:[%s0 + $0x120] sm:$0xff]
  %v51 = vld [vmem:[%s0 + $0x128] sm:$0xff]
  %v52 = vld [vmem:[%s0 + $0x130] sm:$0xff]
  %v53 = vld [vmem:[%s0 + $0x138] sm:$0xff]
  %v54 = vld [vmem:[%s0 + $0x140] sm:$0xff]
  %v55 = vld [vmem:[%s0 + $0x148] sm:$0xff]
  %v56 = vld [vmem:[%s0 + $0x150] sm:$0xff]
  %v57 = vld [vmem:[%s0 + $0x158] sm:$0xff]
  %v58 = vld [vmem:[%s0 + $0x160] sm:$0xff]
  %v59 = vld [vmem:[%s0 + $0x168] sm:$0xff]
  %v60 = vld [vmem:[%s0 + $0x170] sm:$0xff]
  %v61 = vld [vmem:[%s0 + $0x178] sm:$0xff]
  %v62 = vld [vmem:[%s0 + $0x180] sm:$0xff]
  %v63 = vld [vmem:[%s0 + $0x188] sm:$0xff]
  %v64 = vld [vmem:[%s0 + $0x190] sm:$0xff]
  %v65 = vld [vmem:[%s0 + $0x198] sm:$0xff]
  %v66 = vld [vmem:[%s0 + $0x1a0] sm:$0xff]
  %v67 = vld [vmem:[%s0 + $0x1a8] sm:$0xff]
  %v68 = vld [vmem:[%s0 + $0x1b0] sm:$0xff]
  %v69 = vld [vmem:[%s0 + $0x1b8] sm:$0xff]
  %v70 = vld [vmem:[%s0 + $0x1c0] sm:$0xff]
  %v71 = vld [vmem:[%s0 + $0x1c8] sm:$0xff]
  %v72 = vld [vmem:[%s0 + $0x1d0] sm:$0xff]
  %v73 = vld [vmem:[%s0 + $0x1d8] sm:$0xff]
  %v74 = vld [vmem:[%s0 + $0x1e0] sm:$0xff]
  %v75 = vld [vmem:[%s0 + $0x1e8] sm:$0xff]
  %v76 = vld [vmem:[%s0 + $0x1f0] sm:$0xff]
  %v77 = vld [vmem:[%s0 + $0x1f8] sm:$0xff]
  %v78 = vpack.c.bf16 %v15, %v14
  %v79 = vpack.c.bf16 %v17, %v16
  %v80 = vpack.c.bf16 %v19, %v18
  %v81 = vpack.c.bf16 %v21, %v20
  %v82 = vpack.c.bf16 %v23, %v22
  %v83 = vpack.c.bf16 %v25, %v24
  %v84 = vpack.c.bf16 %v27, %v26
  %v85 = vpack.c.bf16 %v29, %v28
  %v86 = vpack.c.bf16 %v31, %v30
  %v87 = vpack.c.bf16 %v33, %v32
  %v88 = vpack.c.bf16 %v35, %v34
  %v89 = vpack.c.bf16 %v37, %v36
  %v90 = vpack.c.bf16 %v39, %v38
  %v91 = vpack.c.bf16 %v41, %v40
  %v92 = vpack.c.bf16 %v43, %v42
  %v93 = vpack.c.bf16 %v45, %v44
  %v94 = vpack.c.bf16 %v47, %v46
  %v95 = vpack.c.bf16 %v49, %v48
  %v96 = vpack.c.bf16 %v51, %v50
  %v97 = vpack.c.bf16 %v53, %v52
  %v98 = vpack.c.bf16 %v55, %v54
  %v99 = vpack.c.bf16 %v57, %v56
  %v100 = vpack.c.bf16 %v59, %v58
  %v101 = vpack.c.bf16 %v61, %v60
  %v102 = vpack.c.bf16 %v63, %v62
  %v103 = vpack.c.bf16 %v65, %v64
  %v104 = vpack.c.bf16 %v67, %v66
  %v105 = vpack.c.bf16 %v69, %v68
  %v106 = vpack.c.bf16 %v71, %v70
  %v107 = vpack.c.bf16 %v73, %v72
  %v108 = vpack.c.bf16 %v75, %v74
  %v109 = vpack.c.bf16 %v77, %v76
  %v110 = vld [vmem:[%s1] sm:$0xff]
  %v111 = vld [vmem:[%s1 + $0x8] sm:$0xff]
  %v112 = vld [vmem:[%s1 + $0x10] sm:$0xff]
  %v113 = vld [vmem:[%s1 + $0x18] sm:$0xff]
  %v114 = vld [vmem:[%s1 + $0x20] sm:$0xff]
  %v115 = vld [vmem:[%s1 + $0x28] sm:$0xff]
  %v116 = vld [vmem:[%s1 + $0x30] sm:$0xff]
  %v117 = vld [vmem:[%s1 + $0x38] sm:$0xff]
  %v118 = vld [vmem:[%s1 + $0x40] sm:$0xff]
  %v119 = vld [vmem:[%s1 + $0x48] sm:$0xff]
  %v120 = vld [vmem:[%s1 + $0x50] sm:$0xff]
  %v121 = vld [vmem:[%s1 + $0x58] sm:$0xff]
  %v122 = vld [vmem:[%s1 + $0x60] sm:$0xff]
  %v123 = vld [vmem:[%s1 + $0x68] sm:$0xff]
  %v124 = vld [vmem:[%s1 + $0x70] sm:$0xff]
  %v125 = vld [vmem:[%s1 + $0x78] sm:$0xff]
  %v126 = vpack.c.bf16 %v111, %v110
  %v127 = vpack.c.bf16 %v113, %v112
  %v128 = vpack.c.bf16 %v115, %v114
  %v129 = vpack.c.bf16 %v117, %v116
  %v130 = vpack.c.bf16 %v119, %v118
  %v131 = vpack.c.bf16 %v121, %v120
  %v132 = vpack.c.bf16 %v123, %v122
  %v133 = vpack.c.bf16 %v125, %v124
  %v134 = vld [vmem:[%s2] sm:$0x1]
  %v136 = vperm.slane %v134, 0
  %138 = vmatpush.bf16.msra.mxu0 %v133
  %139 = vmatpush.bf16.msra.mxu0 %v132
  %140 = vmatpush.bf16.msra.mxu0 %v131
  %141 = vmatpush.bf16.msra.mxu0 %v130
  %142 = vmatpush.bf16.msra.mxu0 %v129
  %143 = vmatpush.bf16.msra.mxu0 %v128
  %144 = vmatpush.bf16.msra.mxu0 %v127
  %145 = vmatpush.bf16.msra.mxu0 %v126
  %146 = vmatmul.bf16.gmra.mxu0 %v78
  %v147 = vpop.f32.mrf.mxu0
  %v148 = vadd.f32 %v136, %v147
  %v149 = vpop.f32.mrf.mxu0
  %v150 = vadd.f32 %v136, %v149
  %151 = vmatmul.bf16.gmra.mxu0 %v79
  %v152 = vpop.f32.mrf.mxu0
  %v153 = vadd.f32 %v136, %v152
  %v154 = vpop.f32.mrf.mxu0
  %v155 = vadd.f32 %v136, %v154
  %156 = vmatmul.bf16.gmra.mxu0 %v80
  %v157 = vpop.f32.mrf.mxu0
  %v158 = vadd.f32 %v136, %v157
  %v159 = vpop.f32.mrf.mxu0
  %v160 = vadd.f32 %v136, %v159
  %161 = vmatmul.bf16.gmra.mxu0 %v81
  %v162 = vpop.f32.mrf.mxu0
  %v163 = vadd.f32 %v136, %v162
  %v164 = vpop.f32.mrf.mxu0
  %v165 = vadd.f32 %v136, %v164
  %166 = vmatmul.bf16.gmra.mxu0 %v82
  %v167 = vpop.f32.mrf.mxu0
  %v168 = vadd.f32 %v136, %v167
  %v169 = vpop.f32.mrf.mxu0
  %v170 = vadd.f32 %v136, %v169
  %171 = vmatmul.bf16.gmra.mxu0 %v83
  %v172 = vpop.f32.mrf.mxu0
  %v173 = vadd.f32 %v136, %v172
  %v174 = vpop.f32.mrf.mxu0
  %v175 = vadd.f32 %v136, %v174
  %176 = vmatmul.bf16.gmra.mxu0 %v84
  %v177 = vpop.f32.mrf.mxu0
  %v178 = vadd.f32 %v136, %v177
  %v179 = vpop.f32.mrf.mxu0
  %v180 = vadd.f32 %v136, %v179
  %181 = vmatmul.bf16.gmra.mxu0 %v85
  %v182 = vpop.f32.mrf.mxu0
  %v183 = vadd.f32 %v136, %v182
  %v184 = vpop.f32.mrf.mxu0
  %v185 = vadd.f32 %v136, %v184
  %186 = vmatmul.bf16.gmra.mxu0 %v86
  %v187 = vpop.f32.mrf.mxu0
  %v188 = vadd.f32 %v136, %v187
  %v189 = vpop.f32.mrf.mxu0
  %v190 = vadd.f32 %v136, %v189
  %191 = vmatmul.bf16.gmra.mxu0 %v87
  %v192 = vpop.f32.mrf.mxu0
  %v193 = vadd.f32 %v136, %v192
  %v194 = vpop.f32.mrf.mxu0
  %v195 = vadd.f32 %v136, %v194
  %196 = vmatmul.bf16.gmra.mxu0 %v88
  %v197 = vpop.f32.mrf.mxu0
  %v198 = vadd.f32 %v136, %v197
  %v199 = vpop.f32.mrf.mxu0
  %v200 = vadd.f32 %v136, %v199
  %201 = vmatmul.bf16.gmra.mxu0 %v89
  %v202 = vpop.f32.mrf.mxu0
  %v203 = vadd.f32 %v136, %v202
  %v204 = vpop.f32.mrf.mxu0
  %v205 = vadd.f32 %v136, %v204
  %206 = vmatmul.bf16.gmra.mxu0 %v90
  %v207 = vpop.f32.mrf.mxu0
  %v208 = vadd.f32 %v136, %v207
  %v209 = vpop.f32.mrf.mxu0
  %v210 = vadd.f32 %v136, %v209
  %211 = vmatmul.bf16.gmra.mxu0 %v91
  %v212 = vpop.f32.mrf.mxu0
  %v213 = vadd.f32 %v136, %v212
  %v214 = vpop.f32.mrf.mxu0
  %v215 = vadd.f32 %v136, %v214
  %216 = vmatmul.bf16.gmra.mxu0 %v92
  %v217 = vpop.f32.mrf.mxu0
  %v218 = vadd.f32 %v136, %v217
  %v219 = vpop.f32.mrf.mxu0
  %v220 = vadd.f32 %v136, %v219
  %221 = vmatmul.bf16.gmra.mxu0 %v93
  %v222 = vpop.f32.mrf.mxu0
  %v223 = vadd.f32 %v136, %v222
  %v224 = vpop.f32.mrf.mxu0
  %v225 = vadd.f32 %v136, %v224
  %226 = vmatmul.bf16.gmra.mxu0 %v94
  %v227 = vpop.f32.mrf.mxu0
  %v228 = vadd.f32 %v136, %v227
  %v229 = vpop.f32.mrf.mxu0
  %v230 = vadd.f32 %v136, %v229
  %231 = vmatmul.bf16.gmra.mxu0 %v95
  %v232 = vpop.f32.mrf.mxu0
  %v233 = vadd.f32 %v136, %v232
  %v234 = vpop.f32.mrf.mxu0
  %v235 = vadd.f32 %v136, %v234
  %236 = vmatmul.bf16.gmra.mxu0 %v96
  %v237 = vpop.f32.mrf.mxu0
  %v238 = vadd.f32 %v136, %v237
  %v239 = vpop.f32.mrf.mxu0
  %v240 = vadd.f32 %v136, %v239
  %241 = vmatmul.bf16.gmra.mxu0 %v97
  %v242 = vpop.f32.mrf.mxu0
  %v243 = vadd.f32 %v136, %v242
  %v244 = vpop.f32.mrf.mxu0
  %v245 = vadd.f32 %v136, %v244
  %246 = vmatmul.bf16.gmra.mxu0 %v98
  %v247 = vpop.f32.mrf.mxu0
  %v248 = vadd.f32 %v136, %v247
  %v249 = vpop.f32.mrf.mxu0
  %v250 = vadd.f32 %v136, %v249
  %251 = vmatmul.bf16.gmra.mxu0 %v99
  %v252 = vpop.f32.mrf.mxu0
  %v253 = vadd.f32 %v136, %v252
  %v254 = vpop.f32.mrf.mxu0
  %v255 = vadd.f32 %v136, %v254
  %256 = vmatmul.bf16.gmra.mxu0 %v100
  %v257 = vpop.f32.mrf.mxu0
  %v258 = vadd.f32 %v136, %v257
  %v259 = vpop.f32.mrf.mxu0
  %v260 = vadd.f32 %v136, %v259
  %261 = vmatmul.bf16.gmra.mxu0 %v101
  %v262 = vpop.f32.mrf.mxu0
  %v263 = vadd.f32 %v136, %v262
  %v264 = vpop.f32.mrf.mxu0
  %v265 = vadd.f32 %v136, %v264
  %266 = vmatmul.bf16.gmra.mxu0 %v102
  %v267 = vpop.f32.mrf.mxu0
  %v268 = vadd.f32 %v136, %v267
  %v269 = vpop.f32.mrf.mxu0
  %v270 = vadd.f32 %v136, %v269
  %271 = vmatmul.bf16.gmra.mxu0 %v103
  %v272 = vpop.f32.mrf.mxu0
  %v273 = vadd.f32 %v136, %v272
  %v274 = vpop.f32.mrf.mxu0
  %v275 = vadd.f32 %v136, %v274
  %276 = vmatmul.bf16.gmra.mxu0 %v104
  %v277 = vpop.f32.mrf.mxu0
  %v278 = vadd.f32 %v136, %v277
  %v279 = vpop.f32.mrf.mxu0
  %v280 = vadd.f32 %v136, %v279
  %281 = vmatmul.bf16.gmra.mxu0 %v105
  %v282 = vpop.f32.mrf.mxu0
  %v283 = vadd.f32 %v136, %v282
  %v284 = vpop.f32.mrf.mxu0
  %v285 = vadd.f32 %v136, %v284
  %286 = vmatmul.bf16.gmra.mxu0 %v106
  %v287 = vpop.f32.mrf.mxu0
  %v288 = vadd.f32 %v136, %v287
  %v289 = vpop.f32.mrf.mxu0
  %v290 = vadd.f32 %v136, %v289
  %291 = vmatmul.bf16.gmra.mxu0 %v107
  %v292 = vpop.f32.mrf.mxu0
  %v293 = vadd.f32 %v136, %v292
  %v294 = vpop.f32.mrf.mxu0
  %v295 = vadd.f32 %v136, %v294
  %296 = vmatmul.bf16.gmra.mxu0 %v108
  %v297 = vpop.f32.mrf.mxu0
  %v298 = vadd.f32 %v136, %v297
  %v299 = vpop.f32.mrf.mxu0
  %v300 = vadd.f32 %v136, %v299
  %301 = vmatmul.bf16.gmra.mxu0 %v109
  %v302 = vpop.f32.mrf.mxu0
  %v303 = vadd.f32 %v136, %v302
  %v304 = vpop.f32.mrf.mxu0
  %v305 = vadd.f32 %v136, %v304
  %306 = vdwg.mxu0
  %v307 = vmax.f32 %v148, 0.0
  %v308 = vmax.f32 %v150, 0.0
  %v309 = vmax.f32 %v153, 0.0
  %v310 = vmax.f32 %v155, 0.0
  %v311 = vmax.f32 %v158, 0.0
  %v312 = vmax.f32 %v160, 0.0
  %v313 = vmax.f32 %v163, 0.0
  %v314 = vmax.f32 %v165, 0.0
  %v315 = vmax.f32 %v168, 0.0
  %v316 = vmax.f32 %v170, 0.0
  %v317 = vmax.f32 %v173, 0.0
  %v318 = vmax.f32 %v175, 0.0
  %v319 = vmax.f32 %v178, 0.0
  %v320 = vmax.f32 %v180, 0.0
  %v321 = vmax.f32 %v183, 0.0
  %v322 = vmax.f32 %v185, 0.0
  %v323 = vmax.f32 %v188, 0.0
  %v324 = vmax.f32 %v190, 0.0
  %v325 = vmax.f32 %v193, 0.0
  %v326 = vmax.f32 %v195, 0.0
  %v327 = vmax.f32 %v198, 0.0
  %v328 = vmax.f32 %v200, 0.0
  %v329 = vmax.f32 %v203, 0.0
  %v330 = vmax.f32 %v205, 0.0
  %v331 = vmax.f32 %v208, 0.0
  %v332 = vmax.f32 %v210, 0.0
  %v333 = vmax.f32 %v213, 0.0
  %v334 = vmax.f32 %v215, 0.0
  %v335 = vmax.f32 %v218, 0.0
  %v336 = vmax.f32 %v220, 0.0
  %v337 = vmax.f32 %v223, 0.0
  %v338 = vmax.f32 %v225, 0.0
  %v339 = vmax.f32 %v228, 0.0
  %v340 = vmax.f32 %v230, 0.0
  %v341 = vmax.f32 %v233, 0.0
  %v342 = vmax.f32 %v235, 0.0
  %v343 = vmax.f32 %v238, 0.0
  %v344 = vmax.f32 %v240, 0.0
  %v345 = vmax.f32 %v243, 0.0
  %v346 = vmax.f32 %v245, 0.0
  %v347 = vmax.f32 %v248, 0.0
  %v348 = vmax.f32 %v250, 0.0
  %v349 = vmax.f32 %v253, 0.0
  %v350 = vmax.f32 %v255, 0.0
  %v351 = vmax.f32 %v258, 0.0
  %v352 = vmax.f32 %v260, 0.0
  %v353 = vmax.f32 %v263, 0.0
  %v354 = vmax.f32 %v265, 0.0
  %v355 = vmax.f32 %v268, 0.0
  %v356 = vmax.f32 %v270, 0.0
  %v357 = vmax.f32 %v273, 0.0
  %v358 = vmax.f32 %v275, 0.0
  %v359 = vmax.f32 %v278, 0.0
  %v360 = vmax.f32 %v280, 0.0
  %v361 = vmax.f32 %v283, 0.0
  %v362 = vmax.f32 %v285, 0.0
  %v363 = vmax.f32 %v288, 0.0
  %v364 = vmax.f32 %v290, 0.0
  %v365 = vmax.f32 %v293, 0.0
  %v366 = vmax.f32 %v295, 0.0
  %v367 = vmax.f32 %v298, 0.0
  %v368 = vmax.f32 %v300, 0.0
  %v369 = vmax.f32 %v303, 0.0
  %v370 = vmax.f32 %v305, 0.0
  %371 = vst [vmem:[%s3] sm:$0xff] %v307
  %372 = vst [vmem:[%s3 + $0x8] sm:$0xff] %v308
  %373 = vst [vmem:[%s3 + $0x10] sm:$0xff] %v309
  %374 = vst [vmem:[%s3 + $0x18] sm:$0xff] %v310
  %375 = vst [vmem:[%s3 + $0x20] sm:$0xff] %v311
  %376 = vst [vmem:[%s3 + $0x28] sm:$0xff] %v312
  %377 = vst [vmem:[%s3 + $0x30] sm:$0xff] %v313
  %378 = vst [vmem:[%s3 + $0x38] sm:$0xff] %v314
  %379 = vst [vmem:[%s3 + $0x40] sm:$0xff] %v315
  %380 = vst [vmem:[%s3 + $0x48] sm:$0xff] %v316
  %381 = vst [vmem:[%s3 + $0x50] sm:$0xff] %v317
  %382 = vst [vmem:[%s3 + $0x58] sm:$0xff] %v318
  %383 = vst [vmem:[%s3 + $0x60] sm:$0xff] %v319
  %384 = vst [vmem:[%s3 + $0x68] sm:$0xff] %v320
  %385 = vst [vmem:[%s3 + $0x70] sm:$0xff] %v321
  %386 = vst [vmem:[%s3 + $0x78] sm:$0xff] %v322
  %387 = vst [vmem:[%s3 + $0x80] sm:$0xff] %v323
  %388 = vst [vmem:[%s3 + $0x88] sm:$0xff] %v324
  %389 = vst [vmem:[%s3 + $0x90] sm:$0xff] %v325
  %390 = vst [vmem:[%s3 + $0x98] sm:$0xff] %v326
  %391 = vst [vmem:[%s3 + $0xa0] sm:$0xff] %v327
  %392 = vst [vmem:[%s3 + $0xa8] sm:$0xff] %v328
  %393 = vst [vmem:[%s3 + $0xb0] sm:$0xff] %v329
  %394 = vst [vmem:[%s3 + $0xb8] sm:$0xff] %v330
  %395 = vst [vmem:[%s3 + $0xc0] sm:$0xff] %v331
  %396 = vst [vmem:[%s3 + $0xc8] sm:$0xff] %v332
  %397 = vst [vmem:[%s3 + $0xd0] sm:$0xff] %v333
  %398 = vst [vmem:[%s3 + $0xd8] sm:$0xff] %v334
  %399 = vst [vmem:[%s3 + $0xe0] sm:$0xff] %v335
  %400 = vst [vmem:[%s3 + $0xe8] sm:$0xff] %v336
  %401 = vst [vmem:[%s3 + $0xf0] sm:$0xff] %v337
  %402 = vst [vmem:[%s3 + $0xf8] sm:$0xff] %v338
  %403 = vst [vmem:[%s3 + $0x100] sm:$0xff] %v339
  %404 = vst [vmem:[%s3 + $0x108] sm:$0xff] %v340
  %405 = vst [vmem:[%s3 + $0x110] sm:$0xff] %v341
  %406 = vst [vmem:[%s3 + $0x118] sm:$0xff] %v342
  %407 = vst [vmem:[%s3 + $0x120] sm:$0xff] %v343
  %408 = vst [vmem:[%s3 + $0x128] sm:$0xff] %v344
  %409 = vst [vmem:[%s3 + $0x130] sm:$0xff] %v345
  %410 = vst [vmem:[%s3 + $0x138] sm:$0xff] %v346
  %411 = vst [vmem:[%s3 + $0x140] sm:$0xff] %v347
  %412 = vst [vmem:[%s3 + $0x148] sm:$0xff] %v348
  %413 = vst [vmem:[%s3 + $0x150] sm:$0xff] %v349
  %414 = vst [vmem:[%s3 + $0x158] sm:$0xff] %v350
  %415 = vst [vmem:[%s3 + $0x160] sm:$0xff] %v351
  %416 = vst [vmem:[%s3 + $0x168] sm:$0xff] %v352
  %417 = vst [vmem:[%s3 + $0x170] sm:$0xff] %v353
  %418 = vst [vmem:[%s3 + $0x178] sm:$0xff] %v354
  %419 = vst [vmem:[%s3 + $0x180] sm:$0xff] %v355
  %420 = vst [vmem:[%s3 + $0x188] sm:$0xff] %v356
  %421 = vst [vmem:[%s3 + $0x190] sm:$0xff] %v357
  %422 = vst [vmem:[%s3 + $0x198] sm:$0xff] %v358
  %423 = vst [vmem:[%s3 + $0x1a0] sm:$0xff] %v359
  %424 = vst [vmem:[%s3 + $0x1a8] sm:$0xff] %v360
  %425 = vst [vmem:[%s3 + $0x1b0] sm:$0xff] %v361
  %426 = vst [vmem:[%s3 + $0x1b8] sm:$0xff] %v362
  %427 = vst [vmem:[%s3 + $0x1c0] sm:$0xff] %v363
  %428 = vst [vmem:[%s3 + $0x1c8] sm:$0xff] %v364
  %429 = vst [vmem:[%s3 + $0x1d0] sm:$0xff] %v365
  %430 = vst [vmem:[%s3 + $0x1d8] sm:$0xff] %v366
  %431 = vst [vmem:[%s3 + $0x1e0] sm:$0xff] %v367
  %432 = vst [vmem:[%s3 + $0x1e8] sm:$0xff] %v368
  %433 = vst [vmem:[%s3 + $0x1f0] sm:$0xff] %v369
  %434 = vst [vmem:[%s3 + $0x1f8] sm:$0xff] %v370
  // Predicated region
  $region14: #{mobilenet_forward.19} parent=0 // pred_check
    _
  $region15: #{mobilenet_forward.19} parent=0 // pred_check_branch
    %436 = sbr.rel (0) target = $region17
  $region16: #{mobilenet_forward.19} parent=0 // pred_region
    _
  $region17: #{mobilenet_forward.19} parent=0 // pred_fallthru
    _
  // Predicated region
  $region18: #{mobilenet_forward.19} parent=0 // pred_check
    _
  $region19: #{mobilenet_forward.19} parent=0 // pred_check_branch
    %438 = sbr.rel (0) target = $region21
  $region20: #{mobilenet_forward.19} parent=0 // pred_region
    _
  $region21: #{mobilenet_forward.19} parent=0 // pred_fallthru
    _

// kernel: mobilenet_forward.18
$region0: #{mobilenet_forward.18}
  #allocation0 [shape = 'u32[]', space=smem, size = 0x4, offset = 0x4, fixed_abs, tag = 'smem constant byte address 0x4 - core index']
  #allocation1 [shape = 'u32[72,128]{1,0:T(1,128)}', space=vmem, size = 0x9000, scoped, tag = 'internal scratch']
  %s0 = inlined_call_operand.vmem [shape: f32[512,9], index: 0, kind: input, shape index: {}]
  %s1 = inlined_call_operand.vmem [shape: f32[9,128], index: 1, kind: input, shape index: {}]
  %s2 = inlined_call_operand.vmem [shape: f32[1,128], index: 2, kind: input, shape index: {}]
  %s3 = inlined_call_operand.vmem [shape: f32[512,128], index: 3, kind: output, shape index: {}]
  %s4 = sld [smem:[#allocation0]]
  $region22: #{mobilenet_forward.18} parent=0
    _
  %s6 = ssub.s32 1, %s4
  %s7 = scalar_select 0, %s6, %s4
  // Predicated region
  $region2: #{mobilenet_forward.18} parent=0 // pred_check
    _
  $region3: #{mobilenet_forward.18} parent=0 // pred_check_branch
    %9 = sbr.rel (0) target = $region5
  $region4: #{mobilenet_forward.18} parent=0 // pred_region
    _
  $region5: #{mobilenet_forward.18} parent=0 // pred_fallthru
    _
  // Predicated region
  $region6: #{mobilenet_forward.18} parent=0 // pred_check
    _
  $region7: #{mobilenet_forward.18} parent=0 // pred_check_branch
    %11 = sbr.rel (0) target = $region9
  $region8: #{mobilenet_forward.18} parent=0 // pred_region
    _
  $region9: #{mobilenet_forward.18} parent=0 // pred_fallthru
    _
  // Predicated region
  $region10: #{mobilenet_forward.18} parent=0 // pred_check
    _
  $region11: #{mobilenet_forward.18} parent=0 // pred_check_branch
    %13 = sbr.rel (0) target = $region13
  $region12: #{mobilenet_forward.18} parent=0 // pred_region
    _
  $region13: #{mobilenet_forward.18} parent=0 // pred_fallthru
    _
  %v15 = vld [vmem:[%s0] sm:$0xff]
  %v16 = vld [vmem:[%s0 + $0x8] sm:$0xff]
  %v17 = vld [vmem:[%s0 + $0x10] sm:$0xff]
  %v18 = vld [vmem:[%s0 + $0x18] sm:$0xff]
  %v19 = vld [vmem:[%s0 + $0x20] sm:$0xff]
  %v20 = vld [vmem:[%s0 + $0x28] sm:$0xff]
  %v21 = vld [vmem:[%s0 + $0x30] sm:$0xff]
  %v22 = vld [vmem:[%s0 + $0x38] sm:$0xff]
  %v23 = vld [vmem:[%s0 + $0x40] sm:$0xff]
  %v24 = vld [vmem:[%s0 + $0x48] sm:$0xff]
  %v25 = vld [vmem:[%s0 + $0x50] sm:$0xff]
  %v26 = vld [vmem:[%s0 + $0x58] sm:$0xff]
  %v27 = vld [vmem:[%s0 + $0x60] sm:$0xff]
  %v28 = vld [vmem:[%s0 + $0x68] sm:$0xff]
  %v29 = vld [vmem:[%s0 + $0x70] sm:$0xff]
  %v30 = vld [vmem:[%s0 + $0x78] sm:$0xff]
  %v31 = vld [vmem:[%s0 + $0x80] sm:$0xff]
  %v32 = vld [vmem:[%s0 + $0x88] sm:$0xff]
  %v33 = vld [vmem:[%s0 + $0x90] sm:$0xff]
  %v34 = vld [vmem:[%s0 + $0x98] sm:$0xff]
  %v35 = vld [vmem:[%s0 + $0xa0] sm:$0xff]
  %v36 = vld [vmem:[%s0 + $0xa8] sm:$0xff]
  %v37 = vld [vmem:[%s0 + $0xb0] sm:$0xff]
  %v38 = vld [vmem:[%s0 + $0xb8] sm:$0xff]
  %v39 = vld [vmem:[%s0 + $0xc0] sm:$0xff]
  %v40 = vld [vmem:[%s0 + $0xc8] sm:$0xff]
  %v41 = vld [vmem:[%s0 + $0xd0] sm:$0xff]
  %v42 = vld [vmem:[%s0 + $0xd8] sm:$0xff]
  %v43 = vld [vmem:[%s0 + $0xe0] sm:$0xff]
  %v44 = vld [vmem:[%s0 + $0xe8] sm:$0xff]
  %v45 = vld [vmem:[%s0 + $0xf0] sm:$0xff]
  %v46 = vld [vmem:[%s0 + $0xf8] sm:$0xff]
  %v47 = vld [vmem:[%s0 + $0x100] sm:$0xff]
  %v48 = vld [vmem:[%s0 + $0x108] sm:$0xff]
  %v49 = vld [vmem:[%s0 + $0x110] sm:$0xff]
  %v50 = vld [vmem:[%s0 + $0x118] sm:$0xff]
  %v51 = vld [vmem:[%s0 + $0x120] sm:$0xff]
  %v52 = vld [vmem:[%s0 + $0x128] sm:$0xff]
  %v53 = vld [vmem:[%s0 + $0x130] sm:$0xff]
  %v54 = vld [vmem:[%s0 + $0x138] sm:$0xff]
  %v55 = vld [vmem:[%s0 + $0x140] sm:$0xff]
  %v56 = vld [vmem:[%s0 + $0x148] sm:$0xff]
  %v57 = vld [vmem:[%s0 + $0x150] sm:$0xff]
  %v58 = vld [vmem:[%s0 + $0x158] sm:$0xff]
  %v59 = vld [vmem:[%s0 + $0x160] sm:$0xff]
  %v60 = vld [vmem:[%s0 + $0x168] sm:$0xff]
  %v61 = vld [vmem:[%s0 + $0x170] sm:$0xff]
  %v62 = vld [vmem:[%s0 + $0x178] sm:$0xff]
  %v63 = vld [vmem:[%s0 + $0x180] sm:$0xff]
  %v64 = vld [vmem:[%s0 + $0x188] sm:$0xff]
  %v65 = vld [vmem:[%s0 + $0x190] sm:$0xff]
  %v66 = vld [vmem:[%s0 + $0x198] sm:$0xff]
  %v67 = vld [vmem:[%s0 + $0x1a0] sm:$0xff]
  %v68 = vld [vmem:[%s0 + $0x1a8] sm:$0xff]
  %v69 = vld [vmem:[%s0 + $0x1b0] sm:$0xff]
  %v70 = vld [vmem:[%s0 + $0x1b8] sm:$0xff]
  %v71 = vld [vmem:[%s0 + $0x1c0] sm:$0xff]
  %v72 = vld [vmem:[%s0 + $0x1c8] sm:$0xff]
  %v73 = vld [vmem:[%s0 + $0x1d0] sm:$0xff]
  %v74 = vld [vmem:[%s0 + $0x1d8] sm:$0xff]
  %v75 = vld [vmem:[%s0 + $0x1e0] sm:$0xff]
  %v76 = vld [vmem:[%s0 + $0x1e8] sm:$0xff]
  %v77 = vld [vmem:[%s0 + $0x1f0] sm:$0xff]
  %v78 = vld [vmem:[%s0 + $0x1f8] sm:$0xff]
  %v79 = vpack.c.bf16 %v16, %v15
  %v80 = vpack.c.bf16 %v18, %v17
  %v81 = vpack.c.bf16 %v20, %v19
  %v82 = vpack.c.bf16 %v22, %v21
  %v83 = vpack.c.bf16 %v24, %v23
  %v84 = vpack.c.bf16 %v26, %v25
  %v85 = vpack.c.bf16 %v28, %v27
  %v86 = vpack.c.bf16 %v30, %v29
  %v87 = vpack.c.bf16 %v32, %v31
  %v88 = vpack.c.bf16 %v34, %v33
  %v89 = vpack.c.bf16 %v36, %v35
  %v90 = vpack.c.bf16 %v38, %v37
  %v91 = vpack.c.bf16 %v40, %v39
  %v92 = vpack.c.bf16 %v42, %v41
  %v93 = vpack.c.bf16 %v44, %v43
  %v94 = vpack.c.bf16 %v46, %v45
  %v95 = vpack.c.bf16 %v48, %v47
  %v96 = vpack.c.bf16 %v50, %v49
  %v97 = vpack.c.bf16 %v52, %v51
  %v98 = vpack.c.bf16 %v54, %v53
  %v99 = vpack.c.bf16 %v56, %v55
  %v100 = vpack.c.bf16 %v58, %v57
  %v101 = vpack.c.bf16 %v60, %v59
  %v102 = vpack.c.bf16 %v62, %v61
  %v103 = vpack.c.bf16 %v64, %v63
  %v104 = vpack.c.bf16 %v66, %v65
  %v105 = vpack.c.bf16 %v68, %v67
  %v106 = vpack.c.bf16 %v70, %v69
  %v107 = vpack.c.bf16 %v72, %v71
  %v108 = vpack.c.bf16 %v74, %v73
  %v109 = vpack.c.bf16 %v76, %v75
  %v110 = vpack.c.bf16 %v78, %v77
  %v111 = vld [vmem:[%s1] sm:$0xff]
  %v112 = vld [vmem:[%s1 + $0x8] sm:$0x1]
  %v113 = vpack.c.bf16 %v112, %v111
  %v114 = vld [vmem:[%s2] sm:$0x1]
  %v116 = vperm.slane %v114, 0
  %vm118 = vcmask 72704
  %v120 = vsel %vm118, %v79, 0
  %v123 = vsel %vm118, %v80, 0
  %v126 = vsel %vm118, %v81, 0
  %v129 = vsel %vm118, %v82, 0
  %v132 = vsel %vm118, %v83, 0
  %v135 = vsel %vm118, %v84, 0
  %v138 = vsel %vm118, %v85, 0
  %v141 = vsel %vm118, %v86, 0
  %v144 = vsel %vm118, %v87, 0
  %v147 = vsel %vm118, %v88, 0
  %v150 = vsel %vm118, %v89, 0
  %v153 = vsel %vm118, %v90, 0
  %v156 = vsel %vm118, %v91, 0
  %v159 = vsel %vm118, %v92, 0
  %v162 = vsel %vm118, %v93, 0
  %v165 = vsel %vm118, %v94, 0
  %v168 = vsel %vm118, %v95, 0
  %v171 = vsel %vm118, %v96, 0
  %v174 = vsel %vm118, %v97, 0
  %v177 = vsel %vm118, %v98, 0
  %v180 = vsel %vm118, %v99, 0
  %v183 = vsel %vm118, %v100, 0
  %v186 = vsel %vm118, %v101, 0
  %v189 = vsel %vm118, %v102, 0
  %v192 = vsel %vm118, %v103, 0
  %v195 = vsel %vm118, %v104, 0
  %v198 = vsel %vm118, %v105, 0
  %v201 = vsel %vm118, %v106, 0
  %v204 = vsel %vm118, %v107, 0
  %v207 = vsel %vm118, %v108, 0
  %v210 = vsel %vm118, %v109, 0
  %v213 = vsel %vm118, %v110, 0
  %vm215 = vcmask 1043456
  %vm216 = vcmask 1044480
  %v217 = vsel %vm215, 4294967295, 65535
  %v218 = vsel %vm216, %v217, 0
  %v220 = vand.u32 %v113, %v218
  %222 = vmatpush.bf16.msra.mxu0 0
  %223 = vmatpush.bf16.msra.mxu0 0
  %224 = vmatpush.bf16.msra.mxu0 0
  %225 = vmatpush.bf16.msra.mxu0 0
  %226 = vmatpush.bf16.msra.mxu0 0
  %227 = vmatpush.bf16.msra.mxu0 0
  %228 = vmatpush.bf16.msra.mxu0 0
  %229 = vmatpush.bf16.msra.mxu0 %v220
  %230 = vmatmul.bf16.gmra.mxu0 %v120
  %v231 = vpop.f32.mrf.mxu0
  %v232 = vadd.f32 %v116, %v231
  %v233 = vpop.f32.mrf.mxu0
  %v234 = vadd.f32 %v116, %v233
  %235 = vmatmul.bf16.gmra.mxu0 %v123
  %v236 = vpop.f32.mrf.mxu0
  %v237 = vadd.f32 %v116, %v236
  %v238 = vpop.f32.mrf.mxu0
  %v239 = vadd.f32 %v116, %v238
  %240 = vmatmul.bf16.gmra.mxu0 %v126
  %v241 = vpop.f32.mrf.mxu0
  %v242 = vadd.f32 %v116, %v241
  %v243 = vpop.f32.mrf.mxu0
  %v244 = vadd.f32 %v116, %v243
  %245 = vmatmul.bf16.gmra.mxu0 %v129
  %v246 = vpop.f32.mrf.mxu0
  %v247 = vadd.f32 %v116, %v246
  %v248 = vpop.f32.mrf.mxu0
  %v249 = vadd.f32 %v116, %v248
  %250 = vmatmul.bf16.gmra.mxu0 %v132
  %v251 = vpop.f32.mrf.mxu0
  %v252 = vadd.f32 %v116, %v251
  %v253 = vpop.f32.mrf.mxu0
  %v254 = vadd.f32 %v116, %v253
  %255 = vmatmul.bf16.gmra.mxu0 %v135
  %v256 = vpop.f32.mrf.mxu0
  %v257 = vadd.f32 %v116, %v256
  %v258 = vpop.f32.mrf.mxu0
  %v259 = vadd.f32 %v116, %v258
  %260 = vmatmul.bf16.gmra.mxu0 %v138
  %v261 = vpop.f32.mrf.mxu0
  %v262 = vadd.f32 %v116, %v261
  %v263 = vpop.f32.mrf.mxu0
  %v264 = vadd.f32 %v116, %v263
  %265 = vmatmul.bf16.gmra.mxu0 %v141
  %v266 = vpop.f32.mrf.mxu0
  %v267 = vadd.f32 %v116, %v266
  %v268 = vpop.f32.mrf.mxu0
  %v269 = vadd.f32 %v116, %v268
  %270 = vmatmul.bf16.gmra.mxu0 %v144
  %v271 = vpop.f32.mrf.mxu0
  %v272 = vadd.f32 %v116, %v271
  %v273 = vpop.f32.mrf.mxu0
  %v274 = vadd.f32 %v116, %v273
  %275 = vmatmul.bf16.gmra.mxu0 %v147
  %v276 = vpop.f32.mrf.mxu0
  %v277 = vadd.f32 %v116, %v276
  %v278 = vpop.f32.mrf.mxu0
  %v279 = vadd.f32 %v116, %v278
  %280 = vmatmul.bf16.gmra.mxu0 %v150
  %v281 = vpop.f32.mrf.mxu0
  %v282 = vadd.f32 %v116, %v281
  %v283 = vpop.f32.mrf.mxu0
  %v284 = vadd.f32 %v116, %v283
  %285 = vmatmul.bf16.gmra.mxu0 %v153
  %v286 = vpop.f32.mrf.mxu0
  %v287 = vadd.f32 %v116, %v286
  %v288 = vpop.f32.mrf.mxu0
  %v289 = vadd.f32 %v116, %v288
  %290 = vmatmul.bf16.gmra.mxu0 %v156
  %v291 = vpop.f32.mrf.mxu0
  %v292 = vadd.f32 %v116, %v291
  %v293 = vpop.f32.mrf.mxu0
  %v294 = vadd.f32 %v116, %v293
  %295 = vmatmul.bf16.gmra.mxu0 %v159
  %v296 = vpop.f32.mrf.mxu0
  %v297 = vadd.f32 %v116, %v296
  %v298 = vpop.f32.mrf.mxu0
  %v299 = vadd.f32 %v116, %v298
  %300 = vmatmul.bf16.gmra.mxu0 %v162
  %v301 = vpop.f32.mrf.mxu0
  %v302 = vadd.f32 %v116, %v301
  %v303 = vpop.f32.mrf.mxu0
  %v304 = vadd.f32 %v116, %v303
  %305 = vmatmul.bf16.gmra.mxu0 %v165
  %v306 = vpop.f32.mrf.mxu0
  %v307 = vadd.f32 %v116, %v306
  %v308 = vpop.f32.mrf.mxu0
  %v309 = vadd.f32 %v116, %v308
  %310 = vmatmul.bf16.gmra.mxu0 %v168
  %v311 = vpop.f32.mrf.mxu0
  %v312 = vadd.f32 %v116, %v311
  %v313 = vpop.f32.mrf.mxu0
  %v314 = vadd.f32 %v116, %v313
  %315 = vmatmul.bf16.gmra.mxu0 %v171
  %v316 = vpop.f32.mrf.mxu0
  %v317 = vadd.f32 %v116, %v316
  %v318 = vpop.f32.mrf.mxu0
  %v319 = vadd.f32 %v116, %v318
  %320 = vmatmul.bf16.gmra.mxu0 %v174
  %v321 = vpop.f32.mrf.mxu0
  %v322 = vadd.f32 %v116, %v321
  %v323 = vpop.f32.mrf.mxu0
  %v324 = vadd.f32 %v116, %v323
  %325 = vmatmul.bf16.gmra.mxu0 %v177
  %v326 = vpop.f32.mrf.mxu0
  %v327 = vadd.f32 %v116, %v326
  %v328 = vpop.f32.mrf.mxu0
  %v329 = vadd.f32 %v116, %v328
  %330 = vmatmul.bf16.gmra.mxu0 %v180
  %v331 = vpop.f32.mrf.mxu0
  %v332 = vadd.f32 %v116, %v331
  %v333 = vpop.f32.mrf.mxu0
  %v334 = vadd.f32 %v116, %v333
  %335 = vmatmul.bf16.gmra.mxu0 %v183
  %v336 = vpop.f32.mrf.mxu0
  %v337 = vadd.f32 %v116, %v336
  %v338 = vpop.f32.mrf.mxu0
  %v339 = vadd.f32 %v116, %v338
  %340 = vmatmul.bf16.gmra.mxu0 %v186
  %v341 = vpop.f32.mrf.mxu0
  %v342 = vadd.f32 %v116, %v341
  %v343 = vpop.f32.mrf.mxu0
  %v344 = vadd.f32 %v116, %v343
  %345 = vmatmul.bf16.gmra.mxu0 %v189
  %v346 = vpop.f32.mrf.mxu0
  %v347 = vadd.f32 %v116, %v346
  %v348 = vpop.f32.mrf.mxu0
  %v349 = vadd.f32 %v116, %v348
  %350 = vmatmul.bf16.gmra.mxu0 %v192
  %v351 = vpop.f32.mrf.mxu0
  %v352 = vadd.f32 %v116, %v351
  %v353 = vpop.f32.mrf.mxu0
  %v354 = vadd.f32 %v116, %v353
  %355 = vmatmul.bf16.gmra.mxu0 %v195
  %v356 = vpop.f32.mrf.mxu0
  %v357 = vadd.f32 %v116, %v356
  %v358 = vpop.f32.mrf.mxu0
  %v359 = vadd.f32 %v116, %v358
  %360 = vmatmul.bf16.gmra.mxu0 %v198
  %v361 = vpop.f32.mrf.mxu0
  %v362 = vadd.f32 %v116, %v361
  %v363 = vpop.f32.mrf.mxu0
  %v364 = vadd.f32 %v116, %v363
  %365 = vmatmul.bf16.gmra.mxu0 %v201
  %v366 = vpop.f32.mrf.mxu0
  %v367 = vadd.f32 %v116, %v366
  %v368 = vpop.f32.mrf.mxu0
  %v369 = vadd.f32 %v116, %v368
  %370 = vmatmul.bf16.gmra.mxu0 %v204
  %v371 = vpop.f32.mrf.mxu0
  %v372 = vadd.f32 %v116, %v371
  %v373 = vpop.f32.mrf.mxu0
  %v374 = vadd.f32 %v116, %v373
  %375 = vmatmul.bf16.gmra.mxu0 %v207
  %v376 = vpop.f32.mrf.mxu0
  %v377 = vadd.f32 %v116, %v376
  %v378 = vpop.f32.mrf.mxu0
  %v379 = vadd.f32 %v116, %v378
  %380 = vmatmul.bf16.gmra.mxu0 %v210
  %v381 = vpop.f32.mrf.mxu0
  %v382 = vadd.f32 %v116, %v381
  %v383 = vpop.f32.mrf.mxu0
  %v384 = vadd.f32 %v116, %v383
  %385 = vmatmul.bf16.gmra.mxu0 %v213
  %v386 = vpop.f32.mrf.mxu0
  %v387 = vadd.f32 %v116, %v386
  %v388 = vpop.f32.mrf.mxu0
  %v389 = vadd.f32 %v116, %v388
  %390 = vdwg.mxu0
  %v391 = vmax.f32 %v232, 0.0
  %v392 = vmax.f32 %v234, 0.0
  %v393 = vmax.f32 %v237, 0.0
  %v394 = vmax.f32 %v239, 0.0
  %v395 = vmax.f32 %v242, 0.0
  %v396 = vmax.f32 %v244, 0.0
  %v397 = vmax.f32 %v247, 0.0
  %v398 = vmax.f32 %v249, 0.0
  %v399 = vmax.f32 %v252, 0.0
  %v400 = vmax.f32 %v254, 0.0
  %v401 = vmax.f32 %v257, 0.0
  %v402 = vmax.f32 %v259, 0.0
  %v403 = vmax.f32 %v262, 0.0
  %v404 = vmax.f32 %v264, 0.0
  %v405 = vmax.f32 %v267, 0.0
  %v406 = vmax.f32 %v269, 0.0
  %v407 = vmax.f32 %v272, 0.0
  %v408 = vmax.f32 %v274, 0.0
  %v409 = vmax.f32 %v277, 0.0
  %v410 = vmax.f32 %v279, 0.0
  %v411 = vmax.f32 %v282, 0.0
  %v412 = vmax.f32 %v284, 0.0
  %v413 = vmax.f32 %v287, 0.0
  %v414 = vmax.f32 %v289, 0.0
  %v415 = vmax.f32 %v292, 0.0
  %v416 = vmax.f32 %v294, 0.0
  %v417 = vmax.f32 %v297, 0.0
  %v418 = vmax.f32 %v299, 0.0
  %v419 = vmax.f32 %v302, 0.0
  %v420 = vmax.f32 %v304, 0.0
  %v421 = vmax.f32 %v307, 0.0
  %v422 = vmax.f32 %v309, 0.0
  %v423 = vmax.f32 %v312, 0.0
  %v424 = vmax.f32 %v314, 0.0
  %v425 = vmax.f32 %v317, 0.0
  %v426 = vmax.f32 %v319, 0.0
  %v427 = vmax.f32 %v322, 0.0
  %v428 = vmax.f32 %v324, 0.0
  %v429 = vmax.f32 %v327, 0.0
  %v430 = vmax.f32 %v329, 0.0
  %v431 = vmax.f32 %v332, 0.0
  %v432 = vmax.f32 %v334, 0.0
  %v433 = vmax.f32 %v337, 0.0
  %v434 = vmax.f32 %v339, 0.0
  %v435 = vmax.f32 %v342, 0.0
  %v436 = vmax.f32 %v344, 0.0
  %v437 = vmax.f32 %v347, 0.0
  %v438 = vmax.f32 %v349, 0.0
  %v439 = vmax.f32 %v352, 0.0
  %v440 = vmax.f32 %v354, 0.0
  %v441 = vmax.f32 %v357, 0.0
  %v442 = vmax.f32 %v359, 0.0
  %v443 = vmax.f32 %v362, 0.0
  %v444 = vmax.f32 %v364, 0.0
  %v445 = vmax.f32 %v367, 0.0
  %v446 = vmax.f32 %v369, 0.0
  %v447 = vmax.f32 %v372, 0.0
  %v448 = vmax.f32 %v374, 0.0
  %v449 = vmax.f32 %v377, 0.0
  %v450 = vmax.f32 %v379, 0.0
  %v451 = vmax.f32 %v382, 0.0
  %v452 = vmax.f32 %v384, 0.0
  %v453 = vmax.f32 %v387, 0.0
  %v454 = vmax.f32 %v389, 0.0
  %455 = vst [vmem:[%s3] sm:$0xff] %v391
  %456 = vst [vmem:[%s3 + $0x8] sm:$0xff] %v392
  %457 = vst [vmem:[%s3 + $0x10] sm:$0xff] %v393
  %458 = vst [vmem:[%s3 + $0x18] sm:$0xff] %v394
  %459 = vst [vmem:[%s3 + $0x20] sm:$0xff] %v395
  %460 = vst [vmem:[%s3 + $0x28] sm:$0xff] %v396
  %461 = vst [vmem:[%s3 + $0x30] sm:$0xff] %v397
  %462 = vst [vmem:[%s3 + $0x38] sm:$0xff] %v398
  %463 = vst [vmem:[%s3 + $0x40] sm:$0xff] %v399
  %464 = vst [vmem:[%s3 + $0x48] sm:$0xff] %v400
  %465 = vst [vmem:[%s3 + $0x50] sm:$0xff] %v401
  %466 = vst [vmem:[%s3 + $0x58] sm:$0xff] %v402
  %467 = vst [vmem:[%s3 + $0x60] sm:$0xff] %v403
  %468 = vst [vmem:[%s3 + $0x68] sm:$0xff] %v404
  %469 = vst [vmem:[%s3 + $0x70] sm:$0xff] %v405
  %470 = vst [vmem:[%s3 + $0x78] sm:$0xff] %v406
  %471 = vst [vmem:[%s3 + $0x80] sm:$0xff] %v407
  %472 = vst [vmem:[%s3 + $0x88] sm:$0xff] %v408
  %473 = vst [vmem:[%s3 + $0x90] sm:$0xff] %v409
  %474 = vst [vmem:[%s3 + $0x98] sm:$0xff] %v410
  %475 = vst [vmem:[%s3 + $0xa0] sm:$0xff] %v411
  %476 = vst [vmem:[%s3 + $0xa8] sm:$0xff] %v412
  %477 = vst [vmem:[%s3 + $0xb0] sm:$0xff] %v413
  %478 = vst [vmem:[%s3 + $0xb8] sm:$0xff] %v414
  %479 = vst [vmem:[%s3 + $0xc0] sm:$0xff] %v415
  %480 = vst [vmem:[%s3 + $0xc8] sm:$0xff] %v416
  %481 = vst [vmem:[%s3 + $0xd0] sm:$0xff] %v417
  %482 = vst [vmem:[%s3 + $0xd8] sm:$0xff] %v418
  %483 = vst [vmem:[%s3 + $0xe0] sm:$0xff] %v419
  %484 = vst [vmem:[%s3 + $0xe8] sm:$0xff] %v420
  %485 = vst [vmem:[%s3 + $0xf0] sm:$0xff] %v421
  %486 = vst [vmem:[%s3 + $0xf8] sm:$0xff] %v422
  %487 = vst [vmem:[%s3 + $0x100] sm:$0xff] %v423
  %488 = vst [vmem:[%s3 + $0x108] sm:$0xff] %v424
  %489 = vst [vmem:[%s3 + $0x110] sm:$0xff] %v425
  %490 = vst [vmem:[%s3 + $0x118] sm:$0xff] %v426
  %491 = vst [vmem:[%s3 + $0x120] sm:$0xff] %v427
  %492 = vst [vmem:[%s3 + $0x128] sm:$0xff] %v428
  %493 = vst [vmem:[%s3 + $0x130] sm:$0xff] %v429
  %494 = vst [vmem:[%s3 + $0x138] sm:$0xff] %v430
  %495 = vst [vmem:[%s3 + $0x140] sm:$0xff] %v431
  %496 = vst [vmem:[%s3 + $0x148] sm:$0xff] %v432
  %497 = vst [vmem:[%s3 + $0x150] sm:$0xff] %v433
  %498 = vst [vmem:[%s3 + $0x158] sm:$0xff] %v434
  %499 = vst [vmem:[%s3 + $0x160] sm:$0xff] %v435
  %500 = vst [vmem:[%s3 + $0x168] sm:$0xff] %v436
  %501 = vst [vmem:[%s3 + $0x170] sm:$0xff] %v437
  %502 = vst [vmem:[%s3 + $0x178] sm:$0xff] %v438
  %503 = vst [vmem:[%s3 + $0x180] sm:$0xff] %v439
  %504 = vst [vmem:[%s3 + $0x188] sm:$0xff] %v440
  %505 = vst [vmem:[%s3 + $0x190] sm:$0xff] %v441
  %506 = vst [vmem:[%s3 + $0x198] sm:$0xff] %v442
  %507 = vst [vmem:[%s3 + $0x1a0] sm:$0xff] %v443
  %508 = vst [vmem:[%s3 + $0x1a8] sm:$0xff] %v444
  %509 = vst [vmem:[%s3 + $0x1b0] sm:$0xff] %v445
  %510 = vst [vmem:[%s3 + $0x1b8] sm:$0xff] %v446
  %511 = vst [vmem:[%s3 + $0x1c0] sm:$0xff] %v447
  %512 = vst [vmem:[%s3 + $0x1c8] sm:$0xff] %v448
  %513 = vst [vmem:[%s3 + $0x1d0] sm:$0xff] %v449
  %514 = vst [vmem:[%s3 + $0x1d8] sm:$0xff] %v450
  %515 = vst [vmem:[%s3 + $0x1e0] sm:$0xff] %v451
  %516 = vst [vmem:[%s3 + $0x1e8] sm:$0xff] %v452
  %517 = vst [vmem:[%s3 + $0x1f0] sm:$0xff] %v453
  %518 = vst [vmem:[%s3 + $0x1f8] sm:$0xff] %v454
  // Predicated region
  $region14: #{mobilenet_forward.18} parent=0 // pred_check
    _
  $region15: #{mobilenet_forward.18} parent=0 // pred_check_branch
    %520 = sbr.rel (0) target = $region17
  $region16: #{mobilenet_forward.18} parent=0 // pred_region
    _
  $region17: #{mobilenet_forward.18} parent=0 // pred_fallthru
    _
  // Predicated region
  $region18: #{mobilenet_forward.18} parent=0 // pred_check
    _
  $region19: #{mobilenet_forward.18} parent=0 // pred_check_branch
    %522 = sbr.rel (0) target = $region21
  $region20: #{mobilenet_forward.18} parent=0 // pred_region
    _
  $region21: #{mobilenet_forward.18} parent=0 // pred_fallthru
    _

// kernel: mobilenet_forward.21
$region0: #{mobilenet_forward.21}
  #allocation0 [shape = 'u32[]', space=smem, size = 0x4, offset = 0x4, fixed_abs, tag = 'smem constant byte address 0x4 - core index']
  #allocation1 [shape = 'u32[72,128]{1,0:T(1,128)}', space=vmem, size = 0x9000, scoped, tag = 'internal scratch']
  %s0 = inlined_call_operand.vmem [shape: f32[512,128], index: 0, kind: input, shape index: {}]
  %s1 = inlined_call_operand.vmem [shape: f32[512,128], index: 1, kind: input, shape index: {}]
  %s2 = inlined_call_operand.vmem [shape: f32[128,128], index: 2, kind: input, shape index: {}]
  %s3 = inlined_call_operand.vmem [shape: f32[1,128], index: 3, kind: input, shape index: {}]
  %s4 = inlined_call_operand.vmem [shape: f32[128,128], index: 4, kind: input, shape index: {}]
  %s5 = inlined_call_operand.vmem [shape: f32[1,128], index: 5, kind: input, shape index: {}]
  %s6 = inlined_call_operand.vmem [shape: f32[512,128], index: 6, kind: output, shape index: {}]
  %s7 = sld [smem:[#allocation0]]
  $region34: #{mobilenet_forward.21} parent=0
    _
  %s9 = ssub.s32 1, %s7
  %s10 = scalar_select 0, %s9, %s7
  // Predicated region
  $region2: #{mobilenet_forward.21} parent=0 // pred_check
    _
  $region3: #{mobilenet_forward.21} parent=0 // pred_check_branch
    %12 = sbr.rel (0) target = $region5
  $region4: #{mobilenet_forward.21} parent=0 // pred_region
    _
  $region5: #{mobilenet_forward.21} parent=0 // pred_fallthru
    _
  // Predicated region
  $region6: #{mobilenet_forward.21} parent=0 // pred_check
    _
  $region7: #{mobilenet_forward.21} parent=0 // pred_check_branch
    %14 = sbr.rel (0) target = $region9
  $region8: #{mobilenet_forward.21} parent=0 // pred_region
    _
  $region9: #{mobilenet_forward.21} parent=0 // pred_fallthru
    _
  // Predicated region
  $region10: #{mobilenet_forward.21} parent=0 // pred_check
    _
  $region11: #{mobilenet_forward.21} parent=0 // pred_check_branch
    %16 = sbr.rel (0) target = $region13
  $region12: #{mobilenet_forward.21} parent=0 // pred_region
    _
  $region13: #{mobilenet_forward.21} parent=0 // pred_fallthru
    _
  // Predicated region
  $region14: #{mobilenet_forward.21} parent=0 // pred_check
    _
  $region15: #{mobilenet_forward.21} parent=0 // pred_check_branch
    %18 = sbr.rel (0) target = $region17
  $region16: #{mobilenet_forward.21} parent=0 // pred_region
    _
  $region17: #{mobilenet_forward.21} parent=0 // pred_fallthru
    _
  // Predicated region
  $region18: #{mobilenet_forward.21} parent=0 // pred_check
    _
  $region19: #{mobilenet_forward.21} parent=0 // pred_check_branch
    %20 = sbr.rel (0) target = $region21
  $region20: #{mobilenet_forward.21} parent=0 // pred_region
    _
  $region21: #{mobilenet_forward.21} parent=0 // pred_fallthru
    _
  // Predicated region
  $region22: #{mobilenet_forward.21} parent=0 // pred_check
    _
  $region23: #{mobilenet_forward.21} parent=0 // pred_check_branch
    %22 = sbr.rel (0) target = $region25
  $region24: #{mobilenet_forward.21} parent=0 // pred_region
    _
  $region25: #{mobilenet_forward.21} parent=0 // pred_fallthru
    _
  %v23 = vld [vmem:[%s0] sm:$0xff]
  %v24 = vld [vmem:[%s0 + $0x8] sm:$0xff]
  %v25 = vld [vmem:[%s0 + $0x10] sm:$0xff]
  %v26 = vld [vmem:[%s0 + $0x18] sm:$0xff]
  %v27 = vld [vmem:[%s0 + $0x20] sm:$0xff]
  %v28 = vld [vmem:[%s0 + $0x28] sm:$0xff]
  %v29 = vld [vmem:[%s0 + $0x30] sm:$0xff]
  %v30 = vld [vmem:[%s0 + $0x38] sm:$0xff]
  %v31 = vld [vmem:[%s0 + $0x40] sm:$0xff]
  %v32 = vld [vmem:[%s0 + $0x48] sm:$0xff]
  %v33 = vld [vmem:[%s0 + $0x50] sm:$0xff]
  %v34 = vld [vmem:[%s0 + $0x58] sm:$0xff]
  %v35 = vld [vmem:[%s0 + $0x60] sm:$0xff]
  %v36 = vld [vmem:[%s0 + $0x68] sm:$0xff]
  %v37 = vld [vmem:[%s0 + $0x70] sm:$0xff]
  %v38 = vld [vmem:[%s0 + $0x78] sm:$0xff]
  %v39 = vld [vmem:[%s0 + $0x80] sm:$0xff]
  %v40 = vld [vmem:[%s0 + $0x88] sm:$0xff]
  %v41 = vld [vmem:[%s0 + $0x90] sm:$0xff]
  %v42 = vld [vmem:[%s0 + $0x98] sm:$0xff]
  %v43 = vld [vmem:[%s0 + $0xa0] sm:$0xff]
  %v44 = vld [vmem:[%s0 + $0xa8] sm:$0xff]
  %v45 = vld [vmem:[%s0 + $0xb0] sm:$0xff]
  %v46 = vld [vmem:[%s0 + $0xb8] sm:$0xff]
  %v47 = vld [vmem:[%s0 + $0xc0] sm:$0xff]
  %v48 = vld [vmem:[%s0 + $0xc8] sm:$0xff]
  %v49 = vld [vmem:[%s0 + $0xd0] sm:$0xff]
  %v50 = vld [vmem:[%s0 + $0xd8] sm:$0xff]
  %v51 = vld [vmem:[%s0 + $0xe0] sm:$0xff]
  %v52 = vld [vmem:[%s0 + $0xe8] sm:$0xff]
  %v53 = vld [vmem:[%s0 + $0xf0] sm:$0xff]
  %v54 = vld [vmem:[%s0 + $0xf8] sm:$0xff]
  %v55 = vld [vmem:[%s0 + $0x100] sm:$0xff]
  %v56 = vld [vmem:[%s0 + $0x108] sm:$0xff]
  %v57 = vld [vmem:[%s0 + $0x110] sm:$0xff]
  %v58 = vld [vmem:[%s0 + $0x118] sm:$0xff]
  %v59 = vld [vmem:[%s0 + $0x120] sm:$0xff]
  %v60 = vld [vmem:[%s0 + $0x128] sm:$0xff]
  %v61 = vld [vmem:[%s0 + $0x130] sm:$0xff]
  %v62 = vld [vmem:[%s0 + $0x138] sm:$0xff]
  %v63 = vld [vmem:[%s0 + $0x140] sm:$0xff]
  %v64 = vld [vmem:[%s0 + $0x148] sm:$0xff]
  %v65 = vld [vmem:[%s0 + $0x150] sm:$0xff]
  %v66 = vld [vmem:[%s0 + $0x158] sm:$0xff]
  %v67 = vld [vmem:[%s0 + $0x160] sm:$0xff]
  %v68 = vld [vmem:[%s0 + $0x168] sm:$0xff]
  %v69 = vld [vmem:[%s0 + $0x170] sm:$0xff]
  %v70 = vld [vmem:[%s0 + $0x178] sm:$0xff]
  %v71 = vld [vmem:[%s0 + $0x180] sm:$0xff]
  %v72 = vld [vmem:[%s0 + $0x188] sm:$0xff]
  %v73 = vld [vmem:[%s0 + $0x190] sm:$0xff]
  %v74 = vld [vmem:[%s0 + $0x198] sm:$0xff]
  %v75 = vld [vmem:[%s0 + $0x1a0] sm:$0xff]
  %v76 = vld [vmem:[%s0 + $0x1a8] sm:$0xff]
  %v77 = vld [vmem:[%s0 + $0x1b0] sm:$0xff]
  %v78 = vld [vmem:[%s0 + $0x1b8] sm:$0xff]
  %v79 = vld [vmem:[%s0 + $0x1c0] sm:$0xff]
  %v80 = vld [vmem:[%s0 + $0x1c8] sm:$0xff]
  %v81 = vld [vmem:[%s0 + $0x1d0] sm:$0xff]
  %v82 = vld [vmem:[%s0 + $0x1d8] sm:$0xff]
  %v83 = vld [vmem:[%s0 + $0x1e0] sm:$0xff]
  %v84 = vld [vmem:[%s0 + $0x1e8] sm:$0xff]
  %v85 = vld [vmem:[%s0 + $0x1f0] sm:$0xff]
  %v86 = vld [vmem:[%s0 + $0x1f8] sm:$0xff]
  %v87 = vpack.c.bf16 %v24, %v23
  %v88 = vpack.c.bf16 %v26, %v25
  %v89 = vpack.c.bf16 %v28, %v27
  %v90 = vpack.c.bf16 %v30, %v29
  %v91 = vpack.c.bf16 %v32, %v31
  %v92 = vpack.c.bf16 %v34, %v33
  %v93 = vpack.c.bf16 %v36, %v35
  %v94 = vpack.c.bf16 %v38, %v37
  %v95 = vpack.c.bf16 %v40, %v39
  %v96 = vpack.c.bf16 %v42, %v41
  %v97 = vpack.c.bf16 %v44, %v43
  %v98 = vpack.c.bf16 %v46, %v45
  %v99 = vpack.c.bf16 %v48, %v47
  %v100 = vpack.c.bf16 %v50, %v49
  %v101 = vpack.c.bf16 %v52, %v51
  %v102 = vpack.c.bf16 %v54, %v53
  %v103 = vpack.c.bf16 %v56, %v55
  %v104 = vpack.c.bf16 %v58, %v57
  %v105 = vpack.c.bf16 %v60, %v59
  %v106 = vpack.c.bf16 %v62, %v61
  %v107 = vpack.c.bf16 %v64, %v63
  %v108 = vpack.c.bf16 %v66, %v65
  %v109 = vpack.c.bf16 %v68, %v67
  %v110 = vpack.c.bf16 %v70, %v69
  %v111 = vpack.c.bf16 %v72, %v71
  %v112 = vpack.c.bf16 %v74, %v73
  %v113 = vpack.c.bf16 %v76, %v75
  %v114 = vpack.c.bf16 %v78, %v77
  %v115 = vpack.c.bf16 %v80, %v79
  %v116 = vpack.c.bf16 %v82, %v81
  %v117 = vpack.c.bf16 %v84, %v83
  %v118 = vpack.c.bf16 %v86, %v85
  %v119 = vld [vmem:[%s2] sm:$0xff]
  %v120 = vld [vmem:[%s2 + $0x8] sm:$0xff]
  %v121 = vld [vmem:[%s2 + $0x10] sm:$0xff]
  %v122 = vld [vmem:[%s2 + $0x18] sm:$0xff]
  %v123 = vld [vmem:[%s2 + $0x20] sm:$0xff]
  %v124 = vld [vmem:[%s2 + $0x28] sm:$0xff]
  %v125 = vld [vmem:[%s2 + $0x30] sm:$0xff]
  %v126 = vld [vmem:[%s2 + $0x38] sm:$0xff]
  %v127 = vld [vmem:[%s2 + $0x40] sm:$0xff]
  %v128 = vld [vmem:[%s2 + $0x48] sm:$0xff]
  %v129 = vld [vmem:[%s2 + $0x50] sm:$0xff]
  %v130 = vld [vmem:[%s2 + $0x58] sm:$0xff]
  %v131 = vld [vmem:[%s2 + $0x60] sm:$0xff]
  %v132 = vld [vmem:[%s2 + $0x68] sm:$0xff]
  %v133 = vld [vmem:[%s2 + $0x70] sm:$0xff]
  %v134 = vld [vmem:[%s2 + $0x78] sm:$0xff]
  %v135 = vpack.c.bf16 %v120, %v119
  %v136 = vpack.c.bf16 %v122, %v121
  %v137 = vpack.c.bf16 %v124, %v123
  %v138 = vpack.c.bf16 %v126, %v125
  %v139 = vpack.c.bf16 %v128, %v127
  %v140 = vpack.c.bf16 %v130, %v129
  %v141 = vpack.c.bf16 %v132, %v131
  %v142 = vpack.c.bf16 %v134, %v133
  %v143 = vld [vmem:[%s3] sm:$0x1]
  %v145 = vperm.slane %v143, 0
  %147 = vmatpush.bf16.msra.mxu0 %v142
  %148 = vmatpush.bf16.msra.mxu0 %v141
  %149 = vmatpush.bf16.msra.mxu0 %v140
  %150 = vmatpush.bf16.msra.mxu0 %v139
  %151 = vmatpush.bf16.msra.mxu0 %v138
  %152 = vmatpush.bf16.msra.mxu0 %v137
  %153 = vmatpush.bf16.msra.mxu0 %v136
  %154 = vmatpush.bf16.msra.mxu0 %v135
  %155 = vmatmul.bf16.gmra.mxu0 %v87
  %v156 = vpop.f32.mrf.mxu0
  %v157 = vadd.f32 %v145, %v156
  %v158 = vpop.f32.mrf.mxu0
  %v159 = vadd.f32 %v145, %v158
  %160 = vmatmul.bf16.gmra.mxu0 %v88
  %v161 = vpop.f32.mrf.mxu0
  %v162 = vadd.f32 %v145, %v161
  %v163 = vpop.f32.mrf.mxu0
  %v164 = vadd.f32 %v145, %v163
  %165 = vmatmul.bf16.gmra.mxu0 %v89
  %v166 = vpop.f32.mrf.mxu0
  %v167 = vadd.f32 %v145, %v166
  %v168 = vpop.f32.mrf.mxu0
  %v169 = vadd.f32 %v145, %v168
  %170 = vmatmul.bf16.gmra.mxu0 %v90
  %v171 = vpop.f32.mrf.mxu0
  %v172 = vadd.f32 %v145, %v171
  %v173 = vpop.f32.mrf.mxu0
  %v174 = vadd.f32 %v145, %v173
  %175 = vmatmul.bf16.gmra.mxu0 %v91
  %v176 = vpop.f32.mrf.mxu0
  %v177 = vadd.f32 %v145, %v176
  %v178 = vpop.f32.mrf.mxu0
  %v179 = vadd.f32 %v145, %v178
  %180 = vmatmul.bf16.gmra.mxu0 %v92
  %v181 = vpop.f32.mrf.mxu0
  %v182 = vadd.f32 %v145, %v181
  %v183 = vpop.f32.mrf.mxu0
  %v184 = vadd.f32 %v145, %v183
  %185 = vmatmul.bf16.gmra.mxu0 %v93
  %v186 = vpop.f32.mrf.mxu0
  %v187 = vadd.f32 %v145, %v186
  %v188 = vpop.f32.mrf.mxu0
  %v189 = vadd.f32 %v145, %v188
  %190 = vmatmul.bf16.gmra.mxu0 %v94
  %v191 = vpop.f32.mrf.mxu0
  %v192 = vadd.f32 %v145, %v191
  %v193 = vpop.f32.mrf.mxu0
  %v194 = vadd.f32 %v145, %v193
  %195 = vmatmul.bf16.gmra.mxu0 %v95
  %v196 = vpop.f32.mrf.mxu0
  %v197 = vadd.f32 %v145, %v196
  %v198 = vpop.f32.mrf.mxu0
  %v199 = vadd.f32 %v145, %v198
  %200 = vmatmul.bf16.gmra.mxu0 %v96
  %v201 = vpop.f32.mrf.mxu0
  %v202 = vadd.f32 %v145, %v201
  %v203 = vpop.f32.mrf.mxu0
  %v204 = vadd.f32 %v145, %v203
  %205 = vmatmul.bf16.gmra.mxu0 %v97
  %v206 = vpop.f32.mrf.mxu0
  %v207 = vadd.f32 %v145, %v206
  %v208 = vpop.f32.mrf.mxu0
  %v209 = vadd.f32 %v145, %v208
  %210 = vmatmul.bf16.gmra.mxu0 %v98
  %v211 = vpop.f32.mrf.mxu0
  %v212 = vadd.f32 %v145, %v211
  %v213 = vpop.f32.mrf.mxu0
  %v214 = vadd.f32 %v145, %v213
  %215 = vmatmul.bf16.gmra.mxu0 %v99
  %v216 = vpop.f32.mrf.mxu0
  %v217 = vadd.f32 %v145, %v216
  %v218 = vpop.f32.mrf.mxu0
  %v219 = vadd.f32 %v145, %v218
  %220 = vmatmul.bf16.gmra.mxu0 %v100
  %v221 = vpop.f32.mrf.mxu0
  %v222 = vadd.f32 %v145, %v221
  %v223 = vpop.f32.mrf.mxu0
  %v224 = vadd.f32 %v145, %v223
  %225 = vmatmul.bf16.gmra.mxu0 %v101
  %v226 = vpop.f32.mrf.mxu0
  %v227 = vadd.f32 %v145, %v226
  %v228 = vpop.f32.mrf.mxu0
  %v229 = vadd.f32 %v145, %v228
  %230 = vmatmul.bf16.gmra.mxu0 %v102
  %v231 = vpop.f32.mrf.mxu0
  %v232 = vadd.f32 %v145, %v231
  %v233 = vpop.f32.mrf.mxu0
  %v234 = vadd.f32 %v145, %v233
  %235 = vmatmul.bf16.gmra.mxu0 %v103
  %v236 = vpop.f32.mrf.mxu0
  %v237 = vadd.f32 %v145, %v236
  %v238 = vpop.f32.mrf.mxu0
  %v239 = vadd.f32 %v145, %v238
  %240 = vmatmul.bf16.gmra.mxu0 %v104
  %v241 = vpop.f32.mrf.mxu0
  %v242 = vadd.f32 %v145, %v241
  %v243 = vpop.f32.mrf.mxu0
  %v244 = vadd.f32 %v145, %v243
  %245 = vmatmul.bf16.gmra.mxu0 %v105
  %v246 = vpop.f32.mrf.mxu0
  %v247 = vadd.f32 %v145, %v246
  %v248 = vpop.f32.mrf.mxu0
  %v249 = vadd.f32 %v145, %v248
  %250 = vmatmul.bf16.gmra.mxu0 %v106
  %v251 = vpop.f32.mrf.mxu0
  %v252 = vadd.f32 %v145, %v251
  %v253 = vpop.f32.mrf.mxu0
  %v254 = vadd.f32 %v145, %v253
  %255 = vmatmul.bf16.gmra.mxu0 %v107
  %v256 = vpop.f32.mrf.mxu0
  %v257 = vadd.f32 %v145, %v256
  %v258 = vpop.f32.mrf.mxu0
  %v259 = vadd.f32 %v145, %v258
  %260 = vmatmul.bf16.gmra.mxu0 %v108
  %v261 = vpop.f32.mrf.mxu0
  %v262 = vadd.f32 %v145, %v261
  %v263 = vpop.f32.mrf.mxu0
  %v264 = vadd.f32 %v145, %v263
  %265 = vmatmul.bf16.gmra.mxu0 %v109
  %v266 = vpop.f32.mrf.mxu0
  %v267 = vadd.f32 %v145, %v266
  %v268 = vpop.f32.mrf.mxu0
  %v269 = vadd.f32 %v145, %v268
  %270 = vmatmul.bf16.gmra.mxu0 %v110
  %v271 = vpop.f32.mrf.mxu0
  %v272 = vadd.f32 %v145, %v271
  %v273 = vpop.f32.mrf.mxu0
  %v274 = vadd.f32 %v145, %v273
  %275 = vmatmul.bf16.gmra.mxu0 %v111
  %v276 = vpop.f32.mrf.mxu0
  %v277 = vadd.f32 %v145, %v276
  %v278 = vpop.f32.mrf.mxu0
  %v279 = vadd.f32 %v145, %v278
  %280 = vmatmul.bf16.gmra.mxu0 %v112
  %v281 = vpop.f32.mrf.mxu0
  %v282 = vadd.f32 %v145, %v281
  %v283 = vpop.f32.mrf.mxu0
  %v284 = vadd.f32 %v145, %v283
  %285 = vmatmul.bf16.gmra.mxu0 %v113
  %v286 = vpop.f32.mrf.mxu0
  %v287 = vadd.f32 %v145, %v286
  %v288 = vpop.f32.mrf.mxu0
  %v289 = vadd.f32 %v145, %v288
  %290 = vmatmul.bf16.gmra.mxu0 %v114
  %v291 = vpop.f32.mrf.mxu0
  %v292 = vadd.f32 %v145, %v291
  %v293 = vpop.f32.mrf.mxu0
  %v294 = vadd.f32 %v145, %v293
  %295 = vmatmul.bf16.gmra.mxu0 %v115
  %v296 = vpop.f32.mrf.mxu0
  %v297 = vadd.f32 %v145, %v296
  %v298 = vpop.f32.mrf.mxu0
  %v299 = vadd.f32 %v145, %v298
  %300 = vmatmul.bf16.gmra.mxu0 %v116
  %v301 = vpop.f32.mrf.mxu0
  %v302 = vadd.f32 %v145, %v301
  %v303 = vpop.f32.mrf.mxu0
  %v304 = vadd.f32 %v145, %v303
  %305 = vmatmul.bf16.gmra.mxu0 %v117
  %v306 = vpop.f32.mrf.mxu0
  %v307 = vadd.f32 %v145, %v306
  %v308 = vpop.f32.mrf.mxu0
  %v309 = vadd.f32 %v145, %v308
  %310 = vmatmul.bf16.gmra.mxu0 %v118
  %v311 = vpop.f32.mrf.mxu0
  %v312 = vadd.f32 %v145, %v311
  %v313 = vpop.f32.mrf.mxu0
  %v314 = vadd.f32 %v145, %v313
  %315 = vdwg.mxu0
  %v316 = vld [vmem:[%s1] sm:$0xff]
  %v317 = vld [vmem:[%s1 + $0x8] sm:$0xff]
  %v318 = vld [vmem:[%s1 + $0x10] sm:$0xff]
  %v319 = vld [vmem:[%s1 + $0x18] sm:$0xff]
  %v320 = vld [vmem:[%s1 + $0x20] sm:$0xff]
  %v321 = vld [vmem:[%s1 + $0x28] sm:$0xff]
  %v322 = vld [vmem:[%s1 + $0x30] sm:$0xff]
  %v323 = vld [vmem:[%s1 + $0x38] sm:$0xff]
  %v324 = vld [vmem:[%s1 + $0x40] sm:$0xff]
  %v325 = vld [vmem:[%s1 + $0x48] sm:$0xff]
  %v326 = vld [vmem:[%s1 + $0x50] sm:$0xff]
  %v327 = vld [vmem:[%s1 + $0x58] sm:$0xff]
  %v328 = vld [vmem:[%s1 + $0x60] sm:$0xff]
  %v329 = vld [vmem:[%s1 + $0x68] sm:$0xff]
  %v330 = vld [vmem:[%s1 + $0x70] sm:$0xff]
  %v331 = vld [vmem:[%s1 + $0x78] sm:$0xff]
  %v332 = vld [vmem:[%s1 + $0x80] sm:$0xff]
  %v333 = vld [vmem:[%s1 + $0x88] sm:$0xff]
  %v334 = vld [vmem:[%s1 + $0x90] sm:$0xff]
  %v335 = vld [vmem:[%s1 + $0x98] sm:$0xff]
  %v336 = vld [vmem:[%s1 + $0xa0] sm:$0xff]
  %v337 = vld [vmem:[%s1 + $0xa8] sm:$0xff]
  %v338 = vld [vmem:[%s1 + $0xb0] sm:$0xff]
  %v339 = vld [vmem:[%s1 + $0xb8] sm:$0xff]
  %v340 = vld [vmem:[%s1 + $0xc0] sm:$0xff]
  %v341 = vld [vmem:[%s1 + $0xc8] sm:$0xff]
  %v342 = vld [vmem:[%s1 + $0xd0] sm:$0xff]
  %v343 = vld [vmem:[%s1 + $0xd8] sm:$0xff]
  %v344 = vld [vmem:[%s1 + $0xe0] sm:$0xff]
  %v345 = vld [vmem:[%s1 + $0xe8] sm:$0xff]
  %v346 = vld [vmem:[%s1 + $0xf0] sm:$0xff]
  %v347 = vld [vmem:[%s1 + $0xf8] sm:$0xff]
  %v348 = vld [vmem:[%s1 + $0x100] sm:$0xff]
  %v349 = vld [vmem:[%s1 + $0x108] sm:$0xff]
  %v350 = vld [vmem:[%s1 + $0x110] sm:$0xff]
  %v351 = vld [vmem:[%s1 + $0x118] sm:$0xff]
  %v352 = vld [vmem:[%s1 + $0x120] sm:$0xff]
  %v353 = vld [vmem:[%s1 + $0x128] sm:$0xff]
  %v354 = vld [vmem:[%s1 + $0x130] sm:$0xff]
  %v355 = vld [vmem:[%s1 + $0x138] sm:$0xff]
  %v356 = vld [vmem:[%s1 + $0x140] sm:$0xff]
  %v357 = vld [vmem:[%s1 + $0x148] sm:$0xff]
  %v358 = vld [vmem:[%s1 + $0x150] sm:$0xff]
  %v359 = vld [vmem:[%s1 + $0x158] sm:$0xff]
  %v360 = vld [vmem:[%s1 + $0x160] sm:$0xff]
  %v361 = vld [vmem:[%s1 + $0x168] sm:$0xff]
  %v362 = vld [vmem:[%s1 + $0x170] sm:$0xff]
  %v363 = vld [vmem:[%s1 + $0x178] sm:$0xff]
  %v364 = vld [vmem:[%s1 + $0x180] sm:$0xff]
  %v365 = vld [vmem:[%s1 + $0x188] sm:$0xff]
  %v366 = vld [vmem:[%s1 + $0x190] sm:$0xff]
  %v367 = vld [vmem:[%s1 + $0x198] sm:$0xff]
  %v368 = vld [vmem:[%s1 + $0x1a0] sm:$0xff]
  %v369 = vld [vmem:[%s1 + $0x1a8] sm:$0xff]
  %v370 = vld [vmem:[%s1 + $0x1b0] sm:$0xff]
  %v371 = vld [vmem:[%s1 + $0x1b8] sm:$0xff]
  %v372 = vld [vmem:[%s1 + $0x1c0] sm:$0xff]
  %v373 = vld [vmem:[%s1 + $0x1c8] sm:$0xff]
  %v374 = vld [vmem:[%s1 + $0x1d0] sm:$0xff]
  %v375 = vld [vmem:[%s1 + $0x1d8] sm:$0xff]
  %v376 = vld [vmem:[%s1 + $0x1e0] sm:$0xff]
  %v377 = vld [vmem:[%s1 + $0x1e8] sm:$0xff]
  %v378 = vld [vmem:[%s1 + $0x1f0] sm:$0xff]
  %v379 = vld [vmem:[%s1 + $0x1f8] sm:$0xff]
  %v380 = vpack.c.bf16 %v317, %v316
  %v381 = vpack.c.bf16 %v319, %v318
  %v382 = vpack.c.bf16 %v321, %v320
  %v383 = vpack.c.bf16 %v323, %v322
  %v384 = vpack.c.bf16 %v325, %v324
  %v385 = vpack.c.bf16 %v327, %v326
  %v386 = vpack.c.bf16 %v329, %v328
  %v387 = vpack.c.bf16 %v331, %v330
  %v388 = vpack.c.bf16 %v333, %v332
  %v389 = vpack.c.bf16 %v335, %v334
  %v390 = vpack.c.bf16 %v337, %v336
  %v391 = vpack.c.bf16 %v339, %v338
  %v392 = vpack.c.bf16 %v341, %v340
  %v393 = vpack.c.bf16 %v343, %v342
  %v394 = vpack.c.bf16 %v345, %v344
  %v395 = vpack.c.bf16 %v347, %v346
  %v396 = vpack.c.bf16 %v349, %v348
  %v397 = vpack.c.bf16 %v351, %v350
  %v398 = vpack.c.bf16 %v353, %v352
  %v399 = vpack.c.bf16 %v355, %v354
  %v400 = vpack.c.bf16 %v357, %v356
  %v401 = vpack.c.bf16 %v359, %v358
  %v402 = vpack.c.bf16 %v361, %v360
  %v403 = vpack.c.bf16 %v363, %v362
  %v404 = vpack.c.bf16 %v365, %v364
  %v405 = vpack.c.bf16 %v367, %v366
  %v406 = vpack.c.bf16 %v369, %v368
  %v407 = vpack.c.bf16 %v371, %v370
  %v408 = vpack.c.bf16 %v373, %v372
  %v409 = vpack.c.bf16 %v375, %v374
  %v410 = vpack.c.bf16 %v377, %v376
  %v411 = vpack.c.bf16 %v379, %v378
  %v412 = vld [vmem:[%s4] sm:$0xff]
  %v413 = vld [vmem:[%s4 + $0x8] sm:$0xff]
  %v414 = vld [vmem:[%s4 + $0x10] sm:$0xff]
  %v415 = vld [vmem:[%s4 + $0x18] sm:$0xff]
  %v416 = vld [vmem:[%s4 + $0x20] sm:$0xff]
  %v417 = vld [vmem:[%s4 + $0x28] sm:$0xff]
  %v418 = vld [vmem:[%s4 + $0x30] sm:$0xff]
  %v419 = vld [vmem:[%s4 + $0x38] sm:$0xff]
  %v420 = vld [vmem:[%s4 + $0x40] sm:$0xff]
  %v421 = vld [vmem:[%s4 + $0x48] sm:$0xff]
  %v422 = vld [vmem:[%s4 + $0x50] sm:$0xff]
  %v423 = vld [vmem:[%s4 + $0x58] sm:$0xff]
  %v424 = vld [vmem:[%s4 + $0x60] sm:$0xff]
  %v425 = vld [vmem:[%s4 + $0x68] sm:$0xff]
  %v426 = vld [vmem:[%s4 + $0x70] sm:$0xff]
  %v427 = vld [vmem:[%s4 + $0x78] sm:$0xff]
  %v428 = vpack.c.bf16 %v413, %v412
  %v429 = vpack.c.bf16 %v415, %v414
  %v430 = vpack.c.bf16 %v417, %v416
  %v431 = vpack.c.bf16 %v419, %v418
  %v432 = vpack.c.bf16 %v421, %v420
  %v433 = vpack.c.bf16 %v423, %v422
  %v434 = vpack.c.bf16 %v425, %v424
  %v435 = vpack.c.bf16 %v427, %v426
  %v436 = vld [vmem:[%s5] sm:$0x1]
  %v438 = vperm.slane %v436, 0
  %440 = vmatpush.bf16.msra.mxu0 %v435
  %441 = vmatpush.bf16.msra.mxu0 %v434
  %442 = vmatpush.bf16.msra.mxu0 %v433
  %443 = vmatpush.bf16.msra.mxu0 %v432
  %444 = vmatpush.bf16.msra.mxu0 %v431
  %445 = vmatpush.bf16.msra.mxu0 %v430
  %446 = vmatpush.bf16.msra.mxu0 %v429
  %447 = vmatpush.bf16.msra.mxu0 %v428
  %448 = vmatmul.bf16.gmra.mxu0 %v380
  %v449 = vpop.f32.mrf.mxu0
  %v450 = vadd.f32 %v438, %v449
  %v451 = vpop.f32.mrf.mxu0
  %v452 = vadd.f32 %v438, %v451
  %453 = vmatmul.bf16.gmra.mxu0 %v381
  %v454 = vpop.f32.mrf.mxu0
  %v455 = vadd.f32 %v438, %v454
  %v456 = vpop.f32.mrf.mxu0
  %v457 = vadd.f32 %v438, %v456
  %458 = vmatmul.bf16.gmra.mxu0 %v382
  %v459 = vpop.f32.mrf.mxu0
  %v460 = vadd.f32 %v438, %v459
  %v461 = vpop.f32.mrf.mxu0
  %v462 = vadd.f32 %v438, %v461
  %463 = vmatmul.bf16.gmra.mxu0 %v383
  %v464 = vpop.f32.mrf.mxu0
  %v465 = vadd.f32 %v438, %v464
  %v466 = vpop.f32.mrf.mxu0
  %v467 = vadd.f32 %v438, %v466
  %468 = vmatmul.bf16.gmra.mxu0 %v384
  %v469 = vpop.f32.mrf.mxu0
  %v470 = vadd.f32 %v438, %v469
  %v471 = vpop.f32.mrf.mxu0
  %v472 = vadd.f32 %v438, %v471
  %473 = vmatmul.bf16.gmra.mxu0 %v385
  %v474 = vpop.f32.mrf.mxu0
  %v475 = vadd.f32 %v438, %v474
  %v476 = vpop.f32.mrf.mxu0
  %v477 = vadd.f32 %v438, %v476
  %478 = vmatmul.bf16.gmra.mxu0 %v386
  %v479 = vpop.f32.mrf.mxu0
  %v480 = vadd.f32 %v438, %v479
  %v481 = vpop.f32.mrf.mxu0
  %v482 = vadd.f32 %v438, %v481
  %483 = vmatmul.bf16.gmra.mxu0 %v387
  %v484 = vpop.f32.mrf.mxu0
  %v485 = vadd.f32 %v438, %v484
  %v486 = vpop.f32.mrf.mxu0
  %v487 = vadd.f32 %v438, %v486
  %488 = vmatmul.bf16.gmra.mxu0 %v388
  %v489 = vpop.f32.mrf.mxu0
  %v490 = vadd.f32 %v438, %v489
  %v491 = vpop.f32.mrf.mxu0
  %v492 = vadd.f32 %v438, %v491
  %493 = vmatmul.bf16.gmra.mxu0 %v389
  %v494 = vpop.f32.mrf.mxu0
  %v495 = vadd.f32 %v438, %v494
  %v496 = vpop.f32.mrf.mxu0
  %v497 = vadd.f32 %v438, %v496
  %498 = vmatmul.bf16.gmra.mxu0 %v390
  %v499 = vpop.f32.mrf.mxu0
  %v500 = vadd.f32 %v438, %v499
  %v501 = vpop.f32.mrf.mxu0
  %v502 = vadd.f32 %v438, %v501
  %503 = vmatmul.bf16.gmra.mxu0 %v391
  %v504 = vpop.f32.mrf.mxu0
  %v505 = vadd.f32 %v438, %v504
  %v506 = vpop.f32.mrf.mxu0
  %v507 = vadd.f32 %v438, %v506
  %508 = vmatmul.bf16.gmra.mxu0 %v392
  %v509 = vpop.f32.mrf.mxu0
  %v510 = vadd.f32 %v438, %v509
  %v511 = vpop.f32.mrf.mxu0
  %v512 = vadd.f32 %v438, %v511
  %513 = vmatmul.bf16.gmra.mxu0 %v393
  %v514 = vpop.f32.mrf.mxu0
  %v515 = vadd.f32 %v438, %v514
  %v516 = vpop.f32.mrf.mxu0
  %v517 = vadd.f32 %v438, %v516
  %518 = vmatmul.bf16.gmra.mxu0 %v394
  %v519 = vpop.f32.mrf.mxu0
  %v520 = vadd.f32 %v438, %v519
  %v521 = vpop.f32.mrf.mxu0
  %v522 = vadd.f32 %v438, %v521
  %523 = vmatmul.bf16.gmra.mxu0 %v395
  %v524 = vpop.f32.mrf.mxu0
  %v525 = vadd.f32 %v438, %v524
  %v526 = vpop.f32.mrf.mxu0
  %v527 = vadd.f32 %v438, %v526
  %528 = vmatmul.bf16.gmra.mxu0 %v396
  %v529 = vpop.f32.mrf.mxu0
  %v530 = vadd.f32 %v438, %v529
  %v531 = vpop.f32.mrf.mxu0
  %v532 = vadd.f32 %v438, %v531
  %533 = vmatmul.bf16.gmra.mxu0 %v397
  %v534 = vpop.f32.mrf.mxu0
  %v535 = vadd.f32 %v438, %v534
  %v536 = vpop.f32.mrf.mxu0
  %v537 = vadd.f32 %v438, %v536
  %538 = vmatmul.bf16.gmra.mxu0 %v398
  %v539 = vpop.f32.mrf.mxu0
  %v540 = vadd.f32 %v438, %v539
  %v541 = vpop.f32.mrf.mxu0
  %v542 = vadd.f32 %v438, %v541
  %543 = vmatmul.bf16.gmra.mxu0 %v399
  %v544 = vpop.f32.mrf.mxu0
  %v545 = vadd.f32 %v438, %v544
  %v546 = vpop.f32.mrf.mxu0
  %v547 = vadd.f32 %v438, %v546
  %548 = vmatmul.bf16.gmra.mxu0 %v400
  %v549 = vpop.f32.mrf.mxu0
  %v550 = vadd.f32 %v438, %v549
  %v551 = vpop.f32.mrf.mxu0
  %v552 = vadd.f32 %v438, %v551
  %553 = vmatmul.bf16.gmra.mxu0 %v401
  %v554 = vpop.f32.mrf.mxu0
  %v555 = vadd.f32 %v438, %v554
  %v556 = vpop.f32.mrf.mxu0
  %v557 = vadd.f32 %v438, %v556
  %558 = vmatmul.bf16.gmra.mxu0 %v402
  %v559 = vpop.f32.mrf.mxu0
  %v560 = vadd.f32 %v438, %v559
  %v561 = vpop.f32.mrf.mxu0
  %v562 = vadd.f32 %v438, %v561
  %563 = vmatmul.bf16.gmra.mxu0 %v403
  %v564 = vpop.f32.mrf.mxu0
  %v565 = vadd.f32 %v438, %v564
  %v566 = vpop.f32.mrf.mxu0
  %v567 = vadd.f32 %v438, %v566
  %568 = vmatmul.bf16.gmra.mxu0 %v404
  %v569 = vpop.f32.mrf.mxu0
  %v570 = vadd.f32 %v438, %v569
  %v571 = vpop.f32.mrf.mxu0
  %v572 = vadd.f32 %v438, %v571
  %573 = vmatmul.bf16.gmra.mxu0 %v405
  %v574 = vpop.f32.mrf.mxu0
  %v575 = vadd.f32 %v438, %v574
  %v576 = vpop.f32.mrf.mxu0
  %v577 = vadd.f32 %v438, %v576
  %578 = vmatmul.bf16.gmra.mxu0 %v406
  %v579 = vpop.f32.mrf.mxu0
  %v580 = vadd.f32 %v438, %v579
  %v581 = vpop.f32.mrf.mxu0
  %v582 = vadd.f32 %v438, %v581
  %583 = vmatmul.bf16.gmra.mxu0 %v407
  %v584 = vpop.f32.mrf.mxu0
  %v585 = vadd.f32 %v438, %v584
  %v586 = vpop.f32.mrf.mxu0
  %v587 = vadd.f32 %v438, %v586
  %588 = vmatmul.bf16.gmra.mxu0 %v408
  %v589 = vpop.f32.mrf.mxu0
  %v590 = vadd.f32 %v438, %v589
  %v591 = vpop.f32.mrf.mxu0
  %v592 = vadd.f32 %v438, %v591
  %593 = vmatmul.bf16.gmra.mxu0 %v409
  %v594 = vpop.f32.mrf.mxu0
  %v595 = vadd.f32 %v438, %v594
  %v596 = vpop.f32.mrf.mxu0
  %v597 = vadd.f32 %v438, %v596
  %598 = vmatmul.bf16.gmra.mxu0 %v410
  %v599 = vpop.f32.mrf.mxu0
  %v600 = vadd.f32 %v438, %v599
  %v601 = vpop.f32.mrf.mxu0
  %v602 = vadd.f32 %v438, %v601
  %603 = vmatmul.bf16.gmra.mxu0 %v411
  %v604 = vpop.f32.mrf.mxu0
  %v605 = vadd.f32 %v438, %v604
  %v606 = vpop.f32.mrf.mxu0
  %v607 = vadd.f32 %v438, %v606
  %608 = vdwg.mxu0
  %v609 = vadd.f32 %v157, %v450
  %v610 = vadd.f32 %v159, %v452
  %v611 = vadd.f32 %v162, %v455
  %v612 = vadd.f32 %v164, %v457
  %v613 = vadd.f32 %v167, %v460
  %v614 = vadd.f32 %v169, %v462
  %v615 = vadd.f32 %v172, %v465
  %v616 = vadd.f32 %v174, %v467
  %v617 = vadd.f32 %v177, %v470
  %v618 = vadd.f32 %v179, %v472
  %v619 = vadd.f32 %v182, %v475
  %v620 = vadd.f32 %v184, %v477
  %v621 = vadd.f32 %v187, %v480
  %v622 = vadd.f32 %v189, %v482
  %v623 = vadd.f32 %v192, %v485
  %v624 = vadd.f32 %v194, %v487
  %v625 = vadd.f32 %v197, %v490
  %v626 = vadd.f32 %v199, %v492
  %v627 = vadd.f32 %v202, %v495
  %v628 = vadd.f32 %v204, %v497
  %v629 = vadd.f32 %v207, %v500
  %v630 = vadd.f32 %v209, %v502
  %v631 = vadd.f32 %v212, %v505
  %v632 = vadd.f32 %v214, %v507
  %v633 = vadd.f32 %v217, %v510
  %v634 = vadd.f32 %v219, %v512
  %v635 = vadd.f32 %v222, %v515
  %v636 = vadd.f32 %v224, %v517
  %v637 = vadd.f32 %v227, %v520
  %v638 = vadd.f32 %v229, %v522
  %v639 = vadd.f32 %v232, %v525
  %v640 = vadd.f32 %v234, %v527
  %v641 = vadd.f32 %v237, %v530
  %v642 = vadd.f32 %v239, %v532
  %v643 = vadd.f32 %v242, %v535
  %v644 = vadd.f32 %v244, %v537
  %v645 = vadd.f32 %v247, %v540
  %v646 = vadd.f32 %v249, %v542
  %v647 = vadd.f32 %v252, %v545
  %v648 = vadd.f32 %v254, %v547
  %v649 = vadd.f32 %v257, %v550
  %v650 = vadd.f32 %v259, %v552
  %v651 = vadd.f32 %v262, %v555
  %v652 = vadd.f32 %v264, %v557
  %v653 = vadd.f32 %v267, %v560
  %v654 = vadd.f32 %v269, %v562
  %v655 = vadd.f32 %v272, %v565
  %v656 = vadd.f32 %v274, %v567
  %v657 = vadd.f32 %v277, %v570
  %v658 = vadd.f32 %v279, %v572
  %v659 = vadd.f32 %v282, %v575
  %v660 = vadd.f32 %v284, %v577
  %v661 = vadd.f32 %v287, %v580
  %v662 = vadd.f32 %v289, %v582
  %v663 = vadd.f32 %v292, %v585
  %v664 = vadd.f32 %v294, %v587
  %v665 = vadd.f32 %v297, %v590
  %v666 = vadd.f32 %v299, %v592
  %v667 = vadd.f32 %v302, %v595
  %v668 = vadd.f32 %v304, %v597
  %v669 = vadd.f32 %v307, %v600
  %v670 = vadd.f32 %v309, %v602
  %v671 = vadd.f32 %v312, %v605
  %v672 = vadd.f32 %v314, %v607
  %673 = vst [vmem:[%s6] sm:$0xff] %v609
  %674 = vst [vmem:[%s6 + $0x8] sm:$0xff] %v610
  %675 = vst [vmem:[%s6 + $0x10] sm:$0xff] %v611
  %676 = vst [vmem:[%s6 + $0x18] sm:$0xff] %v612
  %677 = vst [vmem:[%s6 + $0x20] sm:$0xff] %v613
  %678 = vst [vmem:[%s6 + $0x28] sm:$0xff] %v614
  %679 = vst [vmem:[%s6 + $0x30] sm:$0xff] %v615
  %680 = vst [vmem:[%s6 + $0x38] sm:$0xff] %v616
  %681 = vst [vmem:[%s6 + $0x40] sm:$0xff] %v617
  %682 = vst [vmem:[%s6 + $0x48] sm:$0xff] %v618
  %683 = vst [vmem:[%s6 + $0x50] sm:$0xff] %v619
  %684 = vst [vmem:[%s6 + $0x58] sm:$0xff] %v620
  %685 = vst [vmem:[%s6 + $0x60] sm:$0xff] %v621
  %686 = vst [vmem:[%s6 + $0x68] sm:$0xff] %v622
  %687 = vst [vmem:[%s6 + $0x70] sm:$0xff] %v623
  %688 = vst [vmem:[%s6 + $0x78] sm:$0xff] %v624
  %689 = vst [vmem:[%s6 + $0x80] sm:$0xff] %v625
  %690 = vst [vmem:[%s6 + $0x88] sm:$0xff] %v626
  %691 = vst [vmem:[%s6 + $0x90] sm:$0xff] %v627
  %692 = vst [vmem:[%s6 + $0x98] sm:$0xff] %v628
  %693 = vst [vmem:[%s6 + $0xa0] sm:$0xff] %v629
  %694 = vst [vmem:[%s6 + $0xa8] sm:$0xff] %v630
  %695 = vst [vmem:[%s6 + $0xb0] sm:$0xff] %v631
  %696 = vst [vmem:[%s6 + $0xb8] sm:$0xff] %v632
  %697 = vst [vmem:[%s6 + $0xc0] sm:$0xff] %v633
  %698 = vst [vmem:[%s6 + $0xc8] sm:$0xff] %v634
  %699 = vst [vmem:[%s6 + $0xd0] sm:$0xff] %v635
  %700 = vst [vmem:[%s6 + $0xd8] sm:$0xff] %v636
  %701 = vst [vmem:[%s6 + $0xe0] sm:$0xff] %v637
  %702 = vst [vmem:[%s6 + $0xe8] sm:$0xff] %v638
  %703 = vst [vmem:[%s6 + $0xf0] sm:$0xff] %v639
  %704 = vst [vmem:[%s6 + $0xf8] sm:$0xff] %v640
  %705 = vst [vmem:[%s6 + $0x100] sm:$0xff] %v641
  %706 = vst [vmem:[%s6 + $0x108] sm:$0xff] %v642
  %707 = vst [vmem:[%s6 + $0x110] sm:$0xff] %v643
  %708 = vst [vmem:[%s6 + $0x118] sm:$0xff] %v644
  %709 = vst [vmem:[%s6 + $0x120] sm:$0xff] %v645
  %710 = vst [vmem:[%s6 + $0x128] sm:$0xff] %v646
  %711 = vst [vmem:[%s6 + $0x130] sm:$0xff] %v647
  %712 = vst [vmem:[%s6 + $0x138] sm:$0xff] %v648
  %713 = vst [vmem:[%s6 + $0x140] sm:$0xff] %v649
  %714 = vst [vmem:[%s6 + $0x148] sm:$0xff] %v650
  %715 = vst [vmem:[%s6 + $0x150] sm:$0xff] %v651
  %716 = vst [vmem:[%s6 + $0x158] sm:$0xff] %v652
  %717 = vst [vmem:[%s6 + $0x160] sm:$0xff] %v653
  %718 = vst [vmem:[%s6 + $0x168] sm:$0xff] %v654
  %719 = vst [vmem:[%s6 + $0x170] sm:$0xff] %v655
  %720 = vst [vmem:[%s6 + $0x178] sm:$0xff] %v656
  %721 = vst [vmem:[%s6 + $0x180] sm:$0xff] %v657
  %722 = vst [vmem:[%s6 + $0x188] sm:$0xff] %v658
  %723 = vst [vmem:[%s6 + $0x190] sm:$0xff] %v659
  %724 = vst [vmem:[%s6 + $0x198] sm:$0xff] %v660
  %725 = vst [vmem:[%s6 + $0x1a0] sm:$0xff] %v661
  %726 = vst [vmem:[%s6 + $0x1a8] sm:$0xff] %v662
  %727 = vst [vmem:[%s6 + $0x1b0] sm:$0xff] %v663
  %728 = vst [vmem:[%s6 + $0x1b8] sm:$0xff] %v664
  %729 = vst [vmem:[%s6 + $0x1c0] sm:$0xff] %v665
  %730 = vst [vmem:[%s6 + $0x1c8] sm:$0xff] %v666
  %731 = vst [vmem:[%s6 + $0x1d0] sm:$0xff] %v667
  %732 = vst [vmem:[%s6 + $0x1d8] sm:$0xff] %v668
  %733 = vst [vmem:[%s6 + $0x1e0] sm:$0xff] %v669
  %734 = vst [vmem:[%s6 + $0x1e8] sm:$0xff] %v670
  %735 = vst [vmem:[%s6 + $0x1f0] sm:$0xff] %v671
  %736 = vst [vmem:[%s6 + $0x1f8] sm:$0xff] %v672
  // Predicated region
  $region26: #{mobilenet_forward.21} parent=0 // pred_check
    _
  $region27: #{mobilenet_forward.21} parent=0 // pred_check_branch
    %738 = sbr.rel (0) target = $region29
  $region28: #{mobilenet_forward.21} parent=0 // pred_region
    _
  $region29: #{mobilenet_forward.21} parent=0 // pred_fallthru
    _
  // Predicated region
  $region30: #{mobilenet_forward.21} parent=0 // pred_check
    _
  $region31: #{mobilenet_forward.21} parent=0 // pred_check_branch
    %740 = sbr.rel (0) target = $region33
  $region32: #{mobilenet_forward.21} parent=0 // pred_region
    _
  $region33: #{mobilenet_forward.21} parent=0 // pred_fallthru
    _

// kernel: mobilenet_forward.25
$region0: #{mobilenet_forward.25}
  #allocation0 [shape = 'u32[]', space=smem, size = 0x4, offset = 0x4, fixed_abs, tag = 'smem constant byte address 0x4 - core index']
  #allocation1 [shape = 'u32[72,128]{1,0:T(1,128)}', space=vmem, size = 0x9000, scoped, tag = 'internal scratch']
  %s0 = inlined_call_operand.vmem [shape: f32[128,128], index: 0, kind: input, shape index: {}]
  %s1 = inlined_call_operand.vmem [shape: f32[128,256], index: 1, kind: input, shape index: {}]
  %s2 = inlined_call_operand.vmem [shape: f32[1,256], index: 2, kind: input, shape index: {}]
  %s3 = inlined_call_operand.vmem [shape: f32[128,256], index: 3, kind: output, shape index: {}]
  %s4 = sld [smem:[#allocation0]]
  $region22: #{mobilenet_forward.25} parent=0
    _
  %s6 = ssub.s32 1, %s4
  %s7 = scalar_select 0, %s6, %s4
  // Predicated region
  $region2: #{mobilenet_forward.25} parent=0 // pred_check
    _
  $region3: #{mobilenet_forward.25} parent=0 // pred_check_branch
    %9 = sbr.rel (0) target = $region5
  $region4: #{mobilenet_forward.25} parent=0 // pred_region
    _
  $region5: #{mobilenet_forward.25} parent=0 // pred_fallthru
    _
  // Predicated region
  $region6: #{mobilenet_forward.25} parent=0 // pred_check
    _
  $region7: #{mobilenet_forward.25} parent=0 // pred_check_branch
    %11 = sbr.rel (0) target = $region9
  $region8: #{mobilenet_forward.25} parent=0 // pred_region
    _
  $region9: #{mobilenet_forward.25} parent=0 // pred_fallthru
    _
  // Predicated region
  $region10: #{mobilenet_forward.25} parent=0 // pred_check
    _
  $region11: #{mobilenet_forward.25} parent=0 // pred_check_branch
    %13 = sbr.rel (0) target = $region13
  $region12: #{mobilenet_forward.25} parent=0 // pred_region
    _
  $region13: #{mobilenet_forward.25} parent=0 // pred_fallthru
    _
  %v14 = vld [vmem:[%s0] sm:$0xff]
  %v15 = vld [vmem:[%s0 + $0x8] sm:$0xff]
  %v16 = vld [vmem:[%s0 + $0x10] sm:$0xff]
  %v17 = vld [vmem:[%s0 + $0x18] sm:$0xff]
  %v18 = vld [vmem:[%s0 + $0x20] sm:$0xff]
  %v19 = vld [vmem:[%s0 + $0x28] sm:$0xff]
  %v20 = vld [vmem:[%s0 + $0x30] sm:$0xff]
  %v21 = vld [vmem:[%s0 + $0x38] sm:$0xff]
  %v22 = vld [vmem:[%s0 + $0x40] sm:$0xff]
  %v23 = vld [vmem:[%s0 + $0x48] sm:$0xff]
  %v24 = vld [vmem:[%s0 + $0x50] sm:$0xff]
  %v25 = vld [vmem:[%s0 + $0x58] sm:$0xff]
  %v26 = vld [vmem:[%s0 + $0x60] sm:$0xff]
  %v27 = vld [vmem:[%s0 + $0x68] sm:$0xff]
  %v28 = vld [vmem:[%s0 + $0x70] sm:$0xff]
  %v29 = vld [vmem:[%s0 + $0x78] sm:$0xff]
  %v30 = vpack.c.bf16 %v15, %v14
  %v31 = vpack.c.bf16 %v17, %v16
  %v32 = vpack.c.bf16 %v19, %v18
  %v33 = vpack.c.bf16 %v21, %v20
  %v34 = vpack.c.bf16 %v23, %v22
  %v35 = vpack.c.bf16 %v25, %v24
  %v36 = vpack.c.bf16 %v27, %v26
  %v37 = vpack.c.bf16 %v29, %v28
  %v38 = vld [vmem:[%s1] sm:$0xff]
  %v39 = vld [vmem:[%s1 + $0x8] sm:$0xff]
  %v40 = vld [vmem:[%s1 + $0x10] sm:$0xff]
  %v41 = vld [vmem:[%s1 + $0x18] sm:$0xff]
  %v42 = vld [vmem:[%s1 + $0x20] sm:$0xff]
  %v43 = vld [vmem:[%s1 + $0x28] sm:$0xff]
  %v44 = vld [vmem:[%s1 + $0x30] sm:$0xff]
  %v45 = vld [vmem:[%s1 + $0x38] sm:$0xff]
  %v46 = vld [vmem:[%s1 + $0x40] sm:$0xff]
  %v47 = vld [vmem:[%s1 + $0x48] sm:$0xff]
  %v48 = vld [vmem:[%s1 + $0x50] sm:$0xff]
  %v49 = vld [vmem:[%s1 + $0x58] sm:$0xff]
  %v50 = vld [vmem:[%s1 + $0x60] sm:$0xff]
  %v51 = vld [vmem:[%s1 + $0x68] sm:$0xff]
  %v52 = vld [vmem:[%s1 + $0x70] sm:$0xff]
  %v53 = vld [vmem:[%s1 + $0x78] sm:$0xff]
  %v54 = vld [vmem:[%s1 + $0x80] sm:$0xff]
  %v55 = vld [vmem:[%s1 + $0x88] sm:$0xff]
  %v56 = vld [vmem:[%s1 + $0x90] sm:$0xff]
  %v57 = vld [vmem:[%s1 + $0x98] sm:$0xff]
  %v58 = vld [vmem:[%s1 + $0xa0] sm:$0xff]
  %v59 = vld [vmem:[%s1 + $0xa8] sm:$0xff]
  %v60 = vld [vmem:[%s1 + $0xb0] sm:$0xff]
  %v61 = vld [vmem:[%s1 + $0xb8] sm:$0xff]
  %v62 = vld [vmem:[%s1 + $0xc0] sm:$0xff]
  %v63 = vld [vmem:[%s1 + $0xc8] sm:$0xff]
  %v64 = vld [vmem:[%s1 + $0xd0] sm:$0xff]
  %v65 = vld [vmem:[%s1 + $0xd8] sm:$0xff]
  %v66 = vld [vmem:[%s1 + $0xe0] sm:$0xff]
  %v67 = vld [vmem:[%s1 + $0xe8] sm:$0xff]
  %v68 = vld [vmem:[%s1 + $0xf0] sm:$0xff]
  %v69 = vld [vmem:[%s1 + $0xf8] sm:$0xff]
  %v70 = vpack.c.bf16 %v40, %v38
  %v71 = vpack.c.bf16 %v41, %v39
  %v72 = vpack.c.bf16 %v44, %v42
  %v73 = vpack.c.bf16 %v45, %v43
  %v74 = vpack.c.bf16 %v48, %v46
  %v75 = vpack.c.bf16 %v49, %v47
  %v76 = vpack.c.bf16 %v52, %v50
  %v77 = vpack.c.bf16 %v53, %v51
  %v78 = vpack.c.bf16 %v56, %v54
  %v79 = vpack.c.bf16 %v57, %v55
  %v80 = vpack.c.bf16 %v60, %v58
  %v81 = vpack.c.bf16 %v61, %v59
  %v82 = vpack.c.bf16 %v64, %v62
  %v83 = vpack.c.bf16 %v65, %v63
  %v84 = vpack.c.bf16 %v68, %v66
  %v85 = vpack.c.bf16 %v69, %v67
  %v86 = vld [vmem:[%s2] sm:$0x3]
  %v88 = vperm.slane %v86, 0
  %v89 = vperm.slane %v86, 1
  %92 = vmatpush.bf16.msra.mxu0 %v84
  %93 = vmatpush.bf16.msra.mxu0 %v82
  %94 = vmatpush.bf16.msra.mxu0 %v80
  %95 = vmatpush.bf16.msra.mxu0 %v78
  %96 = vmatpush.bf16.msra.mxu0 %v76
  %97 = vmatpush.bf16.msra.mxu0 %v74
  %98 = vmatpush.bf16.msra.mxu0 %v72
  %99 = vmatpush.bf16.msra.mxu0 %v70
  %100 = vmatmul.bf16.gmra.mxu0 %v30
  %v101 = vpop.f32.mrf.mxu0
  %v102 = vadd.f32 %v88, %v101
  %v103 = vpop.f32.mrf.mxu0
  %v104 = vadd.f32 %v88, %v103
  %105 = vmatmul.bf16.gmra.mxu0 %v31
  %v106 = vpop.f32.mrf.mxu0
  %v107 = vadd.f32 %v88, %v106
  %v108 = vpop.f32.mrf.mxu0
  %v109 = vadd.f32 %v88, %v108
  %110 = vmatmul.bf16.gmra.mxu0 %v32
  %v111 = vpop.f32.mrf.mxu0
  %v112 = vadd.f32 %v88, %v111
  %v113 = vpop.f32.mrf.mxu0
  %v114 = vadd.f32 %v88, %v113
  %115 = vmatmul.bf16.gmra.mxu0 %v33
  %v116 = vpop.f32.mrf.mxu0
  %v117 = vadd.f32 %v88, %v116
  %v118 = vpop.f32.mrf.mxu0
  %v119 = vadd.f32 %v88, %v118
  %120 = vmatmul.bf16.gmra.mxu0 %v34
  %v121 = vpop.f32.mrf.mxu0
  %v122 = vadd.f32 %v88, %v121
  %v123 = vpop.f32.mrf.mxu0
  %v124 = vadd.f32 %v88, %v123
  %125 = vmatmul.bf16.gmra.mxu0 %v35
  %v126 = vpop.f32.mrf.mxu0
  %v127 = vadd.f32 %v88, %v126
  %v128 = vpop.f32.mrf.mxu0
  %v129 = vadd.f32 %v88, %v128
  %130 = vmatmul.bf16.gmra.mxu0 %v36
  %v131 = vpop.f32.mrf.mxu0
  %v132 = vadd.f32 %v88, %v131
  %v133 = vpop.f32.mrf.mxu0
  %v134 = vadd.f32 %v88, %v133
  %135 = vmatmul.bf16.gmra.mxu0 %v37
  %v136 = vpop.f32.mrf.mxu0
  %v137 = vadd.f32 %v88, %v136
  %v138 = vpop.f32.mrf.mxu0
  %v139 = vadd.f32 %v88, %v138
  %140 = vdwg.mxu0
  %141 = vmatpush.bf16.msra.mxu0 %v85
  %142 = vmatpush.bf16.msra.mxu0 %v83
  %143 = vmatpush.bf16.msra.mxu0 %v81
  %144 = vmatpush.bf16.msra.mxu0 %v79
  %145 = vmatpush.bf16.msra.mxu0 %v77
  %146 = vmatpush.bf16.msra.mxu0 %v75
  %147 = vmatpush.bf16.msra.mxu0 %v73
  %148 = vmatpush.bf16.msra.mxu0 %v71
  %149 = vmatmul.bf16.gmra.mxu0 %v30
  %v150 = vpop.f32.mrf.mxu0
  %v151 = vadd.f32 %v89, %v150
  %v152 = vpop.f32.mrf.mxu0
  %v153 = vadd.f32 %v89, %v152
  %154 = vmatmul.bf16.gmra.mxu0 %v31
  %v155 = vpop.f32.mrf.mxu0
  %v156 = vadd.f32 %v89, %v155
  %v157 = vpop.f32.mrf.mxu0
  %v158 = vadd.f32 %v89, %v157
  %159 = vmatmul.bf16.gmra.mxu0 %v32
  %v160 = vpop.f32.mrf.mxu0
  %v161 = vadd.f32 %v89, %v160
  %v162 = vpop.f32.mrf.mxu0
  %v163 = vadd.f32 %v89, %v162
  %164 = vmatmul.bf16.gmra.mxu0 %v33
  %v165 = vpop.f32.mrf.mxu0
  %v166 = vadd.f32 %v89, %v165
  %v167 = vpop.f32.mrf.mxu0
  %v168 = vadd.f32 %v89, %v167
  %169 = vmatmul.bf16.gmra.mxu0 %v34
  %v170 = vpop.f32.mrf.mxu0
  %v171 = vadd.f32 %v89, %v170
  %v172 = vpop.f32.mrf.mxu0
  %v173 = vadd.f32 %v89, %v172
  %174 = vmatmul.bf16.gmra.mxu0 %v35
  %v175 = vpop.f32.mrf.mxu0
  %v176 = vadd.f32 %v89, %v175
  %v177 = vpop.f32.mrf.mxu0
  %v178 = vadd.f32 %v89, %v177
  %179 = vmatmul.bf16.gmra.mxu0 %v36
  %v180 = vpop.f32.mrf.mxu0
  %v181 = vadd.f32 %v89, %v180
  %v182 = vpop.f32.mrf.mxu0
  %v183 = vadd.f32 %v89, %v182
  %184 = vmatmul.bf16.gmra.mxu0 %v37
  %v185 = vpop.f32.mrf.mxu0
  %v186 = vadd.f32 %v89, %v185
  %v187 = vpop.f32.mrf.mxu0
  %v188 = vadd.f32 %v89, %v187
  %189 = vdwg.mxu0
  %v190 = vmax.f32 %v102, 0.0
  %v191 = vmax.f32 %v151, 0.0
  %v192 = vmax.f32 %v104, 0.0
  %v193 = vmax.f32 %v153, 0.0
  %v194 = vmax.f32 %v107, 0.0
  %v195 = vmax.f32 %v156, 0.0
  %v196 = vmax.f32 %v109, 0.0
  %v197 = vmax.f32 %v158, 0.0
  %v198 = vmax.f32 %v112, 0.0
  %v199 = vmax.f32 %v161, 0.0
  %v200 = vmax.f32 %v114, 0.0
  %v201 = vmax.f32 %v163, 0.0
  %v202 = vmax.f32 %v117, 0.0
  %v203 = vmax.f32 %v166, 0.0
  %v204 = vmax.f32 %v119, 0.0
  %v205 = vmax.f32 %v168, 0.0
  %v206 = vmax.f32 %v122, 0.0
  %v207 = vmax.f32 %v171, 0.0
  %v208 = vmax.f32 %v124, 0.0
  %v209 = vmax.f32 %v173, 0.0
  %v210 = vmax.f32 %v127, 0.0
  %v211 = vmax.f32 %v176, 0.0
  %v212 = vmax.f32 %v129, 0.0
  %v213 = vmax.f32 %v178, 0.0
  %v214 = vmax.f32 %v132, 0.0
  %v215 = vmax.f32 %v181, 0.0
  %v216 = vmax.f32 %v134, 0.0
  %v217 = vmax.f32 %v183, 0.0
  %v218 = vmax.f32 %v137, 0.0
  %v219 = vmax.f32 %v186, 0.0
  %v220 = vmax.f32 %v139, 0.0
  %v221 = vmax.f32 %v188, 0.0
  %222 = vst [vmem:[%s3] sm:$0xff] %v190
  %223 = vst [vmem:[%s3 + $0x8] sm:$0xff] %v191
  %224 = vst [vmem:[%s3 + $0x10] sm:$0xff] %v192
  %225 = vst [vmem:[%s3 + $0x18] sm:$0xff] %v193
  %226 = vst [vmem:[%s3 + $0x20] sm:$0xff] %v194
  %227 = vst [vmem:[%s3 + $0x28] sm:$0xff] %v195
  %228 = vst [vmem:[%s3 + $0x30] sm:$0xff] %v196
  %229 = vst [vmem:[%s3 + $0x38] sm:$0xff] %v197
  %230 = vst [vmem:[%s3 + $0x40] sm:$0xff] %v198
  %231 = vst [vmem:[%s3 + $0x48] sm:$0xff] %v199
  %232 = vst [vmem:[%s3 + $0x50] sm:$0xff] %v200
  %233 = vst [vmem:[%s3 + $0x58] sm:$0xff] %v201
  %234 = vst [vmem:[%s3 + $0x60] sm:$0xff] %v202
  %235 = vst [vmem:[%s3 + $0x68] sm:$0xff] %v203
  %236 = vst [vmem:[%s3 + $0x70] sm:$0xff] %v204
  %237 = vst [vmem:[%s3 + $0x78] sm:$0xff] %v205
  %238 = vst [vmem:[%s3 + $0x80] sm:$0xff] %v206
  %239 = vst [vmem:[%s3 + $0x88] sm:$0xff] %v207
  %240 = vst [vmem:[%s3 + $0x90] sm:$0xff] %v208
  %241 = vst [vmem:[%s3 + $0x98] sm:$0xff] %v209
  %242 = vst [vmem:[%s3 + $0xa0] sm:$0xff] %v210
  %243 = vst [vmem:[%s3 + $0xa8] sm:$0xff] %v211
  %244 = vst [vmem:[%s3 + $0xb0] sm:$0xff] %v212
  %245 = vst [vmem:[%s3 + $0xb8] sm:$0xff] %v213
  %246 = vst [vmem:[%s3 + $0xc0] sm:$0xff] %v214
  %247 = vst [vmem:[%s3 + $0xc8] sm:$0xff] %v215
  %248 = vst [vmem:[%s3 + $0xd0] sm:$0xff] %v216
  %249 = vst [vmem:[%s3 + $0xd8] sm:$0xff] %v217
  %250 = vst [vmem:[%s3 + $0xe0] sm:$0xff] %v218
  %251 = vst [vmem:[%s3 + $0xe8] sm:$0xff] %v219
  %252 = vst [vmem:[%s3 + $0xf0] sm:$0xff] %v220
  %253 = vst [vmem:[%s3 + $0xf8] sm:$0xff] %v221
  // Predicated region
  $region14: #{mobilenet_forward.25} parent=0 // pred_check
    _
  $region15: #{mobilenet_forward.25} parent=0 // pred_check_branch
    %255 = sbr.rel (0) target = $region17
  $region16: #{mobilenet_forward.25} parent=0 // pred_region
    _
  $region17: #{mobilenet_forward.25} parent=0 // pred_fallthru
    _
  // Predicated region
  $region18: #{mobilenet_forward.25} parent=0 // pred_check
    _
  $region19: #{mobilenet_forward.25} parent=0 // pred_check_branch
    %257 = sbr.rel (0) target = $region21
  $region20: #{mobilenet_forward.25} parent=0 // pred_region
    _
  $region21: #{mobilenet_forward.25} parent=0 // pred_fallthru
    _

// kernel: mobilenet_forward.24
$region0: #{mobilenet_forward.24}
  #allocation0 [shape = 'u32[]', space=smem, size = 0x4, offset = 0x4, fixed_abs, tag = 'smem constant byte address 0x4 - core index']
  #allocation1 [shape = 'u32[72,128]{1,0:T(1,128)}', space=vmem, size = 0x9000, scoped, tag = 'internal scratch']
  %s0 = inlined_call_operand.vmem [shape: f32[128,128], index: 0, kind: input, shape index: {}]
  %s1 = inlined_call_operand.vmem [shape: f32[128,128], index: 1, kind: input, shape index: {}]
  %s2 = inlined_call_operand.vmem [shape: f32[128,128], index: 2, kind: input, shape index: {}]
  %s3 = inlined_call_operand.vmem [shape: f32[1,128], index: 3, kind: input, shape index: {}]
  %s4 = inlined_call_operand.vmem [shape: f32[128,128], index: 4, kind: input, shape index: {}]
  %s5 = inlined_call_operand.vmem [shape: f32[1,128], index: 5, kind: input, shape index: {}]
  %s6 = inlined_call_operand.vmem [shape: f32[128,128], index: 6, kind: output, shape index: {}]
  %s7 = sld [smem:[#allocation0]]
  $region34: #{mobilenet_forward.24} parent=0
    _
  %s9 = ssub.s32 1, %s7
  %s10 = scalar_select 0, %s9, %s7
  // Predicated region
  $region2: #{mobilenet_forward.24} parent=0 // pred_check
    _
  $region3: #{mobilenet_forward.24} parent=0 // pred_check_branch
    %12 = sbr.rel (0) target = $region5
  $region4: #{mobilenet_forward.24} parent=0 // pred_region
    _
  $region5: #{mobilenet_forward.24} parent=0 // pred_fallthru
    _
  // Predicated region
  $region6: #{mobilenet_forward.24} parent=0 // pred_check
    _
  $region7: #{mobilenet_forward.24} parent=0 // pred_check_branch
    %14 = sbr.rel (0) target = $region9
  $region8: #{mobilenet_forward.24} parent=0 // pred_region
    _
  $region9: #{mobilenet_forward.24} parent=0 // pred_fallthru
    _
  // Predicated region
  $region10: #{mobilenet_forward.24} parent=0 // pred_check
    _
  $region11: #{mobilenet_forward.24} parent=0 // pred_check_branch
    %16 = sbr.rel (0) target = $region13
  $region12: #{mobilenet_forward.24} parent=0 // pred_region
    _
  $region13: #{mobilenet_forward.24} parent=0 // pred_fallthru
    _
  // Predicated region
  $region14: #{mobilenet_forward.24} parent=0 // pred_check
    _
  $region15: #{mobilenet_forward.24} parent=0 // pred_check_branch
    %18 = sbr.rel (0) target = $region17
  $region16: #{mobilenet_forward.24} parent=0 // pred_region
    _
  $region17: #{mobilenet_forward.24} parent=0 // pred_fallthru
    _
  // Predicated region
  $region18: #{mobilenet_forward.24} parent=0 // pred_check
    _
  $region19: #{mobilenet_forward.24} parent=0 // pred_check_branch
    %20 = sbr.rel (0) target = $region21
  $region20: #{mobilenet_forward.24} parent=0 // pred_region
    _
  $region21: #{mobilenet_forward.24} parent=0 // pred_fallthru
    _
  // Predicated region
  $region22: #{mobilenet_forward.24} parent=0 // pred_check
    _
  $region23: #{mobilenet_forward.24} parent=0 // pred_check_branch
    %22 = sbr.rel (0) target = $region25
  $region24: #{mobilenet_forward.24} parent=0 // pred_region
    _
  $region25: #{mobilenet_forward.24} parent=0 // pred_fallthru
    _
  %v23 = vld [vmem:[%s0] sm:$0xff]
  %v24 = vld [vmem:[%s0 + $0x8] sm:$0xff]
  %v25 = vld [vmem:[%s0 + $0x10] sm:$0xff]
  %v26 = vld [vmem:[%s0 + $0x18] sm:$0xff]
  %v27 = vld [vmem:[%s0 + $0x20] sm:$0xff]
  %v28 = vld [vmem:[%s0 + $0x28] sm:$0xff]
  %v29 = vld [vmem:[%s0 + $0x30] sm:$0xff]
  %v30 = vld [vmem:[%s0 + $0x38] sm:$0xff]
  %v31 = vld [vmem:[%s0 + $0x40] sm:$0xff]
  %v32 = vld [vmem:[%s0 + $0x48] sm:$0xff]
  %v33 = vld [vmem:[%s0 + $0x50] sm:$0xff]
  %v34 = vld [vmem:[%s0 + $0x58] sm:$0xff]
  %v35 = vld [vmem:[%s0 + $0x60] sm:$0xff]
  %v36 = vld [vmem:[%s0 + $0x68] sm:$0xff]
  %v37 = vld [vmem:[%s0 + $0x70] sm:$0xff]
  %v38 = vld [vmem:[%s0 + $0x78] sm:$0xff]
  %v39 = vpack.c.bf16 %v24, %v23
  %v40 = vpack.c.bf16 %v26, %v25
  %v41 = vpack.c.bf16 %v28, %v27
  %v42 = vpack.c.bf16 %v30, %v29
  %v43 = vpack.c.bf16 %v32, %v31
  %v44 = vpack.c.bf16 %v34, %v33
  %v45 = vpack.c.bf16 %v36, %v35
  %v46 = vpack.c.bf16 %v38, %v37
  %v47 = vld [vmem:[%s2] sm:$0xff]
  %v48 = vld [vmem:[%s2 + $0x8] sm:$0xff]
  %v49 = vld [vmem:[%s2 + $0x10] sm:$0xff]
  %v50 = vld [vmem:[%s2 + $0x18] sm:$0xff]
  %v51 = vld [vmem:[%s2 + $0x20] sm:$0xff]
  %v52 = vld [vmem:[%s2 + $0x28] sm:$0xff]
  %v53 = vld [vmem:[%s2 + $0x30] sm:$0xff]
  %v54 = vld [vmem:[%s2 + $0x38] sm:$0xff]
  %v55 = vld [vmem:[%s2 + $0x40] sm:$0xff]
  %v56 = vld [vmem:[%s2 + $0x48] sm:$0xff]
  %v57 = vld [vmem:[%s2 + $0x50] sm:$0xff]
  %v58 = vld [vmem:[%s2 + $0x58] sm:$0xff]
  %v59 = vld [vmem:[%s2 + $0x60] sm:$0xff]
  %v60 = vld [vmem:[%s2 + $0x68] sm:$0xff]
  %v61 = vld [vmem:[%s2 + $0x70] sm:$0xff]
  %v62 = vld [vmem:[%s2 + $0x78] sm:$0xff]
  %v63 = vpack.c.bf16 %v48, %v47
  %v64 = vpack.c.bf16 %v50, %v49
  %v65 = vpack.c.bf16 %v52, %v51
  %v66 = vpack.c.bf16 %v54, %v53
  %v67 = vpack.c.bf16 %v56, %v55
  %v68 = vpack.c.bf16 %v58, %v57
  %v69 = vpack.c.bf16 %v60, %v59
  %v70 = vpack.c.bf16 %v62, %v61
  %v71 = vld [vmem:[%s3] sm:$0x1]
  %v73 = vperm.slane %v71, 0
  %75 = vmatpush.bf16.msra.mxu0 %v70
  %76 = vmatpush.bf16.msra.mxu0 %v69
  %77 = vmatpush.bf16.msra.mxu0 %v68
  %78 = vmatpush.bf16.msra.mxu0 %v67
  %79 = vmatpush.bf16.msra.mxu0 %v66
  %80 = vmatpush.bf16.msra.mxu0 %v65
  %81 = vmatpush.bf16.msra.mxu0 %v64
  %82 = vmatpush.bf16.msra.mxu0 %v63
  %83 = vmatmul.bf16.gmra.mxu0 %v39
  %v84 = vpop.f32.mrf.mxu0
  %v85 = vadd.f32 %v73, %v84
  %v86 = vpop.f32.mrf.mxu0
  %v87 = vadd.f32 %v73, %v86
  %88 = vmatmul.bf16.gmra.mxu0 %v40
  %v89 = vpop.f32.mrf.mxu0
  %v90 = vadd.f32 %v73, %v89
  %v91 = vpop.f32.mrf.mxu0
  %v92 = vadd.f32 %v73, %v91
  %93 = vmatmul.bf16.gmra.mxu0 %v41
  %v94 = vpop.f32.mrf.mxu0
  %v95 = vadd.f32 %v73, %v94
  %v96 = vpop.f32.mrf.mxu0
  %v97 = vadd.f32 %v73, %v96
  %98 = vmatmul.bf16.gmra.mxu0 %v42
  %v99 = vpop.f32.mrf.mxu0
  %v100 = vadd.f32 %v73, %v99
  %v101 = vpop.f32.mrf.mxu0
  %v102 = vadd.f32 %v73, %v101
  %103 = vmatmul.bf16.gmra.mxu0 %v43
  %v104 = vpop.f32.mrf.mxu0
  %v105 = vadd.f32 %v73, %v104
  %v106 = vpop.f32.mrf.mxu0
  %v107 = vadd.f32 %v73, %v106
  %108 = vmatmul.bf16.gmra.mxu0 %v44
  %v109 = vpop.f32.mrf.mxu0
  %v110 = vadd.f32 %v73, %v109
  %v111 = vpop.f32.mrf.mxu0
  %v112 = vadd.f32 %v73, %v111
  %113 = vmatmul.bf16.gmra.mxu0 %v45
  %v114 = vpop.f32.mrf.mxu0
  %v115 = vadd.f32 %v73, %v114
  %v116 = vpop.f32.mrf.mxu0
  %v117 = vadd.f32 %v73, %v116
  %118 = vmatmul.bf16.gmra.mxu0 %v46
  %v119 = vpop.f32.mrf.mxu0
  %v120 = vadd.f32 %v73, %v119
  %v121 = vpop.f32.mrf.mxu0
  %v122 = vadd.f32 %v73, %v121
  %123 = vdwg.mxu0
  %v124 = vld [vmem:[%s1] sm:$0xff]
  %v125 = vld [vmem:[%s1 + $0x8] sm:$0xff]
  %v126 = vld [vmem:[%s1 + $0x10] sm:$0xff]
  %v127 = vld [vmem:[%s1 + $0x18] sm:$0xff]
  %v128 = vld [vmem:[%s1 + $0x20] sm:$0xff]
  %v129 = vld [vmem:[%s1 + $0x28] sm:$0xff]
  %v130 = vld [vmem:[%s1 + $0x30] sm:$0xff]
  %v131 = vld [vmem:[%s1 + $0x38] sm:$0xff]
  %v132 = vld [vmem:[%s1 + $0x40] sm:$0xff]
  %v133 = vld [vmem:[%s1 + $0x48] sm:$0xff]
  %v134 = vld [vmem:[%s1 + $0x50] sm:$0xff]
  %v135 = vld [vmem:[%s1 + $0x58] sm:$0xff]
  %v136 = vld [vmem:[%s1 + $0x60] sm:$0xff]
  %v137 = vld [vmem:[%s1 + $0x68] sm:$0xff]
  %v138 = vld [vmem:[%s1 + $0x70] sm:$0xff]
  %v139 = vld [vmem:[%s1 + $0x78] sm:$0xff]
  %v140 = vpack.c.bf16 %v125, %v124
  %v141 = vpack.c.bf16 %v127, %v126
  %v142 = vpack.c.bf16 %v129, %v128
  %v143 = vpack.c.bf16 %v131, %v130
  %v144 = vpack.c.bf16 %v133, %v132
  %v145 = vpack.c.bf16 %v135, %v134
  %v146 = vpack.c.bf16 %v137, %v136
  %v147 = vpack.c.bf16 %v139, %v138
  %v148 = vld [vmem:[%s4] sm:$0xff]
  %v149 = vld [vmem:[%s4 + $0x8] sm:$0xff]
  %v150 = vld [vmem:[%s4 + $0x10] sm:$0xff]
  %v151 = vld [vmem:[%s4 + $0x18] sm:$0xff]
  %v152 = vld [vmem:[%s4 + $0x20] sm:$0xff]
  %v153 = vld [vmem:[%s4 + $0x28] sm:$0xff]
  %v154 = vld [vmem:[%s4 + $0x30] sm:$0xff]
  %v155 = vld [vmem:[%s4 + $0x38] sm:$0xff]
  %v156 = vld [vmem:[%s4 + $0x40] sm:$0xff]
  %v157 = vld [vmem:[%s4 + $0x48] sm:$0xff]
  %v158 = vld [vmem:[%s4 + $0x50] sm:$0xff]
  %v159 = vld [vmem:[%s4 + $0x58] sm:$0xff]
  %v160 = vld [vmem:[%s4 + $0x60] sm:$0xff]
  %v161 = vld [vmem:[%s4 + $0x68] sm:$0xff]
  %v162 = vld [vmem:[%s4 + $0x70] sm:$0xff]
  %v163 = vld [vmem:[%s4 + $0x78] sm:$0xff]
  %v164 = vpack.c.bf16 %v149, %v148
  %v165 = vpack.c.bf16 %v151, %v150
  %v166 = vpack.c.bf16 %v153, %v152
  %v167 = vpack.c.bf16 %v155, %v154
  %v168 = vpack.c.bf16 %v157, %v156
  %v169 = vpack.c.bf16 %v159, %v158
  %v170 = vpack.c.bf16 %v161, %v160
  %v171 = vpack.c.bf16 %v163, %v162
  %v172 = vld [vmem:[%s5] sm:$0x1]
  %v174 = vperm.slane %v172, 0
  %176 = vmatpush.bf16.msra.mxu0 %v171
  %177 = vmatpush.bf16.msra.mxu0 %v170
  %178 = vmatpush.bf16.msra.mxu0 %v169
  %179 = vmatpush.bf16.msra.mxu0 %v168
  %180 = vmatpush.bf16.msra.mxu0 %v167
  %181 = vmatpush.bf16.msra.mxu0 %v166
  %182 = vmatpush.bf16.msra.mxu0 %v165
  %183 = vmatpush.bf16.msra.mxu0 %v164
  %184 = vmatmul.bf16.gmra.mxu0 %v140
  %v185 = vpop.f32.mrf.mxu0
  %v186 = vadd.f32 %v174, %v185
  %v187 = vpop.f32.mrf.mxu0
  %v188 = vadd.f32 %v174, %v187
  %189 = vmatmul.bf16.gmra.mxu0 %v141
  %v190 = vpop.f32.mrf.mxu0
  %v191 = vadd.f32 %v174, %v190
  %v192 = vpop.f32.mrf.mxu0
  %v193 = vadd.f32 %v174, %v192
  %194 = vmatmul.bf16.gmra.mxu0 %v142
  %v195 = vpop.f32.mrf.mxu0
  %v196 = vadd.f32 %v174, %v195
  %v197 = vpop.f32.mrf.mxu0
  %v198 = vadd.f32 %v174, %v197
  %199 = vmatmul.bf16.gmra.mxu0 %v143
  %v200 = vpop.f32.mrf.mxu0
  %v201 = vadd.f32 %v174, %v200
  %v202 = vpop.f32.mrf.mxu0
  %v203 = vadd.f32 %v174, %v202
  %204 = vmatmul.bf16.gmra.mxu0 %v144
  %v205 = vpop.f32.mrf.mxu0
  %v206 = vadd.f32 %v174, %v205
  %v207 = vpop.f32.mrf.mxu0
  %v208 = vadd.f32 %v174, %v207
  %209 = vmatmul.bf16.gmra.mxu0 %v145
  %v210 = vpop.f32.mrf.mxu0
  %v211 = vadd.f32 %v174, %v210
  %v212 = vpop.f32.mrf.mxu0
  %v213 = vadd.f32 %v174, %v212
  %214 = vmatmul.bf16.gmra.mxu0 %v146
  %v215 = vpop.f32.mrf.mxu0
  %v216 = vadd.f32 %v174, %v215
  %v217 = vpop.f32.mrf.mxu0
  %v218 = vadd.f32 %v174, %v217
  %219 = vmatmul.bf16.gmra.mxu0 %v147
  %v220 = vpop.f32.mrf.mxu0
  %v221 = vadd.f32 %v174, %v220
  %v222 = vpop.f32.mrf.mxu0
  %v223 = vadd.f32 %v174, %v222
  %224 = vdwg.mxu0
  %v225 = vadd.f32 %v85, %v186
  %v226 = vadd.f32 %v87, %v188
  %v227 = vadd.f32 %v90, %v191
  %v228 = vadd.f32 %v92, %v193
  %v229 = vadd.f32 %v95, %v196
  %v230 = vadd.f32 %v97, %v198
  %v231 = vadd.f32 %v100, %v201
  %v232 = vadd.f32 %v102, %v203
  %v233 = vadd.f32 %v105, %v206
  %v234 = vadd.f32 %v107, %v208
  %v235 = vadd.f32 %v110, %v211
  %v236 = vadd.f32 %v112, %v213
  %v237 = vadd.f32 %v115, %v216
  %v238 = vadd.f32 %v117, %v218
  %v239 = vadd.f32 %v120, %v221
  %v240 = vadd.f32 %v122, %v223
  %241 = vst [vmem:[%s6] sm:$0xff] %v225
  %242 = vst [vmem:[%s6 + $0x8] sm:$0xff] %v226
  %243 = vst [vmem:[%s6 + $0x10] sm:$0xff] %v227
  %244 = vst [vmem:[%s6 + $0x18] sm:$0xff] %v228
  %245 = vst [vmem:[%s6 + $0x20] sm:$0xff] %v229
  %246 = vst [vmem:[%s6 + $0x28] sm:$0xff] %v230
  %247 = vst [vmem:[%s6 + $0x30] sm:$0xff] %v231
  %248 = vst [vmem:[%s6 + $0x38] sm:$0xff] %v232
  %249 = vst [vmem:[%s6 + $0x40] sm:$0xff] %v233
  %250 = vst [vmem:[%s6 + $0x48] sm:$0xff] %v234
  %251 = vst [vmem:[%s6 + $0x50] sm:$0xff] %v235
  %252 = vst [vmem:[%s6 + $0x58] sm:$0xff] %v236
  %253 = vst [vmem:[%s6 + $0x60] sm:$0xff] %v237
  %254 = vst [vmem:[%s6 + $0x68] sm:$0xff] %v238
  %255 = vst [vmem:[%s6 + $0x70] sm:$0xff] %v239
  %256 = vst [vmem:[%s6 + $0x78] sm:$0xff] %v240
  // Predicated region
  $region26: #{mobilenet_forward.24} parent=0 // pred_check
    _
  $region27: #{mobilenet_forward.24} parent=0 // pred_check_branch
    %258 = sbr.rel (0) target = $region29
  $region28: #{mobilenet_forward.24} parent=0 // pred_region
    _
  $region29: #{mobilenet_forward.24} parent=0 // pred_fallthru
    _
  // Predicated region
  $region30: #{mobilenet_forward.24} parent=0 // pred_check
    _
  $region31: #{mobilenet_forward.24} parent=0 // pred_check_branch
    %260 = sbr.rel (0) target = $region33
  $region32: #{mobilenet_forward.24} parent=0 // pred_region
    _
  $region33: #{mobilenet_forward.24} parent=0 // pred_fallthru
    _

// kernel: mobilenet_forward.28
$region0: #{mobilenet_forward.28}
  #allocation0 [shape = 'u32[]', space=smem, size = 0x4, offset = 0x4, fixed_abs, tag = 'smem constant byte address 0x4 - core index']
  #allocation1 [shape = 'u32[72,128]{1,0:T(1,128)}', space=vmem, size = 0x9000, scoped, tag = 'internal scratch']
  %s0 = inlined_call_operand.vmem [shape: f32[32,128], index: 0, kind: input, shape index: {}]
  %s1 = inlined_call_operand.vmem [shape: f32[128,384], index: 1, kind: input, shape index: {}]
  %s2 = inlined_call_operand.vmem [shape: f32[1,384], index: 2, kind: input, shape index: {}]
  %s3 = inlined_call_operand.vmem [shape: f32[32,384], index: 3, kind: output, shape index: {}]
  %s4 = sld [smem:[#allocation0]]
  $region22: #{mobilenet_forward.28} parent=0
    _
  %s6 = ssub.s32 1, %s4
  %s7 = scalar_select 0, %s6, %s4
  // Predicated region
  $region2: #{mobilenet_forward.28} parent=0 // pred_check
    _
  $region3: #{mobilenet_forward.28} parent=0 // pred_check_branch
    %9 = sbr.rel (0) target = $region5
  $region4: #{mobilenet_forward.28} parent=0 // pred_region
    _
  $region5: #{mobilenet_forward.28} parent=0 // pred_fallthru
    _
  // Predicated region
  $region6: #{mobilenet_forward.28} parent=0 // pred_check
    _
  $region7: #{mobilenet_forward.28} parent=0 // pred_check_branch
    %11 = sbr.rel (0) target = $region9
  $region8: #{mobilenet_forward.28} parent=0 // pred_region
    _
  $region9: #{mobilenet_forward.28} parent=0 // pred_fallthru
    _
  // Predicated region
  $region10: #{mobilenet_forward.28} parent=0 // pred_check
    _
  $region11: #{mobilenet_forward.28} parent=0 // pred_check_branch
    %13 = sbr.rel (0) target = $region13
  $region12: #{mobilenet_forward.28} parent=0 // pred_region
    _
  $region13: #{mobilenet_forward.28} parent=0 // pred_fallthru
    _
  %v14 = vld [vmem:[%s0] sm:$0xff]
  %v15 = vld [vmem:[%s0 + $0x8] sm:$0xff]
  %v16 = vld [vmem:[%s0 + $0x10] sm:$0xff]
  %v17 = vld [vmem:[%s0 + $0x18] sm:$0xff]
  %v18 = vpack.c.bf16 %v15, %v14
  %v19 = vpack.c.bf16 %v17, %v16
  %v20 = vld [vmem:[%s1] sm:$0xff]
  %v21 = vld [vmem:[%s1 + $0x8] sm:$0xff]
  %v22 = vld [vmem:[%s1 + $0x10] sm:$0xff]
  %v23 = vld [vmem:[%s1 + $0x18] sm:$0xff]
  %v24 = vld [vmem:[%s1 + $0x20] sm:$0xff]
  %v25 = vld [vmem:[%s1 + $0x28] sm:$0xff]
  %v26 = vld [vmem:[%s1 + $0x30] sm:$0xff]
  %v27 = vld [vmem:[%s1 + $0x38] sm:$0xff]
  %v28 = vld [vmem:[%s1 + $0x40] sm:$0xff]
  %v29 = vld [vmem:[%s1 + $0x48] sm:$0xff]
  %v30 = vld [vmem:[%s1 + $0x50] sm:$0xff]
  %v31 = vld [vmem:[%s1 + $0x58] sm:$0xff]
  %v32 = vld [vmem:[%s1 + $0x60] sm:$0xff]
  %v33 = vld [vmem:[%s1 + $0x68] sm:$0xff]
  %v34 = vld [vmem:[%s1 + $0x70] sm:$0xff]
  %v35 = vld [vmem:[%s1 + $0x78] sm:$0xff]
  %v36 = vld [vmem:[%s1 + $0x80] sm:$0xff]
  %v37 = vld [vmem:[%s1 + $0x88] sm:$0xff]
  %v38 = vld [vmem:[%s1 + $0x90] sm:$0xff]
  %v39 = vld [vmem:[%s1 + $0x98] sm:$0xff]
  %v40 = vld [vmem:[%s1 + $0xa0] sm:$0xff]
  %v41 = vld [vmem:[%s1 + $0xa8] sm:$0xff]
  %v42 = vld [vmem:[%s1 + $0xb0] sm:$0xff]
  %v43 = vld [vmem:[%s1 + $0xb8] sm:$0xff]
  %v44 = vld [vmem:[%s1 + $0xc0] sm:$0xff]
  %v45 = vld [vmem:[%s1 + $0xc8] sm:$0xff]
  %v46 = vld [vmem:[%s1 + $0xd0] sm:$0xff]
  %v47 = vld [vmem:[%s1 + $0xd8] sm:$0xff]
  %v48 = vld [vmem:[%s1 + $0xe0] sm:$0xff]
  %v49 = vld [vmem:[%s1 + $0xe8] sm:$0xff]
  %v50 = vld [vmem:[%s1 + $0xf0] sm:$0xff]
  %v51 = vld [vmem:[%s1 + $0xf8] sm:$0xff]
  %v52 = vld [vmem:[%s1 + $0x100] sm:$0xff]
  %v53 = vld [vmem:[%s1 + $0x108] sm:$0xff]
  %v54 = vld [vmem:[%s1 + $0x110] sm:$0xff]
  %v55 = vld [vmem:[%s1 + $0x118] sm:$0xff]
  %v56 = vld [vmem:[%s1 + $0x120] sm:$0xff]
  %v57 = vld [vmem:[%s1 + $0x128] sm:$0xff]
  %v58 = vld [vmem:[%s1 + $0x130] sm:$0xff]
  %v59 = vld [vmem:[%s1 + $0x138] sm:$0xff]
  %v60 = vld [vmem:[%s1 + $0x140] sm:$0xff]
  %v61 = vld [vmem:[%s1 + $0x148] sm:$0xff]
  %v62 = vld [vmem:[%s1 + $0x150] sm:$0xff]
  %v63 = vld [vmem:[%s1 + $0x158] sm:$0xff]
  %v64 = vld [vmem:[%s1 + $0x160] sm:$0xff]
  %v65 = vld [vmem:[%s1 + $0x168] sm:$0xff]
  %v66 = vld [vmem:[%s1 + $0x170] sm:$0xff]
  %v67 = vld [vmem:[%s1 + $0x178] sm:$0xff]
  %v68 = vpack.c.bf16 %v23, %v20
  %v69 = vpack.c.bf16 %v24, %v21
  %v70 = vpack.c.bf16 %v25, %v22
  %v71 = vpack.c.bf16 %v29, %v26
  %v72 = vpack.c.bf16 %v30, %v27
  %v73 = vpack.c.bf16 %v31, %v28
  %v74 = vpack.c.bf16 %v35, %v32
  %v75 = vpack.c.bf16 %v36, %v33
  %v76 = vpack.c.bf16 %v37, %v34
  %v77 = vpack.c.bf16 %v41, %v38
  %v78 = vpack.c.bf16 %v42, %v39
  %v79 = vpack.c.bf16 %v43, %v40
  %v80 = vpack.c.bf16 %v47, %v44
  %v81 = vpack.c.bf16 %v48, %v45
  %v82 = vpack.c.bf16 %v49, %v46
  %v83 = vpack.c.bf16 %v53, %v50
  %v84 = vpack.c.bf16 %v54, %v51
  %v85 = vpack.c.bf16 %v55, %v52
  %v86 = vpack.c.bf16 %v59, %v56
  %v87 = vpack.c.bf16 %v60, %v57
  %v88 = vpack.c.bf16 %v61, %v58
  %v89 = vpack.c.bf16 %v65, %v62
  %v90 = vpack.c.bf16 %v66, %v63
  %v91 = vpack.c.bf16 %v67, %v64
  %v92 = vld [vmem:[%s2] sm:$0x7]
  %v94 = vperm.slane %v92, 0
  %v95 = vperm.slane %v92, 1
  %v96 = vperm.slane %v92, 2
  %100 = vmatpush.bf16.msra.mxu0 %v89
  %101 = vmatpush.bf16.msra.mxu0 %v86
  %102 = vmatpush.bf16.msra.mxu0 %v83
  %103 = vmatpush.bf16.msra.mxu0 %v80
  %104 = vmatpush.bf16.msra.mxu0 %v77
  %105 = vmatpush.bf16.msra.mxu0 %v74
  %106 = vmatpush.bf16.msra.mxu0 %v71
  %107 = vmatpush.bf16.msra.mxu0 %v68
  %108 = vmatmul.bf16.gmra.mxu0 %v18
  %v109 = vpop.f32.mrf.mxu0
  %v110 = vadd.f32 %v94, %v109
  %v111 = vpop.f32.mrf.mxu0
  %v112 = vadd.f32 %v94, %v111
  %113 = vmatmul.bf16.gmra.mxu0 %v19
  %v114 = vpop.f32.mrf.mxu0
  %v115 = vadd.f32 %v94, %v114
  %v116 = vpop.f32.mrf.mxu0
  %v117 = vadd.f32 %v94, %v116
  %118 = vdwg.mxu0
  %119 = vmatpush.bf16.msra.mxu0 %v90
  %120 = vmatpush.bf16.msra.mxu0 %v87
  %121 = vmatpush.bf16.msra.mxu0 %v84
  %122 = vmatpush.bf16.msra.mxu0 %v81
  %123 = vmatpush.bf16.msra.mxu0 %v78
  %124 = vmatpush.bf16.msra.mxu0 %v75
  %125 = vmatpush.bf16.msra.mxu0 %v72
  %126 = vmatpush.bf16.msra.mxu0 %v69
  %127 = vmatmul.bf16.gmra.mxu0 %v18
  %v128 = vpop.f32.mrf.mxu0
  %v129 = vadd.f32 %v95, %v128
  %v130 = vpop.f32.mrf.mxu0
  %v131 = vadd.f32 %v95, %v130
  %132 = vmatmul.bf16.gmra.mxu0 %v19
  %v133 = vpop.f32.mrf.mxu0
  %v134 = vadd.f32 %v95, %v133
  %v135 = vpop.f32.mrf.mxu0
  %v136 = vadd.f32 %v95, %v135
  %137 = vdwg.mxu0
  %138 = vmatpush.bf16.msra.mxu0 %v91
  %139 = vmatpush.bf16.msra.mxu0 %v88
  %140 = vmatpush.bf16.msra.mxu0 %v85
  %141 = vmatpush.bf16.msra.mxu0 %v82
  %142 = vmatpush.bf16.msra.mxu0 %v79
  %143 = vmatpush.bf16.msra.mxu0 %v76
  %144 = vmatpush.bf16.msra.mxu0 %v73
  %145 = vmatpush.bf16.msra.mxu0 %v70
  %146 = vmatmul.bf16.gmra.mxu0 %v18
  %v147 = vpop.f32.mrf.mxu0
  %v148 = vadd.f32 %v96, %v147
  %v149 = vpop.f32.mrf.mxu0
  %v150 = vadd.f32 %v96, %v149
  %151 = vmatmul.bf16.gmra.mxu0 %v19
  %v152 = vpop.f32.mrf.mxu0
  %v153 = vadd.f32 %v96, %v152
  %v154 = vpop.f32.mrf.mxu0
  %v155 = vadd.f32 %v96, %v154
  %156 = vdwg.mxu0
  %v157 = vmax.f32 %v110, 0.0
  %v158 = vmax.f32 %v129, 0.0
  %v159 = vmax.f32 %v148, 0.0
  %v160 = vmax.f32 %v112, 0.0
  %v161 = vmax.f32 %v131, 0.0
  %v162 = vmax.f32 %v150, 0.0
  %v163 = vmax.f32 %v115, 0.0
  %v164 = vmax.f32 %v134, 0.0
  %v165 = vmax.f32 %v153, 0.0
  %v166 = vmax.f32 %v117, 0.0
  %v167 = vmax.f32 %v136, 0.0
  %v168 = vmax.f32 %v155, 0.0
  %169 = vst [vmem:[%s3] sm:$0xff] %v157
  %170 = vst [vmem:[%s3 + $0x8] sm:$0xff] %v158
  %171 = vst [vmem:[%s3 + $0x10] sm:$0xff] %v159
  %172 = vst [vmem:[%s3 + $0x18] sm:$0xff] %v160
  %173 = vst [vmem:[%s3 + $0x20] sm:$0xff] %v161
  %174 = vst [vmem:[%s3 + $0x28] sm:$0xff] %v162
  %175 = vst [vmem:[%s3 + $0x30] sm:$0xff] %v163
  %176 = vst [vmem:[%s3 + $0x38] sm:$0xff] %v164
  %177 = vst [vmem:[%s3 + $0x40] sm:$0xff] %v165
  %178 = vst [vmem:[%s3 + $0x48] sm:$0xff] %v166
  %179 = vst [vmem:[%s3 + $0x50] sm:$0xff] %v167
  %180 = vst [vmem:[%s3 + $0x58] sm:$0xff] %v168
  // Predicated region
  $region14: #{mobilenet_forward.28} parent=0 // pred_check
    _
  $region15: #{mobilenet_forward.28} parent=0 // pred_check_branch
    %182 = sbr.rel (0) target = $region17
  $region16: #{mobilenet_forward.28} parent=0 // pred_region
    _
  $region17: #{mobilenet_forward.28} parent=0 // pred_fallthru
    _
  // Predicated region
  $region18: #{mobilenet_forward.28} parent=0 // pred_check
    _
  $region19: #{mobilenet_forward.28} parent=0 // pred_check_branch
    %184 = sbr.rel (0) target = $region21
  $region20: #{mobilenet_forward.28} parent=0 // pred_region
    _
  $region21: #{mobilenet_forward.28} parent=0 // pred_fallthru
    _

// kernel: mobilenet_forward.20
$region0: #{mobilenet_forward.20}
  #allocation0 [shape = 'u32[]', space=smem, size = 0x4, offset = 0x4, fixed_abs, tag = 'smem constant byte address 0x4 - core index']
  #allocation1 [shape = 'u32[72,128]{1,0:T(1,128)}', space=vmem, size = 0x9000, scoped, tag = 'internal scratch']
  %s0 = inlined_call_operand.vmem [shape: f32[2,18,18,128], index: 0, kind: input, shape index: {}]
  %s1 = inlined_call_operand.vmem [shape: f32[9,128], index: 1, kind: input, shape index: {}]
  %s2 = inlined_call_operand.vmem [shape: f32[1,128], index: 2, kind: input, shape index: {}]
  %s3 = inlined_call_operand.vmem [shape: f32[2,16,16,128], index: 3, kind: output, shape index: {}]
  %s4 = sld [smem:[#allocation0]]
  $region22: #{mobilenet_forward.20} parent=0
    _
  %s6 = ssub.s32 1, %s4
  %s7 = scalar_select 0, %s6, %s4
  // Predicated region
  $region2: #{mobilenet_forward.20} parent=0 // pred_check
    _
  $region3: #{mobilenet_forward.20} parent=0 // pred_check_branch
    %9 = sbr.rel (0) target = $region5
  $region4: #{mobilenet_forward.20} parent=0 // pred_region
    _
  $region5: #{mobilenet_forward.20} parent=0 // pred_fallthru
    _
  // Predicated region
  $region6: #{mobilenet_forward.20} parent=0 // pred_check
    _
  $region7: #{mobilenet_forward.20} parent=0 // pred_check_branch
    %11 = sbr.rel (0) target = $region9
  $region8: #{mobilenet_forward.20} parent=0 // pred_region
    _
  $region9: #{mobilenet_forward.20} parent=0 // pred_fallthru
    _
  // Predicated region
  $region10: #{mobilenet_forward.20} parent=0 // pred_check
    _
  $region11: #{mobilenet_forward.20} parent=0 // pred_check_branch
    %13 = sbr.rel (0) target = $region13
  $region12: #{mobilenet_forward.20} parent=0 // pred_region
    _
  $region13: #{mobilenet_forward.20} parent=0 // pred_fallthru
    _
  %v14 = vld [vmem:[%s0] sm:$0xff]
  %v15 = vld [vmem:[%s0 + $0x8] sm:$0xff]
  %v16 = vld [vmem:[%s0 + $0x10] sm:$0x3]
  %v17 = vld [vmem:[%s0 + $0x18] sm:$0xff]
  %v18 = vld [vmem:[%s0 + $0x20] sm:$0xff]
  %v19 = vld [vmem:[%s0 + $0x28] sm:$0x3]
  %v20 = vld [vmem:[%s0 + $0x30] sm:$0xff]
  %v21 = vld [vmem:[%s0 + $0x38] sm:$0xff]
  %v22 = vld [vmem:[%s0 + $0x40] sm:$0x3]
  %v23 = vld [vmem:[%s0 + $0x48] sm:$0xff]
  %v24 = vld [vmem:[%s0 + $0x50] sm:$0xff]
  %v25 = vld [vmem:[%s0 + $0x58] sm:$0x3]
  %v26 = vld [vmem:[%s0 + $0x60] sm:$0xff]
  %v27 = vld [vmem:[%s0 + $0x68] sm:$0xff]
  %v28 = vld [vmem:[%s0 + $0x70] sm:$0x3]
  %v29 = vld [vmem:[%s0 + $0x78] sm:$0xff]
  %v30 = vld [vmem:[%s0 + $0x80] sm:$0xff]
  %v31 = vld [vmem:[%s0 + $0x88] sm:$0x3]
  %v32 = vld [vmem:[%s0 + $0x90] sm:$0xff]
  %v33 = vld [vmem:[%s0 + $0x98] sm:$0xff]
  %v34 = vld [vmem:[%s0 + $0xa0] sm:$0x3]
  %v35 = vld [vmem:[%s0 + $0xa8] sm:$0xff]
  %v36 = vld [vmem:[%s0 + $0xb0] sm:$0xff]
  %v37 = vld [vmem:[%s0 + $0xb8] sm:$0x3]
  %v38 = vld [vmem:[%s0 + $0xc0] sm:$0xff]
  %v39 = vld [vmem:[%s0 + $0xc8] sm:$0xff]
  %v40 = vld [vmem:[%s0 + $0xd0] sm:$0x3]
  %v41 = vld [vmem:[%s0 + $0xd8] sm:$0xff]
  %v42 = vld [vmem:[%s0 + $0xe0] sm:$0xff]
  %v43 = vld [vmem:[%s0 + $0xe8] sm:$0x3]
  %v44 = vld [vmem:[%s0 + $0xf0] sm:$0xff]
  %v45 = vld [vmem:[%s0 + $0xf8] sm:$0xff]
  %v46 = vld [vmem:[%s0 + $0x100] sm:$0x3]
  %v47 = vld [vmem:[%s0 + $0x108] sm:$0xff]
  %v48 = vld [vmem:[%s0 + $0x110] sm:$0xff]
  %v49 = vld [vmem:[%s0 + $0x118] sm:$0x3]
  %v50 = vld [vmem:[%s0 + $0x120] sm:$0xff]
  %v51 = vld [vmem:[%s0 + $0x128] sm:$0xff]
  %v52 = vld [vmem:[%s0 + $0x130] sm:$0x3]
  %v53 = vld [vmem:[%s0 + $0x138] sm:$0xff]
  %v54 = vld [vmem:[%s0 + $0x140] sm:$0xff]
  %v55 = vld [vmem:[%s0 + $0x148] sm:$0x3]
  %v56 = vld [vmem:[%s0 + $0x150] sm:$0xff]
  %v57 = vld [vmem:[%s0 + $0x158] sm:$0xff]
  %v58 = vld [vmem:[%s0 + $0x160] sm:$0x3]
  %v59 = vld [vmem:[%s0 + $0x168] sm:$0xff]
  %v60 = vld [vmem:[%s0 + $0x170] sm:$0xff]
  %v61 = vld [vmem:[%s0 + $0x178] sm:$0x3]
  %v62 = vld [vmem:[%s0 + $0x180] sm:$0xff]
  %v63 = vld [vmem:[%s0 + $0x188] sm:$0xff]
  %v64 = vld [vmem:[%s0 + $0x190] sm:$0x3]
  %v65 = vld [vmem:[%s0 + $0x198] sm:$0xff]
  %v66 = vld [vmem:[%s0 + $0x1a0] sm:$0xff]
  %v67 = vld [vmem:[%s0 + $0x1a8] sm:$0x3]
  %v68 = vld [vmem:[%s0 + $0x1b0] sm:$0xff]
  %v69 = vld [vmem:[%s0 + $0x1b8] sm:$0xff]
  %v70 = vld [vmem:[%s0 + $0x1c0] sm:$0x3]
  %v71 = vld [vmem:[%s0 + $0x1c8] sm:$0xff]
  %v72 = vld [vmem:[%s0 + $0x1d0] sm:$0xff]
  %v73 = vld [vmem:[%s0 + $0x1d8] sm:$0x3]
  %v74 = vld [vmem:[%s0 + $0x1e0] sm:$0xff]
  %v75 = vld [vmem:[%s0 + $0x1e8] sm:$0xff]
  %v76 = vld [vmem:[%s0 + $0x1f0] sm:$0x3]
  %v77 = vld [vmem:[%s0 + $0x1f8] sm:$0xff]
  %v78 = vld [vmem:[%s0 + $0x200] sm:$0xff]
  %v79 = vld [vmem:[%s0 + $0x208] sm:$0x3]
  %v80 = vld [vmem:[%s0 + $0x210] sm:$0xff]
  %v81 = vld [vmem:[%s0 + $0x218] sm:$0xff]
  %v82 = vld [vmem:[%s0 + $0x220] sm:$0x3]
  %v83 = vld [vmem:[%s0 + $0x228] sm:$0xff]
  %v84 = vld [vmem:[%s0 + $0x230] sm:$0xff]
  %v85 = vld [vmem:[%s0 + $0x238] sm:$0x3]
  %v86 = vld [vmem:[%s0 + $0x240] sm:$0xff]
  %v87 = vld [vmem:[%s0 + $0x248] sm:$0xff]
  %v88 = vld [vmem:[%s0 + $0x250] sm:$0x3]
  %v89 = vld [vmem:[%s0 + $0x258] sm:$0xff]
  %v90 = vld [vmem:[%s0 + $0x260] sm:$0xff]
  %v91 = vld [vmem:[%s0 + $0x268] sm:$0x3]
  %v92 = vld [vmem:[%s0 + $0x270] sm:$0xff]
  %v93 = vld [vmem:[%s0 + $0x278] sm:$0xff]
  %v94 = vld [vmem:[%s0 + $0x280] sm:$0x3]
  %v95 = vld [vmem:[%s0 + $0x288] sm:$0xff]
  %v96 = vld [vmem:[%s0 + $0x290] sm:$0xff]
  %v97 = vld [vmem:[%s0 + $0x298] sm:$0x3]
  %v98 = vld [vmem:[%s0 + $0x2a0] sm:$0xff]
  %v99 = vld [vmem:[%s0 + $0x2a8] sm:$0xff]
  %v100 = vld [vmem:[%s0 + $0x2b0] sm:$0x3]
  %v101 = vld [vmem:[%s0 + $0x2b8] sm:$0xff]
  %v102 = vld [vmem:[%s0 + $0x2c0] sm:$0xff]
  %v103 = vld [vmem:[%s0 + $0x2c8] sm:$0x3]
  %v104 = vld [vmem:[%s0 + $0x2d0] sm:$0xff]
  %v105 = vld [vmem:[%s0 + $0x2d8] sm:$0xff]
  %v106 = vld [vmem:[%s0 + $0x2e0] sm:$0x3]
  %v107 = vld [vmem:[%s0 + $0x2e8] sm:$0xff]
  %v108 = vld [vmem:[%s0 + $0x2f0] sm:$0xff]
  %v109 = vld [vmem:[%s0 + $0x2f8] sm:$0x3]
  %v110 = vld [vmem:[%s0 + $0x300] sm:$0xff]
  %v111 = vld [vmem:[%s0 + $0x308] sm:$0xff]
  %v112 = vld [vmem:[%s0 + $0x310] sm:$0x3]
  %v113 = vld [vmem:[%s0 + $0x318] sm:$0xff]
  %v114 = vld [vmem:[%s0 + $0x320] sm:$0xff]
  %v115 = vld [vmem:[%s0 + $0x328] sm:$0x3]
  %v116 = vld [vmem:[%s0 + $0x330] sm:$0xff]
  %v117 = vld [vmem:[%s0 + $0x338] sm:$0xff]
  %v118 = vld [vmem:[%s0 + $0x340] sm:$0x3]
  %v119 = vld [vmem:[%s0 + $0x348] sm:$0xff]
  %v120 = vld [vmem:[%s0 + $0x350] sm:$0xff]
  %v121 = vld [vmem:[%s0 + $0x358] sm:$0x3]
  %v122 = vld [vmem:[%s1] sm:$0xff]
  %v123 = vld [vmem:[%s1 + $0x8] sm:$0x1]
  %v124 = vperm.slane %v122, 0
  %v125 = vmul.f32 %v14, %v124
  %v126 = vmul.f32 %v15, %v124
  %v127 = vmul.f32 %v17, %v124
  %v128 = vmul.f32 %v18, %v124
  %v129 = vmul.f32 %v20, %v124
  %v130 = vmul.f32 %v21, %v124
  %v131 = vmul.f32 %v23, %v124
  %v132 = vmul.f32 %v24, %v124
  %v133 = vmul.f32 %v26, %v124
  %v134 = vmul.f32 %v27, %v124
  %v135 = vmul.f32 %v29, %v124
  %v136 = vmul.f32 %v30, %v124
  %v137 = vmul.f32 %v32, %v124
  %v138 = vmul.f32 %v33, %v124
  %v139 = vmul.f32 %v35, %v124
  %v140 = vmul.f32 %v36, %v124
  %v141 = vmul.f32 %v38, %v124
  %v142 = vmul.f32 %v39, %v124
  %v143 = vmul.f32 %v41, %v124
  %v144 = vmul.f32 %v42, %v124
  %v145 = vmul.f32 %v44, %v124
  %v146 = vmul.f32 %v45, %v124
  %v147 = vmul.f32 %v47, %v124
  %v148 = vmul.f32 %v48, %v124
  %v149 = vmul.f32 %v50, %v124
  %v150 = vmul.f32 %v51, %v124
  %v151 = vmul.f32 %v53, %v124
  %v152 = vmul.f32 %v54, %v124
  %v153 = vmul.f32 %v56, %v124
  %v154 = vmul.f32 %v57, %v124
  %v155 = vmul.f32 %v59, %v124
  %v156 = vmul.f32 %v60, %v124
  %v157 = vmul.f32 %v68, %v124
  %v158 = vmul.f32 %v69, %v124
  %v159 = vmul.f32 %v71, %v124
  %v160 = vmul.f32 %v72, %v124
  %v161 = vmul.f32 %v74, %v124
  %v162 = vmul.f32 %v75, %v124
  %v163 = vmul.f32 %v77, %v124
  %v164 = vmul.f32 %v78, %v124
  %v165 = vmul.f32 %v80, %v124
  %v166 = vmul.f32 %v81, %v124
  %v167 = vmul.f32 %v83, %v124
  %v168 = vmul.f32 %v84, %v124
  %v169 = vmul.f32 %v86, %v124
  %v170 = vmul.f32 %v87, %v124
  %v171 = vmul.f32 %v89, %v124
  %v172 = vmul.f32 %v90, %v124
  %v173 = vmul.f32 %v92, %v124
  %v174 = vmul.f32 %v93, %v124
  %v175 = vmul.f32 %v95, %v124
  %v176 = vmul.f32 %v96, %v124
  %v177 = vmul.f32 %v98, %v124
  %v178 = vmul.f32 %v99, %v124
  %v179 = vmul.f32 %v101, %v124
  %v180 = vmul.f32 %v102, %v124
  %v181 = vmul.f32 %v104, %v124
  %v182 = vmul.f32 %v105, %v124
  %v183 = vmul.f32 %v107, %v124
  %v184 = vmul.f32 %v108, %v124
  %v185 = vmul.f32 %v110, %v124
  %v186 = vmul.f32 %v111, %v124
  %v187 = vmul.f32 %v113, %v124
  %v188 = vmul.f32 %v114, %v124
  %v189 = vperm.slane %v122, 1
  %v190 = vmul.f32 %v14, %v189
  %v191 = vmul.f32 %v15, %v189
  %v192 = vmul.f32 %v16, %v189
  %v193 = vmul.f32 %v17, %v189
  %v194 = vmul.f32 %v18, %v189
  %v195 = vmul.f32 %v19, %v189
  %v196 = vmul.f32 %v20, %v189
  %v197 = vmul.f32 %v21, %v189
  %v198 = vmul.f32 %v22, %v189
  %v199 = vmul.f32 %v23, %v189
  %v200 = vmul.f32 %v24, %v189
  %v201 = vmul.f32 %v25, %v189
  %v202 = vmul.f32 %v26, %v189
  %v203 = vmul.f32 %v27, %v189
  %v204 = vmul.f32 %v28, %v189
  %v205 = vmul.f32 %v29, %v189
  %v206 = vmul.f32 %v30, %v189
  %v207 = vmul.f32 %v31, %v189
  %v208 = vmul.f32 %v32, %v189
  %v209 = vmul.f32 %v33, %v189
  %v210 = vmul.f32 %v34, %v189
  %v211 = vmul.f32 %v35, %v189
  %v212 = vmul.f32 %v36, %v189
  %v213 = vmul.f32 %v37, %v189
  %v214 = vmul.f32 %v38, %v189
  %v215 = vmul.f32 %v39, %v189
  %v216 = vmul.f32 %v40, %v189
  %v217 = vmul.f32 %v41, %v189
  %v218 = vmul.f32 %v42, %v189
  %v219 = vmul.f32 %v43, %v189
  %v220 = vmul.f32 %v44, %v189
  %v221 = vmul.f32 %v45, %v189
  %v222 = vmul.f32 %v46, %v189
  %v223 = vmul.f32 %v47, %v189
  %v224 = vmul.f32 %v48, %v189
  %v225 = vmul.f32 %v49, %v189
  %v226 = vmul.f32 %v50, %v189
  %v227 = vmul.f32 %v51, %v189
  %v228 = vmul.f32 %v52, %v189
  %v229 = vmul.f32 %v53, %v189
  %v230 = vmul.f32 %v54, %v189
  %v231 = vmul.f32 %v55, %v189
  %v232 = vmul.f32 %v56, %v189
  %v233 = vmul.f32 %v57, %v189
  %v234 = vmul.f32 %v58, %v189
  %v235 = vmul.f32 %v59, %v189
  %v236 = vmul.f32 %v60, %v189
  %v237 = vmul.f32 %v61, %v189
  %v238 = vmul.f32 %v68, %v189
  %v239 = vmul.f32 %v69, %v189
  %v240 = vmul.f32 %v70, %v189
  %v241 = vmul.f32 %v71, %v189
  %v242 = vmul.f32 %v72, %v189
  %v243 = vmul.f32 %v73, %v189
  %v244 = vmul.f32 %v74, %v189
  %v245 = vmul.f32 %v75, %v189
  %v246 = vmul.f32 %v76, %v189
  %v247 = vmul.f32 %v77, %v189
  %v248 = vmul.f32 %v78, %v189
  %v249 = vmul.f32 %v79, %v189
  %v250 = vmul.f32 %v80, %v189
  %v251 = vmul.f32 %v81, %v189
  %v252 = vmul.f32 %v82, %v189
  %v253 = vmul.f32 %v83, %v189
  %v254 = vmul.f32 %v84, %v189
  %v255 = vmul.f32 %v85, %v189
  %v256 = vmul.f32 %v86, %v189
  %v257 = vmul.f32 %v87, %v189
  %v258 = vmul.f32 %v88, %v189
  %v259 = vmul.f32 %v89, %v189
  %v260 = vmul.f32 %v90, %v189
  %v261 = vmul.f32 %v91, %v189
  %v262 = vmul.f32 %v92, %v189
  %v263 = vmul.f32 %v93, %v189
  %v264 = vmul.f32 %v94, %v189
  %v265 = vmul.f32 %v95, %v189
  %v266 = vmul.f32 %v96, %v189
  %v267 = vmul.f32 %v97, %v189
  %v268 = vmul.f32 %v98, %v189
  %v269 = vmul.f32 %v99, %v189
  %v270 = vmul.f32 %v100, %v189
  %v271 = vmul.f32 %v101, %v189
  %v272 = vmul.f32 %v102, %v189
  %v273 = vmul.f32 %v103, %v189
  %v274 = vmul.f32 %v104, %v189
  %v275 = vmul.f32 %v105, %v189
  %v276 = vmul.f32 %v106, %v189
  %v277 = vmul.f32 %v107, %v189
  %v278 = vmul.f32 %v108, %v189
  %v279 = vmul.f32 %v109, %v189
  %v280 = vmul.f32 %v110, %v189
  %v281 = vmul.f32 %v111, %v189
  %v282 = vmul.f32 %v112, %v189
  %v283 = vmul.f32 %v113, %v189
  %v284 = vmul.f32 %v114, %v189
  %v285 = vmul.f32 %v115, %v189
  %vm382 = vcmask 1046528
  %v383 = vrot.slane %v190, 1
  %v384 = vrot.slane %v191, 1
  %v385 = vsel %vm382, %v383, %v384
  %v386 = vrot.slane %v192, 1
  %v387 = vsel %vm382, %v384, %v386
  %v388 = vrot.slane %v193, 1
  %v389 = vrot.slane %v194, 1
  %v390 = vsel %vm382, %v388, %v389
  %v391 = vrot.slane %v195, 1
  %v392 = vsel %vm382, %v389, %v391
  %v393 = vrot.slane %v196, 1
  %v394 = vrot.slane %v197, 1
  %v395 = vsel %vm382, %v393, %v394
  %v396 = vrot.slane %v198, 1
  %v397 = vsel %vm382, %v394, %v396
  %v398 = vrot.slane %v199, 1
  %v399 = vrot.slane %v200, 1
  %v400 = vsel %vm382, %v398, %v399
  %v401 = vrot.slane %v201, 1
  %v402 = vsel %vm382, %v399, %v401
  %v403 = vrot.slane %v202, 1
  %v404 = vrot.slane %v203, 1
  %v405 = vsel %vm382, %v403, %v404
  %v406 = vrot.slane %v204, 1
  %v407 = vsel %vm382, %v404, %v406
  %v408 = vrot.slane %v205, 1
  %v409 = vrot.slane %v206, 1
  %v410 = vsel %vm382, %v408, %v409
  %v411 = vrot.slane %v207, 1
  %v412 = vsel %vm382, %v409, %v411
  %v413 = vrot.slane %v208, 1
  %v414 = vrot.slane %v209, 1
  %v415 = vsel %vm382, %v413, %v414
  %v416 = vrot.slane %v210, 1
  %v417 = vsel %vm382, %v414, %v416
  %v418 = vrot.slane %v211, 1
  %v419 = vrot.slane %v212, 1
  %v420 = vsel %vm382, %v418, %v419
  %v421 = vrot.slane %v213, 1
  %v422 = vsel %vm382, %v419, %v421
  %v423 = vrot.slane %v214, 1
  %v424 = vrot.slane %v215, 1
  %v425 = vsel %vm382, %v423, %v424
  %v426 = vrot.slane %v216, 1
  %v427 = vsel %vm382, %v424, %v426
  %v428 = vrot.slane %v217, 1
  %v429 = vrot.slane %v218, 1
  %v430 = vsel %vm382, %v428, %v429
  %v431 = vrot.slane %v219, 1
  %v432 = vsel %vm382, %v429, %v431
  %v433 = vrot.slane %v220, 1
  %v434 = vrot.slane %v221, 1
  %v435 = vsel %vm382, %v433, %v434
  %v436 = vrot.slane %v222, 1
  %v437 = vsel %vm382, %v434, %v436
  %v438 = vrot.slane %v223, 1
  %v439 = vrot.slane %v224, 1
  %v440 = vsel %vm382, %v438, %v439
  %v441 = vrot.slane %v225, 1
  %v442 = vsel %vm382, %v439, %v441
  %v443 = vrot.slane %v226, 1
  %v444 = vrot.slane %v227, 1
  %v445 = vsel %vm382, %v443, %v444
  %v446 = vrot.slane %v228, 1
  %v447 = vsel %vm382, %v444, %v446
  %v448 = vrot.slane %v229, 1
  %v449 = vrot.slane %v230, 1
  %v450 = vsel %vm382, %v448, %v449
  %v451 = vrot.slane %v231, 1
  %v452 = vsel %vm382, %v449, %v451
  %v453 = vrot.slane %v232, 1
  %v454 = vrot.slane %v233, 1
  %v455 = vsel %vm382, %v453, %v454
  %v456 = vrot.slane %v234, 1
  %v457 = vsel %vm382, %v454, %v456
  %v458 = vrot.slane %v235, 1
  %v459 = vrot.slane %v236, 1
  %v460 = vsel %vm382, %v458, %v459
  %v461 = vrot.slane %v237, 1
  %v462 = vsel %vm382, %v459, %v461
  %v463 = vrot.slane %v238, 1
  %v464 = vrot.slane %v239, 1
  %v465 = vsel %vm382, %v463, %v464
  %v466 = vrot.slane %v240, 1
  %v467 = vsel %vm382, %v464, %v466
  %v468 = vrot.slane %v241, 1
  %v469 = vrot.slane %v242, 1
  %v470 = vsel %vm382, %v468, %v469
  %v471 = vrot.slane %v243, 1
  %v472 = vsel %vm382, %v469, %v471
  %v473 = vrot.slane %v244, 1
  %v474 = vrot.slane %v245, 1
  %v475 = vsel %vm382, %v473, %v474
  %v476 = vrot.slane %v246, 1
  %v477 = vsel %vm382, %v474, %v476
  %v478 = vrot.slane %v247, 1
  %v479 = vrot.slane %v248, 1
  %v480 = vsel %vm382, %v478, %v479
  %v481 = vrot.slane %v249, 1
  %v482 = vsel %vm382, %v479, %v481
  %v483 = vrot.slane %v250, 1
  %v484 = vrot.slane %v251, 1
  %v485 = vsel %vm382, %v483, %v484
  %v486 = vrot.slane %v252, 1
  %v487 = vsel %vm382, %v484, %v486
  %v488 = vrot.slane %v253, 1
  %v489 = vrot.slane %v254, 1
  %v490 = vsel %vm382, %v488, %v489
  %v491 = vrot.slane %v255, 1
  %v492 = vsel %vm382, %v489, %v491
  %v493 = vrot.slane %v256, 1
  %v494 = vrot.slane %v257, 1
  %v495 = vsel %vm382, %v493, %v494
  %v496 = vrot.slane %v258, 1
  %v497 = vsel %vm382, %v494, %v496
  %v498 = vrot.slane %v259, 1
  %v499 = vrot.slane %v260, 1
  %v500 = vsel %vm382, %v498, %v499
  %v501 = vrot.slane %v261, 1
  %v502 = vsel %vm382, %v499, %v501
  %v503 = vrot.slane %v262, 1
  %v504 = vrot.slane %v263, 1
  %v505 = vsel %vm382, %v503, %v504
  %v506 = vrot.slane %v264, 1
  %v507 = vsel %vm382, %v504, %v506
  %v508 = vrot.slane %v265, 1
  %v509 = vrot.slane %v266, 1
  %v510 = vsel %vm382, %v508, %v509
  %v511 = vrot.slane %v267, 1
  %v512 = vsel %vm382, %v509, %v511
  %v513 = vrot.slane %v268, 1
  %v514 = vrot.slane %v269, 1
  %v515 = vsel %vm382, %v513, %v514
  %v516 = vrot.slane %v270, 1
  %v517 = vsel %vm382, %v514, %v516
  %v518 = vrot.slane %v271, 1
  %v519 = vrot.slane %v272, 1
  %v520 = vsel %vm382, %v518, %v519
  %v521 = vrot.slane %v273, 1
  %v522 = vsel %vm382, %v519, %v521
  %v523 = vrot.slane %v274, 1
  %v524 = vrot.slane %v275, 1
  %v525 = vsel %vm382, %v523, %v524
  %v526 = vrot.slane %v276, 1
  %v527 = vsel %vm382, %v524, %v526
  %v528 = vrot.slane %v277, 1
  %v529 = vrot.slane %v278, 1
  %v530 = vsel %vm382, %v528, %v529
  %v531 = vrot.slane %v279, 1
  %v532 = vsel %vm382, %v529, %v531
  %v533 = vrot.slane %v280, 1
  %v534 = vrot.slane %v281, 1
  %v535 = vsel %vm382, %v533, %v534
  %v536 = vrot.slane %v282, 1
  %v537 = vsel %vm382, %v534, %v536
  %v538 = vrot.slane %v283, 1
  %v539 = vrot.slane %v284, 1
  %v540 = vsel %vm382, %v538, %v539
  %v541 = vrot.slane %v285, 1
  %v542 = vsel %vm382, %v539, %v541
  %v607 = vadd.f32 %v125, %v385
  %v608 = vadd.f32 %v126, %v387
  %v609 = vadd.f32 %v127, %v390
  %v610 = vadd.f32 %v128, %v392
  %v611 = vadd.f32 %v129, %v395
  %v612 = vadd.f32 %v130, %v397
  %v613 = vadd.f32 %v131, %v400
  %v614 = vadd.f32 %v132, %v402
  %v615 = vadd.f32 %v133, %v405
  %v616 = vadd.f32 %v134, %v407
  %v617 = vadd.f32 %v135, %v410
  %v618 = vadd.f32 %v136, %v412
  %v619 = vadd.f32 %v137, %v415
  %v620 = vadd.f32 %v138, %v417
  %v621 = vadd.f32 %v139, %v420
  %v622 = vadd.f32 %v140, %v422
  %v623 = vadd.f32 %v141, %v425
  %v624 = vadd.f32 %v142, %v427
  %v625 = vadd.f32 %v143, %v430
  %v626 = vadd.f32 %v144, %v432
  %v627 = vadd.f32 %v145, %v435
  %v628 = vadd.f32 %v146, %v437
  %v629 = vadd.f32 %v147, %v440
  %v630 = vadd.f32 %v148, %v442
  %v631 = vadd.f32 %v149, %v445
  %v632 = vadd.f32 %v150, %v447
  %v633 = vadd.f32 %v151, %v450
  %v634 = vadd.f32 %v152, %v452
  %v635 = vadd.f32 %v153, %v455
  %v636 = vadd.f32 %v154, %v457
  %v637 = vadd.f32 %v155, %v460
  %v638 = vadd.f32 %v156, %v462
  %v639 = vadd.f32 %v157, %v465
  %v640 = vadd.f32 %v158, %v467
  %v641 = vadd.f32 %v159, %v470
  %v642 = vadd.f32 %v160, %v472
  %v643 = vadd.f32 %v161, %v475
  %v644 = vadd.f32 %v162, %v477
  %v645 = vadd.f32 %v163, %v480
  %v646 = vadd.f32 %v164, %v482
  %v647 = vadd.f32 %v165, %v485
  %v648 = vadd.f32 %v166, %v487
  %v649 = vadd.f32 %v167, %v490
  %v650 = vadd.f32 %v168, %v492
  %v651 = vadd.f32 %v169, %v495
  %v652 = vadd.f32 %v170, %v497
  %v653 = vadd.f32 %v171, %v500
  %v654 = vadd.f32 %v172, %v502
  %v655 = vadd.f32 %v173, %v505
  %v656 = vadd.f32 %v174, %v507
  %v657 = vadd.f32 %v175, %v510
  %v658 = vadd.f32 %v176, %v512
  %v659 = vadd.f32 %v177, %v515
  %v660 = vadd.f32 %v178, %v517
  %v661 = vadd.f32 %v179, %v520
  %v662 = vadd.f32 %v180, %v522
  %v663 = vadd.f32 %v181, %v525
  %v664 = vadd.f32 %v182, %v527
  %v665 = vadd.f32 %v183, %v530
  %v666 = vadd.f32 %v184, %v532
  %v667 = vadd.f32 %v185, %v535
  %v668 = vadd.f32 %v186, %v537
  %v669 = vadd.f32 %v187, %v540
  %v670 = vadd.f32 %v188, %v542
  %v671 = vperm.slane %v122, 2
  %v672 = vmul.f32 %v14, %v671
  %v673 = vmul.f32 %v15, %v671
  %v674 = vmul.f32 %v16, %v671
  %v675 = vmul.f32 %v17, %v671
  %v676 = vmul.f32 %v18, %v671
  %v677 = vmul.f32 %v19, %v671
  %v678 = vmul.f32 %v20, %v671
  %v679 = vmul.f32 %v21, %v671
  %v680 = vmul.f32 %v22, %v671
  %v681 = vmul.f32 %v23, %v671
  %v682 = vmul.f32 %v24, %v671
  %v683 = vmul.f32 %v25, %v671
  %v684 = vmul.f32 %v26, %v671
  %v685 = vmul.f32 %v27, %v671
  %v686 = vmul.f32 %v28, %v671
  %v687 = vmul.f32 %v29, %v671
  %v688 = vmul.f32 %v30, %v671
  %v689 = vmul.f32 %v31, %v671
  %v690 = vmul.f32 %v32, %v671
  %v691 = vmul.f32 %v33, %v671
  %v692 = vmul.f32 %v34, %v671
  %v693 = vmul.f32 %v35, %v671
  %v694 = vmul.f32 %v36, %v671
  %v695 = vmul.f32 %v37, %v671
  %v696 = vmul.f32 %v38, %v671
  %v697 = vmul.f32 %v39, %v671
  %v698 = vmul.f32 %v40, %v671
  %v699 = vmul.f32 %v41, %v671
  %v700 = vmul.f32 %v42, %v671
  %v701 = vmul.f32 %v43, %v671
  %v702 = vmul.f32 %v44, %v671
  %v703 = vmul.f32 %v45, %v671
  %v704 = vmul.f32 %v46, %v671
  %v705 = vmul.f32 %v47, %v671
  %v706 = vmul.f32 %v48, %v671
  %v707 = vmul.f32 %v49, %v671
  %v708 = vmul.f32 %v50, %v671
  %v709 = vmul.f32 %v51, %v671
  %v710 = vmul.f32 %v52, %v671
  %v711 = vmul.f32 %v53, %v671
  %v712 = vmul.f32 %v54, %v671
  %v713 = vmul.f32 %v55, %v671
  %v714 = vmul.f32 %v56, %v671
  %v715 = vmul.f32 %v57, %v671
  %v716 = vmul.f32 %v58, %v671
  %v717 = vmul.f32 %v59, %v671
  %v718 = vmul.f32 %v60, %v671
  %v719 = vmul.f32 %v61, %v671
  %v720 = vmul.f32 %v68, %v671
  %v721 = vmul.f32 %v69, %v671
  %v722 = vmul.f32 %v70, %v671
  %v723 = vmul.f32 %v71, %v671
  %v724 = vmul.f32 %v72, %v671
  %v725 = vmul.f32 %v73, %v671
  %v726 = vmul.f32 %v74, %v671
  %v727 = vmul.f32 %v75, %v671
  %v728 = vmul.f32 %v76, %v671
  %v729 = vmul.f32 %v77, %v671
  %v730 = vmul.f32 %v78, %v671
  %v731 = vmul.f32 %v79, %v671
  %v732 = vmul.f32 %v80, %v671
  %v733 = vmul.f32 %v81, %v671
  %v734 = vmul.f32 %v82, %v671
  %v735 = vmul.f32 %v83, %v671
  %v736 = vmul.f32 %v84, %v671
  %v737 = vmul.f32 %v85, %v671
  %v738 = vmul.f32 %v86, %v671
  %v739 = vmul.f32 %v87, %v671
  %v740 = vmul.f32 %v88, %v671
  %v741 = vmul.f32 %v89, %v671
  %v742 = vmul.f32 %v90, %v671
  %v743 = vmul.f32 %v91, %v671
  %v744 = vmul.f32 %v92, %v671
  %v745 = vmul.f32 %v93, %v671
  %v746 = vmul.f32 %v94, %v671
  %v747 = vmul.f32 %v95, %v671
  %v748 = vmul.f32 %v96, %v671
  %v749 = vmul.f32 %v97, %v671
  %v750 = vmul.f32 %v98, %v671
  %v751 = vmul.f32 %v99, %v671
  %v752 = vmul.f32 %v100, %v671
  %v753 = vmul.f32 %v101, %v671
  %v754 = vmul.f32 %v102, %v671
  %v755 = vmul.f32 %v103, %v671
  %v756 = vmul.f32 %v104, %v671
  %v757 = vmul.f32 %v105, %v671
  %v758 = vmul.f32 %v106, %v671
  %v759 = vmul.f32 %v107, %v671
  %v760 = vmul.f32 %v108, %v671
  %v761 = vmul.f32 %v109, %v671
  %v762 = vmul.f32 %v110, %v671
  %v763 = vmul.f32 %v111, %v671
  %v764 = vmul.f32 %v112, %v671
  %v765 = vmul.f32 %v113, %v671
  %v766 = vmul.f32 %v114, %v671
  %v767 = vmul.f32 %v115, %v671
  %vm864 = vcmask 1045504
  %v865 = vrot.slane %v672, 2
  %v866 = vrot.slane %v673, 2
  %v867 = vsel %vm864, %v865, %v866
  %v868 = vrot.slane %v674, 2
  %v869 = vsel %vm864, %v866, %v868
  %v870 = vrot.slane %v675, 2
  %v871 = vrot.slane %v676, 2
  %v872 = vsel %vm864, %v870, %v871
  %v873 = vrot.slane %v677, 2
  %v874 = vsel %vm864, %v871, %v873
  %v875 = vrot.slane %v678, 2
  %v876 = vrot.slane %v679, 2
  %v877 = vsel %vm864, %v875, %v876
  %v878 = vrot.slane %v680, 2
  %v879 = vsel %vm864, %v876, %v878
  %v880 = vrot.slane %v681, 2
  %v881 = vrot.slane %v682, 2
  %v882 = vsel %vm864, %v880, %v881
  %v883 = vrot.slane %v683, 2
  %v884 = vsel %vm864, %v881, %v883
  %v885 = vrot.slane %v684, 2
  %v886 = vrot.slane %v685, 2
  %v887 = vsel %vm864, %v885, %v886
  %v888 = vrot.slane %v686, 2
  %v889 = vsel %vm864, %v886, %v888
  %v890 = vrot.slane %v687, 2
  %v891 = vrot.slane %v688, 2
  %v892 = vsel %vm864, %v890, %v891
  %v893 = vrot.slane %v689, 2
  %v894 = vsel %vm864, %v891, %v893
  %v895 = vrot.slane %v690, 2
  %v896 = vrot.slane %v691, 2
  %v897 = vsel %vm864, %v895, %v896
  %v898 = vrot.slane %v692, 2
  %v899 = vsel %vm864, %v896, %v898
  %v900 = vrot.slane %v693, 2
  %v901 = vrot.slane %v694, 2
  %v902 = vsel %vm864, %v900, %v901
  %v903 = vrot.slane %v695, 2
  %v904 = vsel %vm864, %v901, %v903
  %v905 = vrot.slane %v696, 2
  %v906 = vrot.slane %v697, 2
  %v907 = vsel %vm864, %v905, %v906
  %v908 = vrot.slane %v698, 2
  %v909 = vsel %vm864, %v906, %v908
  %v910 = vrot.slane %v699, 2
  %v911 = vrot.slane %v700, 2
  %v912 = vsel %vm864, %v910, %v911
  %v913 = vrot.slane %v701, 2
  %v914 = vsel %vm864, %v911, %v913
  %v915 = vrot.slane %v702, 2
  %v916 = vrot.slane %v703, 2
  %v917 = vsel %vm864, %v915, %v916
  %v918 = vrot.slane %v704, 2
  %v919 = vsel %vm864, %v916, %v918
  %v920 = vrot.slane %v705, 2
  %v921 = vrot.slane %v706, 2
  %v922 = vsel %vm864, %v920, %v921
  %v923 = vrot.slane %v707, 2
  %v924 = vsel %vm864, %v921, %v923
  %v925 = vrot.slane %v708, 2
  %v926 = vrot.slane %v709, 2
  %v927 = vsel %vm864, %v925, %v926
  %v928 = vrot.slane %v710, 2
  %v929 = vsel %vm864, %v926, %v928
  %v930 = vrot.slane %v711, 2
  %v931 = vrot.slane %v712, 2
  %v932 = vsel %vm864, %v930, %v931
  %v933 = vrot.slane %v713, 2
  %v934 = vsel %vm864, %v931, %v933
  %v935 = vrot.slane %v714, 2
  %v936 = vrot.slane %v715, 2
  %v937 = vsel %vm864, %v935, %v936
  %v938 = vrot.slane %v716, 2
  %v939 = vsel %vm864, %v936, %v938
  %v940 = vrot.slane %v717, 2
  %v941 = vrot.slane %v718, 2
  %v942 = vsel %vm864, %v940, %v941
  %v943 = vrot.slane %v719, 2
  %v944 = vsel %vm864, %v941, %v943
  %v945 = vrot.slane %v720, 2
  %v946 = vrot.slane %v721, 2
  %v947 = vsel %vm864, %v945, %v946
  %v948 = vrot.slane %v722, 2
  %v949 = vsel %vm864, %v946, %v948
  %v950 = vrot.slane %v723, 2
  %v951 = vrot.slane %v724, 2
  %v952 = vsel %vm864, %v950, %v951
  %v953 = vrot.slane %v725, 2
  %v954 = vsel %vm864, %v951, %v953
  %v955 = vrot.slane %v726, 2
  %v956 = vrot.slane %v727, 2
  %v957 = vsel %vm864, %v955, %v956
  %v958 = vrot.slane %v728, 2
  %v959 = vsel %vm864, %v956, %v958
  %v960 = vrot.slane %v729, 2
  %v961 = vrot.slane %v730, 2
  %v962 = vsel %vm864, %v960, %v961
  %v963 = vrot.slane %v731, 2
  %v964 = vsel %vm864, %v961, %v963
  %v965 = vrot.slane %v732, 2
  %v966 = vrot.slane %v733, 2
  %v967 = vsel %vm864, %v965, %v966
  %v968 = vrot.slane %v734, 2
  %v969 = vsel %vm864, %v966, %v968
  %v970 = vrot.slane %v735, 2
  %v971 = vrot.slane %v736, 2
  %v972 = vsel %vm864, %v970, %v971
  %v973 = vrot.slane %v737, 2
  %v974 = vsel %vm864, %v971, %v973
  %v975 = vrot.slane %v738, 2
  %v976 = vrot.slane %v739, 2
  %v977 = vsel %vm864, %v975, %v976
  %v978 = vrot.slane %v740, 2
  %v979 = vsel %vm864, %v976, %v978
  %v980 = vrot.slane %v741, 2
  %v981 = vrot.slane %v742, 2
  %v982 = vsel %vm864, %v980, %v981
  %v983 = vrot.slane %v743, 2
  %v984 = vsel %vm864, %v981, %v983
  %v985 = vrot.slane %v744, 2
  %v986 = vrot.slane %v745, 2
  %v987 = vsel %vm864, %v985, %v986
  %v988 = vrot.slane %v746, 2
  %v989 = vsel %vm864, %v986, %v988
  %v990 = vrot.slane %v747, 2
  %v991 = vrot.slane %v748, 2
  %v992 = vsel %vm864, %v990, %v991
  %v993 = vrot.slane %v749, 2
  %v994 = vsel %vm864, %v991, %v993
  %v995 = vrot.slane %v750, 2
  %v996 = vrot.slane %v751, 2
  %v997 = vsel %vm864, %v995, %v996
  %v998 = vrot.slane %v752, 2
  %v999 = vsel %vm864, %v996, %v998
  %v1000 = vrot.slane %v753, 2
  %v1001 = vrot.slane %v754, 2
  %v1002 = vsel %vm864, %v1000, %v1001
  %v1003 = vrot.slane %v755, 2
  %v1004 = vsel %vm864, %v1001, %v1003
  %v1005 = vrot.slane %v756, 2
  %v1006 = vrot.slane %v757, 2
  %v1007 = vsel %vm864, %v1005, %v1006
  %v1008 = vrot.slane %v758, 2
  %v1009 = vsel %vm864, %v1006, %v1008
  %v1010 = vrot.slane %v759, 2
  %v1011 = vrot.slane %v760, 2
  %v1012 = vsel %vm864, %v1010, %v1011
  %v1013 = vrot.slane %v761, 2
  %v1014 = vsel %vm864, %v1011, %v1013
  %v1015 = vrot.slane %v762, 2
  %v1016 = vrot.slane %v763, 2
  %v1017 = vsel %vm864, %v1015, %v1016
  %v1018 = vrot.slane %v764, 2
  %v1019 = vsel %vm864, %v1016, %v1018
  %v1020 = vrot.slane %v765, 2
  %v1021 = vrot.slane %v766, 2
  %v1022 = vsel %vm864, %v1020, %v1021
  %v1023 = vrot.slane %v767, 2
  %v1024 = vsel %vm864, %v1021, %v1023
  %v1089 = vadd.f32 %v607, %v867
  %v1090 = vadd.f32 %v608, %v869
  %v1091 = vadd.f32 %v609, %v872
  %v1092 = vadd.f32 %v610, %v874
  %v1093 = vadd.f32 %v611, %v877
  %v1094 = vadd.f32 %v612, %v879
  %v1095 = vadd.f32 %v613, %v882
  %v1096 = vadd.f32 %v614, %v884
  %v1097 = vadd.f32 %v615, %v887
  %v1098 = vadd.f32 %v616, %v889
  %v1099 = vadd.f32 %v617, %v892
  %v1100 = vadd.f32 %v618, %v894
  %v1101 = vadd.f32 %v619, %v897
  %v1102 = vadd.f32 %v620, %v899
  %v1103 = vadd.f32 %v621, %v902
  %v1104 = vadd.f32 %v622, %v904
  %v1105 = vadd.f32 %v623, %v907
  %v1106 = vadd.f32 %v624, %v909
  %v1107 = vadd.f32 %v625, %v912
  %v1108 = vadd.f32 %v626, %v914
  %v1109 = vadd.f32 %v627, %v917
  %v1110 = vadd.f32 %v628, %v919
  %v1111 = vadd.f32 %v629, %v922
  %v1112 = vadd.f32 %v630, %v924
  %v1113 = vadd.f32 %v631, %v927
  %v1114 = vadd.f32 %v632, %v929
  %v1115 = vadd.f32 %v633, %v932
  %v1116 = vadd.f32 %v634, %v934
  %v1117 = vadd.f32 %v635, %v937
  %v1118 = vadd.f32 %v636, %v939
  %v1119 = vadd.f32 %v637, %v942
  %v1120 = vadd.f32 %v638, %v944
  %v1121 = vadd.f32 %v639, %v947
  %v1122 = vadd.f32 %v640, %v949
  %v1123 = vadd.f32 %v641, %v952
  %v1124 = vadd.f32 %v642, %v954
  %v1125 = vadd.f32 %v643, %v957
  %v1126 = vadd.f32 %v644, %v959
  %v1127 = vadd.f32 %v645, %v962
  %v1128 = vadd.f32 %v646, %v964
  %v1129 = vadd.f32 %v647, %v967
  %v1130 = vadd.f32 %v648, %v969
  %v1131 = vadd.f32 %v649, %v972
  %v1132 = vadd.f32 %v650, %v974
  %v1133 = vadd.f32 %v651, %v977
  %v1134 = vadd.f32 %v652, %v979
  %v1135 = vadd.f32 %v653, %v982
  %v1136 = vadd.f32 %v654, %v984
  %v1137 = vadd.f32 %v655, %v987
  %v1138 = vadd.f32 %v656, %v989
  %v1139 = vadd.f32 %v657, %v992
  %v1140 = vadd.f32 %v658, %v994
  %v1141 = vadd.f32 %v659, %v997
  %v1142 = vadd.f32 %v660, %v999
  %v1143 = vadd.f32 %v661, %v1002
  %v1144 = vadd.f32 %v662, %v1004
  %v1145 = vadd.f32 %v663, %v1007
  %v1146 = vadd.f32 %v664, %v1009
  %v1147 = vadd.f32 %v665, %v1012
  %v1148 = vadd.f32 %v666, %v1014
  %v1149 = vadd.f32 %v667, %v1017
  %v1150 = vadd.f32 %v668, %v1019
  %v1151 = vadd.f32 %v669, %v1022
  %v1152 = vadd.f32 %v670, %v1024
  %v1153 = vperm.slane %v122, 3
  %v1154 = vmul.f32 %v17, %v1153
  %v1155 = vmul.f32 %v18, %v1153
  %v1156 = vmul.f32 %v20, %v1153
  %v1157 = vmul.f32 %v21, %v1153
  %v1158 = vmul.f32 %v23, %v1153
  %v1159 = vmul.f32 %v24, %v1153
  %v1160 = vmul.f32 %v26, %v1153
  %v1161 = vmul.f32 %v27, %v1153
  %v1162 = vmul.f32 %v29, %v1153
  %v1163 = vmul.f32 %v30, %v1153
  %v1164 = vmul.f32 %v32, %v1153
  %v1165 = vmul.f32 %v33, %v1153
  %v1166 = vmul.f32 %v35, %v1153
  %v1167 = vmul.f32 %v36, %v1153
  %v1168 = vmul.f32 %v38, %v1153
  %v1169 = vmul.f32 %v39, %v1153
  %v1170 = vmul.f32 %v41, %v1153
  %v1171 = vmul.f32 %v42, %v1153
  %v1172 = vmul.f32 %v44, %v1153
  %v1173 = vmul.f32 %v45, %v1153
  %v1174 = vmul.f32 %v47, %v1153
  %v1175 = vmul.f32 %v48, %v1153
  %v1176 = vmul.f32 %v50, %v1153
  %v1177 = vmul.f32 %v51, %v1153
  %v1178 = vmul.f32 %v53, %v1153
  %v1179 = vmul.f32 %v54, %v1153
  %v1180 = vmul.f32 %v56, %v1153
  %v1181 = vmul.f32 %v57, %v1153
  %v1182 = vmul.f32 %v59, %v1153
  %v1183 = vmul.f32 %v60, %v1153
  %v1184 = vmul.f32 %v62, %v1153
  %v1185 = vmul.f32 %v63, %v1153
  %v1186 = vmul.f32 %v71, %v1153
  %v1187 = vmul.f32 %v72, %v1153
  %v1188 = vmul.f32 %v74, %v1153
  %v1189 = vmul.f32 %v75, %v1153
  %v1190 = vmul.f32 %v77, %v1153
  %v1191 = vmul.f32 %v78, %v1153
  %v1192 = vmul.f32 %v80, %v1153
  %v1193 = vmul.f32 %v81, %v1153
  %v1194 = vmul.f32 %v83, %v1153
  %v1195 = vmul.f32 %v84, %v1153
  %v1196 = vmul.f32 %v86, %v1153
  %v1197 = vmul.f32 %v87, %v1153
  %v1198 = vmul.f32 %v89, %v1153
  %v1199 = vmul.f32 %v90, %v1153
  %v1200 = vmul.f32 %v92, %v1153
  %v1201 = vmul.f32 %v93, %v1153
  %v1202 = vmul.f32 %v95, %v1153
  %v1203 = vmul.f32 %v96, %v1153
  %v1204 = vmul.f32 %v98, %v1153
  %v1205 = vmul.f32 %v99, %v1153
  %v1206 = vmul.f32 %v101, %v1153
  %v1207 = vmul.f32 %v102, %v1153
  %v1208 = vmul.f32 %v104, %v1153
  %v1209 = vmul.f32 %v105, %v1153
  %v1210 = vmul.f32 %v107, %v1153
  %v1211 = vmul.f32 %v108, %v1153
  %v1212 = vmul.f32 %v110, %v1153
  %v1213 = vmul.f32 %v111, %v1153
  %v1214 = vmul.f32 %v113, %v1153
  %v1215 = vmul.f32 %v114, %v1153
  %v1216 = vmul.f32 %v116, %v1153
  %v1217 = vmul.f32 %v117, %v1153
  %v1218 = vadd.f32 %v1089, %v1154
  %v1219 = vadd.f32 %v1090, %v1155
  %v1220 = vadd.f32 %v1091, %v1156
  %v1221 = vadd.f32 %v1092, %v1157
  %v1222 = vadd.f32 %v1093, %v1158
  %v1223 = vadd.f32 %v1094, %v1159
  %v1224 = vadd.f32 %v1095, %v1160
  %v1225 = vadd.f32 %v1096, %v1161
  %v1226 = vadd.f32 %v1097, %v1162
  %v1227 = vadd.f32 %v1098, %v1163
  %v1228 = vadd.f32 %v1099, %v1164
  %v1229 = vadd.f32 %v1100, %v1165
  %v1230 = vadd.f32 %v1101, %v1166
  %v1231 = vadd.f32 %v1102, %v1167
  %v1232 = vadd.f32 %v1103, %v1168
  %v1233 = vadd.f32 %v1104, %v1169
  %v1234 = vadd.f32 %v1105, %v1170
  %v1235 = vadd.f32 %v1106, %v1171
  %v1236 = vadd.f32 %v1107, %v1172
  %v1237 = vadd.f32 %v1108, %v1173
  %v1238 = vadd.f32 %v1109, %v1174
  %v1239 = vadd.f32 %v1110, %v1175
  %v1240 = vadd.f32 %v1111, %v1176
  %v1241 = vadd.f32 %v1112, %v1177
  %v1242 = vadd.f32 %v1113, %v1178
  %v1243 = vadd.f32 %v1114, %v1179
  %v1244 = vadd.f32 %v1115, %v1180
  %v1245 = vadd.f32 %v1116, %v1181
  %v1246 = vadd.f32 %v1117, %v1182
  %v1247 = vadd.f32 %v1118, %v1183
  %v1248 = vadd.f32 %v1119, %v1184
  %v1249 = vadd.f32 %v1120, %v1185
  %v1250 = vadd.f32 %v1121, %v1186
  %v1251 = vadd.f32 %v1122, %v1187
  %v1252 = vadd.f32 %v1123, %v1188
  %v1253 = vadd.f32 %v1124, %v1189
  %v1254 = vadd.f32 %v1125, %v1190
  %v1255 = vadd.f32 %v1126, %v1191
  %v1256 = vadd.f32 %v1127, %v1192
  %v1257 = vadd.f32 %v1128, %v1193
  %v1258 = vadd.f32 %v1129, %v1194
  %v1259 = vadd.f32 %v1130, %v1195
  %v1260 = vadd.f32 %v1131, %v1196
  %v1261 = vadd.f32 %v1132, %v1197
  %v1262 = vadd.f32 %v1133, %v1198
  %v1263 = vadd.f32 %v1134, %v1199
  %v1264 = vadd.f32 %v1135, %v1200
  %v1265 = vadd.f32 %v1136, %v1201
  %v1266 = vadd.f32 %v1137, %v1202
  %v1267 = vadd.f32 %v1138, %v1203
  %v1268 = vadd.f32 %v1139, %v1204
  %v1269 = vadd.f32 %v1140, %v1205
  %v1270 = vadd.f32 %v1141, %v1206
  %v1271 = vadd.f32 %v1142, %v1207
  %v1272 = vadd.f32 %v1143, %v1208
  %v1273 = vadd.f32 %v1144, %v1209
  %v1274 = vadd.f32 %v1145, %v1210
  %v1275 = vadd.f32 %v1146, %v1211
  %v1276 = vadd.f32 %v1147, %v1212
  %v1277 = vadd.f32 %v1148, %v1213
  %v1278 = vadd.f32 %v1149, %v1214
  %v1279 = vadd.f32 %v1150, %v1215
  %v1280 = vadd.f32 %v1151, %v1216
  %v1281 = vadd.f32 %v1152, %v1217
  %v1282 = vperm.slane %v122, 4
  %v1283 = vmul.f32 %v17, %v1282
  %v1284 = vmul.f32 %v18, %v1282
  %v1285 = vmul.f32 %v19, %v1282
  %v1286 = vmul.f32 %v20, %v1282
  %v1287 = vmul.f32 %v21, %v1282
  %v1288 = vmul.f32 %v22, %v1282
  %v1289 = vmul.f32 %v23, %v1282
  %v1290 = vmul.f32 %v24, %v1282
  %v1291 = vmul.f32 %v25, %v1282
  %v1292 = vmul.f32 %v26, %v1282
  %v1293 = vmul.f32 %v27, %v1282
  %v1294 = vmul.f32 %v28, %v1282
  %v1295 = vmul.f32 %v29, %v1282
  %v1296 = vmul.f32 %v30, %v1282
  %v1297 = vmul.f32 %v31, %v1282
  %v1298 = vmul.f32 %v32, %v1282
  %v1299 = vmul.f32 %v33, %v1282
  %v1300 = vmul.f32 %v34, %v1282
  %v1301 = vmul.f32 %v35, %v1282
  %v1302 = vmul.f32 %v36, %v1282
  %v1303 = vmul.f32 %v37, %v1282
  %v1304 = vmul.f32 %v38, %v1282
  %v1305 = vmul.f32 %v39, %v1282
  %v1306 = vmul.f32 %v40, %v1282
  %v1307 = vmul.f32 %v41, %v1282
  %v1308 = vmul.f32 %v42, %v1282
  %v1309 = vmul.f32 %v43, %v1282
  %v1310 = vmul.f32 %v44, %v1282
  %v1311 = vmul.f32 %v45, %v1282
  %v1312 = vmul.f32 %v46, %v1282
  %v1313 = vmul.f32 %v47, %v1282
  %v1314 = vmul.f32 %v48, %v1282
  %v1315 = vmul.f32 %v49, %v1282
  %v1316 = vmul.f32 %v50, %v1282
  %v1317 = vmul.f32 %v51, %v1282
  %v1318 = vmul.f32 %v52, %v1282
  %v1319 = vmul.f32 %v53, %v1282
  %v1320 = vmul.f32 %v54, %v1282
  %v1321 = vmul.f32 %v55, %v1282
  %v1322 = vmul.f32 %v56, %v1282
  %v1323 = vmul.f32 %v57, %v1282
  %v1324 = vmul.f32 %v58, %v1282
  %v1325 = vmul.f32 %v59, %v1282
  %v1326 = vmul.f32 %v60, %v1282
  %v1327 = vmul.f32 %v61, %v1282
  %v1328 = vmul.f32 %v62, %v1282
  %v1329 = vmul.f32 %v63, %v1282
  %v1330 = vmul.f32 %v64, %v1282
  %v1331 = vmul.f32 %v71, %v1282
  %v1332 = vmul.f32 %v72, %v1282
  %v1333 = vmul.f32 %v73, %v1282
  %v1334 = vmul.f32 %v74, %v1282
  %v1335 = vmul.f32 %v75, %v1282
  %v1336 = vmul.f32 %v76, %v1282
  %v1337 = vmul.f32 %v77, %v1282
  %v1338 = vmul.f32 %v78, %v1282
  %v1339 = vmul.f32 %v79, %v1282
  %v1340 = vmul.f32 %v80, %v1282
  %v1341 = vmul.f32 %v81, %v1282
  %v1342 = vmul.f32 %v82, %v1282
  %v1343 = vmul.f32 %v83, %v1282
  %v1344 = vmul.f32 %v84, %v1282
  %v1345 = vmul.f32 %v85, %v1282
  %v1346 = vmul.f32 %v86, %v1282
  %v1347 = vmul.f32 %v87, %v1282
  %v1348 = vmul.f32 %v88, %v1282
  %v1349 = vmul.f32 %v89, %v1282
  %v1350 = vmul.f32 %v90, %v1282
  %v1351 = vmul.f32 %v91, %v1282
  %v1352 = vmul.f32 %v92, %v1282
  %v1353 = vmul.f32 %v93, %v1282
  %v1354 = vmul.f32 %v94, %v1282
  %v1355 = vmul.f32 %v95, %v1282
  %v1356 = vmul.f32 %v96, %v1282
  %v1357 = vmul.f32 %v97, %v1282
  %v1358 = vmul.f32 %v98, %v1282
  %v1359 = vmul.f32 %v99, %v1282
  %v1360 = vmul.f32 %v100, %v1282
  %v1361 = vmul.f32 %v101, %v1282
  %v1362 = vmul.f32 %v102, %v1282
  %v1363 = vmul.f32 %v103, %v1282
  %v1364 = vmul.f32 %v104, %v1282
  %v1365 = vmul.f32 %v105, %v1282
  %v1366 = vmul.f32 %v106, %v1282
  %v1367 = vmul.f32 %v107, %v1282
  %v1368 = vmul.f32 %v108, %v1282
  %v1369 = vmul.f32 %v109, %v1282
  %v1370 = vmul.f32 %v110, %v1282
  %v1371 = vmul.f32 %v111, %v1282
  %v1372 = vmul.f32 %v112, %v1282
  %v1373 = vmul.f32 %v113, %v1282
  %v1374 = vmul.f32 %v114, %v1282
  %v1375 = vmul.f32 %v115, %v1282
  %v1376 = vmul.f32 %v116, %v1282
  %v1377 = vmul.f32 %v117, %v1282
  %v1378 = vmul.f32 %v118, %v1282
  %v1475 = vrot.slane %v1283, 1
  %v1476 = vrot.slane %v1284, 1
  %v1477 = vsel %vm382, %v1475, %v1476
  %v1478 = vrot.slane %v1285, 1
  %v1479 = vsel %vm382, %v1476, %v1478
  %v1480 = vrot.slane %v1286, 1
  %v1481 = vrot.slane %v1287, 1
  %v1482 = vsel %vm382, %v1480, %v1481
  %v1483 = vrot.slane %v1288, 1
  %v1484 = vsel %vm382, %v1481, %v1483
  %v1485 = vrot.slane %v1289, 1
  %v1486 = vrot.slane %v1290, 1
  %v1487 = vsel %vm382, %v1485, %v1486
  %v1488 = vrot.slane %v1291, 1
  %v1489 = vsel %vm382, %v1486, %v1488
  %v1490 = vrot.slane %v1292, 1
  %v1491 = vrot.slane %v1293, 1
  %v1492 = vsel %vm382, %v1490, %v1491
  %v1493 = vrot.slane %v1294, 1
  %v1494 = vsel %vm382, %v1491, %v1493
  %v1495 = vrot.slane %v1295, 1
  %v1496 = vrot.slane %v1296, 1
  %v1497 = vsel %vm382, %v1495, %v1496
  %v1498 = vrot.slane %v1297, 1
  %v1499 = vsel %vm382, %v1496, %v1498
  %v1500 = vrot.slane %v1298, 1
  %v1501 = vrot.slane %v1299, 1
  %v1502 = vsel %vm382, %v1500, %v1501
  %v1503 = vrot.slane %v1300, 1
  %v1504 = vsel %vm382, %v1501, %v1503
  %v1505 = vrot.slane %v1301, 1
  %v1506 = vrot.slane %v1302, 1
  %v1507 = vsel %vm382, %v1505, %v1506
  %v1508 = vrot.slane %v1303, 1
  %v1509 = vsel %vm382, %v1506, %v1508
  %v1510 = vrot.slane %v1304, 1
  %v1511 = vrot.slane %v1305, 1
  %v1512 = vsel %vm382, %v1510, %v1511
  %v1513 = vrot.slane %v1306, 1
  %v1514 = vsel %vm382, %v1511, %v1513
  %v1515 = vrot.slane %v1307, 1
  %v1516 = vrot.slane %v1308, 1
  %v1517 = vsel %vm382, %v1515, %v1516
  %v1518 = vrot.slane %v1309, 1
  %v1519 = vsel %vm382, %v1516, %v1518
  %v1520 = vrot.slane %v1310, 1
  %v1521 = vrot.slane %v1311, 1
  %v1522 = vsel %vm382, %v1520, %v1521
  %v1523 = vrot.slane %v1312, 1
  %v1524 = vsel %vm382, %v1521, %v1523
  %v1525 = vrot.slane %v1313, 1
  %v1526 = vrot.slane %v1314, 1
  %v1527 = vsel %vm382, %v1525, %v1526
  %v1528 = vrot.slane %v1315, 1
  %v1529 = vsel %vm382, %v1526, %v1528
  %v1530 = vrot.slane %v1316, 1
  %v1531 = vrot.slane %v1317, 1
  %v1532 = vsel %vm382, %v1530, %v1531
  %v1533 = vrot.slane %v1318, 1
  %v1534 = vsel %vm382, %v1531, %v1533
  %v1535 = vrot.slane %v1319, 1
  %v1536 = vrot.slane %v1320, 1
  %v1537 = vsel %vm382, %v1535, %v1536
  %v1538 = vrot.slane %v1321, 1
  %v1539 = vsel %vm382, %v1536, %v1538
  %v1540 = vrot.slane %v1322, 1
  %v1541 = vrot.slane %v1323, 1
  %v1542 = vsel %vm382, %v1540, %v1541
  %v1543 = vrot.slane %v1324, 1
  %v1544 = vsel %vm382, %v1541, %v1543
  %v1545 = vrot.slane %v1325, 1
  %v1546 = vrot.slane %v1326, 1
  %v1547 = vsel %vm382, %v1545, %v1546
  %v1548 = vrot.slane %v1327, 1
  %v1549 = vsel %vm382, %v1546, %v1548
  %v1550 = vrot.slane %v1328, 1
  %v1551 = vrot.slane %v1329, 1
  %v1552 = vsel %vm382, %v1550, %v1551
  %v1553 = vrot.slane %v1330, 1
  %v1554 = vsel %vm382, %v1551, %v1553
  %v1555 = vrot.slane %v1331, 1
  %v1556 = vrot.slane %v1332, 1
  %v1557 = vsel %vm382, %v1555, %v1556
  %v1558 = vrot.slane %v1333, 1
  %v1559 = vsel %vm382, %v1556, %v1558
  %v1560 = vrot.slane %v1334, 1
  %v1561 = vrot.slane %v1335, 1
  %v1562 = vsel %vm382, %v1560, %v1561
  %v1563 = vrot.slane %v1336, 1
  %v1564 = vsel %vm382, %v1561, %v1563
  %v1565 = vrot.slane %v1337, 1
  %v1566 = vrot.slane %v1338, 1
  %v1567 = vsel %vm382, %v1565, %v1566
  %v1568 = vrot.slane %v1339, 1
  %v1569 = vsel %vm382, %v1566, %v1568
  %v1570 = vrot.slane %v1340, 1
  %v1571 = vrot.slane %v1341, 1
  %v1572 = vsel %vm382, %v1570, %v1571
  %v1573 = vrot.slane %v1342, 1
  %v1574 = vsel %vm382, %v1571, %v1573
  %v1575 = vrot.slane %v1343, 1
  %v1576 = vrot.slane %v1344, 1
  %v1577 = vsel %vm382, %v1575, %v1576
  %v1578 = vrot.slane %v1345, 1
  %v1579 = vsel %vm382, %v1576, %v1578
  %v1580 = vrot.slane %v1346, 1
  %v1581 = vrot.slane %v1347, 1
  %v1582 = vsel %vm382, %v1580, %v1581
  %v1583 = vrot.slane %v1348, 1
  %v1584 = vsel %vm382, %v1581, %v1583
  %v1585 = vrot.slane %v1349, 1
  %v1586 = vrot.slane %v1350, 1
  %v1587 = vsel %vm382, %v1585, %v1586
  %v1588 = vrot.slane %v1351, 1
  %v1589 = vsel %vm382, %v1586, %v1588
  %v1590 = vrot.slane %v1352, 1
  %v1591 = vrot.slane %v1353, 1
  %v1592 = vsel %vm382, %v1590, %v1591
  %v1593 = vrot.slane %v1354, 1
  %v1594 = vsel %vm382, %v1591, %v1593
  %v1595 = vrot.slane %v1355, 1
  %v1596 = vrot.slane %v1356, 1
  %v1597 = vsel %vm382, %v1595, %v1596
  %v1598 = vrot.slane %v1357, 1
  %v1599 = vsel %vm382, %v1596, %v1598
  %v1600 = vrot.slane %v1358, 1
  %v1601 = vrot.slane %v1359, 1
  %v1602 = vsel %vm382, %v1600, %v1601
  %v1603 = vrot.slane %v1360, 1
  %v1604 = vsel %vm382, %v1601, %v1603
  %v1605 = vrot.slane %v1361, 1
  %v1606 = vrot.slane %v1362, 1
  %v1607 = vsel %vm382, %v1605, %v1606
  %v1608 = vrot.slane %v1363, 1
  %v1609 = vsel %vm382, %v1606, %v1608
  %v1610 = vrot.slane %v1364, 1
  %v1611 = vrot.slane %v1365, 1
  %v1612 = vsel %vm382, %v1610, %v1611
  %v1613 = vrot.slane %v1366, 1
  %v1614 = vsel %vm382, %v1611, %v1613
  %v1615 = vrot.slane %v1367, 1
  %v1616 = vrot.slane %v1368, 1
  %v1617 = vsel %vm382, %v1615, %v1616
  %v1618 = vrot.slane %v1369, 1
  %v1619 = vsel %vm382, %v1616, %v1618
  %v1620 = vrot.slane %v1370, 1
  %v1621 = vrot.slane %v1371, 1
  %v1622 = vsel %vm382, %v1620, %v1621
  %v1623 = vrot.slane %v1372, 1
  %v1624 = vsel %vm382, %v1621, %v1623
  %v1625 = vrot.slane %v1373, 1
  %v1626 = vrot.slane %v1374, 1
  %v1627 = vsel %vm382, %v1625, %v1626
  %v1628 = vrot.slane %v1375, 1
  %v1629 = vsel %vm382, %v1626, %v1628
  %v1630 = vrot.slane %v1376, 1
  %v1631 = vrot.slane %v1377, 1
  %v1632 = vsel %vm382, %v1630, %v1631
  %v1633 = vrot.slane %v1378, 1
  %v1634 = vsel %vm382, %v1631, %v1633
  %v1699 = vadd.f32 %v1218, %v1477
  %v1700 = vadd.f32 %v1219, %v1479
  %v1701 = vadd.f32 %v1220, %v1482
  %v1702 = vadd.f32 %v1221, %v1484
  %v1703 = vadd.f32 %v1222, %v1487
  %v1704 = vadd.f32 %v1223, %v1489
  %v1705 = vadd.f32 %v1224, %v1492
  %v1706 = vadd.f32 %v1225, %v1494
  %v1707 = vadd.f32 %v1226, %v1497
  %v1708 = vadd.f32 %v1227, %v1499
  %v1709 = vadd.f32 %v1228, %v1502
  %v1710 = vadd.f32 %v1229, %v1504
  %v1711 = vadd.f32 %v1230, %v1507
  %v1712 = vadd.f32 %v1231, %v1509
  %v1713 = vadd.f32 %v1232, %v1512
  %v1714 = vadd.f32 %v1233, %v1514
  %v1715 = vadd.f32 %v1234, %v1517
  %v1716 = vadd.f32 %v1235, %v1519
  %v1717 = vadd.f32 %v1236, %v1522
  %v1718 = vadd.f32 %v1237, %v1524
  %v1719 = vadd.f32 %v1238, %v1527
  %v1720 = vadd.f32 %v1239, %v1529
  %v1721 = vadd.f32 %v1240, %v1532
  %v1722 = vadd.f32 %v1241, %v1534
  %v1723 = vadd.f32 %v1242, %v1537
  %v1724 = vadd.f32 %v1243, %v1539
  %v1725 = vadd.f32 %v1244, %v1542
  %v1726 = vadd.f32 %v1245, %v1544
  %v1727 = vadd.f32 %v1246, %v1547
  %v1728 = vadd.f32 %v1247, %v1549
  %v1729 = vadd.f32 %v1248, %v1552
  %v1730 = vadd.f32 %v1249, %v1554
  %v1731 = vadd.f32 %v1250, %v1557
  %v1732 = vadd.f32 %v1251, %v1559
  %v1733 = vadd.f32 %v1252, %v1562
  %v1734 = vadd.f32 %v1253, %v1564
  %v1735 = vadd.f32 %v1254, %v1567
  %v1736 = vadd.f32 %v1255, %v1569
  %v1737 = vadd.f32 %v1256, %v1572
  %v1738 = vadd.f32 %v1257, %v1574
  %v1739 = vadd.f32 %v1258, %v1577
  %v1740 = vadd.f32 %v1259, %v1579
  %v1741 = vadd.f32 %v1260, %v1582
  %v1742 = vadd.f32 %v1261, %v1584
  %v1743 = vadd.f32 %v1262, %v1587
  %v1744 = vadd.f32 %v1263, %v1589
  %v1745 = vadd.f32 %v1264, %v1592
  %v1746 = vadd.f32 %v1265, %v1594
  %v1747 = vadd.f32 %v1266, %v1597
  %v1748 = vadd.f32 %v1267, %v1599
  %v1749 = vadd.f32 %v1268, %v1602
  %v1750 = vadd.f32 %v1269, %v1604
  %v1751 = vadd.f32 %v1270, %v1607
  %v1752 = vadd.f32 %v1271, %v1609
  %v1753 = vadd.f32 %v1272, %v1612
  %v1754 = vadd.f32 %v1273, %v1614
  %v1755 = vadd.f32 %v1274, %v1617
  %v1756 = vadd.f32 %v1275, %v1619
  %v1757 = vadd.f32 %v1276, %v1622
  %v1758 = vadd.f32 %v1277, %v1624
  %v1759 = vadd.f32 %v1278, %v1627
  %v1760 = vadd.f32 %v1279, %v1629
  %v1761 = vadd.f32 %v1280, %v1632
  %v1762 = vadd.f32 %v1281, %v1634
  %v1763 = vperm.slane %v122, 5
  %v1764 = vmul.f32 %v17, %v1763
  %v1765 = vmul.f32 %v18, %v1763
  %v1766 = vmul.f32 %v19, %v1763
  %v1767 = vmul.f32 %v20, %v1763
  %v1768 = vmul.f32 %v21, %v1763
  %v1769 = vmul.f32 %v22, %v1763
  %v1770 = vmul.f32 %v23, %v1763
  %v1771 = vmul.f32 %v24, %v1763
  %v1772 = vmul.f32 %v25, %v1763
  %v1773 = vmul.f32 %v26, %v1763
  %v1774 = vmul.f32 %v27, %v1763
  %v1775 = vmul.f32 %v28, %v1763
  %v1776 = vmul.f32 %v29, %v1763
  %v1777 = vmul.f32 %v30, %v1763
  %v1778 = vmul.f32 %v31, %v1763
  %v1779 = vmul.f32 %v32, %v1763
  %v1780 = vmul.f32 %v33, %v1763
  %v1781 = vmul.f32 %v34, %v1763
  %v1782 = vmul.f32 %v35, %v1763
  %v1783 = vmul.f32 %v36, %v1763
  %v1784 = vmul.f32 %v37, %v1763
  %v1785 = vmul.f32 %v38, %v1763
  %v1786 = vmul.f32 %v39, %v1763
  %v1787 = vmul.f32 %v40, %v1763
  %v1788 = vmul.f32 %v41, %v1763
  %v1789 = vmul.f32 %v42, %v1763
  %v1790 = vmul.f32 %v43, %v1763
  %v1791 = vmul.f32 %v44, %v1763
  %v1792 = vmul.f32 %v45, %v1763
  %v1793 = vmul.f32 %v46, %v1763
  %v1794 = vmul.f32 %v47, %v1763
  %v1795 = vmul.f32 %v48, %v1763
  %v1796 = vmul.f32 %v49, %v1763
  %v1797 = vmul.f32 %v50, %v1763
  %v1798 = vmul.f32 %v51, %v1763
  %v1799 = vmul.f32 %v52, %v1763
  %v1800 = vmul.f32 %v53, %v1763
  %v1801 = vmul.f32 %v54, %v1763
  %v1802 = vmul.f32 %v55, %v1763
  %v1803 = vmul.f32 %v56, %v1763
  %v1804 = vmul.f32 %v57, %v1763
  %v1805 = vmul.f32 %v58, %v1763
  %v1806 = vmul.f32 %v59, %v1763
  %v1807 = vmul.f32 %v60, %v1763
  %v1808 = vmul.f32 %v61, %v1763
  %v1809 = vmul.f32 %v62, %v1763
  %v1810 = vmul.f32 %v63, %v1763
  %v1811 = vmul.f32 %v64, %v1763
  %v1812 = vmul.f32 %v71, %v1763
  %v1813 = vmul.f32 %v72, %v1763
  %v1814 = vmul.f32 %v73, %v1763
  %v1815 = vmul.f32 %v74, %v1763
  %v1816 = vmul.f32 %v75, %v1763
  %v1817 = vmul.f32 %v76, %v1763
  %v1818 = vmul.f32 %v77, %v1763
  %v1819 = vmul.f32 %v78, %v1763
  %v1820 = vmul.f32 %v79, %v1763
  %v1821 = vmul.f32 %v80, %v1763
  %v1822 = vmul.f32 %v81, %v1763
  %v1823 = vmul.f32 %v82, %v1763
  %v1824 = vmul.f32 %v83, %v1763
  %v1825 = vmul.f32 %v84, %v1763
  %v1826 = vmul.f32 %v85, %v1763
  %v1827 = vmul.f32 %v86, %v1763
  %v1828 = vmul.f32 %v87, %v1763
  %v1829 = vmul.f32 %v88, %v1763
  %v1830 = vmul.f32 %v89, %v1763
  %v1831 = vmul.f32 %v90, %v1763
  %v1832 = vmul.f32 %v91, %v1763
  %v1833 = vmul.f32 %v92, %v1763
  %v1834 = vmul.f32 %v93, %v1763
  %v1835 = vmul.f32 %v94, %v1763
  %v1836 = vmul.f32 %v95, %v1763
  %v1837 = vmul.f32 %v96, %v1763
  %v1838 = vmul.f32 %v97, %v1763
  %v1839 = vmul.f32 %v98, %v1763
  %v1840 = vmul.f32 %v99, %v1763
  %v1841 = vmul.f32 %v100, %v1763
  %v1842 = vmul.f32 %v101, %v1763
  %v1843 = vmul.f32 %v102, %v1763
  %v1844 = vmul.f32 %v103, %v1763
  %v1845 = vmul.f32 %v104, %v1763
  %v1846 = vmul.f32 %v105, %v1763
  %v1847 = vmul.f32 %v106, %v1763
  %v1848 = vmul.f32 %v107, %v1763
  %v1849 = vmul.f32 %v108, %v1763
  %v1850 = vmul.f32 %v109, %v1763
  %v1851 = vmul.f32 %v110, %v1763
  %v1852 = vmul.f32 %v111, %v1763
  %v1853 = vmul.f32 %v112, %v1763
  %v1854 = vmul.f32 %v113, %v1763
  %v1855 = vmul.f32 %v114, %v1763
  %v1856 = vmul.f32 %v115, %v1763
  %v1857 = vmul.f32 %v116, %v1763
  %v1858 = vmul.f32 %v117, %v1763
  %v1859 = vmul.f32 %v118, %v1763
  %v1956 = vrot.slane %v1764, 2
  %v1957 = vrot.slane %v1765, 2
  %v1958 = vsel %vm864, %v1956, %v1957
  %v1959 = vrot.slane %v1766, 2
  %v1960 = vsel %vm864, %v1957, %v1959
  %v1961 = vrot.slane %v1767, 2
  %v1962 = vrot.slane %v1768, 2
  %v1963 = vsel %vm864, %v1961, %v1962
  %v1964 = vrot.slane %v1769, 2
  %v1965 = vsel %vm864, %v1962, %v1964
  %v1966 = vrot.slane %v1770, 2
  %v1967 = vrot.slane %v1771, 2
  %v1968 = vsel %vm864, %v1966, %v1967
  %v1969 = vrot.slane %v1772, 2
  %v1970 = vsel %vm864, %v1967, %v1969
  %v1971 = vrot.slane %v1773, 2
  %v1972 = vrot.slane %v1774, 2
  %v1973 = vsel %vm864, %v1971, %v1972
  %v1974 = vrot.slane %v1775, 2
  %v1975 = vsel %vm864, %v1972, %v1974
  %v1976 = vrot.slane %v1776, 2
  %v1977 = vrot.slane %v1777, 2
  %v1978 = vsel %vm864, %v1976, %v1977
  %v1979 = vrot.slane %v1778, 2
  %v1980 = vsel %vm864, %v1977, %v1979
  %v1981 = vrot.slane %v1779, 2
  %v1982 = vrot.slane %v1780, 2
  %v1983 = vsel %vm864, %v1981, %v1982
  %v1984 = vrot.slane %v1781, 2
  %v1985 = vsel %vm864, %v1982, %v1984
  %v1986 = vrot.slane %v1782, 2
  %v1987 = vrot.slane %v1783, 2
  %v1988 = vsel %vm864, %v1986, %v1987
  %v1989 = vrot.slane %v1784, 2
  %v1990 = vsel %vm864, %v1987, %v1989
  %v1991 = vrot.slane %v1785, 2
  %v1992 = vrot.slane %v1786, 2
  %v1993 = vsel %vm864, %v1991, %v1992
  %v1994 = vrot.slane %v1787, 2
  %v1995 = vsel %vm864, %v1992, %v1994
  %v1996 = vrot.slane %v1788, 2
  %v1997 = vrot.slane %v1789, 2
  %v1998 = vsel %vm864, %v1996, %v1997
  %v1999 = vrot.slane %v1790, 2
  %v2000 = vsel %vm864, %v1997, %v1999
  %v2001 = vrot.slane %v1791, 2
  %v2002 = vrot.slane %v1792, 2
  %v2003 = vsel %vm864, %v2001, %v2002
  %v2004 = vrot.slane %v1793, 2
  %v2005 = vsel %vm864, %v2002, %v2004
  %v2006 = vrot.slane %v1794, 2
  %v2007 = vrot.slane %v1795, 2
  %v2008 = vsel %vm864, %v2006, %v2007
  %v2009 = vrot.slane %v1796, 2
  %v2010 = vsel %vm864, %v2007, %v2009
  %v2011 = vrot.slane %v1797, 2
  %v2012 = vrot.slane %v1798, 2
  %v2013 = vsel %vm864, %v2011, %v2012
  %v2014 = vrot.slane %v1799, 2
  %v2015 = vsel %vm864, %v2012, %v2014
  %v2016 = vrot.slane %v1800, 2
  %v2017 = vrot.slane %v1801, 2
  %v2018 = vsel %vm864, %v2016, %v2017
  %v2019 = vrot.slane %v1802, 2
  %v2020 = vsel %vm864, %v2017, %v2019
  %v2021 = vrot.slane %v1803, 2
  %v2022 = vrot.slane %v1804, 2
  %v2023 = vsel %vm864, %v2021, %v2022
  %v2024 = vrot.slane %v1805, 2
  %v2025 = vsel %vm864, %v2022, %v2024
  %v2026 = vrot.slane %v1806, 2
  %v2027 = vrot.slane %v1807, 2
  %v2028 = vsel %vm864, %v2026, %v2027
  %v2029 = vrot.slane %v1808, 2
  %v2030 = vsel %vm864, %v2027, %v2029
  %v2031 = vrot.slane %v1809, 2
  %v2032 = vrot.slane %v1810, 2
  %v2033 = vsel %vm864, %v2031, %v2032
  %v2034 = vrot.slane %v1811, 2
  %v2035 = vsel %vm864, %v2032, %v2034
  %v2036 = vrot.slane %v1812, 2
  %v2037 = vrot.slane %v1813, 2
  %v2038 = vsel %vm864, %v2036, %v2037
  %v2039 = vrot.slane %v1814, 2
  %v2040 = vsel %vm864, %v2037, %v2039
  %v2041 = vrot.slane %v1815, 2
  %v2042 = vrot.slane %v1816, 2
  %v2043 = vsel %vm864, %v2041, %v2042
  %v2044 = vrot.slane %v1817, 2
  %v2045 = vsel %vm864, %v2042, %v2044
  %v2046 = vrot.slane %v1818, 2
  %v2047 = vrot.slane %v1819, 2
  %v2048 = vsel %vm864, %v2046, %v2047
  %v2049 = vrot.slane %v1820, 2
  %v2050 = vsel %vm864, %v2047, %v2049
  %v2051 = vrot.slane %v1821, 2
  %v2052 = vrot.slane %v1822, 2
  %v2053 = vsel %vm864, %v2051, %v2052
  %v2054 = vrot.slane %v1823, 2
  %v2055 = vsel %vm864, %v2052, %v2054
  %v2056 = vrot.slane %v1824, 2
  %v2057 = vrot.slane %v1825, 2
  %v2058 = vsel %vm864, %v2056, %v2057
  %v2059 = vrot.slane %v1826, 2
  %v2060 = vsel %vm864, %v2057, %v2059
  %v2061 = vrot.slane %v1827, 2
  %v2062 = vrot.slane %v1828, 2
  %v2063 = vsel %vm864, %v2061, %v2062
  %v2064 = vrot.slane %v1829, 2
  %v2065 = vsel %vm864, %v2062, %v2064
  %v2066 = vrot.slane %v1830, 2
  %v2067 = vrot.slane %v1831, 2
  %v2068 = vsel %vm864, %v2066, %v2067
  %v2069 = vrot.slane %v1832, 2
  %v2070 = vsel %vm864, %v2067, %v2069
  %v2071 = vrot.slane %v1833, 2
  %v2072 = vrot.slane %v1834, 2
  %v2073 = vsel %vm864, %v2071, %v2072
  %v2074 = vrot.slane %v1835, 2
  %v2075 = vsel %vm864, %v2072, %v2074
  %v2076 = vrot.slane %v1836, 2
  %v2077 = vrot.slane %v1837, 2
  %v2078 = vsel %vm864, %v2076, %v2077
  %v2079 = vrot.slane %v1838, 2
  %v2080 = vsel %vm864, %v2077, %v2079
  %v2081 = vrot.slane %v1839, 2
  %v2082 = vrot.slane %v1840, 2
  %v2083 = vsel %vm864, %v2081, %v2082
  %v2084 = vrot.slane %v1841, 2
  %v2085 = vsel %vm864, %v2082, %v2084
  %v2086 = vrot.slane %v1842, 2
  %v2087 = vrot.slane %v1843, 2
  %v2088 = vsel %vm864, %v2086, %v2087
  %v2089 = vrot.slane %v1844, 2
  %v2090 = vsel %vm864, %v2087, %v2089
  %v2091 = vrot.slane %v1845, 2
  %v2092 = vrot.slane %v1846, 2
  %v2093 = vsel %vm864, %v2091, %v2092
  %v2094 = vrot.slane %v1847, 2
  %v2095 = vsel %vm864, %v2092, %v2094
  %v2096 = vrot.slane %v1848, 2
  %v2097 = vrot.slane %v1849, 2
  %v2098 = vsel %vm864, %v2096, %v2097
  %v2099 = vrot.slane %v1850, 2
  %v2100 = vsel %vm864, %v2097, %v2099
  %v2101 = vrot.slane %v1851, 2
  %v2102 = vrot.slane %v1852, 2
  %v2103 = vsel %vm864, %v2101, %v2102
  %v2104 = vrot.slane %v1853, 2
  %v2105 = vsel %vm864, %v2102, %v2104
  %v2106 = vrot.slane %v1854, 2
  %v2107 = vrot.slane %v1855, 2
  %v2108 = vsel %vm864, %v2106, %v2107
  %v2109 = vrot.slane %v1856, 2
  %v2110 = vsel %vm864, %v2107, %v2109
  %v2111 = vrot.slane %v1857, 2
  %v2112 = vrot.slane %v1858, 2
  %v2113 = vsel %vm864, %v2111, %v2112
  %v2114 = vrot.slane %v1859, 2
  %v2115 = vsel %vm864, %v2112, %v2114
  %v2180 = vadd.f32 %v1699, %v1958
  %v2181 = vadd.f32 %v1700, %v1960
  %v2182 = vadd.f32 %v1701, %v1963
  %v2183 = vadd.f32 %v1702, %v1965
  %v2184 = vadd.f32 %v1703, %v1968
  %v2185 = vadd.f32 %v1704, %v1970
  %v2186 = vadd.f32 %v1705, %v1973
  %v2187 = vadd.f32 %v1706, %v1975
  %v2188 = vadd.f32 %v1707, %v1978
  %v2189 = vadd.f32 %v1708, %v1980
  %v2190 = vadd.f32 %v1709, %v1983
  %v2191 = vadd.f32 %v1710, %v1985
  %v2192 = vadd.f32 %v1711, %v1988
  %v2193 = vadd.f32 %v1712, %v1990
  %v2194 = vadd.f32 %v1713, %v1993
  %v2195 = vadd.f32 %v1714, %v1995
  %v2196 = vadd.f32 %v1715, %v1998
  %v2197 = vadd.f32 %v1716, %v2000
  %v2198 = vadd.f32 %v1717, %v2003
  %v2199 = vadd.f32 %v1718, %v2005
  %v2200 = vadd.f32 %v1719, %v2008
  %v2201 = vadd.f32 %v1720, %v2010
  %v2202 = vadd.f32 %v1721, %v2013
  %v2203 = vadd.f32 %v1722, %v2015
  %v2204 = vadd.f32 %v1723, %v2018
  %v2205 = vadd.f32 %v1724, %v2020
  %v2206 = vadd.f32 %v1725, %v2023
  %v2207 = vadd.f32 %v1726, %v2025
  %v2208 = vadd.f32 %v1727, %v2028
  %v2209 = vadd.f32 %v1728, %v2030
  %v2210 = vadd.f32 %v1729, %v2033
  %v2211 = vadd.f32 %v1730, %v2035
  %v2212 = vadd.f32 %v1731, %v2038
  %v2213 = vadd.f32 %v1732, %v2040
  %v2214 = vadd.f32 %v1733, %v2043
  %v2215 = vadd.f32 %v1734, %v2045
  %v2216 = vadd.f32 %v1735, %v2048
  %v2217 = vadd.f32 %v1736, %v2050
  %v2218 = vadd.f32 %v1737, %v2053
  %v2219 = vadd.f32 %v1738, %v2055
  %v2220 = vadd.f32 %v1739, %v2058
  %v2221 = vadd.f32 %v1740, %v2060
  %v2222 = vadd.f32 %v1741, %v2063
  %v2223 = vadd.f32 %v1742, %v2065
  %v2224 = vadd.f32 %v1743, %v2068
  %v2225 = vadd.f32 %v1744, %v2070
  %v2226 = vadd.f32 %v1745, %v2073
  %v2227 = vadd.f32 %v1746, %v2075
  %v2228 = vadd.f32 %v1747, %v2078
  %v2229 = vadd.f32 %v1748, %v2080
  %v2230 = vadd.f32 %v1749, %v2083
  %v2231 = vadd.f32 %v1750, %v2085
  %v2232 = vadd.f32 %v1751, %v2088
  %v2233 = vadd.f32 %v1752, %v2090
  %v2234 = vadd.f32 %v1753, %v2093
  %v2235 = vadd.f32 %v1754, %v2095
  %v2236 = vadd.f32 %v1755, %v2098
  %v2237 = vadd.f32 %v1756, %v2100
  %v2238 = vadd.f32 %v1757, %v2103
  %v2239 = vadd.f32 %v1758, %v2105
  %v2240 = vadd.f32 %v1759, %v2108
  %v2241 = vadd.f32 %v1760, %v2110
  %v2242 = vadd.f32 %v1761, %v2113
  %v2243 = vadd.f32 %v1762, %v2115
  %v2244 = vperm.slane %v122, 6
  %v2245 = vmul.f32 %v20, %v2244
  %v2246 = vmul.f32 %v21, %v2244
  %v2247 = vmul.f32 %v23, %v2244
  %v2248 = vmul.f32 %v24, %v2244
  %v2249 = vmul.f32 %v26, %v2244
  %v2250 = vmul.f32 %v27, %v2244
  %v2251 = vmul.f32 %v29, %v2244
  %v2252 = vmul.f32 %v30, %v2244
  %v2253 = vmul.f32 %v32, %v2244
  %v2254 = vmul.f32 %v33, %v2244
  %v2255 = vmul.f32 %v35, %v2244
  %v2256 = vmul.f32 %v36, %v2244
  %v2257 = vmul.f32 %v38, %v2244
  %v2258 = vmul.f32 %v39, %v2244
  %v2259 = vmul.f32 %v41, %v2244
  %v2260 = vmul.f32 %v42, %v2244
  %v2261 = vmul.f32 %v44, %v2244
  %v2262 = vmul.f32 %v45, %v2244
  %v2263 = vmul.f32 %v47, %v2244
  %v2264 = vmul.f32 %v48, %v2244
  %v2265 = vmul.f32 %v50, %v2244
  %v2266 = vmul.f32 %v51, %v2244
  %v2267 = vmul.f32 %v53, %v2244
  %v2268 = vmul.f32 %v54, %v2244
  %v2269 = vmul.f32 %v56, %v2244
  %v2270 = vmul.f32 %v57, %v2244
  %v2271 = vmul.f32 %v59, %v2244
  %v2272 = vmul.f32 %v60, %v2244
  %v2273 = vmul.f32 %v62, %v2244
  %v2274 = vmul.f32 %v63, %v2244
  %v2275 = vmul.f32 %v65, %v2244
  %v2276 = vmul.f32 %v66, %v2244
  %v2277 = vmul.f32 %v74, %v2244
  %v2278 = vmul.f32 %v75, %v2244
  %v2279 = vmul.f32 %v77, %v2244
  %v2280 = vmul.f32 %v78, %v2244
  %v2281 = vmul.f32 %v80, %v2244
  %v2282 = vmul.f32 %v81, %v2244
  %v2283 = vmul.f32 %v83, %v2244
  %v2284 = vmul.f32 %v84, %v2244
  %v2285 = vmul.f32 %v86, %v2244
  %v2286 = vmul.f32 %v87, %v2244
  %v2287 = vmul.f32 %v89, %v2244
  %v2288 = vmul.f32 %v90, %v2244
  %v2289 = vmul.f32 %v92, %v2244
  %v2290 = vmul.f32 %v93, %v2244
  %v2291 = vmul.f32 %v95, %v2244
  %v2292 = vmul.f32 %v96, %v2244
  %v2293 = vmul.f32 %v98, %v2244
  %v2294 = vmul.f32 %v99, %v2244
  %v2295 = vmul.f32 %v101, %v2244
  %v2296 = vmul.f32 %v102, %v2244
  %v2297 = vmul.f32 %v104, %v2244
  %v2298 = vmul.f32 %v105, %v2244
  %v2299 = vmul.f32 %v107, %v2244
  %v2300 = vmul.f32 %v108, %v2244
  %v2301 = vmul.f32 %v110, %v2244
  %v2302 = vmul.f32 %v111, %v2244
  %v2303 = vmul.f32 %v113, %v2244
  %v2304 = vmul.f32 %v114, %v2244
  %v2305 = vmul.f32 %v116, %v2244
  %v2306 = vmul.f32 %v117, %v2244
  %v2307 = vmul.f32 %v119, %v2244
  %v2308 = vmul.f32 %v120, %v2244
  %v2309 = vadd.f32 %v2180, %v2245
  %v2310 = vadd.f32 %v2181, %v2246
  %v2311 = vadd.f32 %v2182, %v2247
  %v2312 = vadd.f32 %v2183, %v2248
  %v2313 = vadd.f32 %v2184, %v2249
  %v2314 = vadd.f32 %v2185, %v2250
  %v2315 = vadd.f32 %v2186, %v2251
  %v2316 = vadd.f32 %v2187, %v2252
  %v2317 = vadd.f32 %v2188, %v2253
  %v2318 = vadd.f32 %v2189, %v2254
  %v2319 = vadd.f32 %v2190, %v2255
  %v2320 = vadd.f32 %v2191, %v2256
  %v2321 = vadd.f32 %v2192, %v2257
  %v2322 = vadd.f32 %v2193, %v2258
  %v2323 = vadd.f32 %v2194, %v2259
  %v2324 = vadd.f32 %v2195, %v2260
  %v2325 = vadd.f32 %v2196, %v2261
  %v2326 = vadd.f32 %v2197, %v2262
  %v2327 = vadd.f32 %v2198, %v2263
  %v2328 = vadd.f32 %v2199, %v2264
  %v2329 = vadd.f32 %v2200, %v2265
  %v2330 = vadd.f32 %v2201, %v2266
  %v2331 = vadd.f32 %v2202, %v2267
  %v2332 = vadd.f32 %v2203, %v2268
  %v2333 = vadd.f32 %v2204, %v2269
  %v2334 = vadd.f32 %v2205, %v2270
  %v2335 = vadd.f32 %v2206, %v2271
  %v2336 = vadd.f32 %v2207, %v2272
  %v2337 = vadd.f32 %v2208, %v2273
  %v2338 = vadd.f32 %v2209, %v2274
  %v2339 = vadd.f32 %v2210, %v2275
  %v2340 = vadd.f32 %v2211, %v2276
  %v2341 = vadd.f32 %v2212, %v2277
  %v2342 = vadd.f32 %v2213, %v2278
  %v2343 = vadd.f32 %v2214, %v2279
  %v2344 = vadd.f32 %v2215, %v2280
  %v2345 = vadd.f32 %v2216, %v2281
  %v2346 = vadd.f32 %v2217, %v2282
  %v2347 = vadd.f32 %v2218, %v2283
  %v2348 = vadd.f32 %v2219, %v2284
  %v2349 = vadd.f32 %v2220, %v2285
  %v2350 = vadd.f32 %v2221, %v2286
  %v2351 = vadd.f32 %v2222, %v2287
  %v2352 = vadd.f32 %v2223, %v2288
  %v2353 = vadd.f32 %v2224, %v2289
  %v2354 = vadd.f32 %v2225, %v2290
  %v2355 = vadd.f32 %v2226, %v2291
  %v2356 = vadd.f32 %v2227, %v2292
  %v2357 = vadd.f32 %v2228, %v2293
  %v2358 = vadd.f32 %v2229, %v2294
  %v2359 = vadd.f32 %v2230, %v2295
  %v2360 = vadd.f32 %v2231, %v2296
  %v2361 = vadd.f32 %v2232, %v2297
  %v2362 = vadd.f32 %v2233, %v2298
  %v2363 = vadd.f32 %v2234, %v2299
  %v2364 = vadd.f32 %v2235, %v2300
  %v2365 = vadd.f32 %v2236, %v2301
  %v2366 = vadd.f32 %v2237, %v2302
  %v2367 = vadd.f32 %v2238, %v2303
  %v2368 = vadd.f32 %v2239, %v2304
  %v2369 = vadd.f32 %v2240, %v2305
  %v2370 = vadd.f32 %v2241, %v2306
  %v2371 = vadd.f32 %v2242, %v2307
  %v2372 = vadd.f32 %v2243, %v2308
  %v2373 = vperm.slane %v122, 7
  %v2374 = vmul.f32 %v20, %v2373
  %v2375 = vmul.f32 %v21, %v2373
  %v2376 = vmul.f32 %v22, %v2373
  %v2377 = vmul.f32 %v23, %v2373
  %v2378 = vmul.f32 %v24, %v2373
  %v2379 = vmul.f32 %v25, %v2373
  %v2380 = vmul.f32 %v26, %v2373
  %v2381 = vmul.f32 %v27, %v2373
  %v2382 = vmul.f32 %v28, %v2373
  %v2383 = vmul.f32 %v29, %v2373
  %v2384 = vmul.f32 %v30, %v2373
  %v2385 = vmul.f32 %v31, %v2373
  %v2386 = vmul.f32 %v32, %v2373
  %v2387 = vmul.f32 %v33, %v2373
  %v2388 = vmul.f32 %v34, %v2373
  %v2389 = vmul.f32 %v35, %v2373
  %v2390 = vmul.f32 %v36, %v2373
  %v2391 = vmul.f32 %v37, %v2373
  %v2392 = vmul.f32 %v38, %v2373
  %v2393 = vmul.f32 %v39, %v2373
  %v2394 = vmul.f32 %v40, %v2373
  %v2395 = vmul.f32 %v41, %v2373
  %v2396 = vmul.f32 %v42, %v2373
  %v2397 = vmul.f32 %v43, %v2373
  %v2398 = vmul.f32 %v44, %v2373
  %v2399 = vmul.f32 %v45, %v2373
  %v2400 = vmul.f32 %v46, %v2373
  %v2401 = vmul.f32 %v47, %v2373
  %v2402 = vmul.f32 %v48, %v2373
  %v2403 = vmul.f32 %v49, %v2373
  %v2404 = vmul.f32 %v50, %v2373
  %v2405 = vmul.f32 %v51, %v2373
  %v2406 = vmul.f32 %v52, %v2373
  %v2407 = vmul.f32 %v53, %v2373
  %v2408 = vmul.f32 %v54, %v2373
  %v2409 = vmul.f32 %v55, %v2373
  %v2410 = vmul.f32 %v56, %v2373
  %v2411 = vmul.f32 %v57, %v2373
  %v2412 = vmul.f32 %v58, %v2373
  %v2413 = vmul.f32 %v59, %v2373
  %v2414 = vmul.f32 %v60, %v2373
  %v2415 = vmul.f32 %v61, %v2373
  %v2416 = vmul.f32 %v62, %v2373
  %v2417 = vmul.f32 %v63, %v2373
  %v2418 = vmul.f32 %v64, %v2373
  %v2419 = vmul.f32 %v65, %v2373
  %v2420 = vmul.f32 %v66, %v2373
  %v2421 = vmul.f32 %v67, %v2373
  %v2422 = vmul.f32 %v74, %v2373
  %v2423 = vmul.f32 %v75, %v2373
  %v2424 = vmul.f32 %v76, %v2373
  %v2425 = vmul.f32 %v77, %v2373
  %v2426 = vmul.f32 %v78, %v2373
  %v2427 = vmul.f32 %v79, %v2373
  %v2428 = vmul.f32 %v80, %v2373
  %v2429 = vmul.f32 %v81, %v2373
  %v2430 = vmul.f32 %v82, %v2373
  %v2431 = vmul.f32 %v83, %v2373
  %v2432 = vmul.f32 %v84, %v2373
  %v2433 = vmul.f32 %v85, %v2373
  %v2434 = vmul.f32 %v86, %v2373
  %v2435 = vmul.f32 %v87, %v2373
  %v2436 = vmul.f32 %v88, %v2373
  %v2437 = vmul.f32 %v89, %v2373
  %v2438 = vmul.f32 %v90, %v2373
  %v2439 = vmul.f32 %v91, %v2373
  %v2440 = vmul.f32 %v92, %v2373
  %v2441 = vmul.f32 %v93, %v2373
  %v2442 = vmul.f32 %v94, %v2373
  %v2443 = vmul.f32 %v95, %v2373
  %v2444 = vmul.f32 %v96, %v2373
  %v2445 = vmul.f32 %v97, %v2373
  %v2446 = vmul.f32 %v98, %v2373
  %v2447 = vmul.f32 %v99, %v2373
  %v2448 = vmul.f32 %v100, %v2373
  %v2449 = vmul.f32 %v101, %v2373
  %v2450 = vmul.f32 %v102, %v2373
  %v2451 = vmul.f32 %v103, %v2373
  %v2452 = vmul.f32 %v104, %v2373
  %v2453 = vmul.f32 %v105, %v2373
  %v2454 = vmul.f32 %v106, %v2373
  %v2455 = vmul.f32 %v107, %v2373
  %v2456 = vmul.f32 %v108, %v2373
  %v2457 = vmul.f32 %v109, %v2373
  %v2458 = vmul.f32 %v110, %v2373
  %v2459 = vmul.f32 %v111, %v2373
  %v2460 = vmul.f32 %v112, %v2373
  %v2461 = vmul.f32 %v113, %v2373
  %v2462 = vmul.f32 %v114, %v2373
  %v2463 = vmul.f32 %v115, %v2373
  %v2464 = vmul.f32 %v116, %v2373
  %v2465 = vmul.f32 %v117, %v2373
  %v2466 = vmul.f32 %v118, %v2373
  %v2467 = vmul.f32 %v119, %v2373
  %v2468 = vmul.f32 %v120, %v2373
  %v2469 = vmul.f32 %v121, %v2373
  %v2566 = vrot.slane %v2374, 1
  %v2567 = vrot.slane %v2375, 1
  %v2568 = vsel %vm382, %v2566, %v2567
  %v2569 = vrot.slane %v2376, 1
  %v2570 = vsel %vm382, %v2567, %v2569
  %v2571 = vrot.slane %v2377, 1
  %v2572 = vrot.slane %v2378, 1
  %v2573 = vsel %vm382, %v2571, %v2572
  %v2574 = vrot.slane %v2379, 1
  %v2575 = vsel %vm382, %v2572, %v2574
  %v2576 = vrot.slane %v2380, 1
  %v2577 = vrot.slane %v2381, 1
  %v2578 = vsel %vm382, %v2576, %v2577
  %v2579 = vrot.slane %v2382, 1
  %v2580 = vsel %vm382, %v2577, %v2579
  %v2581 = vrot.slane %v2383, 1
  %v2582 = vrot.slane %v2384, 1
  %v2583 = vsel %vm382, %v2581, %v2582
  %v2584 = vrot.slane %v2385, 1
  %v2585 = vsel %vm382, %v2582, %v2584
  %v2586 = vrot.slane %v2386, 1
  %v2587 = vrot.slane %v2387, 1
  %v2588 = vsel %vm382, %v2586, %v2587
  %v2589 = vrot.slane %v2388, 1
  %v2590 = vsel %vm382, %v2587, %v2589
  %v2591 = vrot.slane %v2389, 1
  %v2592 = vrot.slane %v2390, 1
  %v2593 = vsel %vm382, %v2591, %v2592
  %v2594 = vrot.slane %v2391, 1
  %v2595 = vsel %vm382, %v2592, %v2594
  %v2596 = vrot.slane %v2392, 1
  %v2597 = vrot.slane %v2393, 1
  %v2598 = vsel %vm382, %v2596, %v2597
  %v2599 = vrot.slane %v2394, 1
  %v2600 = vsel %vm382, %v2597, %v2599
  %v2601 = vrot.slane %v2395, 1
  %v2602 = vrot.slane %v2396, 1
  %v2603 = vsel %vm382, %v2601, %v2602
  %v2604 = vrot.slane %v2397, 1
  %v2605 = vsel %vm382, %v2602, %v2604
  %v2606 = vrot.slane %v2398, 1
  %v2607 = vrot.slane %v2399, 1
  %v2608 = vsel %vm382, %v2606, %v2607
  %v2609 = vrot.slane %v2400, 1
  %v2610 = vsel %vm382, %v2607, %v2609
  %v2611 = vrot.slane %v2401, 1
  %v2612 = vrot.slane %v2402, 1
  %v2613 = vsel %vm382, %v2611, %v2612
  %v2614 = vrot.slane %v2403, 1
  %v2615 = vsel %vm382, %v2612, %v2614
  %v2616 = vrot.slane %v2404, 1
  %v2617 = vrot.slane %v2405, 1
  %v2618 = vsel %vm382, %v2616, %v2617
  %v2619 = vrot.slane %v2406, 1
  %v2620 = vsel %vm382, %v2617, %v2619
  %v2621 = vrot.slane %v2407, 1
  %v2622 = vrot.slane %v2408, 1
  %v2623 = vsel %vm382, %v2621, %v2622
  %v2624 = vrot.slane %v2409, 1
  %v2625 = vsel %vm382, %v2622, %v2624
  %v2626 = vrot.slane %v2410, 1
  %v2627 = vrot.slane %v2411, 1
  %v2628 = vsel %vm382, %v2626, %v2627
  %v2629 = vrot.slane %v2412, 1
  %v2630 = vsel %vm382, %v2627, %v2629
  %v2631 = vrot.slane %v2413, 1
  %v2632 = vrot.slane %v2414, 1
  %v2633 = vsel %vm382, %v2631, %v2632
  %v2634 = vrot.slane %v2415, 1
  %v2635 = vsel %vm382, %v2632, %v2634
  %v2636 = vrot.slane %v2416, 1
  %v2637 = vrot.slane %v2417, 1
  %v2638 = vsel %vm382, %v2636, %v2637
  %v2639 = vrot.slane %v2418, 1
  %v2640 = vsel %vm382, %v2637, %v2639
  %v2641 = vrot.slane %v2419, 1
  %v2642 = vrot.slane %v2420, 1
  %v2643 = vsel %vm382, %v2641, %v2642
  %v2644 = vrot.slane %v2421, 1
  %v2645 = vsel %vm382, %v2642, %v2644
  %v2646 = vrot.slane %v2422, 1
  %v2647 = vrot.slane %v2423, 1
  %v2648 = vsel %vm382, %v2646, %v2647
  %v2649 = vrot.slane %v2424, 1
  %v2650 = vsel %vm382, %v2647, %v2649
  %v2651 = vrot.slane %v2425, 1
  %v2652 = vrot.slane %v2426, 1
  %v2653 = vsel %vm382, %v2651, %v2652
  %v2654 = vrot.slane %v2427, 1
  %v2655 = vsel %vm382, %v2652, %v2654
  %v2656 = vrot.slane %v2428, 1
  %v2657 = vrot.slane %v2429, 1
  %v2658 = vsel %vm382, %v2656, %v2657
  %v2659 = vrot.slane %v2430, 1
  %v2660 = vsel %vm382, %v2657, %v2659
  %v2661 = vrot.slane %v2431, 1
  %v2662 = vrot.slane %v2432, 1
  %v2663 = vsel %vm382, %v2661, %v2662
  %v2664 = vrot.slane %v2433, 1
  %v2665 = vsel %vm382, %v2662, %v2664
  %v2666 = vrot.slane %v2434, 1
  %v2667 = vrot.slane %v2435, 1
  %v2668 = vsel %vm382, %v2666, %v2667
  %v2669 = vrot.slane %v2436, 1
  %v2670 = vsel %vm382, %v2667, %v2669
  %v2671 = vrot.slane %v2437, 1
  %v2672 = vrot.slane %v2438, 1
  %v2673 = vsel %vm382, %v2671, %v2672
  %v2674 = vrot.slane %v2439, 1
  %v2675 = vsel %vm382, %v2672, %v2674
  %v2676 = vrot.slane %v2440, 1
  %v2677 = vrot.slane %v2441, 1
  %v2678 = vsel %vm382, %v2676, %v2677
  %v2679 = vrot.slane %v2442, 1
  %v2680 = vsel %vm382, %v2677, %v2679
  %v2681 = vrot.slane %v2443, 1
  %v2682 = vrot.slane %v2444, 1
  %v2683 = vsel %vm382, %v2681, %v2682
  %v2684 = vrot.slane %v2445, 1
  %v2685 = vsel %vm382, %v2682, %v2684
  %v2686 = vrot.slane %v2446, 1
  %v2687 = vrot.slane %v2447, 1
  %v2688 = vsel %vm382, %v2686, %v2687
  %v2689 = vrot.slane %v2448, 1
  %v2690 = vsel %vm382, %v2687, %v2689
  %v2691 = vrot.slane %v2449, 1
  %v2692 = vrot.slane %v2450, 1
  %v2693 = vsel %vm382, %v2691, %v2692
  %v2694 = vrot.slane %v2451, 1
  %v2695 = vsel %vm382, %v2692, %v2694
  %v2696 = vrot.slane %v2452, 1
  %v2697 = vrot.slane %v2453, 1
  %v2698 = vsel %vm382, %v2696, %v2697
  %v2699 = vrot.slane %v2454, 1
  %v2700 = vsel %vm382, %v2697, %v2699
  %v2701 = vrot.slane %v2455, 1
  %v2702 = vrot.slane %v2456, 1
  %v2703 = vsel %vm382, %v2701, %v2702
  %v2704 = vrot.slane %v2457, 1
  %v2705 = vsel %vm382, %v2702, %v2704
  %v2706 = vrot.slane %v2458, 1
  %v2707 = vrot.slane %v2459, 1
  %v2708 = vsel %vm382, %v2706, %v2707
  %v2709 = vrot.slane %v2460, 1
  %v2710 = vsel %vm382, %v2707, %v2709
  %v2711 = vrot.slane %v2461, 1
  %v2712 = vrot.slane %v2462, 1
  %v2713 = vsel %vm382, %v2711, %v2712
  %v2714 = vrot.slane %v2463, 1
  %v2715 = vsel %vm382, %v2712, %v2714
  %v2716 = vrot.slane %v2464, 1
  %v2717 = vrot.slane %v2465, 1
  %v2718 = vsel %vm382, %v2716, %v2717
  %v2719 = vrot.slane %v2466, 1
  %v2720 = vsel %vm382, %v2717, %v2719
  %v2721 = vrot.slane %v2467, 1
  %v2722 = vrot.slane %v2468, 1
  %v2723 = vsel %vm382, %v2721, %v2722
  %v2724 = vrot.slane %v2469, 1
  %v2725 = vsel %vm382, %v2722, %v2724
  %v2790 = vadd.f32 %v2309, %v2568
  %v2791 = vadd.f32 %v2310, %v2570
  %v2792 = vadd.f32 %v2311, %v2573
  %v2793 = vadd.f32 %v2312, %v2575
  %v2794 = vadd.f32 %v2313, %v2578
  %v2795 = vadd.f32 %v2314, %v2580
  %v2796 = vadd.f32 %v2315, %v2583
  %v2797 = vadd.f32 %v2316, %v2585
  %v2798 = vadd.f32 %v2317, %v2588
  %v2799 = vadd.f32 %v2318, %v2590
  %v2800 = vadd.f32 %v2319, %v2593
  %v2801 = vadd.f32 %v2320, %v2595
  %v2802 = vadd.f32 %v2321, %v2598
  %v2803 = vadd.f32 %v2322, %v2600
  %v2804 = vadd.f32 %v2323, %v2603
  %v2805 = vadd.f32 %v2324, %v2605
  %v2806 = vadd.f32 %v2325, %v2608
  %v2807 = vadd.f32 %v2326, %v2610
  %v2808 = vadd.f32 %v2327, %v2613
  %v2809 = vadd.f32 %v2328, %v2615
  %v2810 = vadd.f32 %v2329, %v2618
  %v2811 = vadd.f32 %v2330, %v2620
  %v2812 = vadd.f32 %v2331, %v2623
  %v2813 = vadd.f32 %v2332, %v2625
  %v2814 = vadd.f32 %v2333, %v2628
  %v2815 = vadd.f32 %v2334, %v2630
  %v2816 = vadd.f32 %v2335, %v2633
  %v2817 = vadd.f32 %v2336, %v2635
  %v2818 = vadd.f32 %v2337, %v2638
  %v2819 = vadd.f32 %v2338, %v2640
  %v2820 = vadd.f32 %v2339, %v2643
  %v2821 = vadd.f32 %v2340, %v2645
  %v2822 = vadd.f32 %v2341, %v2648
  %v2823 = vadd.f32 %v2342, %v2650
  %v2824 = vadd.f32 %v2343, %v2653
  %v2825 = vadd.f32 %v2344, %v2655
  %v2826 = vadd.f32 %v2345, %v2658
  %v2827 = vadd.f32 %v2346, %v2660
  %v2828 = vadd.f32 %v2347, %v2663
  %v2829 = vadd.f32 %v2348, %v2665
  %v2830 = vadd.f32 %v2349, %v2668
  %v2831 = vadd.f32 %v2350, %v2670
  %v2832 = vadd.f32 %v2351, %v2673
  %v2833 = vadd.f32 %v2352, %v2675
  %v2834 = vadd.f32 %v2353, %v2678
  %v2835 = vadd.f32 %v2354, %v2680
  %v2836 = vadd.f32 %v2355, %v2683
  %v2837 = vadd.f32 %v2356, %v2685
  %v2838 = vadd.f32 %v2357, %v2688
  %v2839 = vadd.f32 %v2358, %v2690
  %v2840 = vadd.f32 %v2359, %v2693
  %v2841 = vadd.f32 %v2360, %v2695
  %v2842 = vadd.f32 %v2361, %v2698
  %v2843 = vadd.f32 %v2362, %v2700
  %v2844 = vadd.f32 %v2363, %v2703
  %v2845 = vadd.f32 %v2364, %v2705
  %v2846 = vadd.f32 %v2365, %v2708
  %v2847 = vadd.f32 %v2366, %v2710
  %v2848 = vadd.f32 %v2367, %v2713
  %v2849 = vadd.f32 %v2368, %v2715
  %v2850 = vadd.f32 %v2369, %v2718
  %v2851 = vadd.f32 %v2370, %v2720
  %v2852 = vadd.f32 %v2371, %v2723
  %v2853 = vadd.f32 %v2372, %v2725
  %v2854 = vperm.slane %v123, 0
  %v2855 = vmul.f32 %v20, %v2854
  %v2856 = vmul.f32 %v21, %v2854
  %v2857 = vmul.f32 %v22, %v2854
  %v2858 = vmul.f32 %v23, %v2854
  %v2859 = vmul.f32 %v24, %v2854
  %v2860 = vmul.f32 %v25, %v2854
  %v2861 = vmul.f32 %v26, %v2854
  %v2862 = vmul.f32 %v27, %v2854
  %v2863 = vmul.f32 %v28, %v2854
  %v2864 = vmul.f32 %v29, %v2854
  %v2865 = vmul.f32 %v30, %v2854
  %v2866 = vmul.f32 %v31, %v2854
  %v2867 = vmul.f32 %v32, %v2854
  %v2868 = vmul.f32 %v33, %v2854
  %v2869 = vmul.f32 %v34, %v2854
  %v2870 = vmul.f32 %v35, %v2854
  %v2871 = vmul.f32 %v36, %v2854
  %v2872 = vmul.f32 %v37, %v2854
  %v2873 = vmul.f32 %v38, %v2854
  %v2874 = vmul.f32 %v39, %v2854
  %v2875 = vmul.f32 %v40, %v2854
  %v2876 = vmul.f32 %v41, %v2854
  %v2877 = vmul.f32 %v42, %v2854
  %v2878 = vmul.f32 %v43, %v2854
  %v2879 = vmul.f32 %v44, %v2854
  %v2880 = vmul.f32 %v45, %v2854
  %v2881 = vmul.f32 %v46, %v2854
  %v2882 = vmul.f32 %v47, %v2854
  %v2883 = vmul.f32 %v48, %v2854
  %v2884 = vmul.f32 %v49, %v2854
  %v2885 = vmul.f32 %v50, %v2854
  %v2886 = vmul.f32 %v51, %v2854
  %v2887 = vmul.f32 %v52, %v2854
  %v2888 = vmul.f32 %v53, %v2854
  %v2889 = vmul.f32 %v54, %v2854
  %v2890 = vmul.f32 %v55, %v2854
  %v2891 = vmul.f32 %v56, %v2854
  %v2892 = vmul.f32 %v57, %v2854
  %v2893 = vmul.f32 %v58, %v2854
  %v2894 = vmul.f32 %v59, %v2854
  %v2895 = vmul.f32 %v60, %v2854
  %v2896 = vmul.f32 %v61, %v2854
  %v2897 = vmul.f32 %v62, %v2854
  %v2898 = vmul.f32 %v63, %v2854
  %v2899 = vmul.f32 %v64, %v2854
  %v2900 = vmul.f32 %v65, %v2854
  %v2901 = vmul.f32 %v66, %v2854
  %v2902 = vmul.f32 %v67, %v2854
  %v2903 = vmul.f32 %v74, %v2854
  %v2904 = vmul.f32 %v75, %v2854
  %v2905 = vmul.f32 %v76, %v2854
  %v2906 = vmul.f32 %v77, %v2854
  %v2907 = vmul.f32 %v78, %v2854
  %v2908 = vmul.f32 %v79, %v2854
  %v2909 = vmul.f32 %v80, %v2854
  %v2910 = vmul.f32 %v81, %v2854
  %v2911 = vmul.f32 %v82, %v2854
  %v2912 = vmul.f32 %v83, %v2854
  %v2913 = vmul.f32 %v84, %v2854
  %v2914 = vmul.f32 %v85, %v2854
  %v2915 = vmul.f32 %v86, %v2854
  %v2916 = vmul.f32 %v87, %v2854
  %v2917 = vmul.f32 %v88, %v2854
  %v2918 = vmul.f32 %v89, %v2854
  %v2919 = vmul.f32 %v90, %v2854
  %v2920 = vmul.f32 %v91, %v2854
  %v2921 = vmul.f32 %v92, %v2854
  %v2922 = vmul.f32 %v93, %v2854
  %v2923 = vmul.f32 %v94, %v2854
  %v2924 = vmul.f32 %v95, %v2854
  %v2925 = vmul.f32 %v96, %v2854
  %v2926 = vmul.f32 %v97, %v2854
  %v2927 = vmul.f32 %v98, %v2854
  %v2928 = vmul.f32 %v99, %v2854
  %v2929 = vmul.f32 %v100, %v2854
  %v2930 = vmul.f32 %v101, %v2854
  %v2931 = vmul.f32 %v102, %v2854
  %v2932 = vmul.f32 %v103, %v2854
  %v2933 = vmul.f32 %v104, %v2854
  %v2934 = vmul.f32 %v105, %v2854
  %v2935 = vmul.f32 %v106, %v2854
  %v2936 = vmul.f32 %v107, %v2854
  %v2937 = vmul.f32 %v108, %v2854
  %v2938 = vmul.f32 %v109, %v2854
  %v2939 = vmul.f32 %v110, %v2854
  %v2940 = vmul.f32 %v111, %v2854
  %v2941 = vmul.f32 %v112, %v2854
  %v2942 = vmul.f32 %v113, %v2854
  %v2943 = vmul.f32 %v114, %v2854
  %v2944 = vmul.f32 %v115, %v2854
  %v2945 = vmul.f32 %v116, %v2854
  %v2946 = vmul.f32 %v117, %v2854
  %v2947 = vmul.f32 %v118, %v2854
  %v2948 = vmul.f32 %v119, %v2854
  %v2949 = vmul.f32 %v120, %v2854
  %v2950 = vmul.f32 %v121, %v2854
  %v3047 = vrot.slane %v2855, 2
  %v3048 = vrot.slane %v2856, 2
  %v3049 = vsel %vm864, %v3047, %v3048
  %v3050 = vrot.slane %v2857, 2
  %v3051 = vsel %vm864, %v3048, %v3050
  %v3052 = vrot.slane %v2858, 2
  %v3053 = vrot.slane %v2859, 2
  %v3054 = vsel %vm864, %v3052, %v3053
  %v3055 = vrot.slane %v2860, 2
  %v3056 = vsel %vm864, %v3053, %v3055
  %v3057 = vrot.slane %v2861, 2
  %v3058 = vrot.slane %v2862, 2
  %v3059 = vsel %vm864, %v3057, %v3058
  %v3060 = vrot.slane %v2863, 2
  %v3061 = vsel %vm864, %v3058, %v3060
  %v3062 = vrot.slane %v2864, 2
  %v3063 = vrot.slane %v2865, 2
  %v3064 = vsel %vm864, %v3062, %v3063
  %v3065 = vrot.slane %v2866, 2
  %v3066 = vsel %vm864, %v3063, %v3065
  %v3067 = vrot.slane %v2867, 2
  %v3068 = vrot.slane %v2868, 2
  %v3069 = vsel %vm864, %v3067, %v3068
  %v3070 = vrot.slane %v2869, 2
  %v3071 = vsel %vm864, %v3068, %v3070
  %v3072 = vrot.slane %v2870, 2
  %v3073 = vrot.slane %v2871, 2
  %v3074 = vsel %vm864, %v3072, %v3073
  %v3075 = vrot.slane %v2872, 2
  %v3076 = vsel %vm864, %v3073, %v3075
  %v3077 = vrot.slane %v2873, 2
  %v3078 = vrot.slane %v2874, 2
  %v3079 = vsel %vm864, %v3077, %v3078
  %v3080 = vrot.slane %v2875, 2
  %v3081 = vsel %vm864, %v3078, %v3080
  %v3082 = vrot.slane %v2876, 2
  %v3083 = vrot.slane %v2877, 2
  %v3084 = vsel %vm864, %v3082, %v3083
  %v3085 = vrot.slane %v2878, 2
  %v3086 = vsel %vm864, %v3083, %v3085
  %v3087 = vrot.slane %v2879, 2
  %v3088 = vrot.slane %v2880, 2
  %v3089 = vsel %vm864, %v3087, %v3088
  %v3090 = vrot.slane %v2881, 2
  %v3091 = vsel %vm864, %v3088, %v3090
  %v3092 = vrot.slane %v2882, 2
  %v3093 = vrot.slane %v2883, 2
  %v3094 = vsel %vm864, %v3092, %v3093
  %v3095 = vrot.slane %v2884, 2
  %v3096 = vsel %vm864, %v3093, %v3095
  %v3097 = vrot.slane %v2885, 2
  %v3098 = vrot.slane %v2886, 2
  %v3099 = vsel %vm864, %v3097, %v3098
  %v3100 = vrot.slane %v2887, 2
  %v3101 = vsel %vm864, %v3098, %v3100
  %v3102 = vrot.slane %v2888, 2
  %v3103 = vrot.slane %v2889, 2
  %v3104 = vsel %vm864, %v3102, %v3103
  %v3105 = vrot.slane %v2890, 2
  %v3106 = vsel %vm864, %v3103, %v3105
  %v3107 = vrot.slane %v2891, 2
  %v3108 = vrot.slane %v2892, 2
  %v3109 = vsel %vm864, %v3107, %v3108
  %v3110 = vrot.slane %v2893, 2
  %v3111 = vsel %vm864, %v3108, %v3110
  %v3112 = vrot.slane %v2894, 2
  %v3113 = vrot.slane %v2895, 2
  %v3114 = vsel %vm864, %v3112, %v3113
  %v3115 = vrot.slane %v2896, 2
  %v3116 = vsel %vm864, %v3113, %v3115
  %v3117 = vrot.slane %v2897, 2
  %v3118 = vrot.slane %v2898, 2
  %v3119 = vsel %vm864, %v3117, %v3118
  %v3120 = vrot.slane %v2899, 2
  %v3121 = vsel %vm864, %v3118, %v3120
  %v3122 = vrot.slane %v2900, 2
  %v3123 = vrot.slane %v2901, 2
  %v3124 = vsel %vm864, %v3122, %v3123
  %v3125 = vrot.slane %v2902, 2
  %v3126 = vsel %vm864, %v3123, %v3125
  %v3127 = vrot.slane %v2903, 2
  %v3128 = vrot.slane %v2904, 2
  %v3129 = vsel %vm864, %v3127, %v3128
  %v3130 = vrot.slane %v2905, 2
  %v3131 = vsel %vm864, %v3128, %v3130
  %v3132 = vrot.slane %v2906, 2
  %v3133 = vrot.slane %v2907, 2
  %v3134 = vsel %vm864, %v3132, %v3133
  %v3135 = vrot.slane %v2908, 2
  %v3136 = vsel %vm864, %v3133, %v3135
  %v3137 = vrot.slane %v2909, 2
  %v3138 = vrot.slane %v2910, 2
  %v3139 = vsel %vm864, %v3137, %v3138
  %v3140 = vrot.slane %v2911, 2
  %v3141 = vsel %vm864, %v3138, %v3140
  %v3142 = vrot.slane %v2912, 2
  %v3143 = vrot.slane %v2913, 2
  %v3144 = vsel %vm864, %v3142, %v3143
  %v3145 = vrot.slane %v2914, 2
  %v3146 = vsel %vm864, %v3143, %v3145
  %v3147 = vrot.slane %v2915, 2
  %v3148 = vrot.slane %v2916, 2
  %v3149 = vsel %vm864, %v3147, %v3148
  %v3150 = vrot.slane %v2917, 2
  %v3151 = vsel %vm864, %v3148, %v3150
  %v3152 = vrot.slane %v2918, 2
  %v3153 = vrot.slane %v2919, 2
  %v3154 = vsel %vm864, %v3152, %v3153
  %v3155 = vrot.slane %v2920, 2
  %v3156 = vsel %vm864, %v3153, %v3155
  %v3157 = vrot.slane %v2921, 2
  %v3158 = vrot.slane %v2922, 2
  %v3159 = vsel %vm864, %v3157, %v3158
  %v3160 = vrot.slane %v2923, 2
  %v3161 = vsel %vm864, %v3158, %v3160
  %v3162 = vrot.slane %v2924, 2
  %v3163 = vrot.slane %v2925, 2
  %v3164 = vsel %vm864, %v3162, %v3163
  %v3165 = vrot.slane %v2926, 2
  %v3166 = vsel %vm864, %v3163, %v3165
  %v3167 = vrot.slane %v2927, 2
  %v3168 = vrot.slane %v2928, 2
  %v3169 = vsel %vm864, %v3167, %v3168
  %v3170 = vrot.slane %v2929, 2
  %v3171 = vsel %vm864, %v3168, %v3170
  %v3172 = vrot.slane %v2930, 2
  %v3173 = vrot.slane %v2931, 2
  %v3174 = vsel %vm864, %v3172, %v3173
  %v3175 = vrot.slane %v2932, 2
  %v3176 = vsel %vm864, %v3173, %v3175
  %v3177 = vrot.slane %v2933, 2
  %v3178 = vrot.slane %v2934, 2
  %v3179 = vsel %vm864, %v3177, %v3178
  %v3180 = vrot.slane %v2935, 2
  %v3181 = vsel %vm864, %v3178, %v3180
  %v3182 = vrot.slane %v2936, 2
  %v3183 = vrot.slane %v2937, 2
  %v3184 = vsel %vm864, %v3182, %v3183
  %v3185 = vrot.slane %v2938, 2
  %v3186 = vsel %vm864, %v3183, %v3185
  %v3187 = vrot.slane %v2939, 2
  %v3188 = vrot.slane %v2940, 2
  %v3189 = vsel %vm864, %v3187, %v3188
  %v3190 = vrot.slane %v2941, 2
  %v3191 = vsel %vm864, %v3188, %v3190
  %v3192 = vrot.slane %v2942, 2
  %v3193 = vrot.slane %v2943, 2
  %v3194 = vsel %vm864, %v3192, %v3193
  %v3195 = vrot.slane %v2944, 2
  %v3196 = vsel %vm864, %v3193, %v3195
  %v3197 = vrot.slane %v2945, 2
  %v3198 = vrot.slane %v2946, 2
  %v3199 = vsel %vm864, %v3197, %v3198
  %v3200 = vrot.slane %v2947, 2
  %v3201 = vsel %vm864, %v3198, %v3200
  %v3202 = vrot.slane %v2948, 2
  %v3203 = vrot.slane %v2949, 2
  %v3204 = vsel %vm864, %v3202, %v3203
  %v3205 = vrot.slane %v2950, 2
  %v3206 = vsel %vm864, %v3203, %v3205
  %v3271 = vadd.f32 %v2790, %v3049
  %v3272 = vadd.f32 %v2791, %v3051
  %v3273 = vadd.f32 %v2792, %v3054
  %v3274 = vadd.f32 %v2793, %v3056
  %v3275 = vadd.f32 %v2794, %v3059
  %v3276 = vadd.f32 %v2795, %v3061
  %v3277 = vadd.f32 %v2796, %v3064
  %v3278 = vadd.f32 %v2797, %v3066
  %v3279 = vadd.f32 %v2798, %v3069
  %v3280 = vadd.f32 %v2799, %v3071
  %v3281 = vadd.f32 %v2800, %v3074
  %v3282 = vadd.f32 %v2801, %v3076
  %v3283 = vadd.f32 %v2802, %v3079
  %v3284 = vadd.f32 %v2803, %v3081
  %v3285 = vadd.f32 %v2804, %v3084
  %v3286 = vadd.f32 %v2805, %v3086
  %v3287 = vadd.f32 %v2806, %v3089
  %v3288 = vadd.f32 %v2807, %v3091
  %v3289 = vadd.f32 %v2808, %v3094
  %v3290 = vadd.f32 %v2809, %v3096
  %v3291 = vadd.f32 %v2810, %v3099
  %v3292 = vadd.f32 %v2811, %v3101
  %v3293 = vadd.f32 %v2812, %v3104
  %v3294 = vadd.f32 %v2813, %v3106
  %v3295 = vadd.f32 %v2814, %v3109
  %v3296 = vadd.f32 %v2815, %v3111
  %v3297 = vadd.f32 %v2816, %v3114
  %v3298 = vadd.f32 %v2817, %v3116
  %v3299 = vadd.f32 %v2818, %v3119
  %v3300 = vadd.f32 %v2819, %v3121
  %v3301 = vadd.f32 %v2820, %v3124
  %v3302 = vadd.f32 %v2821, %v3126
  %v3303 = vadd.f32 %v2822, %v3129
  %v3304 = vadd.f32 %v2823, %v3131
  %v3305 = vadd.f32 %v2824, %v3134
  %v3306 = vadd.f32 %v2825, %v3136
  %v3307 = vadd.f32 %v2826, %v3139
  %v3308 = vadd.f32 %v2827, %v3141
  %v3309 = vadd.f32 %v2828, %v3144
  %v3310 = vadd.f32 %v2829, %v3146
  %v3311 = vadd.f32 %v2830, %v3149
  %v3312 = vadd.f32 %v2831, %v3151
  %v3313 = vadd.f32 %v2832, %v3154
  %v3314 = vadd.f32 %v2833, %v3156
  %v3315 = vadd.f32 %v2834, %v3159
  %v3316 = vadd.f32 %v2835, %v3161
  %v3317 = vadd.f32 %v2836, %v3164
  %v3318 = vadd.f32 %v2837, %v3166
  %v3319 = vadd.f32 %v2838, %v3169
  %v3320 = vadd.f32 %v2839, %v3171
  %v3321 = vadd.f32 %v2840, %v3174
  %v3322 = vadd.f32 %v2841, %v3176
  %v3323 = vadd.f32 %v2842, %v3179
  %v3324 = vadd.f32 %v2843, %v3181
  %v3325 = vadd.f32 %v2844, %v3184
  %v3326 = vadd.f32 %v2845, %v3186
  %v3327 = vadd.f32 %v2846, %v3189
  %v3328 = vadd.f32 %v2847, %v3191
  %v3329 = vadd.f32 %v2848, %v3194
  %v3330 = vadd.f32 %v2849, %v3196
  %v3331 = vadd.f32 %v2850, %v3199
  %v3332 = vadd.f32 %v2851, %v3201
  %v3333 = vadd.f32 %v2852, %v3204
  %v3334 = vadd.f32 %v2853, %v3206
  %v3335 = vld [vmem:[%s2] sm:$0x1]
  %v3337 = vperm.slane %v3335, 0
  %v3339 = vadd.f32 %v3271, %v3337
  %v3340 = vadd.f32 %v3272, %v3337
  %v3341 = vadd.f32 %v3273, %v3337
  %v3342 = vadd.f32 %v3274, %v3337
  %v3343 = vadd.f32 %v3275, %v3337
  %v3344 = vadd.f32 %v3276, %v3337
  %v3345 = vadd.f32 %v3277, %v3337
  %v3346 = vadd.f32 %v3278, %v3337
  %v3347 = vadd.f32 %v3279, %v3337
  %v3348 = vadd.f32 %v3280, %v3337
  %v3349 = vadd.f32 %v3281, %v3337
  %v3350 = vadd.f32 %v3282, %v3337
  %v3351 = vadd.f32 %v3283, %v3337
  %v3352 = vadd.f32 %v3284, %v3337
  %v3353 = vadd.f32 %v3285, %v3337
  %v3354 = vadd.f32 %v3286, %v3337
  %v3355 = vadd.f32 %v3287, %v3337
  %v3356 = vadd.f32 %v3288, %v3337
  %v3357 = vadd.f32 %v3289, %v3337
  %v3358 = vadd.f32 %v3290, %v3337
  %v3359 = vadd.f32 %v3291, %v3337
  %v3360 = vadd.f32 %v3292, %v3337
  %v3361 = vadd.f32 %v3293, %v3337
  %v3362 = vadd.f32 %v3294, %v3337
  %v3363 = vadd.f32 %v3295, %v3337
  %v3364 = vadd.f32 %v3296, %v3337
  %v3365 = vadd.f32 %v3297, %v3337
  %v3366 = vadd.f32 %v3298, %v3337
  %v3367 = vadd.f32 %v3299, %v3337
  %v3368 = vadd.f32 %v3300, %v3337
  %v3369 = vadd.f32 %v3301, %v3337
  %v3370 = vadd.f32 %v3302, %v3337
  %v3371 = vadd.f32 %v3303, %v3337
  %v3372 = vadd.f32 %v3304, %v3337
  %v3373 = vadd.f32 %v3305, %v3337
  %v3374 = vadd.f32 %v3306, %v3337
  %v3375 = vadd.f32 %v3307, %v3337
  %v3376 = vadd.f32 %v3308, %v3337
  %v3377 = vadd.f32 %v3309, %v3337
  %v3378 = vadd.f32 %v3310, %v3337
  %v3379 = vadd.f32 %v3311, %v3337
  %v3380 = vadd.f32 %v3312, %v3337
  %v3381 = vadd.f32 %v3313, %v3337
  %v3382 = vadd.f32 %v3314, %v3337
  %v3383 = vadd.f32 %v3315, %v3337
  %v3384 = vadd.f32 %v3316, %v3337
  %v3385 = vadd.f32 %v3317, %v3337
  %v3386 = vadd.f32 %v3318, %v3337
  %v3387 = vadd.f32 %v3319, %v3337
  %v3388 = vadd.f32 %v3320, %v3337
  %v3389 = vadd.f32 %v3321, %v3337
  %v3390 = vadd.f32 %v3322, %v3337
  %v3391 = vadd.f32 %v3323, %v3337
  %v3392 = vadd.f32 %v3324, %v3337
  %v3393 = vadd.f32 %v3325, %v3337
  %v3394 = vadd.f32 %v3326, %v3337
  %v3395 = vadd.f32 %v3327, %v3337
  %v3396 = vadd.f32 %v3328, %v3337
  %v3397 = vadd.f32 %v3329, %v3337
  %v3398 = vadd.f32 %v3330, %v3337
  %v3399 = vadd.f32 %v3331, %v3337
  %v3400 = vadd.f32 %v3332, %v3337
  %v3401 = vadd.f32 %v3333, %v3337
  %v3402 = vadd.f32 %v3334, %v3337
  %v3403 = vmax.f32 %v3339, 0.0
  %v3404 = vmax.f32 %v3340, 0.0
  %v3405 = vmax.f32 %v3341, 0.0
  %v3406 = vmax.f32 %v3342, 0.0
  %v3407 = vmax.f32 %v3343, 0.0
  %v3408 = vmax.f32 %v3344, 0.0
  %v3409 = vmax.f32 %v3345, 0.0
  %v3410 = vmax.f32 %v3346, 0.0
  %v3411 = vmax.f32 %v3347, 0.0
  %v3412 = vmax.f32 %v3348, 0.0
  %v3413 = vmax.f32 %v3349, 0.0
  %v3414 = vmax.f32 %v3350, 0.0
  %v3415 = vmax.f32 %v3351, 0.0
  %v3416 = vmax.f32 %v3352, 0.0
  %v3417 = vmax.f32 %v3353, 0.0
  %v3418 = vmax.f32 %v3354, 0.0
  %v3419 = vmax.f32 %v3355, 0.0
  %v3420 = vmax.f32 %v3356, 0.0
  %v3421 = vmax.f32 %v3357, 0.0
  %v3422 = vmax.f32 %v3358, 0.0
  %v3423 = vmax.f32 %v3359, 0.0
  %v3424 = vmax.f32 %v3360, 0.0
  %v3425 = vmax.f32 %v3361, 0.0
  %v3426 = vmax.f32 %v3362, 0.0
  %v3427 = vmax.f32 %v3363, 0.0
  %v3428 = vmax.f32 %v3364, 0.0
  %v3429 = vmax.f32 %v3365, 0.0
  %v3430 = vmax.f32 %v3366, 0.0
  %v3431 = vmax.f32 %v3367, 0.0
  %v3432 = vmax.f32 %v3368, 0.0
  %v3433 = vmax.f32 %v3369, 0.0
  %v3434 = vmax.f32 %v3370, 0.0
  %v3435 = vmax.f32 %v3371, 0.0
  %v3436 = vmax.f32 %v3372, 0.0
  %v3437 = vmax.f32 %v3373, 0.0
  %v3438 = vmax.f32 %v3374, 0.0
  %v3439 = vmax.f32 %v3375, 0.0
  %v3440 = vmax.f32 %v3376, 0.0
  %v3441 = vmax.f32 %v3377, 0.0
  %v3442 = vmax.f32 %v3378, 0.0
  %v3443 = vmax.f32 %v3379, 0.0
  %v3444 = vmax.f32 %v3380, 0.0
  %v3445 = vmax.f32 %v3381, 0.0
  %v3446 = vmax.f32 %v3382, 0.0
  %v3447 = vmax.f32 %v3383, 0.0
  %v3448 = vmax.f32 %v3384, 0.0
  %v3449 = vmax.f32 %v3385, 0.0
  %v3450 = vmax.f32 %v3386, 0.0
  %v3451 = vmax.f32 %v3387, 0.0
  %v3452 = vmax.f32 %v3388, 0.0
  %v3453 = vmax.f32 %v3389, 0.0
  %v3454 = vmax.f32 %v3390, 0.0
  %v3455 = vmax.f32 %v3391, 0.0
  %v3456 = vmax.f32 %v3392, 0.0
  %v3457 = vmax.f32 %v3393, 0.0
  %v3458 = vmax.f32 %v3394, 0.0
  %v3459 = vmax.f32 %v3395, 0.0
  %v3460 = vmax.f32 %v3396, 0.0
  %v3461 = vmax.f32 %v3397, 0.0
  %v3462 = vmax.f32 %v3398, 0.0
  %v3463 = vmax.f32 %v3399, 0.0
  %v3464 = vmax.f32 %v3400, 0.0
  %v3465 = vmax.f32 %v3401, 0.0
  %v3466 = vmax.f32 %v3402, 0.0
  %3467 = vst [vmem:[%s3] sm:$0xff] %v3403
  %3468 = vst [vmem:[%s3 + $0x8] sm:$0xff] %v3404
  %3469 = vst [vmem:[%s3 + $0x10] sm:$0xff] %v3405
  %3470 = vst [vmem:[%s3 + $0x18] sm:$0xff] %v3406
  %3471 = vst [vmem:[%s3 + $0x20] sm:$0xff] %v3407
  %3472 = vst [vmem:[%s3 + $0x28] sm:$0xff] %v3408
  %3473 = vst [vmem:[%s3 + $0x30] sm:$0xff] %v3409
  %3474 = vst [vmem:[%s3 + $0x38] sm:$0xff] %v3410
  %3475 = vst [vmem:[%s3 + $0x40] sm:$0xff] %v3411
  %3476 = vst [vmem:[%s3 + $0x48] sm:$0xff] %v3412
  %3477 = vst [vmem:[%s3 + $0x50] sm:$0xff] %v3413
  %3478 = vst [vmem:[%s3 + $0x58] sm:$0xff] %v3414
  %3479 = vst [vmem:[%s3 + $0x60] sm:$0xff] %v3415
  %3480 = vst [vmem:[%s3 + $0x68] sm:$0xff] %v3416
  %3481 = vst [vmem:[%s3 + $0x70] sm:$0xff] %v3417
  %3482 = vst [vmem:[%s3 + $0x78] sm:$0xff] %v3418
  %3483 = vst [vmem:[%s3 + $0x80] sm:$0xff] %v3419
  %3484 = vst [vmem:[%s3 + $0x88] sm:$0xff] %v3420
  %3485 = vst [vmem:[%s3 + $0x90] sm:$0xff] %v3421
  %3486 = vst [vmem:[%s3 + $0x98] sm:$0xff] %v3422
  %3487 = vst [vmem:[%s3 + $0xa0] sm:$0xff] %v3423
  %3488 = vst [vmem:[%s3 + $0xa8] sm:$0xff] %v3424
  %3489 = vst [vmem:[%s3 + $0xb0] sm:$0xff] %v3425
  %3490 = vst [vmem:[%s3 + $0xb8] sm:$0xff] %v3426
  %3491 = vst [vmem:[%s3 + $0xc0] sm:$0xff] %v3427
  %3492 = vst [vmem:[%s3 + $0xc8] sm:$0xff] %v3428
  %3493 = vst [vmem:[%s3 + $0xd0] sm:$0xff] %v3429
  %3494 = vst [vmem:[%s3 + $0xd8] sm:$0xff] %v3430
  %3495 = vst [vmem:[%s3 + $0xe0] sm:$0xff] %v3431
  %3496 = vst [vmem:[%s3 + $0xe8] sm:$0xff] %v3432
  %3497 = vst [vmem:[%s3 + $0xf0] sm:$0xff] %v3433
  %3498 = vst [vmem:[%s3 + $0xf8] sm:$0xff] %v3434
  %3499 = vst [vmem:[%s3 + $0x100] sm:$0xff] %v3435
  %3500 = vst [vmem:[%s3 + $0x108] sm:$0xff] %v3436
  %3501 = vst [vmem:[%s3 + $0x110] sm:$0xff] %v3437
  %3502 = vst [vmem:[%s3 + $0x118] sm:$0xff] %v3438
  %3503 = vst [vmem:[%s3 + $0x120] sm:$0xff] %v3439
  %3504 = vst [vmem:[%s3 + $0x128] sm:$0xff] %v3440
  %3505 = vst [vmem:[%s3 + $0x130] sm:$0xff] %v3441
  %3506 = vst [vmem:[%s3 + $0x138] sm:$0xff] %v3442
  %3507 = vst [vmem:[%s3 + $0x140] sm:$0xff] %v3443
  %3508 = vst [vmem:[%s3 + $0x148] sm:$0xff] %v3444
  %3509 = vst [vmem:[%s3 + $0x150] sm:$0xff] %v3445
  %3510 = vst [vmem:[%s3 + $0x158] sm:$0xff] %v3446
  %3511 = vst [vmem:[%s3 + $0x160] sm:$0xff] %v3447
  %3512 = vst [vmem:[%s3 + $0x168] sm:$0xff] %v3448
  %3513 = vst [vmem:[%s3 + $0x170] sm:$0xff] %v3449
  %3514 = vst [vmem:[%s3 + $0x178] sm:$0xff] %v3450
  %3515 = vst [vmem:[%s3 + $0x180] sm:$0xff] %v3451
  %3516 = vst [vmem:[%s3 + $0x188] sm:$0xff] %v3452
  %3517 = vst [vmem:[%s3 + $0x190] sm:$0xff] %v3453
  %3518 = vst [vmem:[%s3 + $0x198] sm:$0xff] %v3454
  %3519 = vst [vmem:[%s3 + $0x1a0] sm:$0xff] %v3455
  %3520 = vst [vmem:[%s3 + $0x1a8] sm:$0xff] %v3456
  %3521 = vst [vmem:[%s3 + $0x1b0] sm:$0xff] %v3457
  %3522 = vst [vmem:[%s3 + $0x1b8] sm:$0xff] %v3458
  %3523 = vst [vmem:[%s3 + $0x1c0] sm:$0xff] %v3459
  %3524 = vst [vmem:[%s3 + $0x1c8] sm:$0xff] %v3460
  %3525 = vst [vmem:[%s3 + $0x1d0] sm:$0xff] %v3461
  %3526 = vst [vmem:[%s3 + $0x1d8] sm:$0xff] %v3462
  %3527 = vst [vmem:[%s3 + $0x1e0] sm:$0xff] %v3463
  %3528 = vst [vmem:[%s3 + $0x1e8] sm:$0xff] %v3464
  %3529 = vst [vmem:[%s3 + $0x1f0] sm:$0xff] %v3465
  %3530 = vst [vmem:[%s3 + $0x1f8] sm:$0xff] %v3466
  // Predicated region
  $region14: #{mobilenet_forward.20} parent=0 // pred_check
    _
  $region15: #{mobilenet_forward.20} parent=0 // pred_check_branch
    %3532 = sbr.rel (0) target = $region17
  $region16: #{mobilenet_forward.20} parent=0 // pred_region
    _
  $region17: #{mobilenet_forward.20} parent=0 // pred_fallthru
    _
  // Predicated region
  $region18: #{mobilenet_forward.20} parent=0 // pred_check
    _
  $region19: #{mobilenet_forward.20} parent=0 // pred_check_branch
    %3534 = sbr.rel (0) target = $region21
  $region20: #{mobilenet_forward.20} parent=0 // pred_region
    _
  $region21: #{mobilenet_forward.20} parent=0 // pred_fallthru
    _

// kernel: mobilenet_forward.27
$region0: #{mobilenet_forward.27}
  #allocation0 [shape = 'u32[]', space=smem, size = 0x4, offset = 0x4, fixed_abs, tag = 'smem constant byte address 0x4 - core index']
  #allocation1 [shape = 'u32[72,128]{1,0:T(1,128)}', space=vmem, size = 0x9000, scoped, tag = 'internal scratch']
  %s0 = inlined_call_operand.vmem [shape: f32[32,256], index: 0, kind: input, shape index: {}]
  %s1 = inlined_call_operand.vmem [shape: f32[32,128], index: 1, kind: input, shape index: {}]
  %s2 = inlined_call_operand.vmem [shape: f32[256,128], index: 2, kind: input, shape index: {}]
  %s3 = inlined_call_operand.vmem [shape: f32[1,128], index: 3, kind: input, shape index: {}]
  %s4 = inlined_call_operand.vmem [shape: f32[128,128], index: 4, kind: input, shape index: {}]
  %s5 = inlined_call_operand.hbm [shape: f32[1,128], index: 5, kind: input, shape index: {}]
  %s6 = inlined_call_operand.vmem [shape: f32[32,128], index: 6, kind: output, shape index: {}]
  %s7 = sld [smem:[#allocation0]]
  $region38: #{mobilenet_forward.27} parent=0
    _
  %s9 = ssub.s32 1, %s7
  %s10 = scalar_select 0, %s9, %s7
  $region1: #{mobilenet_forward.27} parent=0
    #allocation2 [shape = 'u8[512]{0}', space=vmem, size = 0x400, scoped, tag = 'input window, operand 5, single buffered']
    #allocation3 [shape = 's32[1]{0}', space=sflag, size = 0x4, scoped, tag = 'scoped memory for mobilenet_forward.27']
    %11 = vsyncpa [#allocation3], 0
    // Predicated region
    $region2: #{mobilenet_forward.27} parent=1 // pred_check
      _
    $region3: #{mobilenet_forward.27} parent=1 // pred_check_branch
      %13 = sbr.rel (0) target = $region5
    $region4: #{mobilenet_forward.27} parent=1 // pred_region
      _
    $region5: #{mobilenet_forward.27} parent=1 // pred_fallthru
      _
    // Predicated region
    $region6: #{mobilenet_forward.27} parent=1 // pred_check
      _
    $region7: #{mobilenet_forward.27} parent=1 // pred_check_branch
      %15 = sbr.rel (0) target = $region9
    $region8: #{mobilenet_forward.27} parent=1 // pred_region
      _
    $region9: #{mobilenet_forward.27} parent=1 // pred_fallthru
      _
    // Predicated region
    $region10: #{mobilenet_forward.27} parent=1 // pred_check
      _
    $region11: #{mobilenet_forward.27} parent=1 // pred_check_branch
      %17 = sbr.rel (0) target = $region13
    $region12: #{mobilenet_forward.27} parent=1 // pred_region
      _
    $region13: #{mobilenet_forward.27} parent=1 // pred_fallthru
      _
    // Predicated region
    $region14: #{mobilenet_forward.27} parent=1 // pred_check
      _
    $region15: #{mobilenet_forward.27} parent=1 // pred_check_branch
      %19 = sbr.rel (0) target = $region17
    $region16: #{mobilenet_forward.27} parent=1 // pred_region
      _
    $region17: #{mobilenet_forward.27} parent=1 // pred_fallthru
      _
    // Predicated region
    $region18: #{mobilenet_forward.27} parent=1 // pred_check
      _
    $region19: #{mobilenet_forward.27} parent=1 // pred_check_branch
      %21 = sbr.rel (0) target = $region21
    $region20: #{mobilenet_forward.27} parent=1 // pred_region
      _
    $region21: #{mobilenet_forward.27} parent=1 // pred_fallthru
      _
    // Predicated region
    $region22: #{mobilenet_forward.27} parent=1 // pred_check
      _
    $region23: #{mobilenet_forward.27} parent=1 // pred_check_branch
      %23 = sbr.rel (0) target = $region25
    $region24: #{mobilenet_forward.27} parent=1 // pred_region
      %25 = vsyncadd [#allocation3], 0
      %s27 = sshll.u32 %s5, 4
      %s28 = int_to_ptr.hbm [resolvable:$true] %s27
      %s29 = sshll.u32 [#allocation2], 4
      %s30 = int_to_ptr.vmem [resolvable:$true] %s29
      %32 = dma.hbm_to_vmem [thread:$0]  %s28, 16, %s30, [#allocation3]
    $region25: #{mobilenet_forward.27} parent=1 // pred_fallthru
      _
    // Predicated region
    $region26: #{mobilenet_forward.27} parent=1 // pred_check
      _
    $region27: #{mobilenet_forward.27} parent=1 // pred_check_branch
      %34 = sbr.rel (0) target = $region29
    $region28: #{mobilenet_forward.27} parent=1 // pred_region
      %36 = dma.done [#allocation3], 16
    $region29: #{mobilenet_forward.27} parent=1 // pred_fallthru
      _
    %v37 = vld [vmem:[%s0] sm:$0xff]
    %v38 = vld [vmem:[%s0 + $0x8] sm:$0xff]
    %v39 = vld [vmem:[%s0 + $0x10] sm:$0xff]
    %v40 = vld [vmem:[%s0 + $0x18] sm:$0xff]
    %v41 = vld [vmem:[%s0 + $0x20] sm:$0xff]
    %v42 = vld [vmem:[%s0 + $0x28] sm:$0xff]
    %v43 = vld [vmem:[%s0 + $0x30] sm:$0xff]
    %v44 = vld [vmem:[%s0 + $0x38] sm:$0xff]
    %v45 = vpack.c.bf16 %v39, %v37
    %v46 = vpack.c.bf16 %v40, %v38
    %v47 = vpack.c.bf16 %v43, %v41
    %v48 = vpack.c.bf16 %v44, %v42
    %v49 = vld [vmem:[%s2] sm:$0xff]
    %v50 = vld [vmem:[%s2 + $0x8] sm:$0xff]
    %v51 = vld [vmem:[%s2 + $0x10] sm:$0xff]
    %v52 = vld [vmem:[%s2 + $0x18] sm:$0xff]
    %v53 = vld [vmem:[%s2 + $0x20] sm:$0xff]
    %v54 = vld [vmem:[%s2 + $0x28] sm:$0xff]
    %v55 = vld [vmem:[%s2 + $0x30] sm:$0xff]
    %v56 = vld [vmem:[%s2 + $0x38] sm:$0xff]
    %v57 = vld [vmem:[%s2 + $0x40] sm:$0xff]
    %v58 = vld [vmem:[%s2 + $0x48] sm:$0xff]
    %v59 = vld [vmem:[%s2 + $0x50] sm:$0xff]
    %v60 = vld [vmem:[%s2 + $0x58] sm:$0xff]
    %v61 = vld [vmem:[%s2 + $0x60] sm:$0xff]
    %v62 = vld [vmem:[%s2 + $0x68] sm:$0xff]
    %v63 = vld [vmem:[%s2 + $0x70] sm:$0xff]
    %v64 = vld [vmem:[%s2 + $0x78] sm:$0xff]
    %v65 = vld [vmem:[%s2 + $0x80] sm:$0xff]
    %v66 = vld [vmem:[%s2 + $0x88] sm:$0xff]
    %v67 = vld [vmem:[%s2 + $0x90] sm:$0xff]
    %v68 = vld [vmem:[%s2 + $0x98] sm:$0xff]
    %v69 = vld [vmem:[%s2 + $0xa0] sm:$0xff]
    %v70 = vld [vmem:[%s2 + $0xa8] sm:$0xff]
    %v71 = vld [vmem:[%s2 + $0xb0] sm:$0xff]
    %v72 = vld [vmem:[%s2 + $0xb8] sm:$0xff]
    %v73 = vld [vmem:[%s2 + $0xc0] sm:$0xff]
    %v74 = vld [vmem:[%s2 + $0xc8] sm:$0xff]
    %v75 = vld [vmem:[%s2 + $0xd0] sm:$0xff]
    %v76 = vld [vmem:[%s2 + $0xd8] sm:$0xff]
    %v77 = vld [vmem:[%s2 + $0xe0] sm:$0xff]
    %v78 = vld [vmem:[%s2 + $0xe8] sm:$0xff]
    %v79 = vld [vmem:[%s2 + $0xf0] sm:$0xff]
    %v80 = vld [vmem:[%s2 + $0xf8] sm:$0xff]
    %v81 = vpack.c.bf16 %v50, %v49
    %v82 = vpack.c.bf16 %v52, %v51
    %v83 = vpack.c.bf16 %v54, %v53
    %v84 = vpack.c.bf16 %v56, %v55
    %v85 = vpack.c.bf16 %v58, %v57
    %v86 = vpack.c.bf16 %v60, %v59
    %v87 = vpack.c.bf16 %v62, %v61
    %v88 = vpack.c.bf16 %v64, %v63
    %v89 = vpack.c.bf16 %v66, %v65
    %v90 = vpack.c.bf16 %v68, %v67
    %v91 = vpack.c.bf16 %v70, %v69
    %v92 = vpack.c.bf16 %v72, %v71
    %v93 = vpack.c.bf16 %v74, %v73
    %v94 = vpack.c.bf16 %v76, %v75
    %v95 = vpack.c.bf16 %v78, %v77
    %v96 = vpack.c.bf16 %v80, %v79
    %v97 = vld [vmem:[%s3] sm:$0x1]
    %v99 = vperm.slane %v97, 0
    %101 = vmatpush.bf16.msra.mxu0 %v88
    %102 = vmatpush.bf16.msra.mxu0 %v87
    %103 = vmatpush.bf16.msra.mxu0 %v86
    %104 = vmatpush.bf16.msra.mxu0 %v85
    %105 = vmatpush.bf16.msra.mxu0 %v84
    %106 = vmatpush.bf16.msra.mxu0 %v83
    %107 = vmatpush.bf16.msra.mxu0 %v82
    %108 = vmatpush.bf16.msra.mxu0 %v81
    %109 = vmatmul.bf16.gmra.mxu0 %v45
    %v110 = vpop.f32.mrf.mxu0
    %v111 = vadd.f32 %v99, %v110
    %v112 = vpop.f32.mrf.mxu0
    %v113 = vadd.f32 %v99, %v112
    %114 = vmatmul.bf16.gmra.mxu0 %v47
    %v115 = vpop.f32.mrf.mxu0
    %v116 = vadd.f32 %v99, %v115
    %v117 = vpop.f32.mrf.mxu0
    %v118 = vadd.f32 %v99, %v117
    %119 = vdwg.mxu0
    %120 = vmatpush.bf16.msra.mxu0 %v96
    %121 = vmatpush.bf16.msra.mxu0 %v95
    %122 = vmatpush.bf16.msra.mxu0 %v94
    %123 = vmatpush.bf16.msra.mxu0 %v93
    %124 = vmatpush.bf16.msra.mxu0 %v92
    %125 = vmatpush.bf16.msra.mxu0 %v91
    %126 = vmatpush.bf16.msra.mxu0 %v90
    %127 = vmatpush.bf16.msra.mxu0 %v89
    %128 = vmatmul.bf16.gmra.mxu0 %v46
    %v129 = vpop.f32.mrf.mxu0
    %v130 = vadd.f32 %v111, %v129
    %v131 = vpop.f32.mrf.mxu0
    %v132 = vadd.f32 %v113, %v131
    %133 = vmatmul.bf16.gmra.mxu0 %v48
    %v134 = vpop.f32.mrf.mxu0
    %v135 = vadd.f32 %v116, %v134
    %v136 = vpop.f32.mrf.mxu0
    %v137 = vadd.f32 %v118, %v136
    %138 = vdwg.mxu0
    %v139 = vld [vmem:[%s1] sm:$0xff]
    %v140 = vld [vmem:[%s1 + $0x8] sm:$0xff]
    %v141 = vld [vmem:[%s1 + $0x10] sm:$0xff]
    %v142 = vld [vmem:[%s1 + $0x18] sm:$0xff]
    %v143 = vpack.c.bf16 %v140, %v139
    %v144 = vpack.c.bf16 %v142, %v141
    %v145 = vld [vmem:[%s4] sm:$0xff]
    %v146 = vld [vmem:[%s4 + $0x8] sm:$0xff]
    %v147 = vld [vmem:[%s4 + $0x10] sm:$0xff]
    %v148 = vld [vmem:[%s4 + $0x18] sm:$0xff]
    %v149 = vld [vmem:[%s4 + $0x20] sm:$0xff]
    %v150 = vld [vmem:[%s4 + $0x28] sm:$0xff]
    %v151 = vld [vmem:[%s4 + $0x30] sm:$0xff]
    %v152 = vld [vmem:[%s4 + $0x38] sm:$0xff]
    %v153 = vld [vmem:[%s4 + $0x40] sm:$0xff]
    %v154 = vld [vmem:[%s4 + $0x48] sm:$0xff]
    %v155 = vld [vmem:[%s4 + $0x50] sm:$0xff]
    %v156 = vld [vmem:[%s4 + $0x58] sm:$0xff]
    %v157 = vld [vmem:[%s4 + $0x60] sm:$0xff]
    %v158 = vld [vmem:[%s4 + $0x68] sm:$0xff]
    %v159 = vld [vmem:[%s4 + $0x70] sm:$0xff]
    %v160 = vld [vmem:[%s4 + $0x78] sm:$0xff]
    %v161 = vpack.c.bf16 %v146, %v145
    %v162 = vpack.c.bf16 %v148, %v147
    %v163 = vpack.c.bf16 %v150, %v149
    %v164 = vpack.c.bf16 %v152, %v151
    %v165 = vpack.c.bf16 %v154, %v153
    %v166 = vpack.c.bf16 %v156, %v155
    %v167 = vpack.c.bf16 %v158, %v157
    %v168 = vpack.c.bf16 %v160, %v159
    %v169 = vld [vmem:[#allocation2] sm:$0x1]
    %v171 = vperm.slane %v169, 0
    %173 = vmatpush.bf16.msra.mxu0 %v168
    %174 = vmatpush.bf16.msra.mxu0 %v167
    %175 = vmatpush.bf16.msra.mxu0 %v166
    %176 = vmatpush.bf16.msra.mxu0 %v165
    %177 = vmatpush.bf16.msra.mxu0 %v164
    %178 = vmatpush.bf16.msra.mxu0 %v163
    %179 = vmatpush.bf16.msra.mxu0 %v162
    %180 = vmatpush.bf16.msra.mxu0 %v161
    %181 = vmatmul.bf16.gmra.mxu0 %v143
    %v182 = vpop.f32.mrf.mxu0
    %v183 = vadd.f32 %v171, %v182
    %v184 = vpop.f32.mrf.mxu0
    %v185 = vadd.f32 %v171, %v184
    %186 = vmatmul.bf16.gmra.mxu0 %v144
    %v187 = vpop.f32.mrf.mxu0
    %v188 = vadd.f32 %v171, %v187
    %v189 = vpop.f32.mrf.mxu0
    %v190 = vadd.f32 %v171, %v189
    %191 = vdwg.mxu0
    %v192 = vadd.f32 %v130, %v183
    %v193 = vadd.f32 %v132, %v185
    %v194 = vadd.f32 %v135, %v188
    %v195 = vadd.f32 %v137, %v190
    %196 = vst [vmem:[%s6] sm:$0xff] %v192
    %197 = vst [vmem:[%s6 + $0x8] sm:$0xff] %v193
    %198 = vst [vmem:[%s6 + $0x10] sm:$0xff] %v194
    %199 = vst [vmem:[%s6 + $0x18] sm:$0xff] %v195
    // Predicated region
    $region30: #{mobilenet_forward.27} parent=1 // pred_check
      _
    $region31: #{mobilenet_forward.27} parent=1 // pred_check_branch
      %201 = sbr.rel (0) target = $region33
    $region32: #{mobilenet_forward.27} parent=1 // pred_region
      _
    $region33: #{mobilenet_forward.27} parent=1 // pred_fallthru
      _
    // Predicated region
    $region34: #{mobilenet_forward.27} parent=1 // pred_check
      _
    $region35: #{mobilenet_forward.27} parent=1 // pred_check_branch
      %203 = sbr.rel (0) target = $region37
    $region36: #{mobilenet_forward.27} parent=1 // pred_region
      _
    $region37: #{mobilenet_forward.27} parent=1 // pred_fallthru
      _
    %204 = vsyncpa [#allocation3], 1

// kernel: mobilenet_forward.26
$region0: #{mobilenet_forward.26}
  #allocation0 [shape = 'u32[]', space=smem, size = 0x4, offset = 0x4, fixed_abs, tag = 'smem constant byte address 0x4 - core index']
  #allocation1 [shape = 'u32[72,128]{1,0:T(1,128)}', space=vmem, size = 0x9000, scoped, tag = 'internal scratch']
  %s0 = inlined_call_operand.vmem [shape: f32[2,10,10,256], index: 0, kind: input, shape index: {}]
  %s1 = inlined_call_operand.vmem [shape: f32[9,256], index: 1, kind: input, shape index: {}]
  %s2 = inlined_call_operand.vmem [shape: f32[1,256], index: 2, kind: input, shape index: {}]
  %s3 = inlined_call_operand.vmem [shape: f32[2,8,8,256], index: 3, kind: output, shape index: {}]
  %s4 = sld [smem:[#allocation0]]
  $region22: #{mobilenet_forward.26} parent=0
    _
  %s6 = ssub.s32 1, %s4
  %s7 = scalar_select 0, %s6, %s4
  // Predicated region
  $region2: #{mobilenet_forward.26} parent=0 // pred_check
    _
  $region3: #{mobilenet_forward.26} parent=0 // pred_check_branch
    %9 = sbr.rel (0) target = $region5
  $region4: #{mobilenet_forward.26} parent=0 // pred_region
    _
  $region5: #{mobilenet_forward.26} parent=0 // pred_fallthru
    _
  // Predicated region
  $region6: #{mobilenet_forward.26} parent=0 // pred_check
    _
  $region7: #{mobilenet_forward.26} parent=0 // pred_check_branch
    %11 = sbr.rel (0) target = $region9
  $region8: #{mobilenet_forward.26} parent=0 // pred_region
    _
  $region9: #{mobilenet_forward.26} parent=0 // pred_fallthru
    _
  // Predicated region
  $region10: #{mobilenet_forward.26} parent=0 // pred_check
    _
  $region11: #{mobilenet_forward.26} parent=0 // pred_check_branch
    %13 = sbr.rel (0) target = $region13
  $region12: #{mobilenet_forward.26} parent=0 // pred_region
    _
  $region13: #{mobilenet_forward.26} parent=0 // pred_fallthru
    _
  %v14 = vld [vmem:[%s0] sm:$0xff]
  %v15 = vld [vmem:[%s0 + $0x8] sm:$0xff]
  %v16 = vld [vmem:[%s0 + $0x10] sm:$0x3]
  %v17 = vld [vmem:[%s0 + $0x18] sm:$0x3]
  %v18 = vld [vmem:[%s0 + $0x20] sm:$0xff]
  %v19 = vld [vmem:[%s0 + $0x28] sm:$0xff]
  %v20 = vld [vmem:[%s0 + $0x30] sm:$0x3]
  %v21 = vld [vmem:[%s0 + $0x38] sm:$0x3]
  %v22 = vld [vmem:[%s0 + $0x40] sm:$0xff]
  %v23 = vld [vmem:[%s0 + $0x48] sm:$0xff]
  %v24 = vld [vmem:[%s0 + $0x50] sm:$0x3]
  %v25 = vld [vmem:[%s0 + $0x58] sm:$0x3]
  %v26 = vld [vmem:[%s0 + $0x60] sm:$0xff]
  %v27 = vld [vmem:[%s0 + $0x68] sm:$0xff]
  %v28 = vld [vmem:[%s0 + $0x70] sm:$0x3]
  %v29 = vld [vmem:[%s0 + $0x78] sm:$0x3]
  %v30 = vld [vmem:[%s0 + $0x80] sm:$0xff]
  %v31 = vld [vmem:[%s0 + $0x88] sm:$0xff]
  %v32 = vld [vmem:[%s0 + $0x90] sm:$0x3]
  %v33 = vld [vmem:[%s0 + $0x98] sm:$0x3]
  %v34 = vld [vmem:[%s0 + $0xa0] sm:$0xff]
  %v35 = vld [vmem:[%s0 + $0xa8] sm:$0xff]
  %v36 = vld [vmem:[%s0 + $0xb0] sm:$0x3]
  %v37 = vld [vmem:[%s0 + $0xb8] sm:$0x3]
  %v38 = vld [vmem:[%s0 + $0xc0] sm:$0xff]
  %v39 = vld [vmem:[%s0 + $0xc8] sm:$0xff]
  %v40 = vld [vmem:[%s0 + $0xd0] sm:$0x3]
  %v41 = vld [vmem:[%s0 + $0xd8] sm:$0x3]
  %v42 = vld [vmem:[%s0 + $0xe0] sm:$0xff]
  %v43 = vld [vmem:[%s0 + $0xe8] sm:$0xff]
  %v44 = vld [vmem:[%s0 + $0xf0] sm:$0x3]
  %v45 = vld [vmem:[%s0 + $0xf8] sm:$0x3]
  %v46 = vld [vmem:[%s0 + $0x100] sm:$0xff]
  %v47 = vld [vmem:[%s0 + $0x108] sm:$0xff]
  %v48 = vld [vmem:[%s0 + $0x110] sm:$0x3]
  %v49 = vld [vmem:[%s0 + $0x118] sm:$0x3]
  %v50 = vld [vmem:[%s0 + $0x120] sm:$0xff]
  %v51 = vld [vmem:[%s0 + $0x128] sm:$0xff]
  %v52 = vld [vmem:[%s0 + $0x130] sm:$0x3]
  %v53 = vld [vmem:[%s0 + $0x138] sm:$0x3]
  %v54 = vld [vmem:[%s0 + $0x140] sm:$0xff]
  %v55 = vld [vmem:[%s0 + $0x148] sm:$0xff]
  %v56 = vld [vmem:[%s0 + $0x150] sm:$0x3]
  %v57 = vld [vmem:[%s0 + $0x158] sm:$0x3]
  %v58 = vld [vmem:[%s0 + $0x160] sm:$0xff]
  %v59 = vld [vmem:[%s0 + $0x168] sm:$0xff]
  %v60 = vld [vmem:[%s0 + $0x170] sm:$0x3]
  %v61 = vld [vmem:[%s0 + $0x178] sm:$0x3]
  %v62 = vld [vmem:[%s0 + $0x180] sm:$0xff]
  %v63 = vld [vmem:[%s0 + $0x188] sm:$0xff]
  %v64 = vld [vmem:[%s0 + $0x190] sm:$0x3]
  %v65 = vld [vmem:[%s0 + $0x198] sm:$0x3]
  %v66 = vld [vmem:[%s0 + $0x1a0] sm:$0xff]
  %v67 = vld [vmem:[%s0 + $0x1a8] sm:$0xff]
  %v68 = vld [vmem:[%s0 + $0x1b0] sm:$0x3]
  %v69 = vld [vmem:[%s0 + $0x1b8] sm:$0x3]
  %v70 = vld [vmem:[%s0 + $0x1c0] sm:$0xff]
  %v71 = vld [vmem:[%s0 + $0x1c8] sm:$0xff]
  %v72 = vld [vmem:[%s0 + $0x1d0] sm:$0x3]
  %v73 = vld [vmem:[%s0 + $0x1d8] sm:$0x3]
  %v74 = vld [vmem:[%s0 + $0x1e0] sm:$0xff]
  %v75 = vld [vmem:[%s0 + $0x1e8] sm:$0xff]
  %v76 = vld [vmem:[%s0 + $0x1f0] sm:$0x3]
  %v77 = vld [vmem:[%s0 + $0x1f8] sm:$0x3]
  %v78 = vld [vmem:[%s0 + $0x200] sm:$0xff]
  %v79 = vld [vmem:[%s0 + $0x208] sm:$0xff]
  %v80 = vld [vmem:[%s0 + $0x210] sm:$0x3]
  %v81 = vld [vmem:[%s0 + $0x218] sm:$0x3]
  %v82 = vld [vmem:[%s0 + $0x220] sm:$0xff]
  %v83 = vld [vmem:[%s0 + $0x228] sm:$0xff]
  %v84 = vld [vmem:[%s0 + $0x230] sm:$0x3]
  %v85 = vld [vmem:[%s0 + $0x238] sm:$0x3]
  %v86 = vld [vmem:[%s0 + $0x240] sm:$0xff]
  %v87 = vld [vmem:[%s0 + $0x248] sm:$0xff]
  %v88 = vld [vmem:[%s0 + $0x250] sm:$0x3]
  %v89 = vld [vmem:[%s0 + $0x258] sm:$0x3]
  %v90 = vld [vmem:[%s0 + $0x260] sm:$0xff]
  %v91 = vld [vmem:[%s0 + $0x268] sm:$0xff]
  %v92 = vld [vmem:[%s0 + $0x270] sm:$0x3]
  %v93 = vld [vmem:[%s0 + $0x278] sm:$0x3]
  %v94 = vld [vmem:[%s1] sm:$0xff]
  %v95 = vld [vmem:[%s1 + $0x8] sm:$0xff]
  %v96 = vld [vmem:[%s1 + $0x10] sm:$0x1]
  %v97 = vld [vmem:[%s1 + $0x18] sm:$0x1]
  %v98 = vperm.slane %v94, 0
  %v99 = vperm.slane %v95, 0
  %v100 = vmul.f32 %v14, %v98
  %v101 = vmul.f32 %v15, %v99
  %v102 = vmul.f32 %v18, %v98
  %v103 = vmul.f32 %v19, %v99
  %v104 = vmul.f32 %v22, %v98
  %v105 = vmul.f32 %v23, %v99
  %v106 = vmul.f32 %v26, %v98
  %v107 = vmul.f32 %v27, %v99
  %v108 = vmul.f32 %v30, %v98
  %v109 = vmul.f32 %v31, %v99
  %v110 = vmul.f32 %v34, %v98
  %v111 = vmul.f32 %v35, %v99
  %v112 = vmul.f32 %v38, %v98
  %v113 = vmul.f32 %v39, %v99
  %v114 = vmul.f32 %v42, %v98
  %v115 = vmul.f32 %v43, %v99
  %v116 = vmul.f32 %v54, %v98
  %v117 = vmul.f32 %v55, %v99
  %v118 = vmul.f32 %v58, %v98
  %v119 = vmul.f32 %v59, %v99
  %v120 = vmul.f32 %v62, %v98
  %v121 = vmul.f32 %v63, %v99
  %v122 = vmul.f32 %v66, %v98
  %v123 = vmul.f32 %v67, %v99
  %v124 = vmul.f32 %v70, %v98
  %v125 = vmul.f32 %v71, %v99
  %v126 = vmul.f32 %v74, %v98
  %v127 = vmul.f32 %v75, %v99
  %v128 = vmul.f32 %v78, %v98
  %v129 = vmul.f32 %v79, %v99
  %v130 = vmul.f32 %v82, %v98
  %v131 = vmul.f32 %v83, %v99
  %v132 = vperm.slane %v94, 1
  %v133 = vperm.slane %v95, 1
  %v134 = vmul.f32 %v14, %v132
  %v135 = vmul.f32 %v15, %v133
  %v136 = vmul.f32 %v16, %v132
  %v137 = vmul.f32 %v17, %v133
  %v138 = vmul.f32 %v18, %v132
  %v139 = vmul.f32 %v19, %v133
  %v140 = vmul.f32 %v20, %v132
  %v141 = vmul.f32 %v21, %v133
  %v142 = vmul.f32 %v22, %v132
  %v143 = vmul.f32 %v23, %v133
  %v144 = vmul.f32 %v24, %v132
  %v145 = vmul.f32 %v25, %v133
  %v146 = vmul.f32 %v26, %v132
  %v147 = vmul.f32 %v27, %v133
  %v148 = vmul.f32 %v28, %v132
  %v149 = vmul.f32 %v29, %v133
  %v150 = vmul.f32 %v30, %v132
  %v151 = vmul.f32 %v31, %v133
  %v152 = vmul.f32 %v32, %v132
  %v153 = vmul.f32 %v33, %v133
  %v154 = vmul.f32 %v34, %v132
  %v155 = vmul.f32 %v35, %v133
  %v156 = vmul.f32 %v36, %v132
  %v157 = vmul.f32 %v37, %v133
  %v158 = vmul.f32 %v38, %v132
  %v159 = vmul.f32 %v39, %v133
  %v160 = vmul.f32 %v40, %v132
  %v161 = vmul.f32 %v41, %v133
  %v162 = vmul.f32 %v42, %v132
  %v163 = vmul.f32 %v43, %v133
  %v164 = vmul.f32 %v44, %v132
  %v165 = vmul.f32 %v45, %v133
  %v166 = vmul.f32 %v54, %v132
  %v167 = vmul.f32 %v55, %v133
  %v168 = vmul.f32 %v56, %v132
  %v169 = vmul.f32 %v57, %v133
  %v170 = vmul.f32 %v58, %v132
  %v171 = vmul.f32 %v59, %v133
  %v172 = vmul.f32 %v60, %v132
  %v173 = vmul.f32 %v61, %v133
  %v174 = vmul.f32 %v62, %v132
  %v175 = vmul.f32 %v63, %v133
  %v176 = vmul.f32 %v64, %v132
  %v177 = vmul.f32 %v65, %v133
  %v178 = vmul.f32 %v66, %v132
  %v179 = vmul.f32 %v67, %v133
  %v180 = vmul.f32 %v68, %v132
  %v181 = vmul.f32 %v69, %v133
  %v182 = vmul.f32 %v70, %v132
  %v183 = vmul.f32 %v71, %v133
  %v184 = vmul.f32 %v72, %v132
  %v185 = vmul.f32 %v73, %v133
  %v186 = vmul.f32 %v74, %v132
  %v187 = vmul.f32 %v75, %v133
  %v188 = vmul.f32 %v76, %v132
  %v189 = vmul.f32 %v77, %v133
  %v190 = vmul.f32 %v78, %v132
  %v191 = vmul.f32 %v79, %v133
  %v192 = vmul.f32 %v80, %v132
  %v193 = vmul.f32 %v81, %v133
  %v194 = vmul.f32 %v82, %v132
  %v195 = vmul.f32 %v83, %v133
  %v196 = vmul.f32 %v84, %v132
  %v197 = vmul.f32 %v85, %v133
  %vm262 = vcmask 1046528
  %v263 = vrot.slane %v134, 1
  %v264 = vrot.slane %v136, 1
  %v265 = vsel %vm262, %v263, %v264
  %v266 = vrot.slane %v135, 1
  %v267 = vrot.slane %v137, 1
  %v268 = vsel %vm262, %v266, %v267
  %v269 = vrot.slane %v138, 1
  %v270 = vrot.slane %v140, 1
  %v271 = vsel %vm262, %v269, %v270
  %v272 = vrot.slane %v139, 1
  %v273 = vrot.slane %v141, 1
  %v274 = vsel %vm262, %v272, %v273
  %v275 = vrot.slane %v142, 1
  %v276 = vrot.slane %v144, 1
  %v277 = vsel %vm262, %v275, %v276
  %v278 = vrot.slane %v143, 1
  %v279 = vrot.slane %v145, 1
  %v280 = vsel %vm262, %v278, %v279
  %v281 = vrot.slane %v146, 1
  %v282 = vrot.slane %v148, 1
  %v283 = vsel %vm262, %v281, %v282
  %v284 = vrot.slane %v147, 1
  %v285 = vrot.slane %v149, 1
  %v286 = vsel %vm262, %v284, %v285
  %v287 = vrot.slane %v150, 1
  %v288 = vrot.slane %v152, 1
  %v289 = vsel %vm262, %v287, %v288
  %v290 = vrot.slane %v151, 1
  %v291 = vrot.slane %v153, 1
  %v292 = vsel %vm262, %v290, %v291
  %v293 = vrot.slane %v154, 1
  %v294 = vrot.slane %v156, 1
  %v295 = vsel %vm262, %v293, %v294
  %v296 = vrot.slane %v155, 1
  %v297 = vrot.slane %v157, 1
  %v298 = vsel %vm262, %v296, %v297
  %v299 = vrot.slane %v158, 1
  %v300 = vrot.slane %v160, 1
  %v301 = vsel %vm262, %v299, %v300
  %v302 = vrot.slane %v159, 1
  %v303 = vrot.slane %v161, 1
  %v304 = vsel %vm262, %v302, %v303
  %v305 = vrot.slane %v162, 1
  %v306 = vrot.slane %v164, 1
  %v307 = vsel %vm262, %v305, %v306
  %v308 = vrot.slane %v163, 1
  %v309 = vrot.slane %v165, 1
  %v310 = vsel %vm262, %v308, %v309
  %v311 = vrot.slane %v166, 1
  %v312 = vrot.slane %v168, 1
  %v313 = vsel %vm262, %v311, %v312
  %v314 = vrot.slane %v167, 1
  %v315 = vrot.slane %v169, 1
  %v316 = vsel %vm262, %v314, %v315
  %v317 = vrot.slane %v170, 1
  %v318 = vrot.slane %v172, 1
  %v319 = vsel %vm262, %v317, %v318
  %v320 = vrot.slane %v171, 1
  %v321 = vrot.slane %v173, 1
  %v322 = vsel %vm262, %v320, %v321
  %v323 = vrot.slane %v174, 1
  %v324 = vrot.slane %v176, 1
  %v325 = vsel %vm262, %v323, %v324
  %v326 = vrot.slane %v175, 1
  %v327 = vrot.slane %v177, 1
  %v328 = vsel %vm262, %v326, %v327
  %v329 = vrot.slane %v178, 1
  %v330 = vrot.slane %v180, 1
  %v331 = vsel %vm262, %v329, %v330
  %v332 = vrot.slane %v179, 1
  %v333 = vrot.slane %v181, 1
  %v334 = vsel %vm262, %v332, %v333
  %v335 = vrot.slane %v182, 1
  %v336 = vrot.slane %v184, 1
  %v337 = vsel %vm262, %v335, %v336
  %v338 = vrot.slane %v183, 1
  %v339 = vrot.slane %v185, 1
  %v340 = vsel %vm262, %v338, %v339
  %v341 = vrot.slane %v186, 1
  %v342 = vrot.slane %v188, 1
  %v343 = vsel %vm262, %v341, %v342
  %v344 = vrot.slane %v187, 1
  %v345 = vrot.slane %v189, 1
  %v346 = vsel %vm262, %v344, %v345
  %v347 = vrot.slane %v190, 1
  %v348 = vrot.slane %v192, 1
  %v349 = vsel %vm262, %v347, %v348
  %v350 = vrot.slane %v191, 1
  %v351 = vrot.slane %v193, 1
  %v352 = vsel %vm262, %v350, %v351
  %v353 = vrot.slane %v194, 1
  %v354 = vrot.slane %v196, 1
  %v355 = vsel %vm262, %v353, %v354
  %v356 = vrot.slane %v195, 1
  %v357 = vrot.slane %v197, 1
  %v358 = vsel %vm262, %v356, %v357
  %v391 = vadd.f32 %v100, %v265
  %v392 = vadd.f32 %v101, %v268
  %v393 = vadd.f32 %v102, %v271
  %v394 = vadd.f32 %v103, %v274
  %v395 = vadd.f32 %v104, %v277
  %v396 = vadd.f32 %v105, %v280
  %v397 = vadd.f32 %v106, %v283
  %v398 = vadd.f32 %v107, %v286
  %v399 = vadd.f32 %v108, %v289
  %v400 = vadd.f32 %v109, %v292
  %v401 = vadd.f32 %v110, %v295
  %v402 = vadd.f32 %v111, %v298
  %v403 = vadd.f32 %v112, %v301
  %v404 = vadd.f32 %v113, %v304
  %v405 = vadd.f32 %v114, %v307
  %v406 = vadd.f32 %v115, %v310
  %v407 = vadd.f32 %v116, %v313
  %v408 = vadd.f32 %v117, %v316
  %v409 = vadd.f32 %v118, %v319
  %v410 = vadd.f32 %v119, %v322
  %v411 = vadd.f32 %v120, %v325
  %v412 = vadd.f32 %v121, %v328
  %v413 = vadd.f32 %v122, %v331
  %v414 = vadd.f32 %v123, %v334
  %v415 = vadd.f32 %v124, %v337
  %v416 = vadd.f32 %v125, %v340
  %v417 = vadd.f32 %v126, %v343
  %v418 = vadd.f32 %v127, %v346
  %v419 = vadd.f32 %v128, %v349
  %v420 = vadd.f32 %v129, %v352
  %v421 = vadd.f32 %v130, %v355
  %v422 = vadd.f32 %v131, %v358
  %v423 = vperm.slane %v94, 2
  %v424 = vperm.slane %v95, 2
  %v425 = vmul.f32 %v14, %v423
  %v426 = vmul.f32 %v15, %v424
  %v427 = vmul.f32 %v16, %v423
  %v428 = vmul.f32 %v17, %v424
  %v429 = vmul.f32 %v18, %v423
  %v430 = vmul.f32 %v19, %v424
  %v431 = vmul.f32 %v20, %v423
  %v432 = vmul.f32 %v21, %v424
  %v433 = vmul.f32 %v22, %v423
  %v434 = vmul.f32 %v23, %v424
  %v435 = vmul.f32 %v24, %v423
  %v436 = vmul.f32 %v25, %v424
  %v437 = vmul.f32 %v26, %v423
  %v438 = vmul.f32 %v27, %v424
  %v439 = vmul.f32 %v28, %v423
  %v440 = vmul.f32 %v29, %v424
  %v441 = vmul.f32 %v30, %v423
  %v442 = vmul.f32 %v31, %v424
  %v443 = vmul.f32 %v32, %v423
  %v444 = vmul.f32 %v33, %v424
  %v445 = vmul.f32 %v34, %v423
  %v446 = vmul.f32 %v35, %v424
  %v447 = vmul.f32 %v36, %v423
  %v448 = vmul.f32 %v37, %v424
  %v449 = vmul.f32 %v38, %v423
  %v450 = vmul.f32 %v39, %v424
  %v451 = vmul.f32 %v40, %v423
  %v452 = vmul.f32 %v41, %v424
  %v453 = vmul.f32 %v42, %v423
  %v454 = vmul.f32 %v43, %v424
  %v455 = vmul.f32 %v44, %v423
  %v456 = vmul.f32 %v45, %v424
  %v457 = vmul.f32 %v54, %v423
  %v458 = vmul.f32 %v55, %v424
  %v459 = vmul.f32 %v56, %v423
  %v460 = vmul.f32 %v57, %v424
  %v461 = vmul.f32 %v58, %v423
  %v462 = vmul.f32 %v59, %v424
  %v463 = vmul.f32 %v60, %v423
  %v464 = vmul.f32 %v61, %v424
  %v465 = vmul.f32 %v62, %v423
  %v466 = vmul.f32 %v63, %v424
  %v467 = vmul.f32 %v64, %v423
  %v468 = vmul.f32 %v65, %v424
  %v469 = vmul.f32 %v66, %v423
  %v470 = vmul.f32 %v67, %v424
  %v471 = vmul.f32 %v68, %v423
  %v472 = vmul.f32 %v69, %v424
  %v473 = vmul.f32 %v70, %v423
  %v474 = vmul.f32 %v71, %v424
  %v475 = vmul.f32 %v72, %v423
  %v476 = vmul.f32 %v73, %v424
  %v477 = vmul.f32 %v74, %v423
  %v478 = vmul.f32 %v75, %v424
  %v479 = vmul.f32 %v76, %v423
  %v480 = vmul.f32 %v77, %v424
  %v481 = vmul.f32 %v78, %v423
  %v482 = vmul.f32 %v79, %v424
  %v483 = vmul.f32 %v80, %v423
  %v484 = vmul.f32 %v81, %v424
  %v485 = vmul.f32 %v82, %v423
  %v486 = vmul.f32 %v83, %v424
  %v487 = vmul.f32 %v84, %v423
  %v488 = vmul.f32 %v85, %v424
  %vm553 = vcmask 1045504
  %v554 = vrot.slane %v425, 2
  %v555 = vrot.slane %v427, 2
  %v556 = vsel %vm553, %v554, %v555
  %v557 = vrot.slane %v426, 2
  %v558 = vrot.slane %v428, 2
  %v559 = vsel %vm553, %v557, %v558
  %v560 = vrot.slane %v429, 2
  %v561 = vrot.slane %v431, 2
  %v562 = vsel %vm553, %v560, %v561
  %v563 = vrot.slane %v430, 2
  %v564 = vrot.slane %v432, 2
  %v565 = vsel %vm553, %v563, %v564
  %v566 = vrot.slane %v433, 2
  %v567 = vrot.slane %v435, 2
  %v568 = vsel %vm553, %v566, %v567
  %v569 = vrot.slane %v434, 2
  %v570 = vrot.slane %v436, 2
  %v571 = vsel %vm553, %v569, %v570
  %v572 = vrot.slane %v437, 2
  %v573 = vrot.slane %v439, 2
  %v574 = vsel %vm553, %v572, %v573
  %v575 = vrot.slane %v438, 2
  %v576 = vrot.slane %v440, 2
  %v577 = vsel %vm553, %v575, %v576
  %v578 = vrot.slane %v441, 2
  %v579 = vrot.slane %v443, 2
  %v580 = vsel %vm553, %v578, %v579
  %v581 = vrot.slane %v442, 2
  %v582 = vrot.slane %v444, 2
  %v583 = vsel %vm553, %v581, %v582
  %v584 = vrot.slane %v445, 2
  %v585 = vrot.slane %v447, 2
  %v586 = vsel %vm553, %v584, %v585
  %v587 = vrot.slane %v446, 2
  %v588 = vrot.slane %v448, 2
  %v589 = vsel %vm553, %v587, %v588
  %v590 = vrot.slane %v449, 2
  %v591 = vrot.slane %v451, 2
  %v592 = vsel %vm553, %v590, %v591
  %v593 = vrot.slane %v450, 2
  %v594 = vrot.slane %v452, 2
  %v595 = vsel %vm553, %v593, %v594
  %v596 = vrot.slane %v453, 2
  %v597 = vrot.slane %v455, 2
  %v598 = vsel %vm553, %v596, %v597
  %v599 = vrot.slane %v454, 2
  %v600 = vrot.slane %v456, 2
  %v601 = vsel %vm553, %v599, %v600
  %v602 = vrot.slane %v457, 2
  %v603 = vrot.slane %v459, 2
  %v604 = vsel %vm553, %v602, %v603
  %v605 = vrot.slane %v458, 2
  %v606 = vrot.slane %v460, 2
  %v607 = vsel %vm553, %v605, %v606
  %v608 = vrot.slane %v461, 2
  %v609 = vrot.slane %v463, 2
  %v610 = vsel %vm553, %v608, %v609
  %v611 = vrot.slane %v462, 2
  %v612 = vrot.slane %v464, 2
  %v613 = vsel %vm553, %v611, %v612
  %v614 = vrot.slane %v465, 2
  %v615 = vrot.slane %v467, 2
  %v616 = vsel %vm553, %v614, %v615
  %v617 = vrot.slane %v466, 2
  %v618 = vrot.slane %v468, 2
  %v619 = vsel %vm553, %v617, %v618
  %v620 = vrot.slane %v469, 2
  %v621 = vrot.slane %v471, 2
  %v622 = vsel %vm553, %v620, %v621
  %v623 = vrot.slane %v470, 2
  %v624 = vrot.slane %v472, 2
  %v625 = vsel %vm553, %v623, %v624
  %v626 = vrot.slane %v473, 2
  %v627 = vrot.slane %v475, 2
  %v628 = vsel %vm553, %v626, %v627
  %v629 = vrot.slane %v474, 2
  %v630 = vrot.slane %v476, 2
  %v631 = vsel %vm553, %v629, %v630
  %v632 = vrot.slane %v477, 2
  %v633 = vrot.slane %v479, 2
  %v634 = vsel %vm553, %v632, %v633
  %v635 = vrot.slane %v478, 2
  %v636 = vrot.slane %v480, 2
  %v637 = vsel %vm553, %v635, %v636
  %v638 = vrot.slane %v481, 2
  %v639 = vrot.slane %v483, 2
  %v640 = vsel %vm553, %v638, %v639
  %v641 = vrot.slane %v482, 2
  %v642 = vrot.slane %v484, 2
  %v643 = vsel %vm553, %v641, %v642
  %v644 = vrot.slane %v485, 2
  %v645 = vrot.slane %v487, 2
  %v646 = vsel %vm553, %v644, %v645
  %v647 = vrot.slane %v486, 2
  %v648 = vrot.slane %v488, 2
  %v649 = vsel %vm553, %v647, %v648
  %v682 = vadd.f32 %v391, %v556
  %v683 = vadd.f32 %v392, %v559
  %v684 = vadd.f32 %v393, %v562
  %v685 = vadd.f32 %v394, %v565
  %v686 = vadd.f32 %v395, %v568
  %v687 = vadd.f32 %v396, %v571
  %v688 = vadd.f32 %v397, %v574
  %v689 = vadd.f32 %v398, %v577
  %v690 = vadd.f32 %v399, %v580
  %v691 = vadd.f32 %v400, %v583
  %v692 = vadd.f32 %v401, %v586
  %v693 = vadd.f32 %v402, %v589
  %v694 = vadd.f32 %v403, %v592
  %v695 = vadd.f32 %v404, %v595
  %v696 = vadd.f32 %v405, %v598
  %v697 = vadd.f32 %v406, %v601
  %v698 = vadd.f32 %v407, %v604
  %v699 = vadd.f32 %v408, %v607
  %v700 = vadd.f32 %v409, %v610
  %v701 = vadd.f32 %v410, %v613
  %v702 = vadd.f32 %v411, %v616
  %v703 = vadd.f32 %v412, %v619
  %v704 = vadd.f32 %v413, %v622
  %v705 = vadd.f32 %v414, %v625
  %v706 = vadd.f32 %v415, %v628
  %v707 = vadd.f32 %v416, %v631
  %v708 = vadd.f32 %v417, %v634
  %v709 = vadd.f32 %v418, %v637
  %v710 = vadd.f32 %v419, %v640
  %v711 = vadd.f32 %v420, %v643
  %v712 = vadd.f32 %v421, %v646
  %v713 = vadd.f32 %v422, %v649
  %v714 = vperm.slane %v94, 3
  %v715 = vperm.slane %v95, 3
  %v716 = vmul.f32 %v18, %v714
  %v717 = vmul.f32 %v19, %v715
  %v718 = vmul.f32 %v22, %v714
  %v719 = vmul.f32 %v23, %v715
  %v720 = vmul.f32 %v26, %v714
  %v721 = vmul.f32 %v27, %v715
  %v722 = vmul.f32 %v30, %v714
  %v723 = vmul.f32 %v31, %v715
  %v724 = vmul.f32 %v34, %v714
  %v725 = vmul.f32 %v35, %v715
  %v726 = vmul.f32 %v38, %v714
  %v727 = vmul.f32 %v39, %v715
  %v728 = vmul.f32 %v42, %v714
  %v729 = vmul.f32 %v43, %v715
  %v730 = vmul.f32 %v46, %v714
  %v731 = vmul.f32 %v47, %v715
  %v732 = vmul.f32 %v58, %v714
  %v733 = vmul.f32 %v59, %v715
  %v734 = vmul.f32 %v62, %v714
  %v735 = vmul.f32 %v63, %v715
  %v736 = vmul.f32 %v66, %v714
  %v737 = vmul.f32 %v67, %v715
  %v738 = vmul.f32 %v70, %v714
  %v739 = vmul.f32 %v71, %v715
  %v740 = vmul.f32 %v74, %v714
  %v741 = vmul.f32 %v75, %v715
  %v742 = vmul.f32 %v78, %v714
  %v743 = vmul.f32 %v79, %v715
  %v744 = vmul.f32 %v82, %v714
  %v745 = vmul.f32 %v83, %v715
  %v746 = vmul.f32 %v86, %v714
  %v747 = vmul.f32 %v87, %v715
  %v748 = vadd.f32 %v682, %v716
  %v749 = vadd.f32 %v683, %v717
  %v750 = vadd.f32 %v684, %v718
  %v751 = vadd.f32 %v685, %v719
  %v752 = vadd.f32 %v686, %v720
  %v753 = vadd.f32 %v687, %v721
  %v754 = vadd.f32 %v688, %v722
  %v755 = vadd.f32 %v689, %v723
  %v756 = vadd.f32 %v690, %v724
  %v757 = vadd.f32 %v691, %v725
  %v758 = vadd.f32 %v692, %v726
  %v759 = vadd.f32 %v693, %v727
  %v760 = vadd.f32 %v694, %v728
  %v761 = vadd.f32 %v695, %v729
  %v762 = vadd.f32 %v696, %v730
  %v763 = vadd.f32 %v697, %v731
  %v764 = vadd.f32 %v698, %v732
  %v765 = vadd.f32 %v699, %v733
  %v766 = vadd.f32 %v700, %v734
  %v767 = vadd.f32 %v701, %v735
  %v768 = vadd.f32 %v702, %v736
  %v769 = vadd.f32 %v703, %v737
  %v770 = vadd.f32 %v704, %v738
  %v771 = vadd.f32 %v705, %v739
  %v772 = vadd.f32 %v706, %v740
  %v773 = vadd.f32 %v707, %v741
  %v774 = vadd.f32 %v708, %v742
  %v775 = vadd.f32 %v709, %v743
  %v776 = vadd.f32 %v710, %v744
  %v777 = vadd.f32 %v711, %v745
  %v778 = vadd.f32 %v712, %v746
  %v779 = vadd.f32 %v713, %v747
  %v780 = vperm.slane %v94, 4
  %v781 = vperm.slane %v95, 4
  %v782 = vmul.f32 %v18, %v780
  %v783 = vmul.f32 %v19, %v781
  %v784 = vmul.f32 %v20, %v780
  %v785 = vmul.f32 %v21, %v781
  %v786 = vmul.f32 %v22, %v780
  %v787 = vmul.f32 %v23, %v781
  %v788 = vmul.f32 %v24, %v780
  %v789 = vmul.f32 %v25, %v781
  %v790 = vmul.f32 %v26, %v780
  %v791 = vmul.f32 %v27, %v781
  %v792 = vmul.f32 %v28, %v780
  %v793 = vmul.f32 %v29, %v781
  %v794 = vmul.f32 %v30, %v780
  %v795 = vmul.f32 %v31, %v781
  %v796 = vmul.f32 %v32, %v780
  %v797 = vmul.f32 %v33, %v781
  %v798 = vmul.f32 %v34, %v780
  %v799 = vmul.f32 %v35, %v781
  %v800 = vmul.f32 %v36, %v780
  %v801 = vmul.f32 %v37, %v781
  %v802 = vmul.f32 %v38, %v780
  %v803 = vmul.f32 %v39, %v781
  %v804 = vmul.f32 %v40, %v780
  %v805 = vmul.f32 %v41, %v781
  %v806 = vmul.f32 %v42, %v780
  %v807 = vmul.f32 %v43, %v781
  %v808 = vmul.f32 %v44, %v780
  %v809 = vmul.f32 %v45, %v781
  %v810 = vmul.f32 %v46, %v780
  %v811 = vmul.f32 %v47, %v781
  %v812 = vmul.f32 %v48, %v780
  %v813 = vmul.f32 %v49, %v781
  %v814 = vmul.f32 %v58, %v780
  %v815 = vmul.f32 %v59, %v781
  %v816 = vmul.f32 %v60, %v780
  %v817 = vmul.f32 %v61, %v781
  %v818 = vmul.f32 %v62, %v780
  %v819 = vmul.f32 %v63, %v781
  %v820 = vmul.f32 %v64, %v780
  %v821 = vmul.f32 %v65, %v781
  %v822 = vmul.f32 %v66, %v780
  %v823 = vmul.f32 %v67, %v781
  %v824 = vmul.f32 %v68, %v780
  %v825 = vmul.f32 %v69, %v781
  %v826 = vmul.f32 %v70, %v780
  %v827 = vmul.f32 %v71, %v781
  %v828 = vmul.f32 %v72, %v780
  %v829 = vmul.f32 %v73, %v781
  %v830 = vmul.f32 %v74, %v780
  %v831 = vmul.f32 %v75, %v781
  %v832 = vmul.f32 %v76, %v780
  %v833 = vmul.f32 %v77, %v781
  %v834 = vmul.f32 %v78, %v780
  %v835 = vmul.f32 %v79, %v781
  %v836 = vmul.f32 %v80, %v780
  %v837 = vmul.f32 %v81, %v781
  %v838 = vmul.f32 %v82, %v780
  %v839 = vmul.f32 %v83, %v781
  %v840 = vmul.f32 %v84, %v780
  %v841 = vmul.f32 %v85, %v781
  %v842 = vmul.f32 %v86, %v780
  %v843 = vmul.f32 %v87, %v781
  %v844 = vmul.f32 %v88, %v780
  %v845 = vmul.f32 %v89, %v781
  %v910 = vrot.slane %v782, 1
  %v911 = vrot.slane %v784, 1
  %v912 = vsel %vm262, %v910, %v911
  %v913 = vrot.slane %v783, 1
  %v914 = vrot.slane %v785, 1
  %v915 = vsel %vm262, %v913, %v914
  %v916 = vrot.slane %v786, 1
  %v917 = vrot.slane %v788, 1
  %v918 = vsel %vm262, %v916, %v917
  %v919 = vrot.slane %v787, 1
  %v920 = vrot.slane %v789, 1
  %v921 = vsel %vm262, %v919, %v920
  %v922 = vrot.slane %v790, 1
  %v923 = vrot.slane %v792, 1
  %v924 = vsel %vm262, %v922, %v923
  %v925 = vrot.slane %v791, 1
  %v926 = vrot.slane %v793, 1
  %v927 = vsel %vm262, %v925, %v926
  %v928 = vrot.slane %v794, 1
  %v929 = vrot.slane %v796, 1
  %v930 = vsel %vm262, %v928, %v929
  %v931 = vrot.slane %v795, 1
  %v932 = vrot.slane %v797, 1
  %v933 = vsel %vm262, %v931, %v932
  %v934 = vrot.slane %v798, 1
  %v935 = vrot.slane %v800, 1
  %v936 = vsel %vm262, %v934, %v935
  %v937 = vrot.slane %v799, 1
  %v938 = vrot.slane %v801, 1
  %v939 = vsel %vm262, %v937, %v938
  %v940 = vrot.slane %v802, 1
  %v941 = vrot.slane %v804, 1
  %v942 = vsel %vm262, %v940, %v941
  %v943 = vrot.slane %v803, 1
  %v944 = vrot.slane %v805, 1
  %v945 = vsel %vm262, %v943, %v944
  %v946 = vrot.slane %v806, 1
  %v947 = vrot.slane %v808, 1
  %v948 = vsel %vm262, %v946, %v947
  %v949 = vrot.slane %v807, 1
  %v950 = vrot.slane %v809, 1
  %v951 = vsel %vm262, %v949, %v950
  %v952 = vrot.slane %v810, 1
  %v953 = vrot.slane %v812, 1
  %v954 = vsel %vm262, %v952, %v953
  %v955 = vrot.slane %v811, 1
  %v956 = vrot.slane %v813, 1
  %v957 = vsel %vm262, %v955, %v956
  %v958 = vrot.slane %v814, 1
  %v959 = vrot.slane %v816, 1
  %v960 = vsel %vm262, %v958, %v959
  %v961 = vrot.slane %v815, 1
  %v962 = vrot.slane %v817, 1
  %v963 = vsel %vm262, %v961, %v962
  %v964 = vrot.slane %v818, 1
  %v965 = vrot.slane %v820, 1
  %v966 = vsel %vm262, %v964, %v965
  %v967 = vrot.slane %v819, 1
  %v968 = vrot.slane %v821, 1
  %v969 = vsel %vm262, %v967, %v968
  %v970 = vrot.slane %v822, 1
  %v971 = vrot.slane %v824, 1
  %v972 = vsel %vm262, %v970, %v971
  %v973 = vrot.slane %v823, 1
  %v974 = vrot.slane %v825, 1
  %v975 = vsel %vm262, %v973, %v974
  %v976 = vrot.slane %v826, 1
  %v977 = vrot.slane %v828, 1
  %v978 = vsel %vm262, %v976, %v977
  %v979 = vrot.slane %v827, 1
  %v980 = vrot.slane %v829, 1
  %v981 = vsel %vm262, %v979, %v980
  %v982 = vrot.slane %v830, 1
  %v983 = vrot.slane %v832, 1
  %v984 = vsel %vm262, %v982, %v983
  %v985 = vrot.slane %v831, 1
  %v986 = vrot.slane %v833, 1
  %v987 = vsel %vm262, %v985, %v986
  %v988 = vrot.slane %v834, 1
  %v989 = vrot.slane %v836, 1
  %v990 = vsel %vm262, %v988, %v989
  %v991 = vrot.slane %v835, 1
  %v992 = vrot.slane %v837, 1
  %v993 = vsel %vm262, %v991, %v992
  %v994 = vrot.slane %v838, 1
  %v995 = vrot.slane %v840, 1
  %v996 = vsel %vm262, %v994, %v995
  %v997 = vrot.slane %v839, 1
  %v998 = vrot.slane %v841, 1
  %v999 = vsel %vm262, %v997, %v998
  %v1000 = vrot.slane %v842, 1
  %v1001 = vrot.slane %v844, 1
  %v1002 = vsel %vm262, %v1000, %v1001
  %v1003 = vrot.slane %v843, 1
  %v1004 = vrot.slane %v845, 1
  %v1005 = vsel %vm262, %v1003, %v1004
  %v1038 = vadd.f32 %v748, %v912
  %v1039 = vadd.f32 %v749, %v915
  %v1040 = vadd.f32 %v750, %v918
  %v1041 = vadd.f32 %v751, %v921
  %v1042 = vadd.f32 %v752, %v924
  %v1043 = vadd.f32 %v753, %v927
  %v1044 = vadd.f32 %v754, %v930
  %v1045 = vadd.f32 %v755, %v933
  %v1046 = vadd.f32 %v756, %v936
  %v1047 = vadd.f32 %v757, %v939
  %v1048 = vadd.f32 %v758, %v942
  %v1049 = vadd.f32 %v759, %v945
  %v1050 = vadd.f32 %v760, %v948
  %v1051 = vadd.f32 %v761, %v951
  %v1052 = vadd.f32 %v762, %v954
  %v1053 = vadd.f32 %v763, %v957
  %v1054 = vadd.f32 %v764, %v960
  %v1055 = vadd.f32 %v765, %v963
  %v1056 = vadd.f32 %v766, %v966
  %v1057 = vadd.f32 %v767, %v969
  %v1058 = vadd.f32 %v768, %v972
  %v1059 = vadd.f32 %v769, %v975
  %v1060 = vadd.f32 %v770, %v978
  %v1061 = vadd.f32 %v771, %v981
  %v1062 = vadd.f32 %v772, %v984
  %v1063 = vadd.f32 %v773, %v987
  %v1064 = vadd.f32 %v774, %v990
  %v1065 = vadd.f32 %v775, %v993
  %v1066 = vadd.f32 %v776, %v996
  %v1067 = vadd.f32 %v777, %v999
  %v1068 = vadd.f32 %v778, %v1002
  %v1069 = vadd.f32 %v779, %v1005
  %v1070 = vperm.slane %v94, 5
  %v1071 = vperm.slane %v95, 5
  %v1072 = vmul.f32 %v18, %v1070
  %v1073 = vmul.f32 %v19, %v1071
  %v1074 = vmul.f32 %v20, %v1070
  %v1075 = vmul.f32 %v21, %v1071
  %v1076 = vmul.f32 %v22, %v1070
  %v1077 = vmul.f32 %v23, %v1071
  %v1078 = vmul.f32 %v24, %v1070
  %v1079 = vmul.f32 %v25, %v1071
  %v1080 = vmul.f32 %v26, %v1070
  %v1081 = vmul.f32 %v27, %v1071
  %v1082 = vmul.f32 %v28, %v1070
  %v1083 = vmul.f32 %v29, %v1071
  %v1084 = vmul.f32 %v30, %v1070
  %v1085 = vmul.f32 %v31, %v1071
  %v1086 = vmul.f32 %v32, %v1070
  %v1087 = vmul.f32 %v33, %v1071
  %v1088 = vmul.f32 %v34, %v1070
  %v1089 = vmul.f32 %v35, %v1071
  %v1090 = vmul.f32 %v36, %v1070
  %v1091 = vmul.f32 %v37, %v1071
  %v1092 = vmul.f32 %v38, %v1070
  %v1093 = vmul.f32 %v39, %v1071
  %v1094 = vmul.f32 %v40, %v1070
  %v1095 = vmul.f32 %v41, %v1071
  %v1096 = vmul.f32 %v42, %v1070
  %v1097 = vmul.f32 %v43, %v1071
  %v1098 = vmul.f32 %v44, %v1070
  %v1099 = vmul.f32 %v45, %v1071
  %v1100 = vmul.f32 %v46, %v1070
  %v1101 = vmul.f32 %v47, %v1071
  %v1102 = vmul.f32 %v48, %v1070
  %v1103 = vmul.f32 %v49, %v1071
  %v1104 = vmul.f32 %v58, %v1070
  %v1105 = vmul.f32 %v59, %v1071
  %v1106 = vmul.f32 %v60, %v1070
  %v1107 = vmul.f32 %v61, %v1071
  %v1108 = vmul.f32 %v62, %v1070
  %v1109 = vmul.f32 %v63, %v1071
  %v1110 = vmul.f32 %v64, %v1070
  %v1111 = vmul.f32 %v65, %v1071
  %v1112 = vmul.f32 %v66, %v1070
  %v1113 = vmul.f32 %v67, %v1071
  %v1114 = vmul.f32 %v68, %v1070
  %v1115 = vmul.f32 %v69, %v1071
  %v1116 = vmul.f32 %v70, %v1070
  %v1117 = vmul.f32 %v71, %v1071
  %v1118 = vmul.f32 %v72, %v1070
  %v1119 = vmul.f32 %v73, %v1071
  %v1120 = vmul.f32 %v74, %v1070
  %v1121 = vmul.f32 %v75, %v1071
  %v1122 = vmul.f32 %v76, %v1070
  %v1123 = vmul.f32 %v77, %v1071
  %v1124 = vmul.f32 %v78, %v1070
  %v1125 = vmul.f32 %v79, %v1071
  %v1126 = vmul.f32 %v80, %v1070
  %v1127 = vmul.f32 %v81, %v1071
  %v1128 = vmul.f32 %v82, %v1070
  %v1129 = vmul.f32 %v83, %v1071
  %v1130 = vmul.f32 %v84, %v1070
  %v1131 = vmul.f32 %v85, %v1071
  %v1132 = vmul.f32 %v86, %v1070
  %v1133 = vmul.f32 %v87, %v1071
  %v1134 = vmul.f32 %v88, %v1070
  %v1135 = vmul.f32 %v89, %v1071
  %v1200 = vrot.slane %v1072, 2
  %v1201 = vrot.slane %v1074, 2
  %v1202 = vsel %vm553, %v1200, %v1201
  %v1203 = vrot.slane %v1073, 2
  %v1204 = vrot.slane %v1075, 2
  %v1205 = vsel %vm553, %v1203, %v1204
  %v1206 = vrot.slane %v1076, 2
  %v1207 = vrot.slane %v1078, 2
  %v1208 = vsel %vm553, %v1206, %v1207
  %v1209 = vrot.slane %v1077, 2
  %v1210 = vrot.slane %v1079, 2
  %v1211 = vsel %vm553, %v1209, %v1210
  %v1212 = vrot.slane %v1080, 2
  %v1213 = vrot.slane %v1082, 2
  %v1214 = vsel %vm553, %v1212, %v1213
  %v1215 = vrot.slane %v1081, 2
  %v1216 = vrot.slane %v1083, 2
  %v1217 = vsel %vm553, %v1215, %v1216
  %v1218 = vrot.slane %v1084, 2
  %v1219 = vrot.slane %v1086, 2
  %v1220 = vsel %vm553, %v1218, %v1219
  %v1221 = vrot.slane %v1085, 2
  %v1222 = vrot.slane %v1087, 2
  %v1223 = vsel %vm553, %v1221, %v1222
  %v1224 = vrot.slane %v1088, 2
  %v1225 = vrot.slane %v1090, 2
  %v1226 = vsel %vm553, %v1224, %v1225
  %v1227 = vrot.slane %v1089, 2
  %v1228 = vrot.slane %v1091, 2
  %v1229 = vsel %vm553, %v1227, %v1228
  %v1230 = vrot.slane %v1092, 2
  %v1231 = vrot.slane %v1094, 2
  %v1232 = vsel %vm553, %v1230, %v1231
  %v1233 = vrot.slane %v1093, 2
  %v1234 = vrot.slane %v1095, 2
  %v1235 = vsel %vm553, %v1233, %v1234
  %v1236 = vrot.slane %v1096, 2
  %v1237 = vrot.slane %v1098, 2
  %v1238 = vsel %vm553, %v1236, %v1237
  %v1239 = vrot.slane %v1097, 2
  %v1240 = vrot.slane %v1099, 2
  %v1241 = vsel %vm553, %v1239, %v1240
  %v1242 = vrot.slane %v1100, 2
  %v1243 = vrot.slane %v1102, 2
  %v1244 = vsel %vm553, %v1242, %v1243
  %v1245 = vrot.slane %v1101, 2
  %v1246 = vrot.slane %v1103, 2
  %v1247 = vsel %vm553, %v1245, %v1246
  %v1248 = vrot.slane %v1104, 2
  %v1249 = vrot.slane %v1106, 2
  %v1250 = vsel %vm553, %v1248, %v1249
  %v1251 = vrot.slane %v1105, 2
  %v1252 = vrot.slane %v1107, 2
  %v1253 = vsel %vm553, %v1251, %v1252
  %v1254 = vrot.slane %v1108, 2
  %v1255 = vrot.slane %v1110, 2
  %v1256 = vsel %vm553, %v1254, %v1255
  %v1257 = vrot.slane %v1109, 2
  %v1258 = vrot.slane %v1111, 2
  %v1259 = vsel %vm553, %v1257, %v1258
  %v1260 = vrot.slane %v1112, 2
  %v1261 = vrot.slane %v1114, 2
  %v1262 = vsel %vm553, %v1260, %v1261
  %v1263 = vrot.slane %v1113, 2
  %v1264 = vrot.slane %v1115, 2
  %v1265 = vsel %vm553, %v1263, %v1264
  %v1266 = vrot.slane %v1116, 2
  %v1267 = vrot.slane %v1118, 2
  %v1268 = vsel %vm553, %v1266, %v1267
  %v1269 = vrot.slane %v1117, 2
  %v1270 = vrot.slane %v1119, 2
  %v1271 = vsel %vm553, %v1269, %v1270
  %v1272 = vrot.slane %v1120, 2
  %v1273 = vrot.slane %v1122, 2
  %v1274 = vsel %vm553, %v1272, %v1273
  %v1275 = vrot.slane %v1121, 2
  %v1276 = vrot.slane %v1123, 2
  %v1277 = vsel %vm553, %v1275, %v1276
  %v1278 = vrot.slane %v1124, 2
  %v1279 = vrot.slane %v1126, 2
  %v1280 = vsel %vm553, %v1278, %v1279
  %v1281 = vrot.slane %v1125, 2
  %v1282 = vrot.slane %v1127, 2
  %v1283 = vsel %vm553, %v1281, %v1282
  %v1284 = vrot.slane %v1128, 2
  %v1285 = vrot.slane %v1130, 2
  %v1286 = vsel %vm553, %v1284, %v1285
  %v1287 = vrot.slane %v1129, 2
  %v1288 = vrot.slane %v1131, 2
  %v1289 = vsel %vm553, %v1287, %v1288
  %v1290 = vrot.slane %v1132, 2
  %v1291 = vrot.slane %v1134, 2
  %v1292 = vsel %vm553, %v1290, %v1291
  %v1293 = vrot.slane %v1133, 2
  %v1294 = vrot.slane %v1135, 2
  %v1295 = vsel %vm553, %v1293, %v1294
  %v1328 = vadd.f32 %v1038, %v1202
  %v1329 = vadd.f32 %v1039, %v1205
  %v1330 = vadd.f32 %v1040, %v1208
  %v1331 = vadd.f32 %v1041, %v1211
  %v1332 = vadd.f32 %v1042, %v1214
  %v1333 = vadd.f32 %v1043, %v1217
  %v1334 = vadd.f32 %v1044, %v1220
  %v1335 = vadd.f32 %v1045, %v1223
  %v1336 = vadd.f32 %v1046, %v1226
  %v1337 = vadd.f32 %v1047, %v1229
  %v1338 = vadd.f32 %v1048, %v1232
  %v1339 = vadd.f32 %v1049, %v1235
  %v1340 = vadd.f32 %v1050, %v1238
  %v1341 = vadd.f32 %v1051, %v1241
  %v1342 = vadd.f32 %v1052, %v1244
  %v1343 = vadd.f32 %v1053, %v1247
  %v1344 = vadd.f32 %v1054, %v1250
  %v1345 = vadd.f32 %v1055, %v1253
  %v1346 = vadd.f32 %v1056, %v1256
  %v1347 = vadd.f32 %v1057, %v1259
  %v1348 = vadd.f32 %v1058, %v1262
  %v1349 = vadd.f32 %v1059, %v1265
  %v1350 = vadd.f32 %v1060, %v1268
  %v1351 = vadd.f32 %v1061, %v1271
  %v1352 = vadd.f32 %v1062, %v1274
  %v1353 = vadd.f32 %v1063, %v1277
  %v1354 = vadd.f32 %v1064, %v1280
  %v1355 = vadd.f32 %v1065, %v1283
  %v1356 = vadd.f32 %v1066, %v1286
  %v1357 = vadd.f32 %v1067, %v1289
  %v1358 = vadd.f32 %v1068, %v1292
  %v1359 = vadd.f32 %v1069, %v1295
  %v1360 = vperm.slane %v94, 6
  %v1361 = vperm.slane %v95, 6
  %v1362 = vmul.f32 %v22, %v1360
  %v1363 = vmul.f32 %v23, %v1361
  %v1364 = vmul.f32 %v26, %v1360
  %v1365 = vmul.f32 %v27, %v1361
  %v1366 = vmul.f32 %v30, %v1360
  %v1367 = vmul.f32 %v31, %v1361
  %v1368 = vmul.f32 %v34, %v1360
  %v1369 = vmul.f32 %v35, %v1361
  %v1370 = vmul.f32 %v38, %v1360
  %v1371 = vmul.f32 %v39, %v1361
  %v1372 = vmul.f32 %v42, %v1360
  %v1373 = vmul.f32 %v43, %v1361
  %v1374 = vmul.f32 %v46, %v1360
  %v1375 = vmul.f32 %v47, %v1361
  %v1376 = vmul.f32 %v50, %v1360
  %v1377 = vmul.f32 %v51, %v1361
  %v1378 = vmul.f32 %v62, %v1360
  %v1379 = vmul.f32 %v63, %v1361
  %v1380 = vmul.f32 %v66, %v1360
  %v1381 = vmul.f32 %v67, %v1361
  %v1382 = vmul.f32 %v70, %v1360
  %v1383 = vmul.f32 %v71, %v1361
  %v1384 = vmul.f32 %v74, %v1360
  %v1385 = vmul.f32 %v75, %v1361
  %v1386 = vmul.f32 %v78, %v1360
  %v1387 = vmul.f32 %v79, %v1361
  %v1388 = vmul.f32 %v82, %v1360
  %v1389 = vmul.f32 %v83, %v1361
  %v1390 = vmul.f32 %v86, %v1360
  %v1391 = vmul.f32 %v87, %v1361
  %v1392 = vmul.f32 %v90, %v1360
  %v1393 = vmul.f32 %v91, %v1361
  %v1394 = vadd.f32 %v1328, %v1362
  %v1395 = vadd.f32 %v1329, %v1363
  %v1396 = vadd.f32 %v1330, %v1364
  %v1397 = vadd.f32 %v1331, %v1365
  %v1398 = vadd.f32 %v1332, %v1366
  %v1399 = vadd.f32 %v1333, %v1367
  %v1400 = vadd.f32 %v1334, %v1368
  %v1401 = vadd.f32 %v1335, %v1369
  %v1402 = vadd.f32 %v1336, %v1370
  %v1403 = vadd.f32 %v1337, %v1371
  %v1404 = vadd.f32 %v1338, %v1372
  %v1405 = vadd.f32 %v1339, %v1373
  %v1406 = vadd.f32 %v1340, %v1374
  %v1407 = vadd.f32 %v1341, %v1375
  %v1408 = vadd.f32 %v1342, %v1376
  %v1409 = vadd.f32 %v1343, %v1377
  %v1410 = vadd.f32 %v1344, %v1378
  %v1411 = vadd.f32 %v1345, %v1379
  %v1412 = vadd.f32 %v1346, %v1380
  %v1413 = vadd.f32 %v1347, %v1381
  %v1414 = vadd.f32 %v1348, %v1382
  %v1415 = vadd.f32 %v1349, %v1383
  %v1416 = vadd.f32 %v1350, %v1384
  %v1417 = vadd.f32 %v1351, %v1385
  %v1418 = vadd.f32 %v1352, %v1386
  %v1419 = vadd.f32 %v1353, %v1387
  %v1420 = vadd.f32 %v1354, %v1388
  %v1421 = vadd.f32 %v1355, %v1389
  %v1422 = vadd.f32 %v1356, %v1390
  %v1423 = vadd.f32 %v1357, %v1391
  %v1424 = vadd.f32 %v1358, %v1392
  %v1425 = vadd.f32 %v1359, %v1393
  %v1426 = vperm.slane %v94, 7
  %v1427 = vperm.slane %v95, 7
  %v1428 = vmul.f32 %v22, %v1426
  %v1429 = vmul.f32 %v23, %v1427
  %v1430 = vmul.f32 %v24, %v1426
  %v1431 = vmul.f32 %v25, %v1427
  %v1432 = vmul.f32 %v26, %v1426
  %v1433 = vmul.f32 %v27, %v1427
  %v1434 = vmul.f32 %v28, %v1426
  %v1435 = vmul.f32 %v29, %v1427
  %v1436 = vmul.f32 %v30, %v1426
  %v1437 = vmul.f32 %v31, %v1427
  %v1438 = vmul.f32 %v32, %v1426
  %v1439 = vmul.f32 %v33, %v1427
  %v1440 = vmul.f32 %v34, %v1426
  %v1441 = vmul.f32 %v35, %v1427
  %v1442 = vmul.f32 %v36, %v1426
  %v1443 = vmul.f32 %v37, %v1427
  %v1444 = vmul.f32 %v38, %v1426
  %v1445 = vmul.f32 %v39, %v1427
  %v1446 = vmul.f32 %v40, %v1426
  %v1447 = vmul.f32 %v41, %v1427
  %v1448 = vmul.f32 %v42, %v1426
  %v1449 = vmul.f32 %v43, %v1427
  %v1450 = vmul.f32 %v44, %v1426
  %v1451 = vmul.f32 %v45, %v1427
  %v1452 = vmul.f32 %v46, %v1426
  %v1453 = vmul.f32 %v47, %v1427
  %v1454 = vmul.f32 %v48, %v1426
  %v1455 = vmul.f32 %v49, %v1427
  %v1456 = vmul.f32 %v50, %v1426
  %v1457 = vmul.f32 %v51, %v1427
  %v1458 = vmul.f32 %v52, %v1426
  %v1459 = vmul.f32 %v53, %v1427
  %v1460 = vmul.f32 %v62, %v1426
  %v1461 = vmul.f32 %v63, %v1427
  %v1462 = vmul.f32 %v64, %v1426
  %v1463 = vmul.f32 %v65, %v1427
  %v1464 = vmul.f32 %v66, %v1426
  %v1465 = vmul.f32 %v67, %v1427
  %v1466 = vmul.f32 %v68, %v1426
  %v1467 = vmul.f32 %v69, %v1427
  %v1468 = vmul.f32 %v70, %v1426
  %v1469 = vmul.f32 %v71, %v1427
  %v1470 = vmul.f32 %v72, %v1426
  %v1471 = vmul.f32 %v73, %v1427
  %v1472 = vmul.f32 %v74, %v1426
  %v1473 = vmul.f32 %v75, %v1427
  %v1474 = vmul.f32 %v76, %v1426
  %v1475 = vmul.f32 %v77, %v1427
  %v1476 = vmul.f32 %v78, %v1426
  %v1477 = vmul.f32 %v79, %v1427
  %v1478 = vmul.f32 %v80, %v1426
  %v1479 = vmul.f32 %v81, %v1427
  %v1480 = vmul.f32 %v82, %v1426
  %v1481 = vmul.f32 %v83, %v1427
  %v1482 = vmul.f32 %v84, %v1426
  %v1483 = vmul.f32 %v85, %v1427
  %v1484 = vmul.f32 %v86, %v1426
  %v1485 = vmul.f32 %v87, %v1427
  %v1486 = vmul.f32 %v88, %v1426
  %v1487 = vmul.f32 %v89, %v1427
  %v1488 = vmul.f32 %v90, %v1426
  %v1489 = vmul.f32 %v91, %v1427
  %v1490 = vmul.f32 %v92, %v1426
  %v1491 = vmul.f32 %v93, %v1427
  %v1556 = vrot.slane %v1428, 1
  %v1557 = vrot.slane %v1430, 1
  %v1558 = vsel %vm262, %v1556, %v1557
  %v1559 = vrot.slane %v1429, 1
  %v1560 = vrot.slane %v1431, 1
  %v1561 = vsel %vm262, %v1559, %v1560
  %v1562 = vrot.slane %v1432, 1
  %v1563 = vrot.slane %v1434, 1
  %v1564 = vsel %vm262, %v1562, %v1563
  %v1565 = vrot.slane %v1433, 1
  %v1566 = vrot.slane %v1435, 1
  %v1567 = vsel %vm262, %v1565, %v1566
  %v1568 = vrot.slane %v1436, 1
  %v1569 = vrot.slane %v1438, 1
  %v1570 = vsel %vm262, %v1568, %v1569
  %v1571 = vrot.slane %v1437, 1
  %v1572 = vrot.slane %v1439, 1
  %v1573 = vsel %vm262, %v1571, %v1572
  %v1574 = vrot.slane %v1440, 1
  %v1575 = vrot.slane %v1442, 1
  %v1576 = vsel %vm262, %v1574, %v1575
  %v1577 = vrot.slane %v1441, 1
  %v1578 = vrot.slane %v1443, 1
  %v1579 = vsel %vm262, %v1577, %v1578
  %v1580 = vrot.slane %v1444, 1
  %v1581 = vrot.slane %v1446, 1
  %v1582 = vsel %vm262, %v1580, %v1581
  %v1583 = vrot.slane %v1445, 1
  %v1584 = vrot.slane %v1447, 1
  %v1585 = vsel %vm262, %v1583, %v1584
  %v1586 = vrot.slane %v1448, 1
  %v1587 = vrot.slane %v1450, 1
  %v1588 = vsel %vm262, %v1586, %v1587
  %v1589 = vrot.slane %v1449, 1
  %v1590 = vrot.slane %v1451, 1
  %v1591 = vsel %vm262, %v1589, %v1590
  %v1592 = vrot.slane %v1452, 1
  %v1593 = vrot.slane %v1454, 1
  %v1594 = vsel %vm262, %v1592, %v1593
  %v1595 = vrot.slane %v1453, 1
  %v1596 = vrot.slane %v1455, 1
  %v1597 = vsel %vm262, %v1595, %v1596
  %v1598 = vrot.slane %v1456, 1
  %v1599 = vrot.slane %v1458, 1
  %v1600 = vsel %vm262, %v1598, %v1599
  %v1601 = vrot.slane %v1457, 1
  %v1602 = vrot.slane %v1459, 1
  %v1603 = vsel %vm262, %v1601, %v1602
  %v1604 = vrot.slane %v1460, 1
  %v1605 = vrot.slane %v1462, 1
  %v1606 = vsel %vm262, %v1604, %v1605
  %v1607 = vrot.slane %v1461, 1
  %v1608 = vrot.slane %v1463, 1
  %v1609 = vsel %vm262, %v1607, %v1608
  %v1610 = vrot.slane %v1464, 1
  %v1611 = vrot.slane %v1466, 1
  %v1612 = vsel %vm262, %v1610, %v1611
  %v1613 = vrot.slane %v1465, 1
  %v1614 = vrot.slane %v1467, 1
  %v1615 = vsel %vm262, %v1613, %v1614
  %v1616 = vrot.slane %v1468, 1
  %v1617 = vrot.slane %v1470, 1
  %v1618 = vsel %vm262, %v1616, %v1617
  %v1619 = vrot.slane %v1469, 1
  %v1620 = vrot.slane %v1471, 1
  %v1621 = vsel %vm262, %v1619, %v1620
  %v1622 = vrot.slane %v1472, 1
  %v1623 = vrot.slane %v1474, 1
  %v1624 = vsel %vm262, %v1622, %v1623
  %v1625 = vrot.slane %v1473, 1
  %v1626 = vrot.slane %v1475, 1
  %v1627 = vsel %vm262, %v1625, %v1626
  %v1628 = vrot.slane %v1476, 1
  %v1629 = vrot.slane %v1478, 1
  %v1630 = vsel %vm262, %v1628, %v1629
  %v1631 = vrot.slane %v1477, 1
  %v1632 = vrot.slane %v1479, 1
  %v1633 = vsel %vm262, %v1631, %v1632
  %v1634 = vrot.slane %v1480, 1
  %v1635 = vrot.slane %v1482, 1
  %v1636 = vsel %vm262, %v1634, %v1635
  %v1637 = vrot.slane %v1481, 1
  %v1638 = vrot.slane %v1483, 1
  %v1639 = vsel %vm262, %v1637, %v1638
  %v1640 = vrot.slane %v1484, 1
  %v1641 = vrot.slane %v1486, 1
  %v1642 = vsel %vm262, %v1640, %v1641
  %v1643 = vrot.slane %v1485, 1
  %v1644 = vrot.slane %v1487, 1
  %v1645 = vsel %vm262, %v1643, %v1644
  %v1646 = vrot.slane %v1488, 1
  %v1647 = vrot.slane %v1490, 1
  %v1648 = vsel %vm262, %v1646, %v1647
  %v1649 = vrot.slane %v1489, 1
  %v1650 = vrot.slane %v1491, 1
  %v1651 = vsel %vm262, %v1649, %v1650
  %v1684 = vadd.f32 %v1394, %v1558
  %v1685 = vadd.f32 %v1395, %v1561
  %v1686 = vadd.f32 %v1396, %v1564
  %v1687 = vadd.f32 %v1397, %v1567
  %v1688 = vadd.f32 %v1398, %v1570
  %v1689 = vadd.f32 %v1399, %v1573
  %v1690 = vadd.f32 %v1400, %v1576
  %v1691 = vadd.f32 %v1401, %v1579
  %v1692 = vadd.f32 %v1402, %v1582
  %v1693 = vadd.f32 %v1403, %v1585
  %v1694 = vadd.f32 %v1404, %v1588
  %v1695 = vadd.f32 %v1405, %v1591
  %v1696 = vadd.f32 %v1406, %v1594
  %v1697 = vadd.f32 %v1407, %v1597
  %v1698 = vadd.f32 %v1408, %v1600
  %v1699 = vadd.f32 %v1409, %v1603
  %v1700 = vadd.f32 %v1410, %v1606
  %v1701 = vadd.f32 %v1411, %v1609
  %v1702 = vadd.f32 %v1412, %v1612
  %v1703 = vadd.f32 %v1413, %v1615
  %v1704 = vadd.f32 %v1414, %v1618
  %v1705 = vadd.f32 %v1415, %v1621
  %v1706 = vadd.f32 %v1416, %v1624
  %v1707 = vadd.f32 %v1417, %v1627
  %v1708 = vadd.f32 %v1418, %v1630
  %v1709 = vadd.f32 %v1419, %v1633
  %v1710 = vadd.f32 %v1420, %v1636
  %v1711 = vadd.f32 %v1421, %v1639
  %v1712 = vadd.f32 %v1422, %v1642
  %v1713 = vadd.f32 %v1423, %v1645
  %v1714 = vadd.f32 %v1424, %v1648
  %v1715 = vadd.f32 %v1425, %v1651
  %v1716 = vperm.slane %v96, 0
  %v1717 = vperm.slane %v97, 0
  %v1718 = vmul.f32 %v22, %v1716
  %v1719 = vmul.f32 %v23, %v1717
  %v1720 = vmul.f32 %v24, %v1716
  %v1721 = vmul.f32 %v25, %v1717
  %v1722 = vmul.f32 %v26, %v1716
  %v1723 = vmul.f32 %v27, %v1717
  %v1724 = vmul.f32 %v28, %v1716
  %v1725 = vmul.f32 %v29, %v1717
  %v1726 = vmul.f32 %v30, %v1716
  %v1727 = vmul.f32 %v31, %v1717
  %v1728 = vmul.f32 %v32, %v1716
  %v1729 = vmul.f32 %v33, %v1717
  %v1730 = vmul.f32 %v34, %v1716
  %v1731 = vmul.f32 %v35, %v1717
  %v1732 = vmul.f32 %v36, %v1716
  %v1733 = vmul.f32 %v37, %v1717
  %v1734 = vmul.f32 %v38, %v1716
  %v1735 = vmul.f32 %v39, %v1717
  %v1736 = vmul.f32 %v40, %v1716
  %v1737 = vmul.f32 %v41, %v1717
  %v1738 = vmul.f32 %v42, %v1716
  %v1739 = vmul.f32 %v43, %v1717
  %v1740 = vmul.f32 %v44, %v1716
  %v1741 = vmul.f32 %v45, %v1717
  %v1742 = vmul.f32 %v46, %v1716
  %v1743 = vmul.f32 %v47, %v1717
  %v1744 = vmul.f32 %v48, %v1716
  %v1745 = vmul.f32 %v49, %v1717
  %v1746 = vmul.f32 %v50, %v1716
  %v1747 = vmul.f32 %v51, %v1717
  %v1748 = vmul.f32 %v52, %v1716
  %v1749 = vmul.f32 %v53, %v1717
  %v1750 = vmul.f32 %v62, %v1716
  %v1751 = vmul.f32 %v63, %v1717
  %v1752 = vmul.f32 %v64, %v1716
  %v1753 = vmul.f32 %v65, %v1717
  %v1754 = vmul.f32 %v66, %v1716
  %v1755 = vmul.f32 %v67, %v1717
  %v1756 = vmul.f32 %v68, %v1716
  %v1757 = vmul.f32 %v69, %v1717
  %v1758 = vmul.f32 %v70, %v1716
  %v1759 = vmul.f32 %v71, %v1717
  %v1760 = vmul.f32 %v72, %v1716
  %v1761 = vmul.f32 %v73, %v1717
  %v1762 = vmul.f32 %v74, %v1716
  %v1763 = vmul.f32 %v75, %v1717
  %v1764 = vmul.f32 %v76, %v1716
  %v1765 = vmul.f32 %v77, %v1717
  %v1766 = vmul.f32 %v78, %v1716
  %v1767 = vmul.f32 %v79, %v1717
  %v1768 = vmul.f32 %v80, %v1716
  %v1769 = vmul.f32 %v81, %v1717
  %v1770 = vmul.f32 %v82, %v1716
  %v1771 = vmul.f32 %v83, %v1717
  %v1772 = vmul.f32 %v84, %v1716
  %v1773 = vmul.f32 %v85, %v1717
  %v1774 = vmul.f32 %v86, %v1716
  %v1775 = vmul.f32 %v87, %v1717
  %v1776 = vmul.f32 %v88, %v1716
  %v1777 = vmul.f32 %v89, %v1717
  %v1778 = vmul.f32 %v90, %v1716
  %v1779 = vmul.f32 %v91, %v1717
  %v1780 = vmul.f32 %v92, %v1716
  %v1781 = vmul.f32 %v93, %v1717
  %v1846 = vrot.slane %v1718, 2
  %v1847 = vrot.slane %v1720, 2
  %v1848 = vsel %vm553, %v1846, %v1847
  %v1849 = vrot.slane %v1719, 2
  %v1850 = vrot.slane %v1721, 2
  %v1851 = vsel %vm553, %v1849, %v1850
  %v1852 = vrot.slane %v1722, 2
  %v1853 = vrot.slane %v1724, 2
  %v1854 = vsel %vm553, %v1852, %v1853
  %v1855 = vrot.slane %v1723, 2
  %v1856 = vrot.slane %v1725, 2
  %v1857 = vsel %vm553, %v1855, %v1856
  %v1858 = vrot.slane %v1726, 2
  %v1859 = vrot.slane %v1728, 2
  %v1860 = vsel %vm553, %v1858, %v1859
  %v1861 = vrot.slane %v1727, 2
  %v1862 = vrot.slane %v1729, 2
  %v1863 = vsel %vm553, %v1861, %v1862
  %v1864 = vrot.slane %v1730, 2
  %v1865 = vrot.slane %v1732, 2
  %v1866 = vsel %vm553, %v1864, %v1865
  %v1867 = vrot.slane %v1731, 2
  %v1868 = vrot.slane %v1733, 2
  %v1869 = vsel %vm553, %v1867, %v1868
  %v1870 = vrot.slane %v1734, 2
  %v1871 = vrot.slane %v1736, 2
  %v1872 = vsel %vm553, %v1870, %v1871
  %v1873 = vrot.slane %v1735, 2
  %v1874 = vrot.slane %v1737, 2
  %v1875 = vsel %vm553, %v1873, %v1874
  %v1876 = vrot.slane %v1738, 2
  %v1877 = vrot.slane %v1740, 2
  %v1878 = vsel %vm553, %v1876, %v1877
  %v1879 = vrot.slane %v1739, 2
  %v1880 = vrot.slane %v1741, 2
  %v1881 = vsel %vm553, %v1879, %v1880
  %v1882 = vrot.slane %v1742, 2
  %v1883 = vrot.slane %v1744, 2
  %v1884 = vsel %vm553, %v1882, %v1883
  %v1885 = vrot.slane %v1743, 2
  %v1886 = vrot.slane %v1745, 2
  %v1887 = vsel %vm553, %v1885, %v1886
  %v1888 = vrot.slane %v1746, 2
  %v1889 = vrot.slane %v1748, 2
  %v1890 = vsel %vm553, %v1888, %v1889
  %v1891 = vrot.slane %v1747, 2
  %v1892 = vrot.slane %v1749, 2
  %v1893 = vsel %vm553, %v1891, %v1892
  %v1894 = vrot.slane %v1750, 2
  %v1895 = vrot.slane %v1752, 2
  %v1896 = vsel %vm553, %v1894, %v1895
  %v1897 = vrot.slane %v1751, 2
  %v1898 = vrot.slane %v1753, 2
  %v1899 = vsel %vm553, %v1897, %v1898
  %v1900 = vrot.slane %v1754, 2
  %v1901 = vrot.slane %v1756, 2
  %v1902 = vsel %vm553, %v1900, %v1901
  %v1903 = vrot.slane %v1755, 2
  %v1904 = vrot.slane %v1757, 2
  %v1905 = vsel %vm553, %v1903, %v1904
  %v1906 = vrot.slane %v1758, 2
  %v1907 = vrot.slane %v1760, 2
  %v1908 = vsel %vm553, %v1906, %v1907
  %v1909 = vrot.slane %v1759, 2
  %v1910 = vrot.slane %v1761, 2
  %v1911 = vsel %vm553, %v1909, %v1910
  %v1912 = vrot.slane %v1762, 2
  %v1913 = vrot.slane %v1764, 2
  %v1914 = vsel %vm553, %v1912, %v1913
  %v1915 = vrot.slane %v1763, 2
  %v1916 = vrot.slane %v1765, 2
  %v1917 = vsel %vm553, %v1915, %v1916
  %v1918 = vrot.slane %v1766, 2
  %v1919 = vrot.slane %v1768, 2
  %v1920 = vsel %vm553, %v1918, %v1919
  %v1921 = vrot.slane %v1767, 2
  %v1922 = vrot.slane %v1769, 2
  %v1923 = vsel %vm553, %v1921, %v1922
  %v1924 = vrot.slane %v1770, 2
  %v1925 = vrot.slane %v1772, 2
  %v1926 = vsel %vm553, %v1924, %v1925
  %v1927 = vrot.slane %v1771, 2
  %v1928 = vrot.slane %v1773, 2
  %v1929 = vsel %vm553, %v1927, %v1928
  %v1930 = vrot.slane %v1774, 2
  %v1931 = vrot.slane %v1776, 2
  %v1932 = vsel %vm553, %v1930, %v1931
  %v1933 = vrot.slane %v1775, 2
  %v1934 = vrot.slane %v1777, 2
  %v1935 = vsel %vm553, %v1933, %v1934
  %v1936 = vrot.slane %v1778, 2
  %v1937 = vrot.slane %v1780, 2
  %v1938 = vsel %vm553, %v1936, %v1937
  %v1939 = vrot.slane %v1779, 2
  %v1940 = vrot.slane %v1781, 2
  %v1941 = vsel %vm553, %v1939, %v1940
  %v1974 = vadd.f32 %v1684, %v1848
  %v1975 = vadd.f32 %v1685, %v1851
  %v1976 = vadd.f32 %v1686, %v1854
  %v1977 = vadd.f32 %v1687, %v1857
  %v1978 = vadd.f32 %v1688, %v1860
  %v1979 = vadd.f32 %v1689, %v1863
  %v1980 = vadd.f32 %v1690, %v1866
  %v1981 = vadd.f32 %v1691, %v1869
  %v1982 = vadd.f32 %v1692, %v1872
  %v1983 = vadd.f32 %v1693, %v1875
  %v1984 = vadd.f32 %v1694, %v1878
  %v1985 = vadd.f32 %v1695, %v1881
  %v1986 = vadd.f32 %v1696, %v1884
  %v1987 = vadd.f32 %v1697, %v1887
  %v1988 = vadd.f32 %v1698, %v1890
  %v1989 = vadd.f32 %v1699, %v1893
  %v1990 = vadd.f32 %v1700, %v1896
  %v1991 = vadd.f32 %v1701, %v1899
  %v1992 = vadd.f32 %v1702, %v1902
  %v1993 = vadd.f32 %v1703, %v1905
  %v1994 = vadd.f32 %v1704, %v1908
  %v1995 = vadd.f32 %v1705, %v1911
  %v1996 = vadd.f32 %v1706, %v1914
  %v1997 = vadd.f32 %v1707, %v1917
  %v1998 = vadd.f32 %v1708, %v1920
  %v1999 = vadd.f32 %v1709, %v1923
  %v2000 = vadd.f32 %v1710, %v1926
  %v2001 = vadd.f32 %v1711, %v1929
  %v2002 = vadd.f32 %v1712, %v1932
  %v2003 = vadd.f32 %v1713, %v1935
  %v2004 = vadd.f32 %v1714, %v1938
  %v2005 = vadd.f32 %v1715, %v1941
  %v2006 = vld [vmem:[%s2] sm:$0x3]
  %v2008 = vperm.slane %v2006, 0
  %v2009 = vperm.slane %v2006, 1
  %v2012 = vadd.f32 %v1974, %v2008
  %v2013 = vadd.f32 %v1975, %v2009
  %v2014 = vadd.f32 %v1976, %v2008
  %v2015 = vadd.f32 %v1977, %v2009
  %v2016 = vadd.f32 %v1978, %v2008
  %v2017 = vadd.f32 %v1979, %v2009
  %v2018 = vadd.f32 %v1980, %v2008
  %v2019 = vadd.f32 %v1981, %v2009
  %v2020 = vadd.f32 %v1982, %v2008
  %v2021 = vadd.f32 %v1983, %v2009
  %v2022 = vadd.f32 %v1984, %v2008
  %v2023 = vadd.f32 %v1985, %v2009
  %v2024 = vadd.f32 %v1986, %v2008
  %v2025 = vadd.f32 %v1987, %v2009
  %v2026 = vadd.f32 %v1988, %v2008
  %v2027 = vadd.f32 %v1989, %v2009
  %v2028 = vadd.f32 %v1990, %v2008
  %v2029 = vadd.f32 %v1991, %v2009
  %v2030 = vadd.f32 %v1992, %v2008
  %v2031 = vadd.f32 %v1993, %v2009
  %v2032 = vadd.f32 %v1994, %v2008
  %v2033 = vadd.f32 %v1995, %v2009
  %v2034 = vadd.f32 %v1996, %v2008
  %v2035 = vadd.f32 %v1997, %v2009
  %v2036 = vadd.f32 %v1998, %v2008
  %v2037 = vadd.f32 %v1999, %v2009
  %v2038 = vadd.f32 %v2000, %v2008
  %v2039 = vadd.f32 %v2001, %v2009
  %v2040 = vadd.f32 %v2002, %v2008
  %v2041 = vadd.f32 %v2003, %v2009
  %v2042 = vadd.f32 %v2004, %v2008
  %v2043 = vadd.f32 %v2005, %v2009
  %v2044 = vmax.f32 %v2012, 0.0
  %v2045 = vmax.f32 %v2013, 0.0
  %v2046 = vmax.f32 %v2014, 0.0
  %v2047 = vmax.f32 %v2015, 0.0
  %v2048 = vmax.f32 %v2016, 0.0
  %v2049 = vmax.f32 %v2017, 0.0
  %v2050 = vmax.f32 %v2018, 0.0
  %v2051 = vmax.f32 %v2019, 0.0
  %v2052 = vmax.f32 %v2020, 0.0
  %v2053 = vmax.f32 %v2021, 0.0
  %v2054 = vmax.f32 %v2022, 0.0
  %v2055 = vmax.f32 %v2023, 0.0
  %v2056 = vmax.f32 %v2024, 0.0
  %v2057 = vmax.f32 %v2025, 0.0
  %v2058 = vmax.f32 %v2026, 0.0
  %v2059 = vmax.f32 %v2027, 0.0
  %v2060 = vmax.f32 %v2028, 0.0
  %v2061 = vmax.f32 %v2029, 0.0
  %v2062 = vmax.f32 %v2030, 0.0
  %v2063 = vmax.f32 %v2031, 0.0
  %v2064 = vmax.f32 %v2032, 0.0
  %v2065 = vmax.f32 %v2033, 0.0
  %v2066 = vmax.f32 %v2034, 0.0
  %v2067 = vmax.f32 %v2035, 0.0
  %v2068 = vmax.f32 %v2036, 0.0
  %v2069 = vmax.f32 %v2037, 0.0
  %v2070 = vmax.f32 %v2038, 0.0
  %v2071 = vmax.f32 %v2039, 0.0
  %v2072 = vmax.f32 %v2040, 0.0
  %v2073 = vmax.f32 %v2041, 0.0
  %v2074 = vmax.f32 %v2042, 0.0
  %v2075 = vmax.f32 %v2043, 0.0
  %2076 = vst [vmem:[%s3] sm:$0xff] %v2044
  %2077 = vst [vmem:[%s3 + $0x8] sm:$0xff] %v2045
  %2078 = vst [vmem:[%s3 + $0x10] sm:$0xff] %v2046
  %2079 = vst [vmem:[%s3 + $0x18] sm:$0xff] %v2047
  %2080 = vst [vmem:[%s3 + $0x20] sm:$0xff] %v2048
  %2081 = vst [vmem:[%s3 + $0x28] sm:$0xff] %v2049
  %2082 = vst [vmem:[%s3 + $0x30] sm:$0xff] %v2050
  %2083 = vst [vmem:[%s3 + $0x38] sm:$0xff] %v2051
  %2084 = vst [vmem:[%s3 + $0x40] sm:$0xff] %v2052
  %2085 = vst [vmem:[%s3 + $0x48] sm:$0xff] %v2053
  %2086 = vst [vmem:[%s3 + $0x50] sm:$0xff] %v2054
  %2087 = vst [vmem:[%s3 + $0x58] sm:$0xff] %v2055
  %2088 = vst [vmem:[%s3 + $0x60] sm:$0xff] %v2056
  %2089 = vst [vmem:[%s3 + $0x68] sm:$0xff] %v2057
  %2090 = vst [vmem:[%s3 + $0x70] sm:$0xff] %v2058
  %2091 = vst [vmem:[%s3 + $0x78] sm:$0xff] %v2059
  %2092 = vst [vmem:[%s3 + $0x80] sm:$0xff] %v2060
  %2093 = vst [vmem:[%s3 + $0x88] sm:$0xff] %v2061
  %2094 = vst [vmem:[%s3 + $0x90] sm:$0xff] %v2062
  %2095 = vst [vmem:[%s3 + $0x98] sm:$0xff] %v2063
  %2096 = vst [vmem:[%s3 + $0xa0] sm:$0xff] %v2064
  %2097 = vst [vmem:[%s3 + $0xa8] sm:$0xff] %v2065
  %2098 = vst [vmem:[%s3 + $0xb0] sm:$0xff] %v2066
  %2099 = vst [vmem:[%s3 + $0xb8] sm:$0xff] %v2067
  %2100 = vst [vmem:[%s3 + $0xc0] sm:$0xff] %v2068
  %2101 = vst [vmem:[%s3 + $0xc8] sm:$0xff] %v2069
  %2102 = vst [vmem:[%s3 + $0xd0] sm:$0xff] %v2070
  %2103 = vst [vmem:[%s3 + $0xd8] sm:$0xff] %v2071
  %2104 = vst [vmem:[%s3 + $0xe0] sm:$0xff] %v2072
  %2105 = vst [vmem:[%s3 + $0xe8] sm:$0xff] %v2073
  %2106 = vst [vmem:[%s3 + $0xf0] sm:$0xff] %v2074
  %2107 = vst [vmem:[%s3 + $0xf8] sm:$0xff] %v2075
  // Predicated region
  $region14: #{mobilenet_forward.26} parent=0 // pred_check
    _
  $region15: #{mobilenet_forward.26} parent=0 // pred_check_branch
    %2109 = sbr.rel (0) target = $region17
  $region16: #{mobilenet_forward.26} parent=0 // pred_region
    _
  $region17: #{mobilenet_forward.26} parent=0 // pred_fallthru
    _
  // Predicated region
  $region18: #{mobilenet_forward.26} parent=0 // pred_check
    _
  $region19: #{mobilenet_forward.26} parent=0 // pred_check_branch
    %2111 = sbr.rel (0) target = $region21
  $region20: #{mobilenet_forward.26} parent=0 // pred_region
    _
  $region21: #{mobilenet_forward.26} parent=0 // pred_fallthru
    _

// kernel: mobilenet_forward.31
$region0: #{mobilenet_forward.31}
  #allocation0 [shape = 'u32[]', space=smem, size = 0x4, offset = 0x4, fixed_abs, tag = 'smem constant byte address 0x4 - core index']
  #allocation1 [shape = 'u32[72,128]{1,0:T(1,128)}', space=vmem, size = 0x9000, scoped, tag = 'internal scratch']
  %s0 = inlined_call_operand.vmem [shape: f32[8,128], index: 0, kind: input, shape index: {}]
  %s1 = inlined_call_operand.vmem [shape: f32[128,640], index: 1, kind: input, shape index: {}]
  %s2 = inlined_call_operand.vmem [shape: f32[1,640], index: 2, kind: input, shape index: {}]
  %s3 = inlined_call_operand.vmem [shape: f32[8,640], index: 3, kind: output, shape index: {}]
  %s4 = sld [smem:[#allocation0]]
  $region22: #{mobilenet_forward.31} parent=0
    _
  %s6 = ssub.s32 1, %s4
  %s7 = scalar_select 0, %s6, %s4
  // Predicated region
  $region2: #{mobilenet_forward.31} parent=0 // pred_check
    _
  $region3: #{mobilenet_forward.31} parent=0 // pred_check_branch
    %9 = sbr.rel (0) target = $region5
  $region4: #{mobilenet_forward.31} parent=0 // pred_region
    _
  $region5: #{mobilenet_forward.31} parent=0 // pred_fallthru
    _
  // Predicated region
  $region6: #{mobilenet_forward.31} parent=0 // pred_check
    _
  $region7: #{mobilenet_forward.31} parent=0 // pred_check_branch
    %11 = sbr.rel (0) target = $region9
  $region8: #{mobilenet_forward.31} parent=0 // pred_region
    _
  $region9: #{mobilenet_forward.31} parent=0 // pred_fallthru
    _
  // Predicated region
  $region10: #{mobilenet_forward.31} parent=0 // pred_check
    _
  $region11: #{mobilenet_forward.31} parent=0 // pred_check_branch
    %13 = sbr.rel (0) target = $region13
  $region12: #{mobilenet_forward.31} parent=0 // pred_region
    _
  $region13: #{mobilenet_forward.31} parent=0 // pred_fallthru
    _
  %v14 = vld [vmem:[%s0] sm:$0xff]
  %v15 = vpack.c.bf16 %v14, %v14
  %v16 = vld [vmem:[%s1] sm:$0xff]
  %v17 = vld [vmem:[%s1 + $0x8] sm:$0xff]
  %v18 = vld [vmem:[%s1 + $0x10] sm:$0xff]
  %v19 = vld [vmem:[%s1 + $0x18] sm:$0xff]
  %v20 = vld [vmem:[%s1 + $0x20] sm:$0xff]
  %v21 = vld [vmem:[%s1 + $0x28] sm:$0xff]
  %v22 = vld [vmem:[%s1 + $0x30] sm:$0xff]
  %v23 = vld [vmem:[%s1 + $0x38] sm:$0xff]
  %v24 = vld [vmem:[%s1 + $0x40] sm:$0xff]
  %v25 = vld [vmem:[%s1 + $0x48] sm:$0xff]
  %v26 = vld [vmem:[%s1 + $0x50] sm:$0xff]
  %v27 = vld [vmem:[%s1 + $0x58] sm:$0xff]
  %v28 = vld [vmem:[%s1 + $0x60] sm:$0xff]
  %v29 = vld [vmem:[%s1 + $0x68] sm:$0xff]
  %v30 = vld [vmem:[%s1 + $0x70] sm:$0xff]
  %v31 = vld [vmem:[%s1 + $0x78] sm:$0xff]
  %v32 = vld [vmem:[%s1 + $0x80] sm:$0xff]
  %v33 = vld [vmem:[%s1 + $0x88] sm:$0xff]
  %v34 = vld [vmem:[%s1 + $0x90] sm:$0xff]
  %v35 = vld [vmem:[%s1 + $0x98] sm:$0xff]
  %v36 = vld [vmem:[%s1 + $0xa0] sm:$0xff]
  %v37 = vld [vmem:[%s1 + $0xa8] sm:$0xff]
  %v38 = vld [vmem:[%s1 + $0xb0] sm:$0xff]
  %v39 = vld [vmem:[%s1 + $0xb8] sm:$0xff]
  %v40 = vld [vmem:[%s1 + $0xc0] sm:$0xff]
  %v41 = vld [vmem:[%s1 + $0xc8] sm:$0xff]
  %v42 = vld [vmem:[%s1 + $0xd0] sm:$0xff]
  %v43 = vld [vmem:[%s1 + $0xd8] sm:$0xff]
  %v44 = vld [vmem:[%s1 + $0xe0] sm:$0xff]
  %v45 = vld [vmem:[%s1 + $0xe8] sm:$0xff]
  %v46 = vld [vmem:[%s1 + $0xf0] sm:$0xff]
  %v47 = vld [vmem:[%s1 + $0xf8] sm:$0xff]
  %v48 = vld [vmem:[%s1 + $0x100] sm:$0xff]
  %v49 = vld [vmem:[%s1 + $0x108] sm:$0xff]
  %v50 = vld [vmem:[%s1 + $0x110] sm:$0xff]
  %v51 = vld [vmem:[%s1 + $0x118] sm:$0xff]
  %v52 = vld [vmem:[%s1 + $0x120] sm:$0xff]
  %v53 = vld [vmem:[%s1 + $0x128] sm:$0xff]
  %v54 = vld [vmem:[%s1 + $0x130] sm:$0xff]
  %v55 = vld [vmem:[%s1 + $0x138] sm:$0xff]
  %v56 = vld [vmem:[%s1 + $0x140] sm:$0xff]
  %v57 = vld [vmem:[%s1 + $0x148] sm:$0xff]
  %v58 = vld [vmem:[%s1 + $0x150] sm:$0xff]
  %v59 = vld [vmem:[%s1 + $0x158] sm:$0xff]
  %v60 = vld [vmem:[%s1 + $0x160] sm:$0xff]
  %v61 = vld [vmem:[%s1 + $0x168] sm:$0xff]
  %v62 = vld [vmem:[%s1 + $0x170] sm:$0xff]
  %v63 = vld [vmem:[%s1 + $0x178] sm:$0xff]
  %v64 = vld [vmem:[%s1 + $0x180] sm:$0xff]
  %v65 = vld [vmem:[%s1 + $0x188] sm:$0xff]
  %v66 = vld [vmem:[%s1 + $0x190] sm:$0xff]
  %v67 = vld [vmem:[%s1 + $0x198] sm:$0xff]
  %v68 = vld [vmem:[%s1 + $0x1a0] sm:$0xff]
  %v69 = vld [vmem:[%s1 + $0x1a8] sm:$0xff]
  %v70 = vld [vmem:[%s1 + $0x1b0] sm:$0xff]
  %v71 = vld [vmem:[%s1 + $0x1b8] sm:$0xff]
  %v72 = vld [vmem:[%s1 + $0x1c0] sm:$0xff]
  %v73 = vld [vmem:[%s1 + $0x1c8] sm:$0xff]
  %v74 = vld [vmem:[%s1 + $0x1d0] sm:$0xff]
  %v75 = vld [vmem:[%s1 + $0x1d8] sm:$0xff]
  %v76 = vld [vmem:[%s1 + $0x1e0] sm:$0xff]
  %v77 = vld [vmem:[%s1 + $0x1e8] sm:$0xff]
  %v78 = vld [vmem:[%s1 + $0x1f0] sm:$0xff]
  %v79 = vld [vmem:[%s1 + $0x1f8] sm:$0xff]
  %v80 = vld [vmem:[%s1 + $0x200] sm:$0xff]
  %v81 = vld [vmem:[%s1 + $0x208] sm:$0xff]
  %v82 = vld [vmem:[%s1 + $0x210] sm:$0xff]
  %v83 = vld [vmem:[%s1 + $0x218] sm:$0xff]
  %v84 = vld [vmem:[%s1 + $0x220] sm:$0xff]
  %v85 = vld [vmem:[%s1 + $0x228] sm:$0xff]
  %v86 = vld [vmem:[%s1 + $0x230] sm:$0xff]
  %v87 = vld [vmem:[%s1 + $0x238] sm:$0xff]
  %v88 = vld [vmem:[%s1 + $0x240] sm:$0xff]
  %v89 = vld [vmem:[%s1 + $0x248] sm:$0xff]
  %v90 = vld [vmem:[%s1 + $0x250] sm:$0xff]
  %v91 = vld [vmem:[%s1 + $0x258] sm:$0xff]
  %v92 = vld [vmem:[%s1 + $0x260] sm:$0xff]
  %v93 = vld [vmem:[%s1 + $0x268] sm:$0xff]
  %v94 = vld [vmem:[%s1 + $0x270] sm:$0xff]
  %v95 = vld [vmem:[%s1 + $0x278] sm:$0xff]
  %v96 = vpack.c.bf16 %v21, %v16
  %v97 = vpack.c.bf16 %v22, %v17
  %v98 = vpack.c.bf16 %v23, %v18
  %v99 = vpack.c.bf16 %v24, %v19
  %v100 = vpack.c.bf16 %v25, %v20
  %v101 = vpack.c.bf16 %v31, %v26
  %v102 = vpack.c.bf16 %v32, %v27
  %v103 = vpack.c.bf16 %v33, %v28
  %v104 = vpack.c.bf16 %v34, %v29
  %v105 = vpack.c.bf16 %v35, %v30
  %v106 = vpack.c.bf16 %v41, %v36
  %v107 = vpack.c.bf16 %v42, %v37
  %v108 = vpack.c.bf16 %v43, %v38
  %v109 = vpack.c.bf16 %v44, %v39
  %v110 = vpack.c.bf16 %v45, %v40
  %v111 = vpack.c.bf16 %v51, %v46
  %v112 = vpack.c.bf16 %v52, %v47
  %v113 = vpack.c.bf16 %v53, %v48
  %v114 = vpack.c.bf16 %v54, %v49
  %v115 = vpack.c.bf16 %v55, %v50
  %v116 = vpack.c.bf16 %v61, %v56
  %v117 = vpack.c.bf16 %v62, %v57
  %v118 = vpack.c.bf16 %v63, %v58
  %v119 = vpack.c.bf16 %v64, %v59
  %v120 = vpack.c.bf16 %v65, %v60
  %v121 = vpack.c.bf16 %v71, %v66
  %v122 = vpack.c.bf16 %v72, %v67
  %v123 = vpack.c.bf16 %v73, %v68
  %v124 = vpack.c.bf16 %v74, %v69
  %v125 = vpack.c.bf16 %v75, %v70
  %v126 = vpack.c.bf16 %v81, %v76
  %v127 = vpack.c.bf16 %v82, %v77
  %v128 = vpack.c.bf16 %v83, %v78
  %v129 = vpack.c.bf16 %v84, %v79
  %v130 = vpack.c.bf16 %v85, %v80
  %v131 = vpack.c.bf16 %v91, %v86
  %v132 = vpack.c.bf16 %v92, %v87
  %v133 = vpack.c.bf16 %v93, %v88
  %v134 = vpack.c.bf16 %v94, %v89
  %v135 = vpack.c.bf16 %v95, %v90
  %v136 = vld [vmem:[%s2] sm:$0x1f]
  %v138 = vperm.slane %v136, 0
  %v139 = vperm.slane %v136, 1
  %v140 = vperm.slane %v136, 2
  %v141 = vperm.slane %v136, 3
  %v142 = vperm.slane %v136, 4
  %148 = vmatpush.bf16.msra.mxu0 %v131
  %149 = vmatpush.bf16.msra.mxu0 %v126
  %150 = vmatpush.bf16.msra.mxu0 %v121
  %151 = vmatpush.bf16.msra.mxu0 %v116
  %152 = vmatpush.bf16.msra.mxu0 %v111
  %153 = vmatpush.bf16.msra.mxu0 %v106
  %154 = vmatpush.bf16.msra.mxu0 %v101
  %155 = vmatpush.bf16.msra.mxu0 %v96
  %156 = vmatmul.bf16.gmra.mxu0 %v15
  %v157 = vpop.f32.mrf.mxu0
  %v158 = vadd.f32 %v138, %v157
  %v159 = vpop.f32.mrf.mxu0
  %160 = vdwg.mxu0
  %161 = vmatpush.bf16.msra.mxu0 %v132
  %162 = vmatpush.bf16.msra.mxu0 %v127
  %163 = vmatpush.bf16.msra.mxu0 %v122
  %164 = vmatpush.bf16.msra.mxu0 %v117
  %165 = vmatpush.bf16.msra.mxu0 %v112
  %166 = vmatpush.bf16.msra.mxu0 %v107
  %167 = vmatpush.bf16.msra.mxu0 %v102
  %168 = vmatpush.bf16.msra.mxu0 %v97
  %169 = vmatmul.bf16.gmra.mxu0 %v15
  %v170 = vpop.f32.mrf.mxu0
  %v171 = vadd.f32 %v139, %v170
  %v172 = vpop.f32.mrf.mxu0
  %173 = vdwg.mxu0
  %174 = vmatpush.bf16.msra.mxu0 %v133
  %175 = vmatpush.bf16.msra.mxu0 %v128
  %176 = vmatpush.bf16.msra.mxu0 %v123
  %177 = vmatpush.bf16.msra.mxu0 %v118
  %178 = vmatpush.bf16.msra.mxu0 %v113
  %179 = vmatpush.bf16.msra.mxu0 %v108
  %180 = vmatpush.bf16.msra.mxu0 %v103
  %181 = vmatpush.bf16.msra.mxu0 %v98
  %182 = vmatmul.bf16.gmra.mxu0 %v15
  %v183 = vpop.f32.mrf.mxu0
  %v184 = vadd.f32 %v140, %v183
  %v185 = vpop.f32.mrf.mxu0
  %186 = vdwg.mxu0
  %187 = vmatpush.bf16.msra.mxu0 %v134
  %188 = vmatpush.bf16.msra.mxu0 %v129
  %189 = vmatpush.bf16.msra.mxu0 %v124
  %190 = vmatpush.bf16.msra.mxu0 %v119
  %191 = vmatpush.bf16.msra.mxu0 %v114
  %192 = vmatpush.bf16.msra.mxu0 %v109
  %193 = vmatpush.bf16.msra.mxu0 %v104
  %194 = vmatpush.bf16.msra.mxu0 %v99
  %195 = vmatmul.bf16.gmra.mxu0 %v15
  %v196 = vpop.f32.mrf.mxu0
  %v197 = vadd.f32 %v141, %v196
  %v198 = vpop.f32.mrf.mxu0
  %199 = vdwg.mxu0
  %200 = vmatpush.bf16.msra.mxu0 %v135
  %201 = vmatpush.bf16.msra.mxu0 %v130
  %202 = vmatpush.bf16.msra.mxu0 %v125
  %203 = vmatpush.bf16.msra.mxu0 %v120
  %204 = vmatpush.bf16.msra.mxu0 %v115
  %205 = vmatpush.bf16.msra.mxu0 %v110
  %206 = vmatpush.bf16.msra.mxu0 %v105
  %207 = vmatpush.bf16.msra.mxu0 %v100
  %208 = vmatmul.bf16.gmra.mxu0 %v15
  %v209 = vpop.f32.mrf.mxu0
  %v210 = vadd.f32 %v142, %v209
  %v211 = vpop.f32.mrf.mxu0
  %212 = vdwg.mxu0
  %v213 = vmax.f32 %v158, 0.0
  %v214 = vmax.f32 %v171, 0.0
  %v215 = vmax.f32 %v184, 0.0
  %v216 = vmax.f32 %v197, 0.0
  %v217 = vmax.f32 %v210, 0.0
  %218 = vst [vmem:[%s3] sm:$0xff] %v213
  %219 = vst [vmem:[%s3 + $0x8] sm:$0xff] %v214
  %220 = vst [vmem:[%s3 + $0x10] sm:$0xff] %v215
  %221 = vst [vmem:[%s3 + $0x18] sm:$0xff] %v216
  %222 = vst [vmem:[%s3 + $0x20] sm:$0xff] %v217
  // Predicated region
  $region14: #{mobilenet_forward.31} parent=0 // pred_check
    _
  $region15: #{mobilenet_forward.31} parent=0 // pred_check_branch
    %224 = sbr.rel (0) target = $region17
  $region16: #{mobilenet_forward.31} parent=0 // pred_region
    _
  $region17: #{mobilenet_forward.31} parent=0 // pred_fallthru
    _
  // Predicated region
  $region18: #{mobilenet_forward.31} parent=0 // pred_check
    _
  $region19: #{mobilenet_forward.31} parent=0 // pred_check_branch
    %226 = sbr.rel (0) target = $region21
  $region20: #{mobilenet_forward.31} parent=0 // pred_region
    _
  $region21: #{mobilenet_forward.31} parent=0 // pred_fallthru
    _

// kernel: mobilenet_forward.30
$region0: #{mobilenet_forward.30}
  #allocation0 [shape = 'u32[]', space=smem, size = 0x4, offset = 0x4, fixed_abs, tag = 'smem constant byte address 0x4 - core index']
  #allocation1 [shape = 'u32[72,128]{1,0:T(1,128)}', space=vmem, size = 0x9000, scoped, tag = 'internal scratch']
  %s0 = inlined_call_operand.vmem [shape: f32[8,384], index: 0, kind: input, shape index: {}]
  %s1 = inlined_call_operand.vmem [shape: f32[8,128], index: 1, kind: input, shape index: {}]
  %s2 = inlined_call_operand.vmem [shape: f32[384,128], index: 2, kind: input, shape index: {}]
  %s3 = inlined_call_operand.hbm [shape: f32[1,128], index: 3, kind: input, shape index: {}]
  %s4 = inlined_call_operand.vmem [shape: f32[128,128], index: 4, kind: input, shape index: {}]
  %s5 = inlined_call_operand.hbm [shape: f32[1,128], index: 5, kind: input, shape index: {}]
  %s6 = inlined_call_operand.vmem [shape: f32[8,128], index: 6, kind: output, shape index: {}]
  %s7 = sld [smem:[#allocation0]]
  $region42: #{mobilenet_forward.30} parent=0
    _
  %s9 = ssub.s32 1, %s7
  %s10 = scalar_select 0, %s9, %s7
  $region1: #{mobilenet_forward.30} parent=0
    #allocation2 [shape = 'u8[512]{0}', space=vmem, size = 0x400, scoped, tag = 'input window, operand 3, single buffered']
    #allocation3 [shape = 's32[1]{0}', space=sflag, size = 0x4, scoped, tag = 'scoped memory for mobilenet_forward.30']
    #allocation4 [shape = 'u8[512]{0}', space=vmem, size = 0x400, scoped, tag = 'input window, operand 5, single buffered']
    #allocation5 [shape = 's32[1]{0}', space=sflag, size = 0x4, scoped, tag = 'scoped memory for mobilenet_forward.30']
    %11 = vsyncpa [#allocation3], 0
    %12 = vsyncpa [#allocation5], 0
    // Predicated region
    $region2: #{mobilenet_forward.30} parent=1 // pred_check
      _
    $region3: #{mobilenet_forward.30} parent=1 // pred_check_branch
      %14 = sbr.rel (0) target = $region5
    $region4: #{mobilenet_forward.30} parent=1 // pred_region
      _
    $region5: #{mobilenet_forward.30} parent=1 // pred_fallthru
      _
    // Predicated region
    $region6: #{mobilenet_forward.30} parent=1 // pred_check
      _
    $region7: #{mobilenet_forward.30} parent=1 // pred_check_branch
      %16 = sbr.rel (0) target = $region9
    $region8: #{mobilenet_forward.30} parent=1 // pred_region
      _
    $region9: #{mobilenet_forward.30} parent=1 // pred_fallthru
      _
    // Predicated region
    $region10: #{mobilenet_forward.30} parent=1 // pred_check
      _
    $region11: #{mobilenet_forward.30} parent=1 // pred_check_branch
      %18 = sbr.rel (0) target = $region13
    $region12: #{mobilenet_forward.30} parent=1 // pred_region
      _
    $region13: #{mobilenet_forward.30} parent=1 // pred_fallthru
      _
    // Predicated region
    $region14: #{mobilenet_forward.30} parent=1 // pred_check
      _
    $region15: #{mobilenet_forward.30} parent=1 // pred_check_branch
      %20 = sbr.rel (0) target = $region17
    $region16: #{mobilenet_forward.30} parent=1 // pred_region
      %22 = vsyncadd [#allocation3], 0
      %s24 = sshll.u32 %s3, 4
      %s25 = int_to_ptr.hbm [resolvable:$true] %s24
      %s26 = sshll.u32 [#allocation2], 4
      %s27 = int_to_ptr.vmem [resolvable:$true] %s26
      %29 = dma.hbm_to_vmem [thread:$0]  %s25, 16, %s27, [#allocation3]
    $region17: #{mobilenet_forward.30} parent=1 // pred_fallthru
      _
    // Predicated region
    $region18: #{mobilenet_forward.30} parent=1 // pred_check
      _
    $region19: #{mobilenet_forward.30} parent=1 // pred_check_branch
      %31 = sbr.rel (0) target = $region21
    $region20: #{mobilenet_forward.30} parent=1 // pred_region
      _
    $region21: #{mobilenet_forward.30} parent=1 // pred_fallthru
      _
    // Predicated region
    $region22: #{mobilenet_forward.30} parent=1 // pred_check
      _
    $region23: #{mobilenet_forward.30} parent=1 // pred_check_branch
      %33 = sbr.rel (0) target = $region25
    $region24: #{mobilenet_forward.30} parent=1 // pred_region
      %35 = vsyncadd [#allocation5], 0
      %s37 = sshll.u32 %s5, 4
      %s38 = int_to_ptr.hbm [resolvable:$true] %s37
      %s39 = sshll.u32 [#allocation4], 4
      %s40 = int_to_ptr.vmem [resolvable:$true] %s39
      %42 = dma.hbm_to_vmem [thread:$0]  %s38, 16, %s40, [#allocation5]
    $region25: #{mobilenet_forward.30} parent=1 // pred_fallthru
      _
    // Predicated region
    $region26: #{mobilenet_forward.30} parent=1 // pred_check
      _
    $region27: #{mobilenet_forward.30} parent=1 // pred_check_branch
      %44 = sbr.rel (0) target = $region29
    $region28: #{mobilenet_forward.30} parent=1 // pred_region
      %46 = dma.done [#allocation3], 16
    $region29: #{mobilenet_forward.30} parent=1 // pred_fallthru
      _
    // Predicated region
    $region30: #{mobilenet_forward.30} parent=1 // pred_check
      _
    $region31: #{mobilenet_forward.30} parent=1 // pred_check_branch
      %48 = sbr.rel (0) target = $region33
    $region32: #{mobilenet_forward.30} parent=1 // pred_region
      %50 = dma.done [#allocation5], 16
    $region33: #{mobilenet_forward.30} parent=1 // pred_fallthru
      _
    %v51 = vld [vmem:[%s0] sm:$0xff]
    %v52 = vld [vmem:[%s0 + $0x8] sm:$0xff]
    %v53 = vld [vmem:[%s0 + $0x10] sm:$0xff]
    %v54 = vpack.c.bf16 %v51, %v51
    %v55 = vpack.c.bf16 %v52, %v52
    %v56 = vpack.c.bf16 %v53, %v53
    %v57 = vld [vmem:[%s2] sm:$0xff]
    %v58 = vld [vmem:[%s2 + $0x8] sm:$0xff]
    %v59 = vld [vmem:[%s2 + $0x10] sm:$0xff]
    %v60 = vld [vmem:[%s2 + $0x18] sm:$0xff]
    %v61 = vld [vmem:[%s2 + $0x20] sm:$0xff]
    %v62 = vld [vmem:[%s2 + $0x28] sm:$0xff]
    %v63 = vld [vmem:[%s2 + $0x30] sm:$0xff]
    %v64 = vld [vmem:[%s2 + $0x38] sm:$0xff]
    %v65 = vld [vmem:[%s2 + $0x40] sm:$0xff]
    %v66 = vld [vmem:[%s2 + $0x48] sm:$0xff]
    %v67 = vld [vmem:[%s2 + $0x50] sm:$0xff]
    %v68 = vld [vmem:[%s2 + $0x58] sm:$0xff]
    %v69 = vld [vmem:[%s2 + $0x60] sm:$0xff]
    %v70 = vld [vmem:[%s2 + $0x68] sm:$0xff]
    %v71 = vld [vmem:[%s2 + $0x70] sm:$0xff]
    %v72 = vld [vmem:[%s2 + $0x78] sm:$0xff]
    %v73 = vld [vmem:[%s2 + $0x80] sm:$0xff]
    %v74 = vld [vmem:[%s2 + $0x88] sm:$0xff]
    %v75 = vld [vmem:[%s2 + $0x90] sm:$0xff]
    %v76 = vld [vmem:[%s2 + $0x98] sm:$0xff]
    %v77 = vld [vmem:[%s2 + $0xa0] sm:$0xff]
    %v78 = vld [vmem:[%s2 + $0xa8] sm:$0xff]
    %v79 = vld [vmem:[%s2 + $0xb0] sm:$0xff]
    %v80 = vld [vmem:[%s2 + $0xb8] sm:$0xff]
    %v81 = vld [vmem:[%s2 + $0xc0] sm:$0xff]
    %v82 = vld [vmem:[%s2 + $0xc8] sm:$0xff]
    %v83 = vld [vmem:[%s2 + $0xd0] sm:$0xff]
    %v84 = vld [vmem:[%s2 + $0xd8] sm:$0xff]
    %v85 = vld [vmem:[%s2 + $0xe0] sm:$0xff]
    %v86 = vld [vmem:[%s2 + $0xe8] sm:$0xff]
    %v87 = vld [vmem:[%s2 + $0xf0] sm:$0xff]
    %v88 = vld [vmem:[%s2 + $0xf8] sm:$0xff]
    %v89 = vld [vmem:[%s2 + $0x100] sm:$0xff]
    %v90 = vld [vmem:[%s2 + $0x108] sm:$0xff]
    %v91 = vld [vmem:[%s2 + $0x110] sm:$0xff]
    %v92 = vld [vmem:[%s2 + $0x118] sm:$0xff]
    %v93 = vld [vmem:[%s2 + $0x120] sm:$0xff]
    %v94 = vld [vmem:[%s2 + $0x128] sm:$0xff]
    %v95 = vld [vmem:[%s2 + $0x130] sm:$0xff]
    %v96 = vld [vmem:[%s2 + $0x138] sm:$0xff]
    %v97 = vld [vmem:[%s2 + $0x140] sm:$0xff]
    %v98 = vld [vmem:[%s2 + $0x148] sm:$0xff]
    %v99 = vld [vmem:[%s2 + $0x150] sm:$0xff]
    %v100 = vld [vmem:[%s2 + $0x158] sm:$0xff]
    %v101 = vld [vmem:[%s2 + $0x160] sm:$0xff]
    %v102 = vld [vmem:[%s2 + $0x168] sm:$0xff]
    %v103 = vld [vmem:[%s2 + $0x170] sm:$0xff]
    %v104 = vld [vmem:[%s2 + $0x178] sm:$0xff]
    %v105 = vpack.c.bf16 %v58, %v57
    %v106 = vpack.c.bf16 %v60, %v59
    %v107 = vpack.c.bf16 %v62, %v61
    %v108 = vpack.c.bf16 %v64, %v63
    %v109 = vpack.c.bf16 %v66, %v65
    %v110 = vpack.c.bf16 %v68, %v67
    %v111 = vpack.c.bf16 %v70, %v69
    %v112 = vpack.c.bf16 %v72, %v71
    %v113 = vpack.c.bf16 %v74, %v73
    %v114 = vpack.c.bf16 %v76, %v75
    %v115 = vpack.c.bf16 %v78, %v77
    %v116 = vpack.c.bf16 %v80, %v79
    %v117 = vpack.c.bf16 %v82, %v81
    %v118 = vpack.c.bf16 %v84, %v83
    %v119 = vpack.c.bf16 %v86, %v85
    %v120 = vpack.c.bf16 %v88, %v87
    %v121 = vpack.c.bf16 %v90, %v89
    %v122 = vpack.c.bf16 %v92, %v91
    %v123 = vpack.c.bf16 %v94, %v93
    %v124 = vpack.c.bf16 %v96, %v95
    %v125 = vpack.c.bf16 %v98, %v97
    %v126 = vpack.c.bf16 %v100, %v99
    %v127 = vpack.c.bf16 %v102, %v101
    %v128 = vpack.c.bf16 %v104, %v103
    %v129 = vld [vmem:[#allocation2] sm:$0x1]
    %v131 = vperm.slane %v129, 0
    %133 = vmatpush.bf16.msra.mxu0 %v112
    %134 = vmatpush.bf16.msra.mxu0 %v111
    %135 = vmatpush.bf16.msra.mxu0 %v110
    %136 = vmatpush.bf16.msra.mxu0 %v109
    %137 = vmatpush.bf16.msra.mxu0 %v108
    %138 = vmatpush.bf16.msra.mxu0 %v107
    %139 = vmatpush.bf16.msra.mxu0 %v106
    %140 = vmatpush.bf16.msra.mxu0 %v105
    %141 = vmatmul.bf16.gmra.mxu0 %v54
    %v142 = vpop.f32.mrf.mxu0
    %v143 = vadd.f32 %v131, %v142
    %v144 = vpop.f32.mrf.mxu0
    %145 = vdwg.mxu0
    %146 = vmatpush.bf16.msra.mxu0 %v120
    %147 = vmatpush.bf16.msra.mxu0 %v119
    %148 = vmatpush.bf16.msra.mxu0 %v118
    %149 = vmatpush.bf16.msra.mxu0 %v117
    %150 = vmatpush.bf16.msra.mxu0 %v116
    %151 = vmatpush.bf16.msra.mxu0 %v115
    %152 = vmatpush.bf16.msra.mxu0 %v114
    %153 = vmatpush.bf16.msra.mxu0 %v113
    %154 = vmatmul.bf16.gmra.mxu0 %v55
    %v155 = vpop.f32.mrf.mxu0
    %v156 = vadd.f32 %v143, %v155
    %v157 = vpop.f32.mrf.mxu0
    %158 = vdwg.mxu0
    %159 = vmatpush.bf16.msra.mxu0 %v128
    %160 = vmatpush.bf16.msra.mxu0 %v127
    %161 = vmatpush.bf16.msra.mxu0 %v126
    %162 = vmatpush.bf16.msra.mxu0 %v125
    %163 = vmatpush.bf16.msra.mxu0 %v124
    %164 = vmatpush.bf16.msra.mxu0 %v123
    %165 = vmatpush.bf16.msra.mxu0 %v122
    %166 = vmatpush.bf16.msra.mxu0 %v121
    %167 = vmatmul.bf16.gmra.mxu0 %v56
    %v168 = vpop.f32.mrf.mxu0
    %v169 = vadd.f32 %v156, %v168
    %v170 = vpop.f32.mrf.mxu0
    %171 = vdwg.mxu0
    %v172 = vld [vmem:[%s1] sm:$0xff]
    %v173 = vpack.c.bf16 %v172, %v172
    %v174 = vld [vmem:[%s4] sm:$0xff]
    %v175 = vld [vmem:[%s4 + $0x8] sm:$0xff]
    %v176 = vld [vmem:[%s4 + $0x10] sm:$0xff]
    %v177 = vld [vmem:[%s4 + $0x18] sm:$0xff]
    %v178 = vld [vmem:[%s4 + $0x20] sm:$0xff]
    %v179 = vld [vmem:[%s4 + $0x28] sm:$0xff]
    %v180 = vld [vmem:[%s4 + $0x30] sm:$0xff]
    %v181 = vld [vmem:[%s4 + $0x38] sm:$0xff]
    %v182 = vld [vmem:[%s4 + $0x40] sm:$0xff]
    %v183 = vld [vmem:[%s4 + $0x48] sm:$0xff]
    %v184 = vld [vmem:[%s4 + $0x50] sm:$0xff]
    %v185 = vld [vmem:[%s4 + $0x58] sm:$0xff]
    %v186 = vld [vmem:[%s4 + $0x60] sm:$0xff]
    %v187 = vld [vmem:[%s4 + $0x68] sm:$0xff]
    %v188 = vld [vmem:[%s4 + $0x70] sm:$0xff]
    %v189 = vld [vmem:[%s4 + $0x78] sm:$0xff]
    %v190 = vpack.c.bf16 %v175, %v174
    %v191 = vpack.c.bf16 %v177, %v176
    %v192 = vpack.c.bf16 %v179, %v178
    %v193 = vpack.c.bf16 %v181, %v180
    %v194 = vpack.c.bf16 %v183, %v182
    %v195 = vpack.c.bf16 %v185, %v184
    %v196 = vpack.c.bf16 %v187, %v186
    %v197 = vpack.c.bf16 %v189, %v188
    %v198 = vld [vmem:[#allocation4] sm:$0x1]
    %v200 = vperm.slane %v198, 0
    %202 = vmatpush.bf16.msra.mxu0 %v197
    %203 = vmatpush.bf16.msra.mxu0 %v196
    %204 = vmatpush.bf16.msra.mxu0 %v195
    %205 = vmatpush.bf16.msra.mxu0 %v194
    %206 = vmatpush.bf16.msra.mxu0 %v193
    %207 = vmatpush.bf16.msra.mxu0 %v192
    %208 = vmatpush.bf16.msra.mxu0 %v191
    %209 = vmatpush.bf16.msra.mxu0 %v190
    %210 = vmatmul.bf16.gmra.mxu0 %v173
    %v211 = vpop.f32.mrf.mxu0
    %v212 = vadd.f32 %v200, %v211
    %v213 = vpop.f32.mrf.mxu0
    %214 = vdwg.mxu0
    %v215 = vadd.f32 %v169, %v212
    %216 = vst [vmem:[%s6] sm:$0xff] %v215
    // Predicated region
    $region34: #{mobilenet_forward.30} parent=1 // pred_check
      _
    $region35: #{mobilenet_forward.30} parent=1 // pred_check_branch
      %218 = sbr.rel (0) target = $region37
    $region36: #{mobilenet_forward.30} parent=1 // pred_region
      _
    $region37: #{mobilenet_forward.30} parent=1 // pred_fallthru
      _
    // Predicated region
    $region38: #{mobilenet_forward.30} parent=1 // pred_check
      _
    $region39: #{mobilenet_forward.30} parent=1 // pred_check_branch
      %220 = sbr.rel (0) target = $region41
    $region40: #{mobilenet_forward.30} parent=1 // pred_region
      _
    $region41: #{mobilenet_forward.30} parent=1 // pred_fallthru
      _
    %221 = vsyncpa [#allocation3], 1
    %222 = vsyncpa [#allocation5], 1

// kernel: mobilenet_forward.29
$region0: #{mobilenet_forward.29}
  #allocation0 [shape = 'u32[]', space=smem, size = 0x4, offset = 0x4, fixed_abs, tag = 'smem constant byte address 0x4 - core index']
  #allocation1 [shape = 'u32[72,128]{1,0:T(1,128)}', space=vmem, size = 0x9000, scoped, tag = 'internal scratch']
  %s0 = inlined_call_operand.vmem [shape: f32[2,6,6,384], index: 0, kind: input, shape index: {}]
  %s1 = inlined_call_operand.vmem [shape: f32[9,384], index: 1, kind: input, shape index: {}]
  %s2 = inlined_call_operand.vmem [shape: f32[1,384], index: 2, kind: input, shape index: {}]
  %s3 = inlined_call_operand.vmem [shape: f32[2,4,4,384], index: 3, kind: output, shape index: {}]
  %s4 = sld [smem:[#allocation0]]
  $region22: #{mobilenet_forward.29} parent=0
    _
  %s6 = ssub.s32 1, %s4
  %s7 = scalar_select 0, %s6, %s4
  // Predicated region
  $region2: #{mobilenet_forward.29} parent=0 // pred_check
    _
  $region3: #{mobilenet_forward.29} parent=0 // pred_check_branch
    %9 = sbr.rel (0) target = $region5
  $region4: #{mobilenet_forward.29} parent=0 // pred_region
    _
  $region5: #{mobilenet_forward.29} parent=0 // pred_fallthru
    _
  // Predicated region
  $region6: #{mobilenet_forward.29} parent=0 // pred_check
    _
  $region7: #{mobilenet_forward.29} parent=0 // pred_check_branch
    %11 = sbr.rel (0) target = $region9
  $region8: #{mobilenet_forward.29} parent=0 // pred_region
    _
  $region9: #{mobilenet_forward.29} parent=0 // pred_fallthru
    _
  // Predicated region
  $region10: #{mobilenet_forward.29} parent=0 // pred_check
    _
  $region11: #{mobilenet_forward.29} parent=0 // pred_check_branch
    %13 = sbr.rel (0) target = $region13
  $region12: #{mobilenet_forward.29} parent=0 // pred_region
    _
  $region13: #{mobilenet_forward.29} parent=0 // pred_fallthru
    _
  %v14 = vld [vmem:[%s0] sm:$0x3f]
  %v15 = vld [vmem:[%s0 + $0x8] sm:$0x3f]
  %v16 = vld [vmem:[%s0 + $0x10] sm:$0x3f]
  %v17 = vld [vmem:[%s0 + $0x18] sm:$0x3f]
  %v18 = vld [vmem:[%s0 + $0x20] sm:$0x3f]
  %v19 = vld [vmem:[%s0 + $0x28] sm:$0x3f]
  %v20 = vld [vmem:[%s0 + $0x30] sm:$0x3f]
  %v21 = vld [vmem:[%s0 + $0x38] sm:$0x3f]
  %v22 = vld [vmem:[%s0 + $0x40] sm:$0x3f]
  %v23 = vld [vmem:[%s0 + $0x48] sm:$0x3f]
  %v24 = vld [vmem:[%s0 + $0x50] sm:$0x3f]
  %v25 = vld [vmem:[%s0 + $0x58] sm:$0x3f]
  %v26 = vld [vmem:[%s0 + $0x60] sm:$0x3f]
  %v27 = vld [vmem:[%s0 + $0x68] sm:$0x3f]
  %v28 = vld [vmem:[%s0 + $0x70] sm:$0x3f]
  %v29 = vld [vmem:[%s0 + $0x78] sm:$0x3f]
  %v30 = vld [vmem:[%s0 + $0x80] sm:$0x3f]
  %v31 = vld [vmem:[%s0 + $0x88] sm:$0x3f]
  %v32 = vld [vmem:[%s0 + $0x90] sm:$0x3f]
  %v33 = vld [vmem:[%s0 + $0x98] sm:$0x3f]
  %v34 = vld [vmem:[%s0 + $0xa0] sm:$0x3f]
  %v35 = vld [vmem:[%s0 + $0xa8] sm:$0x3f]
  %v36 = vld [vmem:[%s0 + $0xb0] sm:$0x3f]
  %v37 = vld [vmem:[%s0 + $0xb8] sm:$0x3f]
  %v38 = vld [vmem:[%s0 + $0xc0] sm:$0x3f]
  %v39 = vld [vmem:[%s0 + $0xc8] sm:$0x3f]
  %v40 = vld [vmem:[%s0 + $0xd0] sm:$0x3f]
  %v41 = vld [vmem:[%s0 + $0xd8] sm:$0x3f]
  %v42 = vld [vmem:[%s0 + $0xe0] sm:$0x3f]
  %v43 = vld [vmem:[%s0 + $0xe8] sm:$0x3f]
  %v44 = vld [vmem:[%s0 + $0xf0] sm:$0x3f]
  %v45 = vld [vmem:[%s0 + $0xf8] sm:$0x3f]
  %v46 = vld [vmem:[%s0 + $0x100] sm:$0x3f]
  %v47 = vld [vmem:[%s0 + $0x108] sm:$0x3f]
  %v48 = vld [vmem:[%s0 + $0x110] sm:$0x3f]
  %v49 = vld [vmem:[%s0 + $0x118] sm:$0x3f]
  %v50 = vld [vmem:[%s1] sm:$0xff]
  %v51 = vld [vmem:[%s1 + $0x8] sm:$0xff]
  %v52 = vld [vmem:[%s1 + $0x10] sm:$0xff]
  %v53 = vld [vmem:[%s1 + $0x18] sm:$0x1]
  %v54 = vld [vmem:[%s1 + $0x20] sm:$0x1]
  %v55 = vld [vmem:[%s1 + $0x28] sm:$0x1]
  %v56 = vperm.slane %v50, 0
  %v57 = vperm.slane %v51, 0
  %v58 = vperm.slane %v52, 0
  %v59 = vmul.f32 %v14, %v56
  %v60 = vmul.f32 %v15, %v57
  %v61 = vmul.f32 %v16, %v58
  %v62 = vmul.f32 %v17, %v56
  %v63 = vmul.f32 %v18, %v57
  %v64 = vmul.f32 %v19, %v58
  %v65 = vmul.f32 %v20, %v56
  %v66 = vmul.f32 %v21, %v57
  %v67 = vmul.f32 %v22, %v58
  %v68 = vmul.f32 %v23, %v56
  %v69 = vmul.f32 %v24, %v57
  %v70 = vmul.f32 %v25, %v58
  %v71 = vmul.f32 %v32, %v56
  %v72 = vmul.f32 %v33, %v57
  %v73 = vmul.f32 %v34, %v58
  %v74 = vmul.f32 %v35, %v56
  %v75 = vmul.f32 %v36, %v57
  %v76 = vmul.f32 %v37, %v58
  %v77 = vmul.f32 %v38, %v56
  %v78 = vmul.f32 %v39, %v57
  %v79 = vmul.f32 %v40, %v58
  %v80 = vmul.f32 %v41, %v56
  %v81 = vmul.f32 %v42, %v57
  %v82 = vmul.f32 %v43, %v58
  %v83 = vperm.slane %v50, 1
  %v84 = vperm.slane %v51, 1
  %v85 = vperm.slane %v52, 1
  %v86 = vmul.f32 %v14, %v83
  %v87 = vmul.f32 %v15, %v84
  %v88 = vmul.f32 %v16, %v85
  %v89 = vmul.f32 %v17, %v83
  %v90 = vmul.f32 %v18, %v84
  %v91 = vmul.f32 %v19, %v85
  %v92 = vmul.f32 %v20, %v83
  %v93 = vmul.f32 %v21, %v84
  %v94 = vmul.f32 %v22, %v85
  %v95 = vmul.f32 %v23, %v83
  %v96 = vmul.f32 %v24, %v84
  %v97 = vmul.f32 %v25, %v85
  %v98 = vmul.f32 %v32, %v83
  %v99 = vmul.f32 %v33, %v84
  %v100 = vmul.f32 %v34, %v85
  %v101 = vmul.f32 %v35, %v83
  %v102 = vmul.f32 %v36, %v84
  %v103 = vmul.f32 %v37, %v85
  %v104 = vmul.f32 %v38, %v83
  %v105 = vmul.f32 %v39, %v84
  %v106 = vmul.f32 %v40, %v85
  %v107 = vmul.f32 %v41, %v83
  %v108 = vmul.f32 %v42, %v84
  %v109 = vmul.f32 %v43, %v85
  %v134 = vrot.slane %v86, 1
  %v135 = vrot.slane %v87, 1
  %v136 = vrot.slane %v88, 1
  %v137 = vrot.slane %v89, 1
  %v138 = vrot.slane %v90, 1
  %v139 = vrot.slane %v91, 1
  %v140 = vrot.slane %v92, 1
  %v141 = vrot.slane %v93, 1
  %v142 = vrot.slane %v94, 1
  %v143 = vrot.slane %v95, 1
  %v144 = vrot.slane %v96, 1
  %v145 = vrot.slane %v97, 1
  %v146 = vrot.slane %v98, 1
  %v147 = vrot.slane %v99, 1
  %v148 = vrot.slane %v100, 1
  %v149 = vrot.slane %v101, 1
  %v150 = vrot.slane %v102, 1
  %v151 = vrot.slane %v103, 1
  %v152 = vrot.slane %v104, 1
  %v153 = vrot.slane %v105, 1
  %v154 = vrot.slane %v106, 1
  %v155 = vrot.slane %v107, 1
  %v156 = vrot.slane %v108, 1
  %v157 = vrot.slane %v109, 1
  %v182 = vadd.f32 %v59, %v134
  %v183 = vadd.f32 %v60, %v135
  %v184 = vadd.f32 %v61, %v136
  %v185 = vadd.f32 %v62, %v137
  %v186 = vadd.f32 %v63, %v138
  %v187 = vadd.f32 %v64, %v139
  %v188 = vadd.f32 %v65, %v140
  %v189 = vadd.f32 %v66, %v141
  %v190 = vadd.f32 %v67, %v142
  %v191 = vadd.f32 %v68, %v143
  %v192 = vadd.f32 %v69, %v144
  %v193 = vadd.f32 %v70, %v145
  %v194 = vadd.f32 %v71, %v146
  %v195 = vadd.f32 %v72, %v147
  %v196 = vadd.f32 %v73, %v148
  %v197 = vadd.f32 %v74, %v149
  %v198 = vadd.f32 %v75, %v150
  %v199 = vadd.f32 %v76, %v151
  %v200 = vadd.f32 %v77, %v152
  %v201 = vadd.f32 %v78, %v153
  %v202 = vadd.f32 %v79, %v154
  %v203 = vadd.f32 %v80, %v155
  %v204 = vadd.f32 %v81, %v156
  %v205 = vadd.f32 %v82, %v157
  %v206 = vperm.slane %v50, 2
  %v207 = vperm.slane %v51, 2
  %v208 = vperm.slane %v52, 2
  %v209 = vmul.f32 %v14, %v206
  %v210 = vmul.f32 %v15, %v207
  %v211 = vmul.f32 %v16, %v208
  %v212 = vmul.f32 %v17, %v206
  %v213 = vmul.f32 %v18, %v207
  %v214 = vmul.f32 %v19, %v208
  %v215 = vmul.f32 %v20, %v206
  %v216 = vmul.f32 %v21, %v207
  %v217 = vmul.f32 %v22, %v208
  %v218 = vmul.f32 %v23, %v206
  %v219 = vmul.f32 %v24, %v207
  %v220 = vmul.f32 %v25, %v208
  %v221 = vmul.f32 %v32, %v206
  %v222 = vmul.f32 %v33, %v207
  %v223 = vmul.f32 %v34, %v208
  %v224 = vmul.f32 %v35, %v206
  %v225 = vmul.f32 %v36, %v207
  %v226 = vmul.f32 %v37, %v208
  %v227 = vmul.f32 %v38, %v206
  %v228 = vmul.f32 %v39, %v207
  %v229 = vmul.f32 %v40, %v208
  %v230 = vmul.f32 %v41, %v206
  %v231 = vmul.f32 %v42, %v207
  %v232 = vmul.f32 %v43, %v208
  %v257 = vrot.slane %v209, 2
  %v258 = vrot.slane %v210, 2
  %v259 = vrot.slane %v211, 2
  %v260 = vrot.slane %v212, 2
  %v261 = vrot.slane %v213, 2
  %v262 = vrot.slane %v214, 2
  %v263 = vrot.slane %v215, 2
  %v264 = vrot.slane %v216, 2
  %v265 = vrot.slane %v217, 2
  %v266 = vrot.slane %v218, 2
  %v267 = vrot.slane %v219, 2
  %v268 = vrot.slane %v220, 2
  %v269 = vrot.slane %v221, 2
  %v270 = vrot.slane %v222, 2
  %v271 = vrot.slane %v223, 2
  %v272 = vrot.slane %v224, 2
  %v273 = vrot.slane %v225, 2
  %v274 = vrot.slane %v226, 2
  %v275 = vrot.slane %v227, 2
  %v276 = vrot.slane %v228, 2
  %v277 = vrot.slane %v229, 2
  %v278 = vrot.slane %v230, 2
  %v279 = vrot.slane %v231, 2
  %v280 = vrot.slane %v232, 2
  %v305 = vadd.f32 %v182, %v257
  %v306 = vadd.f32 %v183, %v258
  %v307 = vadd.f32 %v184, %v259
  %v308 = vadd.f32 %v185, %v260
  %v309 = vadd.f32 %v186, %v261
  %v310 = vadd.f32 %v187, %v262
  %v311 = vadd.f32 %v188, %v263
  %v312 = vadd.f32 %v189, %v264
  %v313 = vadd.f32 %v190, %v265
  %v314 = vadd.f32 %v191, %v266
  %v315 = vadd.f32 %v192, %v267
  %v316 = vadd.f32 %v193, %v268
  %v317 = vadd.f32 %v194, %v269
  %v318 = vadd.f32 %v195, %v270
  %v319 = vadd.f32 %v196, %v271
  %v320 = vadd.f32 %v197, %v272
  %v321 = vadd.f32 %v198, %v273
  %v322 = vadd.f32 %v199, %v274
  %v323 = vadd.f32 %v200, %v275
  %v324 = vadd.f32 %v201, %v276
  %v325 = vadd.f32 %v202, %v277
  %v326 = vadd.f32 %v203, %v278
  %v327 = vadd.f32 %v204, %v279
  %v328 = vadd.f32 %v205, %v280
  %v329 = vperm.slane %v50, 3
  %v330 = vperm.slane %v51, 3
  %v331 = vperm.slane %v52, 3
  %v332 = vmul.f32 %v17, %v329
  %v333 = vmul.f32 %v18, %v330
  %v334 = vmul.f32 %v19, %v331
  %v335 = vmul.f32 %v20, %v329
  %v336 = vmul.f32 %v21, %v330
  %v337 = vmul.f32 %v22, %v331
  %v338 = vmul.f32 %v23, %v329
  %v339 = vmul.f32 %v24, %v330
  %v340 = vmul.f32 %v25, %v331
  %v341 = vmul.f32 %v26, %v329
  %v342 = vmul.f32 %v27, %v330
  %v343 = vmul.f32 %v28, %v331
  %v344 = vmul.f32 %v35, %v329
  %v345 = vmul.f32 %v36, %v330
  %v346 = vmul.f32 %v37, %v331
  %v347 = vmul.f32 %v38, %v329
  %v348 = vmul.f32 %v39, %v330
  %v349 = vmul.f32 %v40, %v331
  %v350 = vmul.f32 %v41, %v329
  %v351 = vmul.f32 %v42, %v330
  %v352 = vmul.f32 %v43, %v331
  %v353 = vmul.f32 %v44, %v329
  %v354 = vmul.f32 %v45, %v330
  %v355 = vmul.f32 %v46, %v331
  %v356 = vadd.f32 %v305, %v332
  %v357 = vadd.f32 %v306, %v333
  %v358 = vadd.f32 %v307, %v334
  %v359 = vadd.f32 %v308, %v335
  %v360 = vadd.f32 %v309, %v336
  %v361 = vadd.f32 %v310, %v337
  %v362 = vadd.f32 %v311, %v338
  %v363 = vadd.f32 %v312, %v339
  %v364 = vadd.f32 %v313, %v340
  %v365 = vadd.f32 %v314, %v341
  %v366 = vadd.f32 %v315, %v342
  %v367 = vadd.f32 %v316, %v343
  %v368 = vadd.f32 %v317, %v344
  %v369 = vadd.f32 %v318, %v345
  %v370 = vadd.f32 %v319, %v346
  %v371 = vadd.f32 %v320, %v347
  %v372 = vadd.f32 %v321, %v348
  %v373 = vadd.f32 %v322, %v349
  %v374 = vadd.f32 %v323, %v350
  %v375 = vadd.f32 %v324, %v351
  %v376 = vadd.f32 %v325, %v352
  %v377 = vadd.f32 %v326, %v353
  %v378 = vadd.f32 %v327, %v354
  %v379 = vadd.f32 %v328, %v355
  %v380 = vperm.slane %v50, 4
  %v381 = vperm.slane %v51, 4
  %v382 = vperm.slane %v52, 4
  %v383 = vmul.f32 %v17, %v380
  %v384 = vmul.f32 %v18, %v381
  %v385 = vmul.f32 %v19, %v382
  %v386 = vmul.f32 %v20, %v380
  %v387 = vmul.f32 %v21, %v381
  %v388 = vmul.f32 %v22, %v382
  %v389 = vmul.f32 %v23, %v380
  %v390 = vmul.f32 %v24, %v381
  %v391 = vmul.f32 %v25, %v382
  %v392 = vmul.f32 %v26, %v380
  %v393 = vmul.f32 %v27, %v381
  %v394 = vmul.f32 %v28, %v382
  %v395 = vmul.f32 %v35, %v380
  %v396 = vmul.f32 %v36, %v381
  %v397 = vmul.f32 %v37, %v382
  %v398 = vmul.f32 %v38, %v380
  %v399 = vmul.f32 %v39, %v381
  %v400 = vmul.f32 %v40, %v382
  %v401 = vmul.f32 %v41, %v380
  %v402 = vmul.f32 %v42, %v381
  %v403 = vmul.f32 %v43, %v382
  %v404 = vmul.f32 %v44, %v380
  %v405 = vmul.f32 %v45, %v381
  %v406 = vmul.f32 %v46, %v382
  %v431 = vrot.slane %v383, 1
  %v432 = vrot.slane %v384, 1
  %v433 = vrot.slane %v385, 1
  %v434 = vrot.slane %v386, 1
  %v435 = vrot.slane %v387, 1
  %v436 = vrot.slane %v388, 1
  %v437 = vrot.slane %v389, 1
  %v438 = vrot.slane %v390, 1
  %v439 = vrot.slane %v391, 1
  %v440 = vrot.slane %v392, 1
  %v441 = vrot.slane %v393, 1
  %v442 = vrot.slane %v394, 1
  %v443 = vrot.slane %v395, 1
  %v444 = vrot.slane %v396, 1
  %v445 = vrot.slane %v397, 1
  %v446 = vrot.slane %v398, 1
  %v447 = vrot.slane %v399, 1
  %v448 = vrot.slane %v400, 1
  %v449 = vrot.slane %v401, 1
  %v450 = vrot.slane %v402, 1
  %v451 = vrot.slane %v403, 1
  %v452 = vrot.slane %v404, 1
  %v453 = vrot.slane %v405, 1
  %v454 = vrot.slane %v406, 1
  %v479 = vadd.f32 %v356, %v431
  %v480 = vadd.f32 %v357, %v432
  %v481 = vadd.f32 %v358, %v433
  %v482 = vadd.f32 %v359, %v434
  %v483 = vadd.f32 %v360, %v435
  %v484 = vadd.f32 %v361, %v436
  %v485 = vadd.f32 %v362, %v437
  %v486 = vadd.f32 %v363, %v438
  %v487 = vadd.f32 %v364, %v439
  %v488 = vadd.f32 %v365, %v440
  %v489 = vadd.f32 %v366, %v441
  %v490 = vadd.f32 %v367, %v442
  %v491 = vadd.f32 %v368, %v443
  %v492 = vadd.f32 %v369, %v444
  %v493 = vadd.f32 %v370, %v445
  %v494 = vadd.f32 %v371, %v446
  %v495 = vadd.f32 %v372, %v447
  %v496 = vadd.f32 %v373, %v448
  %v497 = vadd.f32 %v374, %v449
  %v498 = vadd.f32 %v375, %v450
  %v499 = vadd.f32 %v376, %v451
  %v500 = vadd.f32 %v377, %v452
  %v501 = vadd.f32 %v378, %v453
  %v502 = vadd.f32 %v379, %v454
  %v503 = vperm.slane %v50, 5
  %v504 = vperm.slane %v51, 5
  %v505 = vperm.slane %v52, 5
  %v506 = vmul.f32 %v17, %v503
  %v507 = vmul.f32 %v18, %v504
  %v508 = vmul.f32 %v19, %v505
  %v509 = vmul.f32 %v20, %v503
  %v510 = vmul.f32 %v21, %v504
  %v511 = vmul.f32 %v22, %v505
  %v512 = vmul.f32 %v23, %v503
  %v513 = vmul.f32 %v24, %v504
  %v514 = vmul.f32 %v25, %v505
  %v515 = vmul.f32 %v26, %v503
  %v516 = vmul.f32 %v27, %v504
  %v517 = vmul.f32 %v28, %v505
  %v518 = vmul.f32 %v35, %v503
  %v519 = vmul.f32 %v36, %v504
  %v520 = vmul.f32 %v37, %v505
  %v521 = vmul.f32 %v38, %v503
  %v522 = vmul.f32 %v39, %v504
  %v523 = vmul.f32 %v40, %v505
  %v524 = vmul.f32 %v41, %v503
  %v525 = vmul.f32 %v42, %v504
  %v526 = vmul.f32 %v43, %v505
  %v527 = vmul.f32 %v44, %v503
  %v528 = vmul.f32 %v45, %v504
  %v529 = vmul.f32 %v46, %v505
  %v554 = vrot.slane %v506, 2
  %v555 = vrot.slane %v507, 2
  %v556 = vrot.slane %v508, 2
  %v557 = vrot.slane %v509, 2
  %v558 = vrot.slane %v510, 2
  %v559 = vrot.slane %v511, 2
  %v560 = vrot.slane %v512, 2
  %v561 = vrot.slane %v513, 2
  %v562 = vrot.slane %v514, 2
  %v563 = vrot.slane %v515, 2
  %v564 = vrot.slane %v516, 2
  %v565 = vrot.slane %v517, 2
  %v566 = vrot.slane %v518, 2
  %v567 = vrot.slane %v519, 2
  %v568 = vrot.slane %v520, 2
  %v569 = vrot.slane %v521, 2
  %v570 = vrot.slane %v522, 2
  %v571 = vrot.slane %v523, 2
  %v572 = vrot.slane %v524, 2
  %v573 = vrot.slane %v525, 2
  %v574 = vrot.slane %v526, 2
  %v575 = vrot.slane %v527, 2
  %v576 = vrot.slane %v528, 2
  %v577 = vrot.slane %v529, 2
  %v602 = vadd.f32 %v479, %v554
  %v603 = vadd.f32 %v480, %v555
  %v604 = vadd.f32 %v481, %v556
  %v605 = vadd.f32 %v482, %v557
  %v606 = vadd.f32 %v483, %v558
  %v607 = vadd.f32 %v484, %v559
  %v608 = vadd.f32 %v485, %v560
  %v609 = vadd.f32 %v486, %v561
  %v610 = vadd.f32 %v487, %v562
  %v611 = vadd.f32 %v488, %v563
  %v612 = vadd.f32 %v489, %v564
  %v613 = vadd.f32 %v490, %v565
  %v614 = vadd.f32 %v491, %v566
  %v615 = vadd.f32 %v492, %v567
  %v616 = vadd.f32 %v493, %v568
  %v617 = vadd.f32 %v494, %v569
  %v618 = vadd.f32 %v495, %v570
  %v619 = vadd.f32 %v496, %v571
  %v620 = vadd.f32 %v497, %v572
  %v621 = vadd.f32 %v498, %v573
  %v622 = vadd.f32 %v499, %v574
  %v623 = vadd.f32 %v500, %v575
  %v624 = vadd.f32 %v501, %v576
  %v625 = vadd.f32 %v502, %v577
  %v626 = vperm.slane %v50, 6
  %v627 = vperm.slane %v51, 6
  %v628 = vperm.slane %v52, 6
  %v629 = vmul.f32 %v20, %v626
  %v630 = vmul.f32 %v21, %v627
  %v631 = vmul.f32 %v22, %v628
  %v632 = vmul.f32 %v23, %v626
  %v633 = vmul.f32 %v24, %v627
  %v634 = vmul.f32 %v25, %v628
  %v635 = vmul.f32 %v26, %v626
  %v636 = vmul.f32 %v27, %v627
  %v637 = vmul.f32 %v28, %v628
  %v638 = vmul.f32 %v29, %v626
  %v639 = vmul.f32 %v30, %v627
  %v640 = vmul.f32 %v31, %v628
  %v641 = vmul.f32 %v38, %v626
  %v642 = vmul.f32 %v39, %v627
  %v643 = vmul.f32 %v40, %v628
  %v644 = vmul.f32 %v41, %v626
  %v645 = vmul.f32 %v42, %v627
  %v646 = vmul.f32 %v43, %v628
  %v647 = vmul.f32 %v44, %v626
  %v648 = vmul.f32 %v45, %v627
  %v649 = vmul.f32 %v46, %v628
  %v650 = vmul.f32 %v47, %v626
  %v651 = vmul.f32 %v48, %v627
  %v652 = vmul.f32 %v49, %v628
  %v653 = vadd.f32 %v602, %v629
  %v654 = vadd.f32 %v603, %v630
  %v655 = vadd.f32 %v604, %v631
  %v656 = vadd.f32 %v605, %v632
  %v657 = vadd.f32 %v606, %v633
  %v658 = vadd.f32 %v607, %v634
  %v659 = vadd.f32 %v608, %v635
  %v660 = vadd.f32 %v609, %v636
  %v661 = vadd.f32 %v610, %v637
  %v662 = vadd.f32 %v611, %v638
  %v663 = vadd.f32 %v612, %v639
  %v664 = vadd.f32 %v613, %v640
  %v665 = vadd.f32 %v614, %v641
  %v666 = vadd.f32 %v615, %v642
  %v667 = vadd.f32 %v616, %v643
  %v668 = vadd.f32 %v617, %v644
  %v669 = vadd.f32 %v618, %v645
  %v670 = vadd.f32 %v619, %v646
  %v671 = vadd.f32 %v620, %v647
  %v672 = vadd.f32 %v621, %v648
  %v673 = vadd.f32 %v622, %v649
  %v674 = vadd.f32 %v623, %v650
  %v675 = vadd.f32 %v624, %v651
  %v676 = vadd.f32 %v625, %v652
  %v677 = vperm.slane %v50, 7
  %v678 = vperm.slane %v51, 7
  %v679 = vperm.slane %v52, 7
  %v680 = vmul.f32 %v20, %v677
  %v681 = vmul.f32 %v21, %v678
  %v682 = vmul.f32 %v22, %v679
  %v683 = vmul.f32 %v23, %v677
  %v684 = vmul.f32 %v24, %v678
  %v685 = vmul.f32 %v25, %v679
  %v686 = vmul.f32 %v26, %v677
  %v687 = vmul.f32 %v27, %v678
  %v688 = vmul.f32 %v28, %v679
  %v689 = vmul.f32 %v29, %v677
  %v690 = vmul.f32 %v30, %v678
  %v691 = vmul.f32 %v31, %v679
  %v692 = vmul.f32 %v38, %v677
  %v693 = vmul.f32 %v39, %v678
  %v694 = vmul.f32 %v40, %v679
  %v695 = vmul.f32 %v41, %v677
  %v696 = vmul.f32 %v42, %v678
  %v697 = vmul.f32 %v43, %v679
  %v698 = vmul.f32 %v44, %v677
  %v699 = vmul.f32 %v45, %v678
  %v700 = vmul.f32 %v46, %v679
  %v701 = vmul.f32 %v47, %v677
  %v702 = vmul.f32 %v48, %v678
  %v703 = vmul.f32 %v49, %v679
  %v728 = vrot.slane %v680, 1
  %v729 = vrot.slane %v681, 1
  %v730 = vrot.slane %v682, 1
  %v731 = vrot.slane %v683, 1
  %v732 = vrot.slane %v684, 1
  %v733 = vrot.slane %v685, 1
  %v734 = vrot.slane %v686, 1
  %v735 = vrot.slane %v687, 1
  %v736 = vrot.slane %v688, 1
  %v737 = vrot.slane %v689, 1
  %v738 = vrot.slane %v690, 1
  %v739 = vrot.slane %v691, 1
  %v740 = vrot.slane %v692, 1
  %v741 = vrot.slane %v693, 1
  %v742 = vrot.slane %v694, 1
  %v743 = vrot.slane %v695, 1
  %v744 = vrot.slane %v696, 1
  %v745 = vrot.slane %v697, 1
  %v746 = vrot.slane %v698, 1
  %v747 = vrot.slane %v699, 1
  %v748 = vrot.slane %v700, 1
  %v749 = vrot.slane %v701, 1
  %v750 = vrot.slane %v702, 1
  %v751 = vrot.slane %v703, 1
  %v776 = vadd.f32 %v653, %v728
  %v777 = vadd.f32 %v654, %v729
  %v778 = vadd.f32 %v655, %v730
  %v779 = vadd.f32 %v656, %v731
  %v780 = vadd.f32 %v657, %v732
  %v781 = vadd.f32 %v658, %v733
  %v782 = vadd.f32 %v659, %v734
  %v783 = vadd.f32 %v660, %v735
  %v784 = vadd.f32 %v661, %v736
  %v785 = vadd.f32 %v662, %v737
  %v786 = vadd.f32 %v663, %v738
  %v787 = vadd.f32 %v664, %v739
  %v788 = vadd.f32 %v665, %v740
  %v789 = vadd.f32 %v666, %v741
  %v790 = vadd.f32 %v667, %v742
  %v791 = vadd.f32 %v668, %v743
  %v792 = vadd.f32 %v669, %v744
  %v793 = vadd.f32 %v670, %v745
  %v794 = vadd.f32 %v671, %v746
  %v795 = vadd.f32 %v672, %v747
  %v796 = vadd.f32 %v673, %v748
  %v797 = vadd.f32 %v674, %v749
  %v798 = vadd.f32 %v675, %v750
  %v799 = vadd.f32 %v676, %v751
  %v800 = vperm.slane %v53, 0
  %v801 = vperm.slane %v54, 0
  %v802 = vperm.slane %v55, 0
  %v803 = vmul.f32 %v20, %v800
  %v804 = vmul.f32 %v21, %v801
  %v805 = vmul.f32 %v22, %v802
  %v806 = vmul.f32 %v23, %v800
  %v807 = vmul.f32 %v24, %v801
  %v808 = vmul.f32 %v25, %v802
  %v809 = vmul.f32 %v26, %v800
  %v810 = vmul.f32 %v27, %v801
  %v811 = vmul.f32 %v28, %v802
  %v812 = vmul.f32 %v29, %v800
  %v813 = vmul.f32 %v30, %v801
  %v814 = vmul.f32 %v31, %v802
  %v815 = vmul.f32 %v38, %v800
  %v816 = vmul.f32 %v39, %v801
  %v817 = vmul.f32 %v40, %v802
  %v818 = vmul.f32 %v41, %v800
  %v819 = vmul.f32 %v42, %v801
  %v820 = vmul.f32 %v43, %v802
  %v821 = vmul.f32 %v44, %v800
  %v822 = vmul.f32 %v45, %v801
  %v823 = vmul.f32 %v46, %v802
  %v824 = vmul.f32 %v47, %v800
  %v825 = vmul.f32 %v48, %v801
  %v826 = vmul.f32 %v49, %v802
  %v851 = vrot.slane %v803, 2
  %v852 = vrot.slane %v804, 2
  %v853 = vrot.slane %v805, 2
  %v854 = vrot.slane %v806, 2
  %v855 = vrot.slane %v807, 2
  %v856 = vrot.slane %v808, 2
  %v857 = vrot.slane %v809, 2
  %v858 = vrot.slane %v810, 2
  %v859 = vrot.slane %v811, 2
  %v860 = vrot.slane %v812, 2
  %v861 = vrot.slane %v813, 2
  %v862 = vrot.slane %v814, 2
  %v863 = vrot.slane %v815, 2
  %v864 = vrot.slane %v816, 2
  %v865 = vrot.slane %v817, 2
  %v866 = vrot.slane %v818, 2
  %v867 = vrot.slane %v819, 2
  %v868 = vrot.slane %v820, 2
  %v869 = vrot.slane %v821, 2
  %v870 = vrot.slane %v822, 2
  %v871 = vrot.slane %v823, 2
  %v872 = vrot.slane %v824, 2
  %v873 = vrot.slane %v825, 2
  %v874 = vrot.slane %v826, 2
  %v899 = vadd.f32 %v776, %v851
  %v900 = vadd.f32 %v777, %v852
  %v901 = vadd.f32 %v778, %v853
  %v902 = vadd.f32 %v779, %v854
  %v903 = vadd.f32 %v780, %v855
  %v904 = vadd.f32 %v781, %v856
  %v905 = vadd.f32 %v782, %v857
  %v906 = vadd.f32 %v783, %v858
  %v907 = vadd.f32 %v784, %v859
  %v908 = vadd.f32 %v785, %v860
  %v909 = vadd.f32 %v786, %v861
  %v910 = vadd.f32 %v787, %v862
  %v911 = vadd.f32 %v788, %v863
  %v912 = vadd.f32 %v789, %v864
  %v913 = vadd.f32 %v790, %v865
  %v914 = vadd.f32 %v791, %v866
  %v915 = vadd.f32 %v792, %v867
  %v916 = vadd.f32 %v793, %v868
  %v917 = vadd.f32 %v794, %v869
  %v918 = vadd.f32 %v795, %v870
  %v919 = vadd.f32 %v796, %v871
  %v920 = vadd.f32 %v797, %v872
  %v921 = vadd.f32 %v798, %v873
  %v922 = vadd.f32 %v799, %v874
  %v923 = vld [vmem:[%s2] sm:$0x7]
  %v925 = vperm.slane %v923, 0
  %v926 = vperm.slane %v923, 1
  %v927 = vperm.slane %v923, 2
  %v931 = vadd.f32 %v899, %v925
  %v932 = vadd.f32 %v900, %v926
  %v933 = vadd.f32 %v901, %v927
  %v934 = vadd.f32 %v902, %v925
  %v935 = vadd.f32 %v903, %v926
  %v936 = vadd.f32 %v904, %v927
  %v937 = vadd.f32 %v905, %v925
  %v938 = vadd.f32 %v906, %v926
  %v939 = vadd.f32 %v907, %v927
  %v940 = vadd.f32 %v908, %v925
  %v941 = vadd.f32 %v909, %v926
  %v942 = vadd.f32 %v910, %v927
  %v943 = vadd.f32 %v911, %v925
  %v944 = vadd.f32 %v912, %v926
  %v945 = vadd.f32 %v913, %v927
  %v946 = vadd.f32 %v914, %v925
  %v947 = vadd.f32 %v915, %v926
  %v948 = vadd.f32 %v916, %v927
  %v949 = vadd.f32 %v917, %v925
  %v950 = vadd.f32 %v918, %v926
  %v951 = vadd.f32 %v919, %v927
  %v952 = vadd.f32 %v920, %v925
  %v953 = vadd.f32 %v921, %v926
  %v954 = vadd.f32 %v922, %v927
  %v955 = vmax.f32 %v931, 0.0
  %v956 = vmax.f32 %v932, 0.0
  %v957 = vmax.f32 %v933, 0.0
  %v958 = vmax.f32 %v934, 0.0
  %v959 = vmax.f32 %v935, 0.0
  %v960 = vmax.f32 %v936, 0.0
  %v961 = vmax.f32 %v937, 0.0
  %v962 = vmax.f32 %v938, 0.0
  %v963 = vmax.f32 %v939, 0.0
  %v964 = vmax.f32 %v940, 0.0
  %v965 = vmax.f32 %v941, 0.0
  %v966 = vmax.f32 %v942, 0.0
  %v967 = vmax.f32 %v943, 0.0
  %v968 = vmax.f32 %v944, 0.0
  %v969 = vmax.f32 %v945, 0.0
  %v970 = vmax.f32 %v946, 0.0
  %v971 = vmax.f32 %v947, 0.0
  %v972 = vmax.f32 %v948, 0.0
  %v973 = vmax.f32 %v949, 0.0
  %v974 = vmax.f32 %v950, 0.0
  %v975 = vmax.f32 %v951, 0.0
  %v976 = vmax.f32 %v952, 0.0
  %v977 = vmax.f32 %v953, 0.0
  %v978 = vmax.f32 %v954, 0.0
  %v995 = vrot.slane %v956, 4
  %v996 = vrot.slane %v959, 4
  %v997 = vrot.slane %v962, 4
  %v998 = vrot.slane %v965, 4
  %v999 = vrot.slane %v968, 4
  %v1000 = vrot.slane %v971, 4
  %v1001 = vrot.slane %v974, 4
  %v1002 = vrot.slane %v977, 4
  %vm1003 = vcmask 1043456
  %v1004 = vsel %vm1003, %v955, %v995
  %v1005 = vsel %vm1003, %v958, %v996
  %v1006 = vsel %vm1003, %v961, %v997
  %v1007 = vsel %vm1003, %v964, %v998
  %v1008 = vsel %vm1003, %v967, %v999
  %v1009 = vsel %vm1003, %v970, %v1000
  %v1010 = vsel %vm1003, %v973, %v1001
  %v1011 = vsel %vm1003, %v976, %v1002
  %1020 = vst [vmem:[%s3] sm:$0xff] %v1004
  %1021 = vst [vmem:[%s3 + $0x8] sm:$0xf] %v957
  %1022 = vst [vmem:[%s3 + $0xc] sm:$0xff] %v1005
  %1023 = vst [vmem:[%s3 + $0x14] sm:$0xf] %v960
  %1024 = vst [vmem:[%s3 + $0x18] sm:$0xff] %v1006
  %1025 = vst [vmem:[%s3 + $0x20] sm:$0xf] %v963
  %1026 = vst [vmem:[%s3 + $0x24] sm:$0xff] %v1007
  %1027 = vst [vmem:[%s3 + $0x2c] sm:$0xf] %v966
  %1028 = vst [vmem:[%s3 + $0x30] sm:$0xff] %v1008
  %1029 = vst [vmem:[%s3 + $0x38] sm:$0xf] %v969
  %1030 = vst [vmem:[%s3 + $0x3c] sm:$0xff] %v1009
  %1031 = vst [vmem:[%s3 + $0x44] sm:$0xf] %v972
  %1032 = vst [vmem:[%s3 + $0x48] sm:$0xff] %v1010
  %1033 = vst [vmem:[%s3 + $0x50] sm:$0xf] %v975
  %1034 = vst [vmem:[%s3 + $0x54] sm:$0xff] %v1011
  %1035 = vst [vmem:[%s3 + $0x5c] sm:$0xf] %v978
  // Predicated region
  $region14: #{mobilenet_forward.29} parent=0 // pred_check
    _
  $region15: #{mobilenet_forward.29} parent=0 // pred_check_branch
    %1037 = sbr.rel (0) target = $region17
  $region16: #{mobilenet_forward.29} parent=0 // pred_region
    _
  $region17: #{mobilenet_forward.29} parent=0 // pred_fallthru
    _
  // Predicated region
  $region18: #{mobilenet_forward.29} parent=0 // pred_check
    _
  $region19: #{mobilenet_forward.29} parent=0 // pred_check_branch
    %1039 = sbr.rel (0) target = $region21
  $region20: #{mobilenet_forward.29} parent=0 // pred_region
    _
  $region21: #{mobilenet_forward.29} parent=0 // pred_fallthru
    _

// kernel: mobilenet_forward.33
$region0: #{mobilenet_forward.33}
  #allocation0 [shape = 'u32[]', space=smem, size = 0x4, offset = 0x4, fixed_abs, tag = 'smem constant byte address 0x4 - core index']
  #allocation1 [shape = 'u32[72,128]{1,0:T(1,128)}', space=vmem, size = 0x9000, scoped, tag = 'internal scratch']
  %s0 = inlined_call_operand.vmem [shape: f32[8,640], index: 0, kind: input, shape index: {}]
  %s1 = inlined_call_operand.vmem [shape: f32[8,128], index: 1, kind: input, shape index: {}]
  %s2 = inlined_call_operand.vmem [shape: f32[640,128], index: 2, kind: input, shape index: {}]
  %s3 = inlined_call_operand.hbm [shape: f32[1,128], index: 3, kind: input, shape index: {}]
  %s4 = inlined_call_operand.vmem [shape: f32[8,128], index: 4, kind: output, shape index: {}]
  %s5 = sld [smem:[#allocation0]]
  $region30: #{mobilenet_forward.33} parent=0
    _
  %s7 = ssub.s32 1, %s5
  %s8 = scalar_select 0, %s7, %s5
  $region1: #{mobilenet_forward.33} parent=0
    #allocation2 [shape = 'u8[512]{0}', space=vmem, size = 0x400, scoped, tag = 'input window, operand 3, single buffered']
    #allocation3 [shape = 's32[1]{0}', space=sflag, size = 0x4, scoped, tag = 'scoped memory for mobilenet_forward.33']
    %9 = vsyncpa [#allocation3], 0
    // Predicated region
    $region2: #{mobilenet_forward.33} parent=1 // pred_check
      _
    $region3: #{mobilenet_forward.33} parent=1 // pred_check_branch
      %11 = sbr.rel (0) target = $region5
    $region4: #{mobilenet_forward.33} parent=1 // pred_region
      _
    $region5: #{mobilenet_forward.33} parent=1 // pred_fallthru
      _
    // Predicated region
    $region6: #{mobilenet_forward.33} parent=1 // pred_check
      _
    $region7: #{mobilenet_forward.33} parent=1 // pred_check_branch
      %13 = sbr.rel (0) target = $region9
    $region8: #{mobilenet_forward.33} parent=1 // pred_region
      _
    $region9: #{mobilenet_forward.33} parent=1 // pred_fallthru
      _
    // Predicated region
    $region10: #{mobilenet_forward.33} parent=1 // pred_check
      _
    $region11: #{mobilenet_forward.33} parent=1 // pred_check_branch
      %15 = sbr.rel (0) target = $region13
    $region12: #{mobilenet_forward.33} parent=1 // pred_region
      _
    $region13: #{mobilenet_forward.33} parent=1 // pred_fallthru
      _
    // Predicated region
    $region14: #{mobilenet_forward.33} parent=1 // pred_check
      _
    $region15: #{mobilenet_forward.33} parent=1 // pred_check_branch
      %17 = sbr.rel (0) target = $region17
    $region16: #{mobilenet_forward.33} parent=1 // pred_region
      %19 = vsyncadd [#allocation3], 0
      %s21 = sshll.u32 %s3, 4
      %s22 = int_to_ptr.hbm [resolvable:$true] %s21
      %s23 = sshll.u32 [#allocation2], 4
      %s24 = int_to_ptr.vmem [resolvable:$true] %s23
      %26 = dma.hbm_to_vmem [thread:$0]  %s22, 16, %s24, [#allocation3]
    $region17: #{mobilenet_forward.33} parent=1 // pred_fallthru
      _
    // Predicated region
    $region18: #{mobilenet_forward.33} parent=1 // pred_check
      _
    $region19: #{mobilenet_forward.33} parent=1 // pred_check_branch
      %28 = sbr.rel (0) target = $region21
    $region20: #{mobilenet_forward.33} parent=1 // pred_region
      %30 = dma.done [#allocation3], 16
    $region21: #{mobilenet_forward.33} parent=1 // pred_fallthru
      _
    %v31 = vld [vmem:[%s0] sm:$0xff]
    %v32 = vld [vmem:[%s0 + $0x8] sm:$0xff]
    %v33 = vld [vmem:[%s0 + $0x10] sm:$0xff]
    %v34 = vld [vmem:[%s0 + $0x18] sm:$0xff]
    %v35 = vld [vmem:[%s0 + $0x20] sm:$0xff]
    %v36 = vpack.c.bf16 %v31, %v31
    %v37 = vpack.c.bf16 %v32, %v32
    %v38 = vpack.c.bf16 %v33, %v33
    %v39 = vpack.c.bf16 %v34, %v34
    %v40 = vpack.c.bf16 %v35, %v35
    %v41 = vld [vmem:[%s2] sm:$0xff]
    %v42 = vld [vmem:[%s2 + $0x8] sm:$0xff]
    %v43 = vld [vmem:[%s2 + $0x10] sm:$0xff]
    %v44 = vld [vmem:[%s2 + $0x18] sm:$0xff]
    %v45 = vld [vmem:[%s2 + $0x20] sm:$0xff]
    %v46 = vld [vmem:[%s2 + $0x28] sm:$0xff]
    %v47 = vld [vmem:[%s2 + $0x30] sm:$0xff]
    %v48 = vld [vmem:[%s2 + $0x38] sm:$0xff]
    %v49 = vld [vmem:[%s2 + $0x40] sm:$0xff]
    %v50 = vld [vmem:[%s2 + $0x48] sm:$0xff]
    %v51 = vld [vmem:[%s2 + $0x50] sm:$0xff]
    %v52 = vld [vmem:[%s2 + $0x58] sm:$0xff]
    %v53 = vld [vmem:[%s2 + $0x60] sm:$0xff]
    %v54 = vld [vmem:[%s2 + $0x68] sm:$0xff]
    %v55 = vld [vmem:[%s2 + $0x70] sm:$0xff]
    %v56 = vld [vmem:[%s2 + $0x78] sm:$0xff]
    %v57 = vld [vmem:[%s2 + $0x80] sm:$0xff]
    %v58 = vld [vmem:[%s2 + $0x88] sm:$0xff]
    %v59 = vld [vmem:[%s2 + $0x90] sm:$0xff]
    %v60 = vld [vmem:[%s2 + $0x98] sm:$0xff]
    %v61 = vld [vmem:[%s2 + $0xa0] sm:$0xff]
    %v62 = vld [vmem:[%s2 + $0xa8] sm:$0xff]
    %v63 = vld [vmem:[%s2 + $0xb0] sm:$0xff]
    %v64 = vld [vmem:[%s2 + $0xb8] sm:$0xff]
    %v65 = vld [vmem:[%s2 + $0xc0] sm:$0xff]
    %v66 = vld [vmem:[%s2 + $0xc8] sm:$0xff]
    %v67 = vld [vmem:[%s2 + $0xd0] sm:$0xff]
    %v68 = vld [vmem:[%s2 + $0xd8] sm:$0xff]
    %v69 = vld [vmem:[%s2 + $0xe0] sm:$0xff]
    %v70 = vld [vmem:[%s2 + $0xe8] sm:$0xff]
    %v71 = vld [vmem:[%s2 + $0xf0] sm:$0xff]
    %v72 = vld [vmem:[%s2 + $0xf8] sm:$0xff]
    %v73 = vld [vmem:[%s2 + $0x100] sm:$0xff]
    %v74 = vld [vmem:[%s2 + $0x108] sm:$0xff]
    %v75 = vld [vmem:[%s2 + $0x110] sm:$0xff]
    %v76 = vld [vmem:[%s2 + $0x118] sm:$0xff]
    %v77 = vld [vmem:[%s2 + $0x120] sm:$0xff]
    %v78 = vld [vmem:[%s2 + $0x128] sm:$0xff]
    %v79 = vld [vmem:[%s2 + $0x130] sm:$0xff]
    %v80 = vld [vmem:[%s2 + $0x138] sm:$0xff]
    %v81 = vld [vmem:[%s2 + $0x140] sm:$0xff]
    %v82 = vld [vmem:[%s2 + $0x148] sm:$0xff]
    %v83 = vld [vmem:[%s2 + $0x150] sm:$0xff]
    %v84 = vld [vmem:[%s2 + $0x158] sm:$0xff]
    %v85 = vld [vmem:[%s2 + $0x160] sm:$0xff]
    %v86 = vld [vmem:[%s2 + $0x168] sm:$0xff]
    %v87 = vld [vmem:[%s2 + $0x170] sm:$0xff]
    %v88 = vld [vmem:[%s2 + $0x178] sm:$0xff]
    %v89 = vld [vmem:[%s2 + $0x180] sm:$0xff]
    %v90 = vld [vmem:[%s2 + $0x188] sm:$0xff]
    %v91 = vld [vmem:[%s2 + $0x190] sm:$0xff]
    %v92 = vld [vmem:[%s2 + $0x198] sm:$0xff]
    %v93 = vld [vmem:[%s2 + $0x1a0] sm:$0xff]
    %v94 = vld [vmem:[%s2 + $0x1a8] sm:$0xff]
    %v95 = vld [vmem:[%s2 + $0x1b0] sm:$0xff]
    %v96 = vld [vmem:[%s2 + $0x1b8] sm:$0xff]
    %v97 = vld [vmem:[%s2 + $0x1c0] sm:$0xff]
    %v98 = vld [vmem:[%s2 + $0x1c8] sm:$0xff]
    %v99 = vld [vmem:[%s2 + $0x1d0] sm:$0xff]
    %v100 = vld [vmem:[%s2 + $0x1d8] sm:$0xff]
    %v101 = vld [vmem:[%s2 + $0x1e0] sm:$0xff]
    %v102 = vld [vmem:[%s2 + $0x1e8] sm:$0xff]
    %v103 = vld [vmem:[%s2 + $0x1f0] sm:$0xff]
    %v104 = vld [vmem:[%s2 + $0x1f8] sm:$0xff]
    %v105 = vld [vmem:[%s2 + $0x200] sm:$0xff]
    %v106 = vld [vmem:[%s2 + $0x208] sm:$0xff]
    %v107 = vld [vmem:[%s2 + $0x210] sm:$0xff]
    %v108 = vld [vmem:[%s2 + $0x218] sm:$0xff]
    %v109 = vld [vmem:[%s2 + $0x220] sm:$0xff]
    %v110 = vld [vmem:[%s2 + $0x228] sm:$0xff]
    %v111 = vld [vmem:[%s2 + $0x230] sm:$0xff]
    %v112 = vld [vmem:[%s2 + $0x238] sm:$0xff]
    %v113 = vld [vmem:[%s2 + $0x240] sm:$0xff]
    %v114 = vld [vmem:[%s2 + $0x248] sm:$0xff]
    %v115 = vld [vmem:[%s2 + $0x250] sm:$0xff]
    %v116 = vld [vmem:[%s2 + $0x258] sm:$0xff]
    %v117 = vld [vmem:[%s2 + $0x260] sm:$0xff]
    %v118 = vld [vmem:[%s2 + $0x268] sm:$0xff]
    %v119 = vld [vmem:[%s2 + $0x270] sm:$0xff]
    %v120 = vld [vmem:[%s2 + $0x278] sm:$0xff]
    %v121 = vpack.c.bf16 %v42, %v41
    %v122 = vpack.c.bf16 %v44, %v43
    %v123 = vpack.c.bf16 %v46, %v45
    %v124 = vpack.c.bf16 %v48, %v47
    %v125 = vpack.c.bf16 %v50, %v49
    %v126 = vpack.c.bf16 %v52, %v51
    %v127 = vpack.c.bf16 %v54, %v53
    %v128 = vpack.c.bf16 %v56, %v55
    %v129 = vpack.c.bf16 %v58, %v57
    %v130 = vpack.c.bf16 %v60, %v59
    %v131 = vpack.c.bf16 %v62, %v61
    %v132 = vpack.c.bf16 %v64, %v63
    %v133 = vpack.c.bf16 %v66, %v65
    %v134 = vpack.c.bf16 %v68, %v67
    %v135 = vpack.c.bf16 %v70, %v69
    %v136 = vpack.c.bf16 %v72, %v71
    %v137 = vpack.c.bf16 %v74, %v73
    %v138 = vpack.c.bf16 %v76, %v75
    %v139 = vpack.c.bf16 %v78, %v77
    %v140 = vpack.c.bf16 %v80, %v79
    %v141 = vpack.c.bf16 %v82, %v81
    %v142 = vpack.c.bf16 %v84, %v83
    %v143 = vpack.c.bf16 %v86, %v85
    %v144 = vpack.c.bf16 %v88, %v87
    %v145 = vpack.c.bf16 %v90, %v89
    %v146 = vpack.c.bf16 %v92, %v91
    %v147 = vpack.c.bf16 %v94, %v93
    %v148 = vpack.c.bf16 %v96, %v95
    %v149 = vpack.c.bf16 %v98, %v97
    %v150 = vpack.c.bf16 %v100, %v99
    %v151 = vpack.c.bf16 %v102, %v101
    %v152 = vpack.c.bf16 %v104, %v103
    %v153 = vpack.c.bf16 %v106, %v105
    %v154 = vpack.c.bf16 %v108, %v107
    %v155 = vpack.c.bf16 %v110, %v109
    %v156 = vpack.c.bf16 %v112, %v111
    %v157 = vpack.c.bf16 %v114, %v113
    %v158 = vpack.c.bf16 %v116, %v115
    %v159 = vpack.c.bf16 %v118, %v117
    %v160 = vpack.c.bf16 %v120, %v119
    %v161 = vld [vmem:[#allocation2] sm:$0x1]
    %v163 = vperm.slane %v161, 0
    %165 = vmatpush.bf16.msra.mxu0 %v128
    %166 = vmatpush.bf16.msra.mxu0 %v127
    %167 = vmatpush.bf16.msra.mxu0 %v126
    %168 = vmatpush.bf16.msra.mxu0 %v125
    %169 = vmatpush.bf16.msra.mxu0 %v124
    %170 = vmatpush.bf16.msra.mxu0 %v123
    %171 = vmatpush.bf16.msra.mxu0 %v122
    %172 = vmatpush.bf16.msra.mxu0 %v121
    %173 = vmatmul.bf16.gmra.mxu0 %v36
    %v174 = vpop.f32.mrf.mxu0
    %v175 = vadd.f32 %v163, %v174
    %v176 = vpop.f32.mrf.mxu0
    %177 = vdwg.mxu0
    %178 = vmatpush.bf16.msra.mxu0 %v136
    %179 = vmatpush.bf16.msra.mxu0 %v135
    %180 = vmatpush.bf16.msra.mxu0 %v134
    %181 = vmatpush.bf16.msra.mxu0 %v133
    %182 = vmatpush.bf16.msra.mxu0 %v132
    %183 = vmatpush.bf16.msra.mxu0 %v131
    %184 = vmatpush.bf16.msra.mxu0 %v130
    %185 = vmatpush.bf16.msra.mxu0 %v129
    %186 = vmatmul.bf16.gmra.mxu0 %v37
    %v187 = vpop.f32.mrf.mxu0
    %v188 = vadd.f32 %v175, %v187
    %v189 = vpop.f32.mrf.mxu0
    %190 = vdwg.mxu0
    %191 = vmatpush.bf16.msra.mxu0 %v144
    %192 = vmatpush.bf16.msra.mxu0 %v143
    %193 = vmatpush.bf16.msra.mxu0 %v142
    %194 = vmatpush.bf16.msra.mxu0 %v141
    %195 = vmatpush.bf16.msra.mxu0 %v140
    %196 = vmatpush.bf16.msra.mxu0 %v139
    %197 = vmatpush.bf16.msra.mxu0 %v138
    %198 = vmatpush.bf16.msra.mxu0 %v137
    %199 = vmatmul.bf16.gmra.mxu0 %v38
    %v200 = vpop.f32.mrf.mxu0
    %v201 = vadd.f32 %v188, %v200
    %v202 = vpop.f32.mrf.mxu0
    %203 = vdwg.mxu0
    %204 = vmatpush.bf16.msra.mxu0 %v152
    %205 = vmatpush.bf16.msra.mxu0 %v151
    %206 = vmatpush.bf16.msra.mxu0 %v150
    %207 = vmatpush.bf16.msra.mxu0 %v149
    %208 = vmatpush.bf16.msra.mxu0 %v148
    %209 = vmatpush.bf16.msra.mxu0 %v147
    %210 = vmatpush.bf16.msra.mxu0 %v146
    %211 = vmatpush.bf16.msra.mxu0 %v145
    %212 = vmatmul.bf16.gmra.mxu0 %v39
    %v213 = vpop.f32.mrf.mxu0
    %v214 = vadd.f32 %v201, %v213
    %v215 = vpop.f32.mrf.mxu0
    %216 = vdwg.mxu0
    %217 = vmatpush.bf16.msra.mxu0 %v160
    %218 = vmatpush.bf16.msra.mxu0 %v159
    %219 = vmatpush.bf16.msra.mxu0 %v158
    %220 = vmatpush.bf16.msra.mxu0 %v157
    %221 = vmatpush.bf16.msra.mxu0 %v156
    %222 = vmatpush.bf16.msra.mxu0 %v155
    %223 = vmatpush.bf16.msra.mxu0 %v154
    %224 = vmatpush.bf16.msra.mxu0 %v153
    %225 = vmatmul.bf16.gmra.mxu0 %v40
    %v226 = vpop.f32.mrf.mxu0
    %v227 = vadd.f32 %v214, %v226
    %v228 = vpop.f32.mrf.mxu0
    %229 = vdwg.mxu0
    %v230 = vld [vmem:[%s1] sm:$0xff]
    %v231 = vadd.f32 %v227, %v230
    %232 = vst [vmem:[%s4] sm:$0xff] %v231
    // Predicated region
    $region22: #{mobilenet_forward.33} parent=1 // pred_check
      _
    $region23: #{mobilenet_forward.33} parent=1 // pred_check_branch
      %234 = sbr.rel (0) target = $region25
    $region24: #{mobilenet_forward.33} parent=1 // pred_region
      _
    $region25: #{mobilenet_forward.33} parent=1 // pred_fallthru
      _
    // Predicated region
    $region26: #{mobilenet_forward.33} parent=1 // pred_check
      _
    $region27: #{mobilenet_forward.33} parent=1 // pred_check_branch
      %236 = sbr.rel (0) target = $region29
    $region28: #{mobilenet_forward.33} parent=1 // pred_region
      _
    $region29: #{mobilenet_forward.33} parent=1 // pred_fallthru
      _
    %237 = vsyncpa [#allocation3], 1

// kernel: mobilenet_forward.34
$region0: #{mobilenet_forward.34}
  #allocation0 [shape = 'u32[]', space=smem, size = 0x4, offset = 0x4, fixed_abs, tag = 'smem constant byte address 0x4 - core index']
  #allocation1 [shape = 'u32[72,128]{1,0:T(1,128)}', space=vmem, size = 0x9000, scoped, tag = 'internal scratch']
  %s0 = inlined_call_operand.vmem [shape: f32[8,128], index: 0, kind: input, shape index: {}]
  %s1 = inlined_call_operand.vmem [shape: f32[128,128], index: 1, kind: input, shape index: {}]
  %s2 = inlined_call_operand.hbm [shape: f32[1,128], index: 2, kind: input, shape index: {}]
  %s3 = inlined_call_operand.vmem [shape: f32[8,128], index: 3, kind: output, shape index: {}]
  %s4 = sld [smem:[#allocation0]]
  $region26: #{mobilenet_forward.34} parent=0
    _
  %s6 = ssub.s32 1, %s4
  %s7 = scalar_select 0, %s6, %s4
  $region1: #{mobilenet_forward.34} parent=0
    #allocation2 [shape = 'u8[512]{0}', space=vmem, size = 0x400, scoped, tag = 'input window, operand 2, single buffered']
    #allocation3 [shape = 's32[1]{0}', space=sflag, size = 0x4, scoped, tag = 'scoped memory for mobilenet_forward.34']
    %8 = vsyncpa [#allocation3], 0
    // Predicated region
    $region2: #{mobilenet_forward.34} parent=1 // pred_check
      _
    $region3: #{mobilenet_forward.34} parent=1 // pred_check_branch
      %10 = sbr.rel (0) target = $region5
    $region4: #{mobilenet_forward.34} parent=1 // pred_region
      _
    $region5: #{mobilenet_forward.34} parent=1 // pred_fallthru
      _
    // Predicated region
    $region6: #{mobilenet_forward.34} parent=1 // pred_check
      _
    $region7: #{mobilenet_forward.34} parent=1 // pred_check_branch
      %12 = sbr.rel (0) target = $region9
    $region8: #{mobilenet_forward.34} parent=1 // pred_region
      _
    $region9: #{mobilenet_forward.34} parent=1 // pred_fallthru
      _
    // Predicated region
    $region10: #{mobilenet_forward.34} parent=1 // pred_check
      _
    $region11: #{mobilenet_forward.34} parent=1 // pred_check_branch
      %14 = sbr.rel (0) target = $region13
    $region12: #{mobilenet_forward.34} parent=1 // pred_region
      %16 = vsyncadd [#allocation3], 0
      %s18 = sshll.u32 %s2, 4
      %s19 = int_to_ptr.hbm [resolvable:$true] %s18
      %s20 = sshll.u32 [#allocation2], 4
      %s21 = int_to_ptr.vmem [resolvable:$true] %s20
      %23 = dma.hbm_to_vmem [thread:$0]  %s19, 16, %s21, [#allocation3]
    $region13: #{mobilenet_forward.34} parent=1 // pred_fallthru
      _
    // Predicated region
    $region14: #{mobilenet_forward.34} parent=1 // pred_check
      _
    $region15: #{mobilenet_forward.34} parent=1 // pred_check_branch
      %25 = sbr.rel (0) target = $region17
    $region16: #{mobilenet_forward.34} parent=1 // pred_region
      %27 = dma.done [#allocation3], 16
    $region17: #{mobilenet_forward.34} parent=1 // pred_fallthru
      _
    %v28 = vld [vmem:[%s0] sm:$0xff]
    %v29 = vpack.c.bf16 %v28, %v28
    %v30 = vld [vmem:[%s1] sm:$0xff]
    %v31 = vld [vmem:[%s1 + $0x8] sm:$0xff]
    %v32 = vld [vmem:[%s1 + $0x10] sm:$0xff]
    %v33 = vld [vmem:[%s1 + $0x18] sm:$0xff]
    %v34 = vld [vmem:[%s1 + $0x20] sm:$0xff]
    %v35 = vld [vmem:[%s1 + $0x28] sm:$0xff]
    %v36 = vld [vmem:[%s1 + $0x30] sm:$0xff]
    %v37 = vld [vmem:[%s1 + $0x38] sm:$0xff]
    %v38 = vld [vmem:[%s1 + $0x40] sm:$0xff]
    %v39 = vld [vmem:[%s1 + $0x48] sm:$0xff]
    %v40 = vld [vmem:[%s1 + $0x50] sm:$0xff]
    %v41 = vld [vmem:[%s1 + $0x58] sm:$0xff]
    %v42 = vld [vmem:[%s1 + $0x60] sm:$0xff]
    %v43 = vld [vmem:[%s1 + $0x68] sm:$0xff]
    %v44 = vld [vmem:[%s1 + $0x70] sm:$0xff]
    %v45 = vld [vmem:[%s1 + $0x78] sm:$0xff]
    %v46 = vpack.c.bf16 %v31, %v30
    %v47 = vpack.c.bf16 %v33, %v32
    %v48 = vpack.c.bf16 %v35, %v34
    %v49 = vpack.c.bf16 %v37, %v36
    %v50 = vpack.c.bf16 %v39, %v38
    %v51 = vpack.c.bf16 %v41, %v40
    %v52 = vpack.c.bf16 %v43, %v42
    %v53 = vpack.c.bf16 %v45, %v44
    %v54 = vld [vmem:[#allocation2] sm:$0x1]
    %v56 = vperm.slane %v54, 0
    %58 = vmatpush.bf16.msra.mxu0 %v53
    %59 = vmatpush.bf16.msra.mxu0 %v52
    %60 = vmatpush.bf16.msra.mxu0 %v51
    %61 = vmatpush.bf16.msra.mxu0 %v50
    %62 = vmatpush.bf16.msra.mxu0 %v49
    %63 = vmatpush.bf16.msra.mxu0 %v48
    %64 = vmatpush.bf16.msra.mxu0 %v47
    %65 = vmatpush.bf16.msra.mxu0 %v46
    %66 = vmatmul.bf16.gmra.mxu0 %v29
    %v67 = vpop.f32.mrf.mxu0
    %v68 = vadd.f32 %v56, %v67
    %v69 = vpop.f32.mrf.mxu0
    %70 = vdwg.mxu0
    %71 = vst [vmem:[%s3] sm:$0xff] %v68
    // Predicated region
    $region18: #{mobilenet_forward.34} parent=1 // pred_check
      _
    $region19: #{mobilenet_forward.34} parent=1 // pred_check_branch
      %73 = sbr.rel (0) target = $region21
    $region20: #{mobilenet_forward.34} parent=1 // pred_region
      _
    $region21: #{mobilenet_forward.34} parent=1 // pred_fallthru
      _
    // Predicated region
    $region22: #{mobilenet_forward.34} parent=1 // pred_check
      _
    $region23: #{mobilenet_forward.34} parent=1 // pred_check_branch
      %75 = sbr.rel (0) target = $region25
    $region24: #{mobilenet_forward.34} parent=1 // pred_region
      _
    $region25: #{mobilenet_forward.34} parent=1 // pred_fallthru
      _
    %76 = vsyncpa [#allocation3], 1

// kernel: mobilenet_forward.32
$region0: #{mobilenet_forward.32}
  #allocation0 [shape = 'u32[]', space=smem, size = 0x4, offset = 0x4, fixed_abs, tag = 'smem constant byte address 0x4 - core index']
  #allocation1 [shape = 'u32[72,128]{1,0:T(1,128)}', space=vmem, size = 0x9000, scoped, tag = 'internal scratch']
  %s0 = inlined_call_operand.vmem [shape: f32[2,4,4,640], index: 0, kind: input, shape index: {}]
  %s1 = inlined_call_operand.vmem [shape: f32[9,640], index: 1, kind: input, shape index: {}]
  %s2 = inlined_call_operand.vmem [shape: f32[1,640], index: 2, kind: input, shape index: {}]
  %s3 = inlined_call_operand.vmem [shape: f32[2,2,2,640], index: 3, kind: output, shape index: {}]
  %s4 = sld [smem:[#allocation0]]
  $region22: #{mobilenet_forward.32} parent=0
    _
  %s6 = ssub.s32 1, %s4
  %s7 = scalar_select 0, %s6, %s4
  // Predicated region
  $region2: #{mobilenet_forward.32} parent=0 // pred_check
    _
  $region3: #{mobilenet_forward.32} parent=0 // pred_check_branch
    %9 = sbr.rel (0) target = $region5
  $region4: #{mobilenet_forward.32} parent=0 // pred_region
    _
  $region5: #{mobilenet_forward.32} parent=0 // pred_fallthru
    _
  // Predicated region
  $region6: #{mobilenet_forward.32} parent=0 // pred_check
    _
  $region7: #{mobilenet_forward.32} parent=0 // pred_check_branch
    %11 = sbr.rel (0) target = $region9
  $region8: #{mobilenet_forward.32} parent=0 // pred_region
    _
  $region9: #{mobilenet_forward.32} parent=0 // pred_fallthru
    _
  // Predicated region
  $region10: #{mobilenet_forward.32} parent=0 // pred_check
    _
  $region11: #{mobilenet_forward.32} parent=0 // pred_check_branch
    %13 = sbr.rel (0) target = $region13
  $region12: #{mobilenet_forward.32} parent=0 // pred_region
    _
  $region13: #{mobilenet_forward.32} parent=0 // pred_fallthru
    _
  %v14 = vld [vmem:[%s0] sm:$0xff]
  %v15 = vld [vmem:[%s0 + $0x8] sm:$0xff]
  %v16 = vld [vmem:[%s0 + $0x10] sm:$0xf]
  %v17 = vld [vmem:[%s0 + $0x14] sm:$0xff]
  %v18 = vld [vmem:[%s0 + $0x1c] sm:$0xff]
  %v19 = vld [vmem:[%s0 + $0x24] sm:$0xf]
  %v20 = vld [vmem:[%s0 + $0x28] sm:$0xff]
  %v21 = vld [vmem:[%s0 + $0x30] sm:$0xff]
  %v22 = vld [vmem:[%s0 + $0x38] sm:$0xf]
  %v23 = vld [vmem:[%s0 + $0x3c] sm:$0xff]
  %v24 = vld [vmem:[%s0 + $0x44] sm:$0xff]
  %v25 = vld [vmem:[%s0 + $0x4c] sm:$0xf]
  %v26 = vld [vmem:[%s0 + $0x50] sm:$0xff]
  %v27 = vld [vmem:[%s0 + $0x58] sm:$0xff]
  %v28 = vld [vmem:[%s0 + $0x60] sm:$0xf]
  %v29 = vld [vmem:[%s0 + $0x64] sm:$0xff]
  %v30 = vld [vmem:[%s0 + $0x6c] sm:$0xff]
  %v31 = vld [vmem:[%s0 + $0x74] sm:$0xf]
  %v32 = vld [vmem:[%s0 + $0x78] sm:$0xff]
  %v33 = vld [vmem:[%s0 + $0x80] sm:$0xff]
  %v34 = vld [vmem:[%s0 + $0x88] sm:$0xf]
  %v35 = vld [vmem:[%s0 + $0x8c] sm:$0xff]
  %v36 = vld [vmem:[%s0 + $0x94] sm:$0xff]
  %v37 = vld [vmem:[%s0 + $0x9c] sm:$0xf]
  %v38 = vld [vmem:[%s1] sm:$0xff]
  %v39 = vld [vmem:[%s1 + $0x8] sm:$0xff]
  %v40 = vld [vmem:[%s1 + $0x10] sm:$0xff]
  %v41 = vld [vmem:[%s1 + $0x18] sm:$0xff]
  %v42 = vld [vmem:[%s1 + $0x20] sm:$0xff]
  %v43 = vld [vmem:[%s1 + $0x28] sm:$0x1]
  %v44 = vld [vmem:[%s1 + $0x30] sm:$0x1]
  %v45 = vld [vmem:[%s1 + $0x38] sm:$0x1]
  %v46 = vld [vmem:[%s1 + $0x40] sm:$0x1]
  %v47 = vld [vmem:[%s1 + $0x48] sm:$0x1]
  %v48 = vperm.slane %v38, 0
  %v49 = vperm.slane %v39, 0
  %v50 = vperm.slane %v40, 0
  %v51 = vperm.slane %v41, 0
  %v52 = vperm.slane %v42, 0
  %v57 = vrot.slane %v49, 4
  %v58 = vrot.slane %v51, 4
  %vm59 = vcmask 1043456
  %v60 = vsel %vm59, %v48, %v57
  %v61 = vsel %vm59, %v50, %v58
  %v64 = vmul.f32 %v14, %v60
  %v65 = vmul.f32 %v15, %v61
  %v66 = vmul.f32 %v16, %v52
  %v67 = vmul.f32 %v17, %v60
  %v68 = vmul.f32 %v18, %v61
  %v69 = vmul.f32 %v19, %v52
  %v70 = vmul.f32 %v26, %v60
  %v71 = vmul.f32 %v27, %v61
  %v72 = vmul.f32 %v28, %v52
  %v73 = vmul.f32 %v29, %v60
  %v74 = vmul.f32 %v30, %v61
  %v75 = vmul.f32 %v31, %v52
  %v76 = vperm.slane %v38, 1
  %v77 = vperm.slane %v39, 1
  %v78 = vperm.slane %v40, 1
  %v79 = vperm.slane %v41, 1
  %v80 = vperm.slane %v42, 1
  %v86 = vrot.slane %v77, 4
  %v87 = vrot.slane %v79, 4
  %v88 = vsel %vm59, %v76, %v86
  %v89 = vsel %vm59, %v78, %v87
  %v90 = vrot.slane %v88, 7
  %v91 = vrot.slane %v89, 7
  %v92 = vrot.slane %v80, 7
  %v96 = vmul.f32 %v14, %v90
  %v97 = vmul.f32 %v15, %v91
  %v98 = vmul.f32 %v16, %v92
  %v99 = vmul.f32 %v17, %v90
  %v100 = vmul.f32 %v18, %v91
  %v101 = vmul.f32 %v19, %v92
  %v102 = vmul.f32 %v26, %v90
  %v103 = vmul.f32 %v27, %v91
  %v104 = vmul.f32 %v28, %v92
  %v105 = vmul.f32 %v29, %v90
  %v106 = vmul.f32 %v30, %v91
  %v107 = vmul.f32 %v31, %v92
  %v120 = vrot.slane %v96, 5
  %v121 = vrot.slane %v120, 4
  %v122 = vrot.slane %v97, 5
  %v123 = vrot.slane %v122, 4
  %v124 = vrot.slane %v98, 5
  %v125 = vrot.slane %v124, 4
  %v126 = vrot.slane %v99, 5
  %v127 = vrot.slane %v126, 4
  %v128 = vrot.slane %v100, 5
  %v129 = vrot.slane %v128, 4
  %v130 = vrot.slane %v101, 5
  %v131 = vrot.slane %v130, 4
  %v132 = vrot.slane %v102, 5
  %v133 = vrot.slane %v132, 4
  %v134 = vrot.slane %v103, 5
  %v135 = vrot.slane %v134, 4
  %v136 = vrot.slane %v104, 5
  %v137 = vrot.slane %v136, 4
  %v138 = vrot.slane %v105, 5
  %v139 = vrot.slane %v138, 4
  %v140 = vrot.slane %v106, 5
  %v141 = vrot.slane %v140, 4
  %v142 = vrot.slane %v107, 5
  %v143 = vrot.slane %v142, 4
  %v156 = vadd.f32 %v64, %v121
  %v157 = vadd.f32 %v65, %v123
  %v158 = vadd.f32 %v66, %v125
  %v159 = vadd.f32 %v67, %v127
  %v160 = vadd.f32 %v68, %v129
  %v161 = vadd.f32 %v69, %v131
  %v162 = vadd.f32 %v70, %v133
  %v163 = vadd.f32 %v71, %v135
  %v164 = vadd.f32 %v72, %v137
  %v165 = vadd.f32 %v73, %v139
  %v166 = vadd.f32 %v74, %v141
  %v167 = vadd.f32 %v75, %v143
  %v168 = vperm.slane %v38, 2
  %v169 = vperm.slane %v39, 2
  %v170 = vperm.slane %v40, 2
  %v171 = vperm.slane %v41, 2
  %v172 = vperm.slane %v42, 2
  %v178 = vrot.slane %v169, 4
  %v179 = vrot.slane %v171, 4
  %v180 = vsel %vm59, %v168, %v178
  %v181 = vsel %vm59, %v170, %v179
  %v182 = vrot.slane %v180, 6
  %v183 = vrot.slane %v181, 6
  %v184 = vrot.slane %v172, 6
  %v188 = vmul.f32 %v14, %v182
  %v189 = vmul.f32 %v15, %v183
  %v190 = vmul.f32 %v16, %v184
  %v191 = vmul.f32 %v17, %v182
  %v192 = vmul.f32 %v18, %v183
  %v193 = vmul.f32 %v19, %v184
  %v194 = vmul.f32 %v26, %v182
  %v195 = vmul.f32 %v27, %v183
  %v196 = vmul.f32 %v28, %v184
  %v197 = vmul.f32 %v29, %v182
  %v198 = vmul.f32 %v30, %v183
  %v199 = vmul.f32 %v31, %v184
  %v212 = vrot.slane %v188, 6
  %v213 = vrot.slane %v212, 4
  %v214 = vrot.slane %v189, 6
  %v215 = vrot.slane %v214, 4
  %v216 = vrot.slane %v190, 6
  %v217 = vrot.slane %v216, 4
  %v218 = vrot.slane %v191, 6
  %v219 = vrot.slane %v218, 4
  %v220 = vrot.slane %v192, 6
  %v221 = vrot.slane %v220, 4
  %v222 = vrot.slane %v193, 6
  %v223 = vrot.slane %v222, 4
  %v224 = vrot.slane %v194, 6
  %v225 = vrot.slane %v224, 4
  %v226 = vrot.slane %v195, 6
  %v227 = vrot.slane %v226, 4
  %v228 = vrot.slane %v196, 6
  %v229 = vrot.slane %v228, 4
  %v230 = vrot.slane %v197, 6
  %v231 = vrot.slane %v230, 4
  %v232 = vrot.slane %v198, 6
  %v233 = vrot.slane %v232, 4
  %v234 = vrot.slane %v199, 6
  %v235 = vrot.slane %v234, 4
  %v248 = vadd.f32 %v156, %v213
  %v249 = vadd.f32 %v157, %v215
  %v250 = vadd.f32 %v158, %v217
  %v251 = vadd.f32 %v159, %v219
  %v252 = vadd.f32 %v160, %v221
  %v253 = vadd.f32 %v161, %v223
  %v254 = vadd.f32 %v162, %v225
  %v255 = vadd.f32 %v163, %v227
  %v256 = vadd.f32 %v164, %v229
  %v257 = vadd.f32 %v165, %v231
  %v258 = vadd.f32 %v166, %v233
  %v259 = vadd.f32 %v167, %v235
  %v260 = vperm.slane %v38, 3
  %v261 = vperm.slane %v39, 3
  %v262 = vperm.slane %v40, 3
  %v263 = vperm.slane %v41, 3
  %v264 = vperm.slane %v42, 3
  %v269 = vrot.slane %v261, 4
  %v270 = vrot.slane %v263, 4
  %v271 = vsel %vm59, %v260, %v269
  %v272 = vsel %vm59, %v262, %v270
  %v275 = vmul.f32 %v17, %v271
  %v276 = vmul.f32 %v18, %v272
  %v277 = vmul.f32 %v19, %v264
  %v278 = vmul.f32 %v20, %v271
  %v279 = vmul.f32 %v21, %v272
  %v280 = vmul.f32 %v22, %v264
  %v281 = vmul.f32 %v29, %v271
  %v282 = vmul.f32 %v30, %v272
  %v283 = vmul.f32 %v31, %v264
  %v284 = vmul.f32 %v32, %v271
  %v285 = vmul.f32 %v33, %v272
  %v286 = vmul.f32 %v34, %v264
  %v287 = vadd.f32 %v248, %v275
  %v288 = vadd.f32 %v249, %v276
  %v289 = vadd.f32 %v250, %v277
  %v290 = vadd.f32 %v251, %v278
  %v291 = vadd.f32 %v252, %v279
  %v292 = vadd.f32 %v253, %v280
  %v293 = vadd.f32 %v254, %v281
  %v294 = vadd.f32 %v255, %v282
  %v295 = vadd.f32 %v256, %v283
  %v296 = vadd.f32 %v257, %v284
  %v297 = vadd.f32 %v258, %v285
  %v298 = vadd.f32 %v259, %v286
  %v299 = vperm.slane %v38, 4
  %v300 = vperm.slane %v39, 4
  %v301 = vperm.slane %v40, 4
  %v302 = vperm.slane %v41, 4
  %v303 = vperm.slane %v42, 4
  %v309 = vrot.slane %v300, 4
  %v310 = vrot.slane %v302, 4
  %v311 = vsel %vm59, %v299, %v309
  %v312 = vsel %vm59, %v301, %v310
  %v313 = vrot.slane %v311, 7
  %v314 = vrot.slane %v312, 7
  %v315 = vrot.slane %v303, 7
  %v319 = vmul.f32 %v17, %v313
  %v320 = vmul.f32 %v18, %v314
  %v321 = vmul.f32 %v19, %v315
  %v322 = vmul.f32 %v20, %v313
  %v323 = vmul.f32 %v21, %v314
  %v324 = vmul.f32 %v22, %v315
  %v325 = vmul.f32 %v29, %v313
  %v326 = vmul.f32 %v30, %v314
  %v327 = vmul.f32 %v31, %v315
  %v328 = vmul.f32 %v32, %v313
  %v329 = vmul.f32 %v33, %v314
  %v330 = vmul.f32 %v34, %v315
  %v343 = vrot.slane %v319, 5
  %v344 = vrot.slane %v343, 4
  %v345 = vrot.slane %v320, 5
  %v346 = vrot.slane %v345, 4
  %v347 = vrot.slane %v321, 5
  %v348 = vrot.slane %v347, 4
  %v349 = vrot.slane %v322, 5
  %v350 = vrot.slane %v349, 4
  %v351 = vrot.slane %v323, 5
  %v352 = vrot.slane %v351, 4
  %v353 = vrot.slane %v324, 5
  %v354 = vrot.slane %v353, 4
  %v355 = vrot.slane %v325, 5
  %v356 = vrot.slane %v355, 4
  %v357 = vrot.slane %v326, 5
  %v358 = vrot.slane %v357, 4
  %v359 = vrot.slane %v327, 5
  %v360 = vrot.slane %v359, 4
  %v361 = vrot.slane %v328, 5
  %v362 = vrot.slane %v361, 4
  %v363 = vrot.slane %v329, 5
  %v364 = vrot.slane %v363, 4
  %v365 = vrot.slane %v330, 5
  %v366 = vrot.slane %v365, 4
  %v379 = vadd.f32 %v287, %v344
  %v380 = vadd.f32 %v288, %v346
  %v381 = vadd.f32 %v289, %v348
  %v382 = vadd.f32 %v290, %v350
  %v383 = vadd.f32 %v291, %v352
  %v384 = vadd.f32 %v292, %v354
  %v385 = vadd.f32 %v293, %v356
  %v386 = vadd.f32 %v294, %v358
  %v387 = vadd.f32 %v295, %v360
  %v388 = vadd.f32 %v296, %v362
  %v389 = vadd.f32 %v297, %v364
  %v390 = vadd.f32 %v298, %v366
  %v391 = vperm.slane %v38, 5
  %v392 = vperm.slane %v39, 5
  %v393 = vperm.slane %v40, 5
  %v394 = vperm.slane %v41, 5
  %v395 = vperm.slane %v42, 5
  %v401 = vrot.slane %v392, 4
  %v402 = vrot.slane %v394, 4
  %v403 = vsel %vm59, %v391, %v401
  %v404 = vsel %vm59, %v393, %v402
  %v405 = vrot.slane %v403, 6
  %v406 = vrot.slane %v404, 6
  %v407 = vrot.slane %v395, 6
  %v411 = vmul.f32 %v17, %v405
  %v412 = vmul.f32 %v18, %v406
  %v413 = vmul.f32 %v19, %v407
  %v414 = vmul.f32 %v20, %v405
  %v415 = vmul.f32 %v21, %v406
  %v416 = vmul.f32 %v22, %v407
  %v417 = vmul.f32 %v29, %v405
  %v418 = vmul.f32 %v30, %v406
  %v419 = vmul.f32 %v31, %v407
  %v420 = vmul.f32 %v32, %v405
  %v421 = vmul.f32 %v33, %v406
  %v422 = vmul.f32 %v34, %v407
  %v435 = vrot.slane %v411, 6
  %v436 = vrot.slane %v435, 4
  %v437 = vrot.slane %v412, 6
  %v438 = vrot.slane %v437, 4
  %v439 = vrot.slane %v413, 6
  %v440 = vrot.slane %v439, 4
  %v441 = vrot.slane %v414, 6
  %v442 = vrot.slane %v441, 4
  %v443 = vrot.slane %v415, 6
  %v444 = vrot.slane %v443, 4
  %v445 = vrot.slane %v416, 6
  %v446 = vrot.slane %v445, 4
  %v447 = vrot.slane %v417, 6
  %v448 = vrot.slane %v447, 4
  %v449 = vrot.slane %v418, 6
  %v450 = vrot.slane %v449, 4
  %v451 = vrot.slane %v419, 6
  %v452 = vrot.slane %v451, 4
  %v453 = vrot.slane %v420, 6
  %v454 = vrot.slane %v453, 4
  %v455 = vrot.slane %v421, 6
  %v456 = vrot.slane %v455, 4
  %v457 = vrot.slane %v422, 6
  %v458 = vrot.slane %v457, 4
  %v471 = vadd.f32 %v379, %v436
  %v472 = vadd.f32 %v380, %v438
  %v473 = vadd.f32 %v381, %v440
  %v474 = vadd.f32 %v382, %v442
  %v475 = vadd.f32 %v383, %v444
  %v476 = vadd.f32 %v384, %v446
  %v477 = vadd.f32 %v385, %v448
  %v478 = vadd.f32 %v386, %v450
  %v479 = vadd.f32 %v387, %v452
  %v480 = vadd.f32 %v388, %v454
  %v481 = vadd.f32 %v389, %v456
  %v482 = vadd.f32 %v390, %v458
  %v483 = vperm.slane %v38, 6
  %v484 = vperm.slane %v39, 6
  %v485 = vperm.slane %v40, 6
  %v486 = vperm.slane %v41, 6
  %v487 = vperm.slane %v42, 6
  %v492 = vrot.slane %v484, 4
  %v493 = vrot.slane %v486, 4
  %v494 = vsel %vm59, %v483, %v492
  %v495 = vsel %vm59, %v485, %v493
  %v498 = vmul.f32 %v20, %v494
  %v499 = vmul.f32 %v21, %v495
  %v500 = vmul.f32 %v22, %v487
  %v501 = vmul.f32 %v23, %v494
  %v502 = vmul.f32 %v24, %v495
  %v503 = vmul.f32 %v25, %v487
  %v504 = vmul.f32 %v32, %v494
  %v505 = vmul.f32 %v33, %v495
  %v506 = vmul.f32 %v34, %v487
  %v507 = vmul.f32 %v35, %v494
  %v508 = vmul.f32 %v36, %v495
  %v509 = vmul.f32 %v37, %v487
  %v510 = vadd.f32 %v471, %v498
  %v511 = vadd.f32 %v472, %v499
  %v512 = vadd.f32 %v473, %v500
  %v513 = vadd.f32 %v474, %v501
  %v514 = vadd.f32 %v475, %v502
  %v515 = vadd.f32 %v476, %v503
  %v516 = vadd.f32 %v477, %v504
  %v517 = vadd.f32 %v478, %v505
  %v518 = vadd.f32 %v479, %v506
  %v519 = vadd.f32 %v480, %v507
  %v520 = vadd.f32 %v481, %v508
  %v521 = vadd.f32 %v482, %v509
  %v522 = vperm.slane %v38, 7
  %v523 = vperm.slane %v39, 7
  %v524 = vperm.slane %v40, 7
  %v525 = vperm.slane %v41, 7
  %v526 = vperm.slane %v42, 7
  %v532 = vrot.slane %v523, 4
  %v533 = vrot.slane %v525, 4
  %v534 = vsel %vm59, %v522, %v532
  %v535 = vsel %vm59, %v524, %v533
  %v536 = vrot.slane %v534, 7
  %v537 = vrot.slane %v535, 7
  %v538 = vrot.slane %v526, 7
  %v542 = vmul.f32 %v20, %v536
  %v543 = vmul.f32 %v21, %v537
  %v544 = vmul.f32 %v22, %v538
  %v545 = vmul.f32 %v23, %v536
  %v546 = vmul.f32 %v24, %v537
  %v547 = vmul.f32 %v25, %v538
  %v548 = vmul.f32 %v32, %v536
  %v549 = vmul.f32 %v33, %v537
  %v550 = vmul.f32 %v34, %v538
  %v551 = vmul.f32 %v35, %v536
  %v552 = vmul.f32 %v36, %v537
  %v553 = vmul.f32 %v37, %v538
  %v566 = vrot.slane %v542, 5
  %v567 = vrot.slane %v566, 4
  %v568 = vrot.slane %v543, 5
  %v569 = vrot.slane %v568, 4
  %v570 = vrot.slane %v544, 5
  %v571 = vrot.slane %v570, 4
  %v572 = vrot.slane %v545, 5
  %v573 = vrot.slane %v572, 4
  %v574 = vrot.slane %v546, 5
  %v575 = vrot.slane %v574, 4
  %v576 = vrot.slane %v547, 5
  %v577 = vrot.slane %v576, 4
  %v578 = vrot.slane %v548, 5
  %v579 = vrot.slane %v578, 4
  %v580 = vrot.slane %v549, 5
  %v581 = vrot.slane %v580, 4
  %v582 = vrot.slane %v550, 5
  %v583 = vrot.slane %v582, 4
  %v584 = vrot.slane %v551, 5
  %v585 = vrot.slane %v584, 4
  %v586 = vrot.slane %v552, 5
  %v587 = vrot.slane %v586, 4
  %v588 = vrot.slane %v553, 5
  %v589 = vrot.slane %v588, 4
  %v602 = vadd.f32 %v510, %v567
  %v603 = vadd.f32 %v511, %v569
  %v604 = vadd.f32 %v512, %v571
  %v605 = vadd.f32 %v513, %v573
  %v606 = vadd.f32 %v514, %v575
  %v607 = vadd.f32 %v515, %v577
  %v608 = vadd.f32 %v516, %v579
  %v609 = vadd.f32 %v517, %v581
  %v610 = vadd.f32 %v518, %v583
  %v611 = vadd.f32 %v519, %v585
  %v612 = vadd.f32 %v520, %v587
  %v613 = vadd.f32 %v521, %v589
  %v614 = vperm.slane %v43, 0
  %v615 = vperm.slane %v44, 0
  %v616 = vperm.slane %v45, 0
  %v617 = vperm.slane %v46, 0
  %v618 = vperm.slane %v47, 0
  %v624 = vrot.slane %v615, 4
  %v625 = vrot.slane %v617, 4
  %v626 = vsel %vm59, %v614, %v624
  %v627 = vsel %vm59, %v616, %v625
  %v628 = vrot.slane %v626, 6
  %v629 = vrot.slane %v627, 6
  %v630 = vrot.slane %v618, 6
  %v634 = vmul.f32 %v20, %v628
  %v635 = vmul.f32 %v21, %v629
  %v636 = vmul.f32 %v22, %v630
  %v637 = vmul.f32 %v23, %v628
  %v638 = vmul.f32 %v24, %v629
  %v639 = vmul.f32 %v25, %v630
  %v640 = vmul.f32 %v32, %v628
  %v641 = vmul.f32 %v33, %v629
  %v642 = vmul.f32 %v34, %v630
  %v643 = vmul.f32 %v35, %v628
  %v644 = vmul.f32 %v36, %v629
  %v645 = vmul.f32 %v37, %v630
  %v658 = vrot.slane %v634, 6
  %v659 = vrot.slane %v658, 4
  %v660 = vrot.slane %v635, 6
  %v661 = vrot.slane %v660, 4
  %v662 = vrot.slane %v636, 6
  %v663 = vrot.slane %v662, 4
  %v664 = vrot.slane %v637, 6
  %v665 = vrot.slane %v664, 4
  %v666 = vrot.slane %v638, 6
  %v667 = vrot.slane %v666, 4
  %v668 = vrot.slane %v639, 6
  %v669 = vrot.slane %v668, 4
  %v670 = vrot.slane %v640, 6
  %v671 = vrot.slane %v670, 4
  %v672 = vrot.slane %v641, 6
  %v673 = vrot.slane %v672, 4
  %v674 = vrot.slane %v642, 6
  %v675 = vrot.slane %v674, 4
  %v676 = vrot.slane %v643, 6
  %v677 = vrot.slane %v676, 4
  %v678 = vrot.slane %v644, 6
  %v679 = vrot.slane %v678, 4
  %v680 = vrot.slane %v645, 6
  %v681 = vrot.slane %v680, 4
  %v694 = vadd.f32 %v602, %v659
  %v695 = vadd.f32 %v603, %v661
  %v696 = vadd.f32 %v604, %v663
  %v697 = vadd.f32 %v605, %v665
  %v698 = vadd.f32 %v606, %v667
  %v699 = vadd.f32 %v607, %v669
  %v700 = vadd.f32 %v608, %v671
  %v701 = vadd.f32 %v609, %v673
  %v702 = vadd.f32 %v610, %v675
  %v703 = vadd.f32 %v611, %v677
  %v704 = vadd.f32 %v612, %v679
  %v705 = vadd.f32 %v613, %v681
  %v706 = vld [vmem:[%s2] sm:$0x1f]
  %v708 = vperm.slane %v706, 0
  %v709 = vperm.slane %v706, 1
  %v710 = vperm.slane %v706, 2
  %v711 = vperm.slane %v706, 3
  %v712 = vperm.slane %v706, 4
  %v714 = vrot.slane %v709, 4
  %v715 = vrot.slane %v711, 4
  %v716 = vsel %vm59, %v708, %v714
  %v717 = vsel %vm59, %v710, %v715
  %v720 = vadd.f32 %v694, %v716
  %v721 = vadd.f32 %v695, %v717
  %v722 = vadd.f32 %v696, %v712
  %v723 = vadd.f32 %v697, %v716
  %v724 = vadd.f32 %v698, %v717
  %v725 = vadd.f32 %v699, %v712
  %v726 = vadd.f32 %v700, %v716
  %v727 = vadd.f32 %v701, %v717
  %v728 = vadd.f32 %v702, %v712
  %v729 = vadd.f32 %v703, %v716
  %v730 = vadd.f32 %v704, %v717
  %v731 = vadd.f32 %v705, %v712
  %v732 = vmax.f32 %v720, 0.0
  %v733 = vmax.f32 %v721, 0.0
  %v734 = vmax.f32 %v722, 0.0
  %v735 = vmax.f32 %v723, 0.0
  %v736 = vmax.f32 %v724, 0.0
  %v737 = vmax.f32 %v725, 0.0
  %v738 = vmax.f32 %v726, 0.0
  %v739 = vmax.f32 %v727, 0.0
  %v740 = vmax.f32 %v728, 0.0
  %v741 = vmax.f32 %v729, 0.0
  %v742 = vmax.f32 %v730, 0.0
  %v743 = vmax.f32 %v731, 0.0
  %v756 = vrot.slane %v732, 2
  %v757 = vrot.slane %v733, 4
  %v758 = vrot.slane %v733, 6
  %v759 = vrot.slane %v734, 2
  %v760 = vrot.slane %v735, 2
  %v761 = vrot.slane %v736, 4
  %v762 = vrot.slane %v736, 6
  %v763 = vrot.slane %v737, 2
  %v764 = vrot.slane %v738, 2
  %v765 = vrot.slane %v739, 4
  %v766 = vrot.slane %v739, 6
  %v767 = vrot.slane %v740, 2
  %v768 = vrot.slane %v741, 2
  %v769 = vrot.slane %v742, 4
  %v770 = vrot.slane %v742, 6
  %v771 = vrot.slane %v743, 2
  %vm772 = vcmask 1041408
  %v773 = vsel %vm772, %v732, %v756
  %vm774 = vcmask 1045508
  %v775 = vsel %vm774, %v757, %v758
  %v776 = vsel %vm59, %v773, %v775
  %v777 = vsel %vm772, %v734, %v759
  %v778 = vsel %vm772, %v735, %v760
  %v779 = vsel %vm774, %v761, %v762
  %v780 = vsel %vm59, %v778, %v779
  %v781 = vsel %vm772, %v737, %v763
  %v782 = vsel %vm772, %v738, %v764
  %v783 = vsel %vm774, %v765, %v766
  %v784 = vsel %vm59, %v782, %v783
  %v785 = vsel %vm772, %v740, %v767
  %v786 = vsel %vm772, %v741, %v768
  %v787 = vsel %vm774, %v769, %v770
  %v788 = vsel %vm59, %v786, %v787
  %v789 = vsel %vm772, %v743, %v771
  %798 = vst [vmem:[%s3] sm:$0xff] %v776
  %799 = vst [vmem:[%s3 + $0x8] sm:$0x3] %v777
  %800 = vst [vmem:[%s3 + $0xa] sm:$0xff] %v780
  %801 = vst [vmem:[%s3 + $0x12] sm:$0x3] %v781
  %802 = vst [vmem:[%s3 + $0x14] sm:$0xff] %v784
  %803 = vst [vmem:[%s3 + $0x1c] sm:$0x3] %v785
  %804 = vst [vmem:[%s3 + $0x1e] sm:$0xff] %v788
  %805 = vst [vmem:[%s3 + $0x26] sm:$0x3] %v789
  // Predicated region
  $region14: #{mobilenet_forward.32} parent=0 // pred_check
    _
  $region15: #{mobilenet_forward.32} parent=0 // pred_check_branch
    %807 = sbr.rel (0) target = $region17
  $region16: #{mobilenet_forward.32} parent=0 // pred_region
    _
  $region17: #{mobilenet_forward.32} parent=0 // pred_fallthru
    _
  // Predicated region
  $region18: #{mobilenet_forward.32} parent=0 // pred_check
    _
  $region19: #{mobilenet_forward.32} parent=0 // pred_check_branch
    %809 = sbr.rel (0) target = $region21
  $region20: #{mobilenet_forward.32} parent=0 // pred_region
    _
  $region21: #{mobilenet_forward.32} parent=0 // pred_fallthru
    _

// kernel: mobilenet_forward.35
$region0: #{mobilenet_forward.35}
  #allocation0 [shape = 'u32[]', space=smem, size = 0x4, offset = 0x4, fixed_abs, tag = 'smem constant byte address 0x4 - core index']
  #allocation1 [shape = 'u32[72,128]{1,0:T(1,128)}', space=vmem, size = 0x9000, scoped, tag = 'internal scratch']
  %s0 = inlined_call_operand.vmem [shape: f32[2,4,128], index: 0, kind: input, shape index: {}]
  %s1 = inlined_call_operand.vmem [shape: f32[128,10], index: 1, kind: input, shape index: {}]
  %s2 = inlined_call_operand.vmem [shape: f32[128,512], index: 2, kind: input, shape index: {}]
  %s3 = inlined_call_operand.vmem [shape: f32[1,512], index: 3, kind: input, shape index: {}]
  %s4 = inlined_call_operand.vmem [shape: f32[512,512], index: 4, kind: input, shape index: {}]
  %s5 = inlined_call_operand.vmem [shape: f32[1,512], index: 5, kind: input, shape index: {}]
  %s6 = inlined_call_operand.vmem [shape: f32[512,2], index: 6, kind: input, shape index: {}]
  %s7 = inlined_call_operand.vmem [shape: f32[1,2], index: 7, kind: input, shape index: {}]
  %s8 = inlined_call_operand.hbm [shape: f32[2,10], index: 8, kind: output, shape index: {0}]
  %s9 = inlined_call_operand.hbm [shape: f32[2,2], index: 9, kind: output, shape index: {1}]
  %10 = xla_tuple %s8, %s9
  %s11 = sld [smem:[#allocation0]]
  $region50: #{mobilenet_forward.35} parent=0
    _
  %s13 = ssub.s32 1, %s11
  %s14 = scalar_select 0, %s13, %s11
  $region1: #{mobilenet_forward.35} parent=0
    #allocation2 [shape = 'u8[1024]{0}', space=vmem, size = 0x400, scoped, tag = 'output window, operand 0, single buffered']
    #allocation3 [shape = 's32[1]{0}', space=sflag, size = 0x4, scoped, tag = 'scoped memory for mobilenet_forward.35']
    #allocation4 [shape = 'u8[1024]{0}', space=vmem, size = 0x400, scoped, tag = 'output window, operand 1, single buffered']
    #allocation5 [shape = 's32[1]{0}', space=sflag, size = 0x4, scoped, tag = 'scoped memory for mobilenet_forward.35']
    %15 = vsyncpa [#allocation3], 0
    %16 = vsyncpa [#allocation5], 0
    // Predicated region
    $region2: #{mobilenet_forward.35} parent=1 // pred_check
      _
    $region3: #{mobilenet_forward.35} parent=1 // pred_check_branch
      %18 = sbr.rel (0) target = $region5
    $region4: #{mobilenet_forward.35} parent=1 // pred_region
      _
    $region5: #{mobilenet_forward.35} parent=1 // pred_fallthru
      _
    // Predicated region
    $region6: #{mobilenet_forward.35} parent=1 // pred_check
      _
    $region7: #{mobilenet_forward.35} parent=1 // pred_check_branch
      %20 = sbr.rel (0) target = $region9
    $region8: #{mobilenet_forward.35} parent=1 // pred_region
      _
    $region9: #{mobilenet_forward.35} parent=1 // pred_fallthru
      _
    // Predicated region
    $region10: #{mobilenet_forward.35} parent=1 // pred_check
      _
    $region11: #{mobilenet_forward.35} parent=1 // pred_check_branch
      %22 = sbr.rel (0) target = $region13
    $region12: #{mobilenet_forward.35} parent=1 // pred_region
      _
    $region13: #{mobilenet_forward.35} parent=1 // pred_fallthru
      _
    // Predicated region
    $region14: #{mobilenet_forward.35} parent=1 // pred_check
      _
    $region15: #{mobilenet_forward.35} parent=1 // pred_check_branch
      %24 = sbr.rel (0) target = $region17
    $region16: #{mobilenet_forward.35} parent=1 // pred_region
      _
    $region17: #{mobilenet_forward.35} parent=1 // pred_fallthru
      _
    // Predicated region
    $region18: #{mobilenet_forward.35} parent=1 // pred_check
      _
    $region19: #{mobilenet_forward.35} parent=1 // pred_check_branch
      %26 = sbr.rel (0) target = $region21
    $region20: #{mobilenet_forward.35} parent=1 // pred_region
      _
    $region21: #{mobilenet_forward.35} parent=1 // pred_fallthru
      _
    // Predicated region
    $region22: #{mobilenet_forward.35} parent=1 // pred_check
      _
    $region23: #{mobilenet_forward.35} parent=1 // pred_check_branch
      %28 = sbr.rel (0) target = $region25
    $region24: #{mobilenet_forward.35} parent=1 // pred_region
      _
    $region25: #{mobilenet_forward.35} parent=1 // pred_fallthru
      _
    // Predicated region
    $region26: #{mobilenet_forward.35} parent=1 // pred_check
      _
    $region27: #{mobilenet_forward.35} parent=1 // pred_check_branch
      %30 = sbr.rel (0) target = $region29
    $region28: #{mobilenet_forward.35} parent=1 // pred_region
      _
    $region29: #{mobilenet_forward.35} parent=1 // pred_fallthru
      _
    // Predicated region
    $region30: #{mobilenet_forward.35} parent=1 // pred_check
      _
    $region31: #{mobilenet_forward.35} parent=1 // pred_check_branch
      %32 = sbr.rel (0) target = $region33
    $region32: #{mobilenet_forward.35} parent=1 // pred_region
      _
    $region33: #{mobilenet_forward.35} parent=1 // pred_fallthru
      _
    %v33 = vld [vmem:[%s0] sm:$0xf]
    %v34 = vld [vmem:[%s0 + $0x4] sm:$0xf]
    %vm35 = vcmask 1043456
    %v36 = vsel %vm35, %v33, 0.0
    %v37 = vrot.slane %v36, 4
    %v38 = vadd.f32 %v36, %v37
    %v39 = vrot.slane %v38, 2
    %v40 = vadd.f32 %v38, %v39
    %v41 = vrot.slane %v40, 1
    %v42 = vadd.f32 %v40, %v41
    %v43 = vsel %vm35, %v34, 0.0
    %v44 = vrot.slane %v43, 4
    %v45 = vadd.f32 %v43, %v44
    %v46 = vrot.slane %v45, 2
    %v47 = vadd.f32 %v45, %v46
    %v48 = vrot.slane %v47, 1
    %v49 = vadd.f32 %v47, %v48
    %v50 = vrcp.pop 4.0
    %v51 = vmul.f32 4.0, %v50
    %v52 = vsub.f32 1.0, %v51
    %v53 = vmul.f32 %v50, %v52
    %v54 = vadd.f32 %v50, %v53
    %vm55 = vweird.f32 %v50
    %v56 = vsel %vm55, %v50, %v54
    %v57 = vmul.f32 %v42, %v56
    %v58 = vmul.f32 %v49, %v56
    %v59 = vld [vmem:[%s1] sm:$0xff]
    %v60 = vld [vmem:[%s1 + $0x8] sm:$0xff]
    %v61 = vld [vmem:[%s1 + $0x10] sm:$0xff]
    %v62 = vld [vmem:[%s1 + $0x18] sm:$0xff]
    %v63 = vld [vmem:[%s1 + $0x20] sm:$0xff]
    %v64 = vld [vmem:[%s1 + $0x28] sm:$0xff]
    %v65 = vld [vmem:[%s1 + $0x30] sm:$0xff]
    %v66 = vld [vmem:[%s1 + $0x38] sm:$0xff]
    %v67 = vld [vmem:[%s1 + $0x40] sm:$0xff]
    %v68 = vld [vmem:[%s1 + $0x48] sm:$0xff]
    %v69 = vld [vmem:[%s1 + $0x50] sm:$0xff]
    %v70 = vld [vmem:[%s1 + $0x58] sm:$0xff]
    %v71 = vld [vmem:[%s1 + $0x60] sm:$0xff]
    %v72 = vld [vmem:[%s1 + $0x68] sm:$0xff]
    %v73 = vld [vmem:[%s1 + $0x70] sm:$0xff]
    %v74 = vld [vmem:[%s1 + $0x78] sm:$0xff]
    %vm77 = vcmask 1041409
    %v78 = vsel %vm77, %v58, %v57
    %80 = vmatpush.msra.mxu0 %v74
    %81 = vmatpush.msra.mxu0 %v73
    %82 = vmatpush.msra.mxu0 %v72
    %83 = vmatpush.msra.mxu0 %v71
    %84 = vmatpush.msra.mxu0 %v70
    %85 = vmatpush.msra.mxu0 %v69
    %86 = vmatpush.msra.mxu0 %v68
    %87 = vmatpush.msra.mxu0 %v67
    %88 = vmatpush.msra.mxu0 %v66
    %89 = vmatpush.msra.mxu0 %v65
    %90 = vmatpush.msra.mxu0 %v64
    %91 = vmatpush.msra.mxu0 %v63
    %92 = vmatpush.msra.mxu0 %v62
    %93 = vmatpush.msra.mxu0 %v61
    %94 = vmatpush.msra.mxu0 %v60
    %95 = vmatpush.msra.mxu0 %v59
    %96 = vmatmul.f32.gmra.mxu0 %v78
    %v97 = vpop.f32.mrf.mxu0
    %v98 = vadd.f32 0.0, %v97
    %99 = vdwg.mxu0
    %vm100 = vcmask 74752
    %v101 = vsel %vm100, %v98, -inf
    %102 = vmax.xlane.f32.xlu0 %v101
    %v103 = vpop.xlane.xlu0 %102
    %v104 = vsub.f32 %v98, %v103
    %v105 = vmul.f32 %v104, 1.442695
    %v106 = vpow.pop %v105
    %v107 = vsel %vm100, %v106, 0.0
    %108 = vadd.xlane.f32.xlu0 %v107
    %v109 = vpop.xlane.xlu0 %108
    %v110 = vlog2.pop %v109
    %v111 = vmul.f32 %v110, 0.6931472
    %v112 = vsub.f32 %v104, %v111
    %113 = vst.msk [vmem:[#allocation2] sm:$0x3] %vm100, %v112
    %v114 = vld [vmem:[%s2] sm:$0xff]
    %v115 = vld [vmem:[%s2 + $0x8] sm:$0xff]
    %v116 = vld [vmem:[%s2 + $0x10] sm:$0xff]
    %v117 = vld [vmem:[%s2 + $0x18] sm:$0xff]
    %v118 = vld [vmem:[%s2 + $0x20] sm:$0xff]
    %v119 = vld [vmem:[%s2 + $0x28] sm:$0xff]
    %v120 = vld [vmem:[%s2 + $0x30] sm:$0xff]
    %v121 = vld [vmem:[%s2 + $0x38] sm:$0xff]
    %v122 = vld [vmem:[%s2 + $0x40] sm:$0xff]
    %v123 = vld [vmem:[%s2 + $0x48] sm:$0xff]
    %v124 = vld [vmem:[%s2 + $0x50] sm:$0xff]
    %v125 = vld [vmem:[%s2 + $0x58] sm:$0xff]
    %v126 = vld [vmem:[%s2 + $0x60] sm:$0xff]
    %v127 = vld [vmem:[%s2 + $0x68] sm:$0xff]
    %v128 = vld [vmem:[%s2 + $0x70] sm:$0xff]
    %v129 = vld [vmem:[%s2 + $0x78] sm:$0xff]
    %v130 = vld [vmem:[%s2 + $0x80] sm:$0xff]
    %v131 = vld [vmem:[%s2 + $0x88] sm:$0xff]
    %v132 = vld [vmem:[%s2 + $0x90] sm:$0xff]
    %v133 = vld [vmem:[%s2 + $0x98] sm:$0xff]
    %v134 = vld [vmem:[%s2 + $0xa0] sm:$0xff]
    %v135 = vld [vmem:[%s2 + $0xa8] sm:$0xff]
    %v136 = vld [vmem:[%s2 + $0xb0] sm:$0xff]
    %v137 = vld [vmem:[%s2 + $0xb8] sm:$0xff]
    %v138 = vld [vmem:[%s2 + $0xc0] sm:$0xff]
    %v139 = vld [vmem:[%s2 + $0xc8] sm:$0xff]
    %v140 = vld [vmem:[%s2 + $0xd0] sm:$0xff]
    %v141 = vld [vmem:[%s2 + $0xd8] sm:$0xff]
    %v142 = vld [vmem:[%s2 + $0xe0] sm:$0xff]
    %v143 = vld [vmem:[%s2 + $0xe8] sm:$0xff]
    %v144 = vld [vmem:[%s2 + $0xf0] sm:$0xff]
    %v145 = vld [vmem:[%s2 + $0xf8] sm:$0xff]
    %v146 = vld [vmem:[%s2 + $0x100] sm:$0xff]
    %v147 = vld [vmem:[%s2 + $0x108] sm:$0xff]
    %v148 = vld [vmem:[%s2 + $0x110] sm:$0xff]
    %v149 = vld [vmem:[%s2 + $0x118] sm:$0xff]
    %v150 = vld [vmem:[%s2 + $0x120] sm:$0xff]
    %v151 = vld [vmem:[%s2 + $0x128] sm:$0xff]
    %v152 = vld [vmem:[%s2 + $0x130] sm:$0xff]
    %v153 = vld [vmem:[%s2 + $0x138] sm:$0xff]
    %v154 = vld [vmem:[%s2 + $0x140] sm:$0xff]
    %v155 = vld [vmem:[%s2 + $0x148] sm:$0xff]
    %v156 = vld [vmem:[%s2 + $0x150] sm:$0xff]
    %v157 = vld [vmem:[%s2 + $0x158] sm:$0xff]
    %v158 = vld [vmem:[%s2 + $0x160] sm:$0xff]
    %v159 = vld [vmem:[%s2 + $0x168] sm:$0xff]
    %v160 = vld [vmem:[%s2 + $0x170] sm:$0xff]
    %v161 = vld [vmem:[%s2 + $0x178] sm:$0xff]
    %v162 = vld [vmem:[%s2 + $0x180] sm:$0xff]
    %v163 = vld [vmem:[%s2 + $0x188] sm:$0xff]
    %v164 = vld [vmem:[%s2 + $0x190] sm:$0xff]
    %v165 = vld [vmem:[%s2 + $0x198] sm:$0xff]
    %v166 = vld [vmem:[%s2 + $0x1a0] sm:$0xff]
    %v167 = vld [vmem:[%s2 + $0x1a8] sm:$0xff]
    %v168 = vld [vmem:[%s2 + $0x1b0] sm:$0xff]
    %v169 = vld [vmem:[%s2 + $0x1b8] sm:$0xff]
    %v170 = vld [vmem:[%s2 + $0x1c0] sm:$0xff]
    %v171 = vld [vmem:[%s2 + $0x1c8] sm:$0xff]
    %v172 = vld [vmem:[%s2 + $0x1d0] sm:$0xff]
    %v173 = vld [vmem:[%s2 + $0x1d8] sm:$0xff]
    %v174 = vld [vmem:[%s2 + $0x1e0] sm:$0xff]
    %v175 = vld [vmem:[%s2 + $0x1e8] sm:$0xff]
    %v176 = vld [vmem:[%s2 + $0x1f0] sm:$0xff]
    %v177 = vld [vmem:[%s2 + $0x1f8] sm:$0xff]
    %v178 = vld [vmem:[%s3] sm:$0xf]
    %v180 = vperm.slane %v178, 0
    %v181 = vperm.slane %v178, 1
    %v182 = vperm.slane %v178, 2
    %v183 = vperm.slane %v178, 3
    %188 = vmatpush.msra.mxu0 %v174
    %189 = vmatpush.msra.mxu0 %v170
    %190 = vmatpush.msra.mxu0 %v166
    %191 = vmatpush.msra.mxu0 %v162
    %192 = vmatpush.msra.mxu0 %v158
    %193 = vmatpush.msra.mxu0 %v154
    %194 = vmatpush.msra.mxu0 %v150
    %195 = vmatpush.msra.mxu0 %v146
    %196 = vmatpush.msra.mxu0 %v142
    %197 = vmatpush.msra.mxu0 %v138
    %198 = vmatpush.msra.mxu0 %v134
    %199 = vmatpush.msra.mxu0 %v130
    %200 = vmatpush.msra.mxu0 %v126
    %201 = vmatpush.msra.mxu0 %v122
    %202 = vmatpush.msra.mxu0 %v118
    %203 = vmatpush.msra.mxu0 %v114
    %204 = vmatmul.f32.gmra.mxu0 %v78
    %v205 = vpop.f32.mrf.mxu0
    %v206 = vadd.f32 %v180, %v205
    %207 = vdwg.mxu0
    %208 = vmatpush.msra.mxu0 %v175
    %209 = vmatpush.msra.mxu0 %v171
    %210 = vmatpush.msra.mxu0 %v167
    %211 = vmatpush.msra.mxu0 %v163
    %212 = vmatpush.msra.mxu0 %v159
    %213 = vmatpush.msra.mxu0 %v155
    %214 = vmatpush.msra.mxu0 %v151
    %215 = vmatpush.msra.mxu0 %v147
    %216 = vmatpush.msra.mxu0 %v143
    %217 = vmatpush.msra.mxu0 %v139
    %218 = vmatpush.msra.mxu0 %v135
    %219 = vmatpush.msra.mxu0 %v131
    %220 = vmatpush.msra.mxu0 %v127
    %221 = vmatpush.msra.mxu0 %v123
    %222 = vmatpush.msra.mxu0 %v119
    %223 = vmatpush.msra.mxu0 %v115
    %224 = vmatmul.f32.gmra.mxu0 %v78
    %v225 = vpop.f32.mrf.mxu0
    %v226 = vadd.f32 %v181, %v225
    %227 = vdwg.mxu0
    %228 = vmatpush.msra.mxu0 %v176
    %229 = vmatpush.msra.mxu0 %v172
    %230 = vmatpush.msra.mxu0 %v168
    %231 = vmatpush.msra.mxu0 %v164
    %232 = vmatpush.msra.mxu0 %v160
    %233 = vmatpush.msra.mxu0 %v156
    %234 = vmatpush.msra.mxu0 %v152
    %235 = vmatpush.msra.mxu0 %v148
    %236 = vmatpush.msra.mxu0 %v144
    %237 = vmatpush.msra.mxu0 %v140
    %238 = vmatpush.msra.mxu0 %v136
    %239 = vmatpush.msra.mxu0 %v132
    %240 = vmatpush.msra.mxu0 %v128
    %241 = vmatpush.msra.mxu0 %v124
    %242 = vmatpush.msra.mxu0 %v120
    %243 = vmatpush.msra.mxu0 %v116
    %244 = vmatmul.f32.gmra.mxu0 %v78
    %v245 = vpop.f32.mrf.mxu0
    %v246 = vadd.f32 %v182, %v245
    %247 = vdwg.mxu0
    %248 = vmatpush.msra.mxu0 %v177
    %249 = vmatpush.msra.mxu0 %v173
    %250 = vmatpush.msra.mxu0 %v169
    %251 = vmatpush.msra.mxu0 %v165
    %252 = vmatpush.msra.mxu0 %v161
    %253 = vmatpush.msra.mxu0 %v157
    %254 = vmatpush.msra.mxu0 %v153
    %255 = vmatpush.msra.mxu0 %v149
    %256 = vmatpush.msra.mxu0 %v145
    %257 = vmatpush.msra.mxu0 %v141
    %258 = vmatpush.msra.mxu0 %v137
    %259 = vmatpush.msra.mxu0 %v133
    %260 = vmatpush.msra.mxu0 %v129
    %261 = vmatpush.msra.mxu0 %v125
    %262 = vmatpush.msra.mxu0 %v121
    %263 = vmatpush.msra.mxu0 %v117
    %264 = vmatmul.f32.gmra.mxu0 %v78
    %v265 = vpop.f32.mrf.mxu0
    %v266 = vadd.f32 %v183, %v265
    %267 = vdwg.mxu0
    %vm268 = vcmp.gt.f32.partialorder %v206, 0.0
    %vm269 = vcmp.gt.f32.partialorder %v226, 0.0
    %vm270 = vcmp.gt.f32.partialorder %v246, 0.0
    %vm271 = vcmp.gt.f32.partialorder %v266, 0.0
    %v272 = vmul.f32 %v206, 0.01
    %v273 = vmul.f32 %v226, 0.01
    %v274 = vmul.f32 %v246, 0.01
    %v275 = vmul.f32 %v266, 0.01
    %v276 = vsel %vm268, %v206, %v272
    %v277 = vsel %vm269, %v226, %v273
    %v278 = vsel %vm270, %v246, %v274
    %v279 = vsel %vm271, %v266, %v275
    %v280 = vld [vmem:[%s4] sm:$0xff]
    %v281 = vld [vmem:[%s4 + $0x8] sm:$0xff]
    %v282 = vld [vmem:[%s4 + $0x10] sm:$0xff]
    %v283 = vld [vmem:[%s4 + $0x18] sm:$0xff]
    %v284 = vld [vmem:[%s4 + $0x20] sm:$0xff]
    %v285 = vld [vmem:[%s4 + $0x28] sm:$0xff]
    %v286 = vld [vmem:[%s4 + $0x30] sm:$0xff]
    %v287 = vld [vmem:[%s4 + $0x38] sm:$0xff]
    %v288 = vld [vmem:[%s4 + $0x40] sm:$0xff]
    %v289 = vld [vmem:[%s4 + $0x48] sm:$0xff]
    %v290 = vld [vmem:[%s4 + $0x50] sm:$0xff]
    %v291 = vld [vmem:[%s4 + $0x58] sm:$0xff]
    %v292 = vld [vmem:[%s4 + $0x60] sm:$0xff]
    %v293 = vld [vmem:[%s4 + $0x68] sm:$0xff]
    %v294 = vld [vmem:[%s4 + $0x70] sm:$0xff]
    %v295 = vld [vmem:[%s4 + $0x78] sm:$0xff]
    %v296 = vld [vmem:[%s4 + $0x80] sm:$0xff]
    %v297 = vld [vmem:[%s4 + $0x88] sm:$0xff]
    %v298 = vld [vmem:[%s4 + $0x90] sm:$0xff]
    %v299 = vld [vmem:[%s4 + $0x98] sm:$0xff]
    %v300 = vld [vmem:[%s4 + $0xa0] sm:$0xff]
    %v301 = vld [vmem:[%s4 + $0xa8] sm:$0xff]
    %v302 = vld [vmem:[%s4 + $0xb0] sm:$0xff]
    %v303 = vld [vmem:[%s4 + $0xb8] sm:$0xff]
    %v304 = vld [vmem:[%s4 + $0xc0] sm:$0xff]
    %v305 = vld [vmem:[%s4 + $0xc8] sm:$0xff]
    %v306 = vld [vmem:[%s4 + $0xd0] sm:$0xff]
    %v307 = vld [vmem:[%s4 + $0xd8] sm:$0xff]
    %v308 = vld [vmem:[%s4 + $0xe0] sm:$0xff]
    %v309 = vld [vmem:[%s4 + $0xe8] sm:$0xff]
    %v310 = vld [vmem:[%s4 + $0xf0] sm:$0xff]
    %v311 = vld [vmem:[%s4 + $0xf8] sm:$0xff]
    %v312 = vld [vmem:[%s4 + $0x100] sm:$0xff]
    %v313 = vld [vmem:[%s4 + $0x108] sm:$0xff]
    %v314 = vld [vmem:[%s4 + $0x110] sm:$0xff]
    %v315 = vld [vmem:[%s4 + $0x118] sm:$0xff]
    %v316 = vld [vmem:[%s4 + $0x120] sm:$0xff]
    %v317 = vld [vmem:[%s4 + $0x128] sm:$0xff]
    %v318 = vld [vmem:[%s4 + $0x130] sm:$0xff]
    %v319 = vld [vmem:[%s4 + $0x138] sm:$0xff]
    %v320 = vld [vmem:[%s4 + $0x140] sm:$0xff]
    %v321 = vld [vmem:[%s4 + $0x148] sm:$0xff]
    %v322 = vld [vmem:[%s4 + $0x150] sm:$0xff]
    %v323 = vld [vmem:[%s4 + $0x158] sm:$0xff]
    %v324 = vld [vmem:[%s4 + $0x160] sm:$0xff]
    %v325 = vld [vmem:[%s4 + $0x168] sm:$0xff]
    %v326 = vld [vmem:[%s4 + $0x170] sm:$0xff]
    %v327 = vld [vmem:[%s4 + $0x178] sm:$0xff]
    %v328 = vld [vmem:[%s4 + $0x180] sm:$0xff]
    %v329 = vld [vmem:[%s4 + $0x188] sm:$0xff]
    %v330 = vld [vmem:[%s4 + $0x190] sm:$0xff]
    %v331 = vld [vmem:[%s4 + $0x198] sm:$0xff]
    %v332 = vld [vmem:[%s4 + $0x1a0] sm:$0xff]
    %v333 = vld [vmem:[%s4 + $0x1a8] sm:$0xff]
    %v334 = vld [vmem:[%s4 + $0x1b0] sm:$0xff]
    %v335 = vld [vmem:[%s4 + $0x1b8] sm:$0xff]
    %v336 = vld [vmem:[%s4 + $0x1c0] sm:$0xff]
    %v337 = vld [vmem:[%s4 + $0x1c8] sm:$0xff]
    %v338 = vld [vmem:[%s4 + $0x1d0] sm:$0xff]
    %v339 = vld [vmem:[%s4 + $0x1d8] sm:$0xff]
    %v340 = vld [vmem:[%s4 + $0x1e0] sm:$0xff]
    %v341 = vld [vmem:[%s4 + $0x1e8] sm:$0xff]
    %v342 = vld [vmem:[%s4 + $0x1f0] sm:$0xff]
    %v343 = vld [vmem:[%s4 + $0x1f8] sm:$0xff]
    %v344 = vld [vmem:[%s4 + $0x200] sm:$0xff]
    %v345 = vld [vmem:[%s4 + $0x208] sm:$0xff]
    %v346 = vld [vmem:[%s4 + $0x210] sm:$0xff]
    %v347 = vld [vmem:[%s4 + $0x218] sm:$0xff]
    %v348 = vld [vmem:[%s4 + $0x220] sm:$0xff]
    %v349 = vld [vmem:[%s4 + $0x228] sm:$0xff]
    %v350 = vld [vmem:[%s4 + $0x230] sm:$0xff]
    %v351 = vld [vmem:[%s4 + $0x238] sm:$0xff]
    %v352 = vld [vmem:[%s4 + $0x240] sm:$0xff]
    %v353 = vld [vmem:[%s4 + $0x248] sm:$0xff]
    %v354 = vld [vmem:[%s4 + $0x250] sm:$0xff]
    %v355 = vld [vmem:[%s4 + $0x258] sm:$0xff]
    %v356 = vld [vmem:[%s4 + $0x260] sm:$0xff]
    %v357 = vld [vmem:[%s4 + $0x268] sm:$0xff]
    %v358 = vld [vmem:[%s4 + $0x270] sm:$0xff]
    %v359 = vld [vmem:[%s4 + $0x278] sm:$0xff]
    %v360 = vld [vmem:[%s4 + $0x280] sm:$0xff]
    %v361 = vld [vmem:[%s4 + $0x288] sm:$0xff]
    %v362 = vld [vmem:[%s4 + $0x290] sm:$0xff]
    %v363 = vld [vmem:[%s4 + $0x298] sm:$0xff]
    %v364 = vld [vmem:[%s4 + $0x2a0] sm:$0xff]
    %v365 = vld [vmem:[%s4 + $0x2a8] sm:$0xff]
    %v366 = vld [vmem:[%s4 + $0x2b0] sm:$0xff]
    %v367 = vld [vmem:[%s4 + $0x2b8] sm:$0xff]
    %v368 = vld [vmem:[%s4 + $0x2c0] sm:$0xff]
    %v369 = vld [vmem:[%s4 + $0x2c8] sm:$0xff]
    %v370 = vld [vmem:[%s4 + $0x2d0] sm:$0xff]
    %v371 = vld [vmem:[%s4 + $0x2d8] sm:$0xff]
    %v372 = vld [vmem:[%s4 + $0x2e0] sm:$0xff]
    %v373 = vld [vmem:[%s4 + $0x2e8] sm:$0xff]
    %v374 = vld [vmem:[%s4 + $0x2f0] sm:$0xff]
    %v375 = vld [vmem:[%s4 + $0x2f8] sm:$0xff]
    %v376 = vld [vmem:[%s4 + $0x300] sm:$0xff]
    %v377 = vld [vmem:[%s4 + $0x308] sm:$0xff]
    %v378 = vld [vmem:[%s4 + $0x310] sm:$0xff]
    %v379 = vld [vmem:[%s4 + $0x318] sm:$0xff]
    %v380 = vld [vmem:[%s4 + $0x320] sm:$0xff]
    %v381 = vld [vmem:[%s4 + $0x328] sm:$0xff]
    %v382 = vld [vmem:[%s4 + $0x330] sm:$0xff]
    %v383 = vld [vmem:[%s4 + $0x338] sm:$0xff]
    %v384 = vld [vmem:[%s4 + $0x340] sm:$0xff]
    %v385 = vld [vmem:[%s4 + $0x348] sm:$0xff]
    %v386 = vld [vmem:[%s4 + $0x350] sm:$0xff]
    %v387 = vld [vmem:[%s4 + $0x358] sm:$0xff]
    %v388 = vld [vmem:[%s4 + $0x360] sm:$0xff]
    %v389 = vld [vmem:[%s4 + $0x368] sm:$0xff]
    %v390 = vld [vmem:[%s4 + $0x370] sm:$0xff]
    %v391 = vld [vmem:[%s4 + $0x378] sm:$0xff]
    %v392 = vld [vmem:[%s4 + $0x380] sm:$0xff]
    %v393 = vld [vmem:[%s4 + $0x388] sm:$0xff]
    %v394 = vld [vmem:[%s4 + $0x390] sm:$0xff]
    %v395 = vld [vmem:[%s4 + $0x398] sm:$0xff]
    %v396 = vld [vmem:[%s4 + $0x3a0] sm:$0xff]
    %v397 = vld [vmem:[%s4 + $0x3a8] sm:$0xff]
    %v398 = vld [vmem:[%s4 + $0x3b0] sm:$0xff]
    %v399 = vld [vmem:[%s4 + $0x3b8] sm:$0xff]
    %v400 = vld [vmem:[%s4 + $0x3c0] sm:$0xff]
    %v401 = vld [vmem:[%s4 + $0x3c8] sm:$0xff]
    %v402 = vld [vmem:[%s4 + $0x3d0] sm:$0xff]
    %v403 = vld [vmem:[%s4 + $0x3d8] sm:$0xff]
    %v404 = vld [vmem:[%s4 + $0x3e0] sm:$0xff]
    %v405 = vld [vmem:[%s4 + $0x3e8] sm:$0xff]
    %v406 = vld [vmem:[%s4 + $0x3f0] sm:$0xff]
    %v407 = vld [vmem:[%s4 + $0x3f8] sm:$0xff]
    %v408 = vld [vmem:[%s4 + $0x400] sm:$0xff]
    %v409 = vld [vmem:[%s4 + $0x408] sm:$0xff]
    %v410 = vld [vmem:[%s4 + $0x410] sm:$0xff]
    %v411 = vld [vmem:[%s4 + $0x418] sm:$0xff]
    %v412 = vld [vmem:[%s4 + $0x420] sm:$0xff]
    %v413 = vld [vmem:[%s4 + $0x428] sm:$0xff]
    %v414 = vld [vmem:[%s4 + $0x430] sm:$0xff]
    %v415 = vld [vmem:[%s4 + $0x438] sm:$0xff]
    %v416 = vld [vmem:[%s4 + $0x440] sm:$0xff]
    %v417 = vld [vmem:[%s4 + $0x448] sm:$0xff]
    %v418 = vld [vmem:[%s4 + $0x450] sm:$0xff]
    %v419 = vld [vmem:[%s4 + $0x458] sm:$0xff]
    %v420 = vld [vmem:[%s4 + $0x460] sm:$0xff]
    %v421 = vld [vmem:[%s4 + $0x468] sm:$0xff]
    %v422 = vld [vmem:[%s4 + $0x470] sm:$0xff]
    %v423 = vld [vmem:[%s4 + $0x478] sm:$0xff]
    %v424 = vld [vmem:[%s4 + $0x480] sm:$0xff]
    %v425 = vld [vmem:[%s4 + $0x488] sm:$0xff]
    %v426 = vld [vmem:[%s4 + $0x490] sm:$0xff]
    %v427 = vld [vmem:[%s4 + $0x498] sm:$0xff]
    %v428 = vld [vmem:[%s4 + $0x4a0] sm:$0xff]
    %v429 = vld [vmem:[%s4 + $0x4a8] sm:$0xff]
    %v430 = vld [vmem:[%s4 + $0x4b0] sm:$0xff]
    %v431 = vld [vmem:[%s4 + $0x4b8] sm:$0xff]
    %v432 = vld [vmem:[%s4 + $0x4c0] sm:$0xff]
    %v433 = vld [vmem:[%s4 + $0x4c8] sm:$0xff]
    %v434 = vld [vmem:[%s4 + $0x4d0] sm:$0xff]
    %v435 = vld [vmem:[%s4 + $0x4d8] sm:$0xff]
    %v436 = vld [vmem:[%s4 + $0x4e0] sm:$0xff]
    %v437 = vld [vmem:[%s4 + $0x4e8] sm:$0xff]
    %v438 = vld [vmem:[%s4 + $0x4f0] sm:$0xff]
    %v439 = vld [vmem:[%s4 + $0x4f8] sm:$0xff]
    %v440 = vld [vmem:[%s4 + $0x500] sm:$0xff]
    %v441 = vld [vmem:[%s4 + $0x508] sm:$0xff]
    %v442 = vld [vmem:[%s4 + $0x510] sm:$0xff]
    %v443 = vld [vmem:[%s4 + $0x518] sm:$0xff]
    %v444 = vld [vmem:[%s4 + $0x520] sm:$0xff]
    %v445 = vld [vmem:[%s4 + $0x528] sm:$0xff]
    %v446 = vld [vmem:[%s4 + $0x530] sm:$0xff]
    %v447 = vld [vmem:[%s4 + $0x538] sm:$0xff]
    %v448 = vld [vmem:[%s4 + $0x540] sm:$0xff]
    %v449 = vld [vmem:[%s4 + $0x548] sm:$0xff]
    %v450 = vld [vmem:[%s4 + $0x550] sm:$0xff]
    %v451 = vld [vmem:[%s4 + $0x558] sm:$0xff]
    %v452 = vld [vmem:[%s4 + $0x560] sm:$0xff]
    %v453 = vld [vmem:[%s4 + $0x568] sm:$0xff]
    %v454 = vld [vmem:[%s4 + $0x570] sm:$0xff]
    %v455 = vld [vmem:[%s4 + $0x578] sm:$0xff]
    %v456 = vld [vmem:[%s4 + $0x580] sm:$0xff]
    %v457 = vld [vmem:[%s4 + $0x588] sm:$0xff]
    %v458 = vld [vmem:[%s4 + $0x590] sm:$0xff]
    %v459 = vld [vmem:[%s4 + $0x598] sm:$0xff]
    %v460 = vld [vmem:[%s4 + $0x5a0] sm:$0xff]
    %v461 = vld [vmem:[%s4 + $0x5a8] sm:$0xff]
    %v462 = vld [vmem:[%s4 + $0x5b0] sm:$0xff]
    %v463 = vld [vmem:[%s4 + $0x5b8] sm:$0xff]
    %v464 = vld [vmem:[%s4 + $0x5c0] sm:$0xff]
    %v465 = vld [vmem:[%s4 + $0x5c8] sm:$0xff]
    %v466 = vld [vmem:[%s4 + $0x5d0] sm:$0xff]
    %v467 = vld [vmem:[%s4 + $0x5d8] sm:$0xff]
    %v468 = vld [vmem:[%s4 + $0x5e0] sm:$0xff]
    %v469 = vld [vmem:[%s4 + $0x5e8] sm:$0xff]
    %v470 = vld [vmem:[%s4 + $0x5f0] sm:$0xff]
    %v471 = vld [vmem:[%s4 + $0x5f8] sm:$0xff]
    %v472 = vld [vmem:[%s4 + $0x600] sm:$0xff]
    %v473 = vld [vmem:[%s4 + $0x608] sm:$0xff]
    %v474 = vld [vmem:[%s4 + $0x610] sm:$0xff]
    %v475 = vld [vmem:[%s4 + $0x618] sm:$0xff]
    %v476 = vld [vmem:[%s4 + $0x620] sm:$0xff]
    %v477 = vld [vmem:[%s4 + $0x628] sm:$0xff]
    %v478 = vld [vmem:[%s4 + $0x630] sm:$0xff]
    %v479 = vld [vmem:[%s4 + $0x638] sm:$0xff]
    %v480 = vld [vmem:[%s4 + $0x640] sm:$0xff]
    %v481 = vld [vmem:[%s4 + $0x648] sm:$0xff]
    %v482 = vld [vmem:[%s4 + $0x650] sm:$0xff]
    %v483 = vld [vmem:[%s4 + $0x658] sm:$0xff]
    %v484 = vld [vmem:[%s4 + $0x660] sm:$0xff]
    %v485 = vld [vmem:[%s4 + $0x668] sm:$0xff]
    %v486 = vld [vmem:[%s4 + $0x670] sm:$0xff]
    %v487 = vld [vmem:[%s4 + $0x678] sm:$0xff]
    %v488 = vld [vmem:[%s4 + $0x680] sm:$0xff]
    %v489 = vld [vmem:[%s4 + $0x688] sm:$0xff]
    %v490 = vld [vmem:[%s4 + $0x690] sm:$0xff]
    %v491 = vld [vmem:[%s4 + $0x698] sm:$0xff]
    %v492 = vld [vmem:[%s4 + $0x6a0] sm:$0xff]
    %v493 = vld [vmem:[%s4 + $0x6a8] sm:$0xff]
    %v494 = vld [vmem:[%s4 + $0x6b0] sm:$0xff]
    %v495 = vld [vmem:[%s4 + $0x6b8] sm:$0xff]
    %v496 = vld [vmem:[%s4 + $0x6c0] sm:$0xff]
    %v497 = vld [vmem:[%s4 + $0x6c8] sm:$0xff]
    %v498 = vld [vmem:[%s4 + $0x6d0] sm:$0xff]
    %v499 = vld [vmem:[%s4 + $0x6d8] sm:$0xff]
    %v500 = vld [vmem:[%s4 + $0x6e0] sm:$0xff]
    %v501 = vld [vmem:[%s4 + $0x6e8] sm:$0xff]
    %v502 = vld [vmem:[%s4 + $0x6f0] sm:$0xff]
    %v503 = vld [vmem:[%s4 + $0x6f8] sm:$0xff]
    %v504 = vld [vmem:[%s4 + $0x700] sm:$0xff]
    %v505 = vld [vmem:[%s4 + $0x708] sm:$0xff]
    %v506 = vld [vmem:[%s4 + $0x710] sm:$0xff]
    %v507 = vld [vmem:[%s4 + $0x718] sm:$0xff]
    %v508 = vld [vmem:[%s4 + $0x720] sm:$0xff]
    %v509 = vld [vmem:[%s4 + $0x728] sm:$0xff]
    %v510 = vld [vmem:[%s4 + $0x730] sm:$0xff]
    %v511 = vld [vmem:[%s4 + $0x738] sm:$0xff]
    %v512 = vld [vmem:[%s4 + $0x740] sm:$0xff]
    %v513 = vld [vmem:[%s4 + $0x748] sm:$0xff]
    %v514 = vld [vmem:[%s4 + $0x750] sm:$0xff]
    %v515 = vld [vmem:[%s4 + $0x758] sm:$0xff]
    %v516 = vld [vmem:[%s4 + $0x760] sm:$0xff]
    %v517 = vld [vmem:[%s4 + $0x768] sm:$0xff]
    %v518 = vld [vmem:[%s4 + $0x770] sm:$0xff]
    %v519 = vld [vmem:[%s4 + $0x778] sm:$0xff]
    %v520 = vld [vmem:[%s4 + $0x780] sm:$0xff]
    %v521 = vld [vmem:[%s4 + $0x788] sm:$0xff]
    %v522 = vld [vmem:[%s4 + $0x790] sm:$0xff]
    %v523 = vld [vmem:[%s4 + $0x798] sm:$0xff]
    %v524 = vld [vmem:[%s4 + $0x7a0] sm:$0xff]
    %v525 = vld [vmem:[%s4 + $0x7a8] sm:$0xff]
    %v526 = vld [vmem:[%s4 + $0x7b0] sm:$0xff]
    %v527 = vld [vmem:[%s4 + $0x7b8] sm:$0xff]
    %v528 = vld [vmem:[%s4 + $0x7c0] sm:$0xff]
    %v529 = vld [vmem:[%s4 + $0x7c8] sm:$0xff]
    %v530 = vld [vmem:[%s4 + $0x7d0] sm:$0xff]
    %v531 = vld [vmem:[%s4 + $0x7d8] sm:$0xff]
    %v532 = vld [vmem:[%s4 + $0x7e0] sm:$0xff]
    %v533 = vld [vmem:[%s4 + $0x7e8] sm:$0xff]
    %v534 = vld [vmem:[%s4 + $0x7f0] sm:$0xff]
    %v535 = vld [vmem:[%s4 + $0x7f8] sm:$0xff]
    %v536 = vld [vmem:[%s5] sm:$0xf]
    %v538 = vperm.slane %v536, 0
    %v539 = vperm.slane %v536, 1
    %v540 = vperm.slane %v536, 2
    %v541 = vperm.slane %v536, 3
    %546 = vmatpush.msra.mxu0 %v340
    %547 = vmatpush.msra.mxu0 %v336
    %548 = vmatpush.msra.mxu0 %v332
    %549 = vmatpush.msra.mxu0 %v328
    %550 = vmatpush.msra.mxu0 %v324
    %551 = vmatpush.msra.mxu0 %v320
    %552 = vmatpush.msra.mxu0 %v316
    %553 = vmatpush.msra.mxu0 %v312
    %554 = vmatpush.msra.mxu0 %v308
    %555 = vmatpush.msra.mxu0 %v304
    %556 = vmatpush.msra.mxu0 %v300
    %557 = vmatpush.msra.mxu0 %v296
    %558 = vmatpush.msra.mxu0 %v292
    %559 = vmatpush.msra.mxu0 %v288
    %560 = vmatpush.msra.mxu0 %v284
    %561 = vmatpush.msra.mxu0 %v280
    %562 = vmatmul.f32.gmra.mxu0 %v276
    %v563 = vpop.f32.mrf.mxu0
    %v564 = vadd.f32 %v538, %v563
    %565 = vdwg.mxu0
    %566 = vmatpush.msra.mxu0 %v404
    %567 = vmatpush.msra.mxu0 %v400
    %568 = vmatpush.msra.mxu0 %v396
    %569 = vmatpush.msra.mxu0 %v392
    %570 = vmatpush.msra.mxu0 %v388
    %571 = vmatpush.msra.mxu0 %v384
    %572 = vmatpush.msra.mxu0 %v380
    %573 = vmatpush.msra.mxu0 %v376
    %574 = vmatpush.msra.mxu0 %v372
    %575 = vmatpush.msra.mxu0 %v368
    %576 = vmatpush.msra.mxu0 %v364
    %577 = vmatpush.msra.mxu0 %v360
    %578 = vmatpush.msra.mxu0 %v356
    %579 = vmatpush.msra.mxu0 %v352
    %580 = vmatpush.msra.mxu0 %v348
    %581 = vmatpush.msra.mxu0 %v344
    %582 = vmatmul.f32.gmra.mxu0 %v277
    %v583 = vpop.f32.mrf.mxu0
    %v584 = vadd.f32 %v564, %v583
    %585 = vdwg.mxu0
    %586 = vmatpush.msra.mxu0 %v468
    %587 = vmatpush.msra.mxu0 %v464
    %588 = vmatpush.msra.mxu0 %v460
    %589 = vmatpush.msra.mxu0 %v456
    %590 = vmatpush.msra.mxu0 %v452
    %591 = vmatpush.msra.mxu0 %v448
    %592 = vmatpush.msra.mxu0 %v444
    %593 = vmatpush.msra.mxu0 %v440
    %594 = vmatpush.msra.mxu0 %v436
    %595 = vmatpush.msra.mxu0 %v432
    %596 = vmatpush.msra.mxu0 %v428
    %597 = vmatpush.msra.mxu0 %v424
    %598 = vmatpush.msra.mxu0 %v420
    %599 = vmatpush.msra.mxu0 %v416
    %600 = vmatpush.msra.mxu0 %v412
    %601 = vmatpush.msra.mxu0 %v408
    %602 = vmatmul.f32.gmra.mxu0 %v278
    %v603 = vpop.f32.mrf.mxu0
    %v604 = vadd.f32 %v584, %v603
    %605 = vdwg.mxu0
    %606 = vmatpush.msra.mxu0 %v532
    %607 = vmatpush.msra.mxu0 %v528
    %608 = vmatpush.msra.mxu0 %v524
    %609 = vmatpush.msra.mxu0 %v520
    %610 = vmatpush.msra.mxu0 %v516
    %611 = vmatpush.msra.mxu0 %v512
    %612 = vmatpush.msra.mxu0 %v508
    %613 = vmatpush.msra.mxu0 %v504
    %614 = vmatpush.msra.mxu0 %v500
    %615 = vmatpush.msra.mxu0 %v496
    %616 = vmatpush.msra.mxu0 %v492
    %617 = vmatpush.msra.mxu0 %v488
    %618 = vmatpush.msra.mxu0 %v484
    %619 = vmatpush.msra.mxu0 %v480
    %620 = vmatpush.msra.mxu0 %v476
    %621 = vmatpush.msra.mxu0 %v472
    %622 = vmatmul.f32.gmra.mxu0 %v279
    %v623 = vpop.f32.mrf.mxu0
    %v624 = vadd.f32 %v604, %v623
    %625 = vdwg.mxu0
    %626 = vmatpush.msra.mxu0 %v341
    %627 = vmatpush.msra.mxu0 %v337
    %628 = vmatpush.msra.mxu0 %v333
    %629 = vmatpush.msra.mxu0 %v329
    %630 = vmatpush.msra.mxu0 %v325
    %631 = vmatpush.msra.mxu0 %v321
    %632 = vmatpush.msra.mxu0 %v317
    %633 = vmatpush.msra.mxu0 %v313
    %634 = vmatpush.msra.mxu0 %v309
    %635 = vmatpush.msra.mxu0 %v305
    %636 = vmatpush.msra.mxu0 %v301
    %637 = vmatpush.msra.mxu0 %v297
    %638 = vmatpush.msra.mxu0 %v293
    %639 = vmatpush.msra.mxu0 %v289
    %640 = vmatpush.msra.mxu0 %v285
    %641 = vmatpush.msra.mxu0 %v281
    %642 = vmatmul.f32.gmra.mxu0 %v276
    %v643 = vpop.f32.mrf.mxu0
    %v644 = vadd.f32 %v539, %v643
    %645 = vdwg.mxu0
    %646 = vmatpush.msra.mxu0 %v405
    %647 = vmatpush.msra.mxu0 %v401
    %648 = vmatpush.msra.mxu0 %v397
    %649 = vmatpush.msra.mxu0 %v393
    %650 = vmatpush.msra.mxu0 %v389
    %651 = vmatpush.msra.mxu0 %v385
    %652 = vmatpush.msra.mxu0 %v381
    %653 = vmatpush.msra.mxu0 %v377
    %654 = vmatpush.msra.mxu0 %v373
    %655 = vmatpush.msra.mxu0 %v369
    %656 = vmatpush.msra.mxu0 %v365
    %657 = vmatpush.msra.mxu0 %v361
    %658 = vmatpush.msra.mxu0 %v357
    %659 = vmatpush.msra.mxu0 %v353
    %660 = vmatpush.msra.mxu0 %v349
    %661 = vmatpush.msra.mxu0 %v345
    %662 = vmatmul.f32.gmra.mxu0 %v277
    %v663 = vpop.f32.mrf.mxu0
    %v664 = vadd.f32 %v644, %v663
    %665 = vdwg.mxu0
    %666 = vmatpush.msra.mxu0 %v469
    %667 = vmatpush.msra.mxu0 %v465
    %668 = vmatpush.msra.mxu0 %v461
    %669 = vmatpush.msra.mxu0 %v457
    %670 = vmatpush.msra.mxu0 %v453
    %671 = vmatpush.msra.mxu0 %v449
    %672 = vmatpush.msra.mxu0 %v445
    %673 = vmatpush.msra.mxu0 %v441
    %674 = vmatpush.msra.mxu0 %v437
    %675 = vmatpush.msra.mxu0 %v433
    %676 = vmatpush.msra.mxu0 %v429
    %677 = vmatpush.msra.mxu0 %v425
    %678 = vmatpush.msra.mxu0 %v421
    %679 = vmatpush.msra.mxu0 %v417
    %680 = vmatpush.msra.mxu0 %v413
    %681 = vmatpush.msra.mxu0 %v409
    %682 = vmatmul.f32.gmra.mxu0 %v278
    %v683 = vpop.f32.mrf.mxu0
    %v684 = vadd.f32 %v664, %v683
    %685 = vdwg.mxu0
    %686 = vmatpush.msra.mxu0 %v533
    %687 = vmatpush.msra.mxu0 %v529
    %688 = vmatpush.msra.mxu0 %v525
    %689 = vmatpush.msra.mxu0 %v521
    %690 = vmatpush.msra.mxu0 %v517
    %691 = vmatpush.msra.mxu0 %v513
    %692 = vmatpush.msra.mxu0 %v509
    %693 = vmatpush.msra.mxu0 %v505
    %694 = vmatpush.msra.mxu0 %v501
    %695 = vmatpush.msra.mxu0 %v497
    %696 = vmatpush.msra.mxu0 %v493
    %697 = vmatpush.msra.mxu0 %v489
    %698 = vmatpush.msra.mxu0 %v485
    %699 = vmatpush.msra.mxu0 %v481
    %700 = vmatpush.msra.mxu0 %v477
    %701 = vmatpush.msra.mxu0 %v473
    %702 = vmatmul.f32.gmra.mxu0 %v279
    %v703 = vpop.f32.mrf.mxu0
    %v704 = vadd.f32 %v684, %v703
    %705 = vdwg.mxu0
    %706 = vmatpush.msra.mxu0 %v342
    %707 = vmatpush.msra.mxu0 %v338
    %708 = vmatpush.msra.mxu0 %v334
    %709 = vmatpush.msra.mxu0 %v330
    %710 = vmatpush.msra.mxu0 %v326
    %711 = vmatpush.msra.mxu0 %v322
    %712 = vmatpush.msra.mxu0 %v318
    %713 = vmatpush.msra.mxu0 %v314
    %714 = vmatpush.msra.mxu0 %v310
    %715 = vmatpush.msra.mxu0 %v306
    %716 = vmatpush.msra.mxu0 %v302
    %717 = vmatpush.msra.mxu0 %v298
    %718 = vmatpush.msra.mxu0 %v294
    %719 = vmatpush.msra.mxu0 %v290
    %720 = vmatpush.msra.mxu0 %v286
    %721 = vmatpush.msra.mxu0 %v282
    %722 = vmatmul.f32.gmra.mxu0 %v276
    %v723 = vpop.f32.mrf.mxu0
    %v724 = vadd.f32 %v540, %v723
    %725 = vdwg.mxu0
    %726 = vmatpush.msra.mxu0 %v406
    %727 = vmatpush.msra.mxu0 %v402
    %728 = vmatpush.msra.mxu0 %v398
    %729 = vmatpush.msra.mxu0 %v394
    %730 = vmatpush.msra.mxu0 %v390
    %731 = vmatpush.msra.mxu0 %v386
    %732 = vmatpush.msra.mxu0 %v382
    %733 = vmatpush.msra.mxu0 %v378
    %734 = vmatpush.msra.mxu0 %v374
    %735 = vmatpush.msra.mxu0 %v370
    %736 = vmatpush.msra.mxu0 %v366
    %737 = vmatpush.msra.mxu0 %v362
    %738 = vmatpush.msra.mxu0 %v358
    %739 = vmatpush.msra.mxu0 %v354
    %740 = vmatpush.msra.mxu0 %v350
    %741 = vmatpush.msra.mxu0 %v346
    %742 = vmatmul.f32.gmra.mxu0 %v277
    %v743 = vpop.f32.mrf.mxu0
    %v744 = vadd.f32 %v724, %v743
    %745 = vdwg.mxu0
    %746 = vmatpush.msra.mxu0 %v470
    %747 = vmatpush.msra.mxu0 %v466
    %748 = vmatpush.msra.mxu0 %v462
    %749 = vmatpush.msra.mxu0 %v458
    %750 = vmatpush.msra.mxu0 %v454
    %751 = vmatpush.msra.mxu0 %v450
    %752 = vmatpush.msra.mxu0 %v446
    %753 = vmatpush.msra.mxu0 %v442
    %754 = vmatpush.msra.mxu0 %v438
    %755 = vmatpush.msra.mxu0 %v434
    %756 = vmatpush.msra.mxu0 %v430
    %757 = vmatpush.msra.mxu0 %v426
    %758 = vmatpush.msra.mxu0 %v422
    %759 = vmatpush.msra.mxu0 %v418
    %760 = vmatpush.msra.mxu0 %v414
    %761 = vmatpush.msra.mxu0 %v410
    %762 = vmatmul.f32.gmra.mxu0 %v278
    %v763 = vpop.f32.mrf.mxu0
    %v764 = vadd.f32 %v744, %v763
    %765 = vdwg.mxu0
    %766 = vmatpush.msra.mxu0 %v534
    %767 = vmatpush.msra.mxu0 %v530
    %768 = vmatpush.msra.mxu0 %v526
    %769 = vmatpush.msra.mxu0 %v522
    %770 = vmatpush.msra.mxu0 %v518
    %771 = vmatpush.msra.mxu0 %v514
    %772 = vmatpush.msra.mxu0 %v510
    %773 = vmatpush.msra.mxu0 %v506
    %774 = vmatpush.msra.mxu0 %v502
    %775 = vmatpush.msra.mxu0 %v498
    %776 = vmatpush.msra.mxu0 %v494
    %777 = vmatpush.msra.mxu0 %v490
    %778 = vmatpush.msra.mxu0 %v486
    %779 = vmatpush.msra.mxu0 %v482
    %780 = vmatpush.msra.mxu0 %v478
    %781 = vmatpush.msra.mxu0 %v474
    %782 = vmatmul.f32.gmra.mxu0 %v279
    %v783 = vpop.f32.mrf.mxu0
    %v784 = vadd.f32 %v764, %v783
    %785 = vdwg.mxu0
    %786 = vmatpush.msra.mxu0 %v343
    %787 = vmatpush.msra.mxu0 %v339
    %788 = vmatpush.msra.mxu0 %v335
    %789 = vmatpush.msra.mxu0 %v331
    %790 = vmatpush.msra.mxu0 %v327
    %791 = vmatpush.msra.mxu0 %v323
    %792 = vmatpush.msra.mxu0 %v319
    %793 = vmatpush.msra.mxu0 %v315
    %794 = vmatpush.msra.mxu0 %v311
    %795 = vmatpush.msra.mxu0 %v307
    %796 = vmatpush.msra.mxu0 %v303
    %797 = vmatpush.msra.mxu0 %v299
    %798 = vmatpush.msra.mxu0 %v295
    %799 = vmatpush.msra.mxu0 %v291
    %800 = vmatpush.msra.mxu0 %v287
    %801 = vmatpush.msra.mxu0 %v283
    %802 = vmatmul.f32.gmra.mxu0 %v276
    %v803 = vpop.f32.mrf.mxu0
    %v804 = vadd.f32 %v541, %v803
    %805 = vdwg.mxu0
    %806 = vmatpush.msra.mxu0 %v407
    %807 = vmatpush.msra.mxu0 %v403
    %808 = vmatpush.msra.mxu0 %v399
    %809 = vmatpush.msra.mxu0 %v395
    %810 = vmatpush.msra.mxu0 %v391
    %811 = vmatpush.msra.mxu0 %v387
    %812 = vmatpush.msra.mxu0 %v383
    %813 = vmatpush.msra.mxu0 %v379
    %814 = vmatpush.msra.mxu0 %v375
    %815 = vmatpush.msra.mxu0 %v371
    %816 = vmatpush.msra.mxu0 %v367
    %817 = vmatpush.msra.mxu0 %v363
    %818 = vmatpush.msra.mxu0 %v359
    %819 = vmatpush.msra.mxu0 %v355
    %820 = vmatpush.msra.mxu0 %v351
    %821 = vmatpush.msra.mxu0 %v347
    %822 = vmatmul.f32.gmra.mxu0 %v277
    %v823 = vpop.f32.mrf.mxu0
    %v824 = vadd.f32 %v804, %v823
    %825 = vdwg.mxu0
    %826 = vmatpush.msra.mxu0 %v471
    %827 = vmatpush.msra.mxu0 %v467
    %828 = vmatpush.msra.mxu0 %v463
    %829 = vmatpush.msra.mxu0 %v459
    %830 = vmatpush.msra.mxu0 %v455
    %831 = vmatpush.msra.mxu0 %v451
    %832 = vmatpush.msra.mxu0 %v447
    %833 = vmatpush.msra.mxu0 %v443
    %834 = vmatpush.msra.mxu0 %v439
    %835 = vmatpush.msra.mxu0 %v435
    %836 = vmatpush.msra.mxu0 %v431
    %837 = vmatpush.msra.mxu0 %v427
    %838 = vmatpush.msra.mxu0 %v423
    %839 = vmatpush.msra.mxu0 %v419
    %840 = vmatpush.msra.mxu0 %v415
    %841 = vmatpush.msra.mxu0 %v411
    %842 = vmatmul.f32.gmra.mxu0 %v278
    %v843 = vpop.f32.mrf.mxu0
    %v844 = vadd.f32 %v824, %v843
    %845 = vdwg.mxu0
    %846 = vmatpush.msra.mxu0 %v535
    %847 = vmatpush.msra.mxu0 %v531
    %848 = vmatpush.msra.mxu0 %v527
    %849 = vmatpush.msra.mxu0 %v523
    %850 = vmatpush.msra.mxu0 %v519
    %851 = vmatpush.msra.mxu0 %v515
    %852 = vmatpush.msra.mxu0 %v511
    %853 = vmatpush.msra.mxu0 %v507
    %854 = vmatpush.msra.mxu0 %v503
    %855 = vmatpush.msra.mxu0 %v499
    %856 = vmatpush.msra.mxu0 %v495
    %857 = vmatpush.msra.mxu0 %v491
    %858 = vmatpush.msra.mxu0 %v487
    %859 = vmatpush.msra.mxu0 %v483
    %860 = vmatpush.msra.mxu0 %v479
    %861 = vmatpush.msra.mxu0 %v475
    %862 = vmatmul.f32.gmra.mxu0 %v279
    %v863 = vpop.f32.mrf.mxu0
    %v864 = vadd.f32 %v844, %v863
    %865 = vdwg.mxu0
    %vm866 = vcmp.gt.f32.partialorder %v624, 0.0
    %vm867 = vcmp.gt.f32.partialorder %v704, 0.0
    %vm868 = vcmp.gt.f32.partialorder %v784, 0.0
    %vm869 = vcmp.gt.f32.partialorder %v864, 0.0
    %v870 = vmul.f32 %v624, 0.01
    %v871 = vmul.f32 %v704, 0.01
    %v872 = vmul.f32 %v784, 0.01
    %v873 = vmul.f32 %v864, 0.01
    %v874 = vsel %vm866, %v624, %v870
    %v875 = vsel %vm867, %v704, %v871
    %v876 = vsel %vm868, %v784, %v872
    %v877 = vsel %vm869, %v864, %v873
    %v878 = vld [vmem:[%s6] sm:$0xff]
    %v879 = vld [vmem:[%s6 + $0x8] sm:$0xff]
    %v880 = vld [vmem:[%s6 + $0x10] sm:$0xff]
    %v881 = vld [vmem:[%s6 + $0x18] sm:$0xff]
    %v882 = vld [vmem:[%s6 + $0x20] sm:$0xff]
    %v883 = vld [vmem:[%s6 + $0x28] sm:$0xff]
    %v884 = vld [vmem:[%s6 + $0x30] sm:$0xff]
    %v885 = vld [vmem:[%s6 + $0x38] sm:$0xff]
    %v886 = vld [vmem:[%s6 + $0x40] sm:$0xff]
    %v887 = vld [vmem:[%s6 + $0x48] sm:$0xff]
    %v888 = vld [vmem:[%s6 + $0x50] sm:$0xff]
    %v889 = vld [vmem:[%s6 + $0x58] sm:$0xff]
    %v890 = vld [vmem:[%s6 + $0x60] sm:$0xff]
    %v891 = vld [vmem:[%s6 + $0x68] sm:$0xff]
    %v892 = vld [vmem:[%s6 + $0x70] sm:$0xff]
    %v893 = vld [vmem:[%s6 + $0x78] sm:$0xff]
    %v894 = vld [vmem:[%s6 + $0x80] sm:$0xff]
    %v895 = vld [vmem:[%s6 + $0x88] sm:$0xff]
    %v896 = vld [vmem:[%s6 + $0x90] sm:$0xff]
    %v897 = vld [vmem:[%s6 + $0x98] sm:$0xff]
    %v898 = vld [vmem:[%s6 + $0xa0] sm:$0xff]
    %v899 = vld [vmem:[%s6 + $0xa8] sm:$0xff]
    %v900 = vld [vmem:[%s6 + $0xb0] sm:$0xff]
    %v901 = vld [vmem:[%s6 + $0xb8] sm:$0xff]
    %v902 = vld [vmem:[%s6 + $0xc0] sm:$0xff]
    %v903 = vld [vmem:[%s6 + $0xc8] sm:$0xff]
    %v904 = vld [vmem:[%s6 + $0xd0] sm:$0xff]
    %v905 = vld [vmem:[%s6 + $0xd8] sm:$0xff]
    %v906 = vld [vmem:[%s6 + $0xe0] sm:$0xff]
    %v907 = vld [vmem:[%s6 + $0xe8] sm:$0xff]
    %v908 = vld [vmem:[%s6 + $0xf0] sm:$0xff]
    %v909 = vld [vmem:[%s6 + $0xf8] sm:$0xff]
    %v910 = vld [vmem:[%s6 + $0x100] sm:$0xff]
    %v911 = vld [vmem:[%s6 + $0x108] sm:$0xff]
    %v912 = vld [vmem:[%s6 + $0x110] sm:$0xff]
    %v913 = vld [vmem:[%s6 + $0x118] sm:$0xff]
    %v914 = vld [vmem:[%s6 + $0x120] sm:$0xff]
    %v915 = vld [vmem:[%s6 + $0x128] sm:$0xff]
    %v916 = vld [vmem:[%s6 + $0x130] sm:$0xff]
    %v917 = vld [vmem:[%s6 + $0x138] sm:$0xff]
    %v918 = vld [vmem:[%s6 + $0x140] sm:$0xff]
    %v919 = vld [vmem:[%s6 + $0x148] sm:$0xff]
    %v920 = vld [vmem:[%s6 + $0x150] sm:$0xff]
    %v921 = vld [vmem:[%s6 + $0x158] sm:$0xff]
    %v922 = vld [vmem:[%s6 + $0x160] sm:$0xff]
    %v923 = vld [vmem:[%s6 + $0x168] sm:$0xff]
    %v924 = vld [vmem:[%s6 + $0x170] sm:$0xff]
    %v925 = vld [vmem:[%s6 + $0x178] sm:$0xff]
    %v926 = vld [vmem:[%s6 + $0x180] sm:$0xff]
    %v927 = vld [vmem:[%s6 + $0x188] sm:$0xff]
    %v928 = vld [vmem:[%s6 + $0x190] sm:$0xff]
    %v929 = vld [vmem:[%s6 + $0x198] sm:$0xff]
    %v930 = vld [vmem:[%s6 + $0x1a0] sm:$0xff]
    %v931 = vld [vmem:[%s6 + $0x1a8] sm:$0xff]
    %v932 = vld [vmem:[%s6 + $0x1b0] sm:$0xff]
    %v933 = vld [vmem:[%s6 + $0x1b8] sm:$0xff]
    %v934 = vld [vmem:[%s6 + $0x1c0] sm:$0xff]
    %v935 = vld [vmem:[%s6 + $0x1c8] sm:$0xff]
    %v936 = vld [vmem:[%s6 + $0x1d0] sm:$0xff]
    %v937 = vld [vmem:[%s6 + $0x1d8] sm:$0xff]
    %v938 = vld [vmem:[%s6 + $0x1e0] sm:$0xff]
    %v939 = vld [vmem:[%s6 + $0x1e8] sm:$0xff]
    %v940 = vld [vmem:[%s6 + $0x1f0] sm:$0xff]
    %v941 = vld [vmem:[%s6 + $0x1f8] sm:$0xff]
    %v942 = vld [vmem:[%s7] sm:$0x1]
    %v944 = vperm.slane %v942, 0
    %946 = vmatpush.msra.mxu0 %v893
    %947 = vmatpush.msra.mxu0 %v892
    %948 = vmatpush.msra.mxu0 %v891
    %949 = vmatpush.msra.mxu0 %v890
    %950 = vmatpush.msra.mxu0 %v889
    %951 = vmatpush.msra.mxu0 %v888
    %952 = vmatpush.msra.mxu0 %v887
    %953 = vmatpush.msra.mxu0 %v886
    %954 = vmatpush.msra.mxu0 %v885
    %955 = vmatpush.msra.mxu0 %v884
    %956 = vmatpush.msra.mxu0 %v883
    %957 = vmatpush.msra.mxu0 %v882
    %958 = vmatpush.msra.mxu0 %v881
    %959 = vmatpush.msra.mxu0 %v880
    %960 = vmatpush.msra.mxu0 %v879
    %961 = vmatpush.msra.mxu0 %v878
    %962 = vmatmul.f32.gmra.mxu0 %v874
    %v963 = vpop.f32.mrf.mxu0
    %v964 = vadd.f32 %v944, %v963
    %965 = vdwg.mxu0
    %966 = vmatpush.msra.mxu0 %v909
    %967 = vmatpush.msra.mxu0 %v908
    %968 = vmatpush.msra.mxu0 %v907
    %969 = vmatpush.msra.mxu0 %v906
    %970 = vmatpush.msra.mxu0 %v905
    %971 = vmatpush.msra.mxu0 %v904
    %972 = vmatpush.msra.mxu0 %v903
    %973 = vmatpush.msra.mxu0 %v902
    %974 = vmatpush.msra.mxu0 %v901
    %975 = vmatpush.msra.mxu0 %v900
    %976 = vmatpush.msra.mxu0 %v899
    %977 = vmatpush.msra.mxu0 %v898
    %978 = vmatpush.msra.mxu0 %v897
    %979 = vmatpush.msra.mxu0 %v896
    %980 = vmatpush.msra.mxu0 %v895
    %981 = vmatpush.msra.mxu0 %v894
    %982 = vmatmul.f32.gmra.mxu0 %v875
    %v983 = vpop.f32.mrf.mxu0
    %v984 = vadd.f32 %v964, %v983
    %985 = vdwg.mxu0
    %986 = vmatpush.msra.mxu0 %v925
    %987 = vmatpush.msra.mxu0 %v924
    %988 = vmatpush.msra.mxu0 %v923
    %989 = vmatpush.msra.mxu0 %v922
    %990 = vmatpush.msra.mxu0 %v921
    %991 = vmatpush.msra.mxu0 %v920
    %992 = vmatpush.msra.mxu0 %v919
    %993 = vmatpush.msra.mxu0 %v918
    %994 = vmatpush.msra.mxu0 %v917
    %995 = vmatpush.msra.mxu0 %v916
    %996 = vmatpush.msra.mxu0 %v915
    %997 = vmatpush.msra.mxu0 %v914
    %998 = vmatpush.msra.mxu0 %v913
    %999 = vmatpush.msra.mxu0 %v912
    %1000 = vmatpush.msra.mxu0 %v911
    %1001 = vmatpush.msra.mxu0 %v910
    %1002 = vmatmul.f32.gmra.mxu0 %v876
    %v1003 = vpop.f32.mrf.mxu0
    %v1004 = vadd.f32 %v984, %v1003
    %1005 = vdwg.mxu0
    %1006 = vmatpush.msra.mxu0 %v941
    %1007 = vmatpush.msra.mxu0 %v940
    %1008 = vmatpush.msra.mxu0 %v939
    %1009 = vmatpush.msra.mxu0 %v938
    %1010 = vmatpush.msra.mxu0 %v937
    %1011 = vmatpush.msra.mxu0 %v936
    %1012 = vmatpush.msra.mxu0 %v935
    %1013 = vmatpush.msra.mxu0 %v934
    %1014 = vmatpush.msra.mxu0 %v933
    %1015 = vmatpush.msra.mxu0 %v932
    %1016 = vmatpush.msra.mxu0 %v931
    %1017 = vmatpush.msra.mxu0 %v930
    %1018 = vmatpush.msra.mxu0 %v929
    %1019 = vmatpush.msra.mxu0 %v928
    %1020 = vmatpush.msra.mxu0 %v927
    %1021 = vmatpush.msra.mxu0 %v926
    %1022 = vmatmul.f32.gmra.mxu0 %v877
    %v1023 = vpop.f32.mrf.mxu0
    %v1024 = vadd.f32 %v1004, %v1023
    %1025 = vdwg.mxu0
    %vm1026 = vcmask 9216
    %v1027 = vsel %vm1026, %v1024, -inf
    %1028 = vmax.xlane.f32.xlu0 %v1027
    %v1029 = vpop.xlane.xlu0 %1028
    %v1030 = vsub.f32 %v1024, %v1029
    %v1031 = vmul.f32 %v1030, 1.442695
    %v1032 = vpow.pop %v1031
    %v1033 = vsel %vm1026, %v1032, 0.0
    %1034 = vadd.xlane.f32.xlu0 %v1033
    %v1035 = vpop.xlane.xlu0 %1034
    %v1036 = vlog2.pop %v1035
    %v1037 = vmul.f32 %v1036, 0.6931472
    %v1038 = vsub.f32 %v1030, %v1037
    %1039 = vst.msk [vmem:[#allocation4] sm:$0x3] %vm1026, %v1038
    // Predicated region
    $region34: #{mobilenet_forward.35} parent=1 // pred_check
      _
    $region35: #{mobilenet_forward.35} parent=1 // pred_check_branch
      %1041 = sbr.rel (0) target = $region37
    $region36: #{mobilenet_forward.35} parent=1 // pred_region
      %1043 = vsyncadd [#allocation3], 0
      %s1045 = sshll.u32 [#allocation2], 4
      %s1046 = int_to_ptr.vmem [resolvable:$true] %s1045
      %s1047 = sshll.u32 %s8, 4
      %s1048 = int_to_ptr.hbm [resolvable:$true] %s1047
      %1050 = dma.vmem_to_hbm [thread:$0]  %s1046, 32, %s1048, [#allocation3]
    $region37: #{mobilenet_forward.35} parent=1 // pred_fallthru
      _
    // Predicated region
    $region38: #{mobilenet_forward.35} parent=1 // pred_check
      _
    $region39: #{mobilenet_forward.35} parent=1 // pred_check_branch
      %1052 = sbr.rel (0) target = $region41
    $region40: #{mobilenet_forward.35} parent=1 // pred_region
      %1054 = vsyncadd [#allocation5], 0
      %s1056 = sshll.u32 [#allocation4], 4
      %s1057 = int_to_ptr.vmem [resolvable:$true] %s1056
      %s1058 = sshll.u32 %s9, 4
      %s1059 = int_to_ptr.hbm [resolvable:$true] %s1058
      %1061 = dma.vmem_to_hbm [thread:$0]  %s1057, 32, %s1059, [#allocation5]
    $region41: #{mobilenet_forward.35} parent=1 // pred_fallthru
      _
    // Predicated region
    $region42: #{mobilenet_forward.35} parent=1 // pred_check
      _
    $region43: #{mobilenet_forward.35} parent=1 // pred_check_branch
      %1063 = sbr.rel (0) target = $region45
    $region44: #{mobilenet_forward.35} parent=1 // pred_region
      %1065 = dma.done [#allocation3], 32
    $region45: #{mobilenet_forward.35} parent=1 // pred_fallthru
      _
    // Predicated region
    $region46: #{mobilenet_forward.35} parent=1 // pred_check
      _
    $region47: #{mobilenet_forward.35} parent=1 // pred_check_branch
      %1067 = sbr.rel (0) target = $region49
    $region48: #{mobilenet_forward.35} parent=1 // pred_region
      %1069 = dma.done [#allocation5], 32
    $region49: #{mobilenet_forward.35} parent=1 // pred_fallthru
      _
    %1070 = vsyncpa [#allocation3], 1
    %1071 = vsyncpa [#allocation5], 1

</llo_original>
